<compile_context>
chip_gen: v5e
topology: v5e:2x2
jax: 0.10.0
libtpu: 0.0.40
codegen_flags: <defaults>
</compile_context>

<pallas_src>
import functools
import math

import jax
import jax.numpy as jnp
from jax import lax
from jax.experimental import pallas as pl
from jax.experimental.pallas import tpu as pltpu

EPS = 1e-5


# --------------------------------------------------------------------------------------
# VMEM budgeting (per-generation tile sizing)
# --------------------------------------------------------------------------------------
def _vmem_budget_bytes():
    """~75% of physical VMEM: 48 MiB on v7x, ~96 MiB on v5e/v6e.  Safe 48 MiB fallback."""
    cap = 64 * 1024 * 1024
    try:
        cap = int(pltpu.get_tpu_info().vmem_capacity_bytes)
    except Exception:
        pass
    return max(32 * 1024 * 1024, (cap * 3) // 4)


def _pick_batch_tile(N, H, W, Cin, Cout, has_sc, fuse_sc, mxu_bytes, budget):
    """Largest divisor Nb of N whose estimated per-step VMEM working set fits `budget`."""
    ncols = 2 * Cout if fuse_sc else Cout

    def est(nb):
        hw = nb * H * W
        img_in = hw * Cin * mxu_bytes
        img_out = hw * Cout * mxu_bytes
        img_sc = img_out if has_sc else 0
        pad1 = nb * (H + 2) * (W + 16) * Cin * mxu_bytes
        pad2 = nb * (H + 2) * (W + 16) * Cout * mxu_bytes
        patch1 = hw * 9 * Cin * mxu_bytes if Cin < 128 else 0      # im2col temp
        patch2 = hw * 9 * Cout * mxu_bytes if Cout < 128 else 0
        f32_1 = hw * ncols * 4                                      # f32 conv result
        f32_2 = hw * Cout * 4
        weights = (9 * Cin * ncols + 9 * Cout * Cout
                   + (Cin * Cout if (has_sc and not fuse_sc) else 0)) * mxu_bytes * 2
        s1 = 2 * (img_in + img_out + img_sc) + pad1 + patch1 + f32_1   # double buffered
        s2 = 2 * (2 * img_out) + pad2 + patch2 + f32_2
        s3 = 2 * (2 * img_out + hw * Cout * 4)
        return max(s1, s2, s3) + weights

    best = 1
    for nb in range(1, N + 1):
        if N % nb == 0 and est(nb) <= budget:
            best = nb
    return best


# --------------------------------------------------------------------------------------
# In-kernel helpers
# --------------------------------------------------------------------------------------
def _conv3x3(a, w_ref, pad_ref):
    """3x3 'same' conv of an (Nb, H, W, C) tile; returns (Nb*H*W, ncols) float32.

    C < 128 : one im2col (Nb*H*W, 9C) x (9C, ncols) MXU matmul.
    C >= 128: nine accumulated (Nb*H*W, C) x (C, ncols) matmuls read directly from the
              halo scratch (no materialized 9x patch).
    pad_ref: (Nb, H+2, W+16, C) VMEM halo scratch; the interior lives at [1:H+1, 8:8+W]
             so the big interior store is sublane-aligned; only the 1-wide halo actually
             read by the taps is zeroed each step.
    """
    Nb, H, W, C = a.shape
    dt = a.dtype
    ncols = w_ref.shape[-1]

    # Zero only the halo the taps read: rows 0 / H+1 over cols 7..8+W, cols 7 / 8+W.
    pad_ref[:, 0:1, 7:9 + W, :] = jnp.zeros((Nb, 1, W + 2, C), dt)
    pad_ref[:, H + 1:H + 2, 7:9 + W, :] = jnp.zeros((Nb, 1, W + 2, C), dt)
    pad_ref[:, :, 7:8, :] = jnp.zeros((Nb, H + 2, 1, C), dt)
    pad_ref[:, :, 8 + W:9 + W, :] = jnp.zeros((Nb, H + 2, 1, C), dt)
    # Aligned interior store (W starts at sublane offset 8).
    pad_ref[:, 1:H + 1, 8:8 + W, :] = a

    if C < 128:
        taps = [pad_ref[:, dh:dh + H, 7 + dw:7 + dw + W, :]
                for dh in range(3) for dw in range(3)]
        patch = jnp.concatenate(taps, axis=-1).reshape(Nb * H * W, 9 * C)
        return jnp.dot(patch, w_ref[...], preferred_element_type=jnp.float32)

    acc = jnp.zeros((Nb * H * W, ncols), jnp.float32)
    t = 0
    for dh in range(3):
        for dw in range(3):
            tap = pad_ref[:, dh:dh + H, 7 + dw:7 + dw + W, :].reshape(Nb * H * W, C)
            acc = acc + jnp.dot(tap, w_ref[t * C:(t + 1) * C, :],
                                preferred_element_type=jnp.float32)
            t += 1
    return acc


# --------------------------------------------------------------------------------------
# Stage kernels (grid over batch; Nb images per grid step)
# --------------------------------------------------------------------------------------
def _stage1_kernel(Nb, H, W, Cin, Cout, has_sc, fuse_sc, x_ref, w_ref, *rest):
    """conv1 (3x3), optionally with the 1x1 shortcut fused into the same matmul;
    emits raw outputs (mxu dtype) + per-channel partial sum / sum-of-squares (f32)."""
    if has_sc and not fuse_sc:
        (wsc_ref, y1_ref, s1_ref, ss1_ref,
         sc_ref, ssc_ref, sssc_ref, pad_ref) = rest
    elif has_sc:
        (y1_ref, s1_ref, ss1_ref,
         sc_ref, ssc_ref, sssc_ref, pad_ref) = rest
    else:
        y1_ref, s1_ref, ss1_ref, pad_ref = rest

    x = x_ref[...]                                          # (Nb, H, W, Cin), MXU dtype
    y = _conv3x3(x, w_ref, pad_ref)                         # (Nb*H*W, ncols) f32
    y1 = y[:, :Cout] if fuse_sc else y
    y1_ref[...] = y1.reshape(Nb, H, W, Cout).astype(y1_ref.dtype)
    s1_ref[0] = jnp.sum(y1, axis=0, keepdims=True)          # stats on pre-rounded f32
    ss1_ref[0] = jnp.sum(y1 * y1, axis=0, keepdims=True)

    if has_sc:
        if fuse_sc:
            sc = y[:, Cout:]                                # fused 1x1 shortcut columns
        else:
            sc = jnp.dot(x.reshape(Nb * H * W, Cin), wsc_ref[...],
                         preferred_element_type=jnp.float32)
        sc_ref[...] = sc.reshape(Nb, H, W, Cout).astype(sc_ref.dtype)
        ssc_ref[0] = jnp.sum(sc, axis=0, keepdims=True)
        sssc_ref[0] = jnp.sum(sc * sc, axis=0, keepdims=True)


def _stage2_kernel(Nb, H, W, C, mxu_dtype, y1_ref, scale_ref, shift_ref, w2_ref,
                   y2_ref, s2_ref, ss2_ref, pad_ref):
    """BN1 (folded scale/shift) + ReLU fused into conv2; emits raw conv2 + stats."""
    a1 = jnp.maximum(
        y1_ref[...].astype(jnp.float32) * scale_ref[...] + shift_ref[...], 0.0)
    y2 = _conv3x3(a1.astype(mxu_dtype), w2_ref, pad_ref)    # (Nb*H*W, C) f32
    y2_ref[...] = y2.reshape(Nb, H, W, C).astype(y2_ref.dtype)
    s2_ref[0] = jnp.sum(y2, axis=0, keepdims=True)
    ss2_ref[0] = jnp.sum(y2 * y2, axis=0, keepdims=True)


def _stage3_kernel(y2_ref, scale2_ref, shift2_ref, sc_ref, scale_s_ref, shift_s_ref,
                   out_ref):
    """BN2 + BN_shortcut (identity => scale=1, shift=0) + add + final ReLU.
    Operates on lane-dense (Nb, H, W*C) slabs; scale/shift are pre-tiled to W*C."""
    left = y2_ref[...].astype(jnp.float32) * scale2_ref[...] + shift2_ref[...]
    short = sc_ref[...].astype(jnp.float32) * scale_s_ref[...] + shift_s_ref[...]
    out_ref[...] = jnp.maximum(left + short, 0.0).astype(out_ref.dtype)


# --------------------------------------------------------------------------------------
# Host-side glue
# --------------------------------------------------------------------------------------
def _fold_bn(sums, sumsqs, gamma, beta, count):
    """Fold per-tile partial (sum, sumsq) into per-channel BN scale/shift (f32)."""
    mean = jnp.sum(sums, axis=(0, 1)) / count
    # TODO(synk): E[x^2]-E[x]^2 in f32 is cancellation-prone when |mean| >> std; a
    # shifted/two-pass accumulation would be more robust for very deep nets.
    var = jnp.sum(sumsqs, axis=(0, 1)) / count - mean * mean   # biased variance
    scale = gamma * lax.rsqrt(var + EPS)
    shift = beta - mean * scale
    return (scale.astype(jnp.float32).reshape(1, -1),
            shift.astype(jnp.float32).reshape(1, -1))


def residual_block_pallas_nhwc(x_nhwc, params, stride=1, mxu_dtype=jnp.bfloat16):
    """ResidualBlock forward on NHWC activations (keep NHWC between stacked blocks)."""
    if stride != 1:
        # TODO(synk): strided (downsampling) 3x3/1x1 convs not implemented in this kernel.
        raise NotImplementedError("stride != 1 not supported in this Pallas kernel")
    N, H, W, Cin = x_nhwc.shape
    Cout = params["w1"].shape[-1]
    has_sc = "wsc" in params
    fuse_sc = has_sc and Cout <= 128       # fold the 1x1 shortcut into conv1's matmul

    x32 = x_nhwc.astype(jnp.float32)
    xm = x32.astype(mxu_dtype)
    mxu_bytes = jnp.dtype(mxu_dtype).itemsize

    budget = _vmem_budget_bytes()
    Nb = _pick_batch_tile(N, H, W, Cin, Cout, has_sc, fuse_sc, mxu_bytes, budget)
    G = N // Nb
    count = float(N * H * W)

    ncols = 2 * Cout if fuse_sc else Cout
    w1r = params["w1"].reshape(9 * Cin, Cout).astype(jnp.float32)
    if fuse_sc:
        wsc = params["wsc"].reshape(Cin, Cout).astype(jnp.float32)
        sc_cols = jnp.zeros((9 * Cin, Cout), jnp.float32).at[4 * Cin:5 * Cin].set(wsc)
        w1f = jnp.concatenate([w1r, sc_cols], axis=-1).astype(mxu_dtype)  # (9Cin, 2Cout)
    else:
        w1f = w1r.astype(mxu_dtype)
    w2f = params["w2"].reshape(9 * Cout, Cout).astype(mxu_dtype)

    cparams = pltpu.CompilerParams(
        dimension_semantics=("parallel",),          # megacore-shard the batch-tile axis
        vmem_limit_bytes=int(budget))

    img_in_spec = pl.BlockSpec((Nb, H, W, Cin), lambda i: (i, 0, 0, 0))
    img_out_spec = pl.BlockSpec((Nb, H, W, Cout), lambda i: (i, 0, 0, 0))
    stat_spec = pl.BlockSpec((1, 1, Cout), lambda i: (i, 0, 0))
    vec_spec = pl.BlockSpec((1, Cout), lambda i: (0, 0))
    act_shape = jax.ShapeDtypeStruct((N, H, W, Cout), mxu_dtype)    # bf16 intermediates
    stat_shape = jax.ShapeDtypeStruct((G, 1, Cout), jnp.float32)

    # ---- stage 1: conv1 (+ fused/explicit 1x1 shortcut conv), partial BN stats ----
    in_specs1 = [img_in_spec, pl.BlockSpec((9 * Cin, ncols), lambda i: (0, 0))]
    args1 = [xm, w1f]
    out_specs1 = [img_out_spec, stat_spec, stat_spec]
    out_shapes1 = [act_shape, stat_shape, stat_shape]
    if has_sc and not fuse_sc:
        in_specs1.append(pl.BlockSpec((Cin, Cout), lambda i: (0, 0)))
        args1.append(params["wsc"].reshape(Cin, Cout).astype(mxu_dtype))
    if has_sc:
        out_specs1 += [img_out_spec, stat_spec, stat_spec]
        out_shapes1 += [act_shape, stat_shape, stat_shape]

    res1 = pl.pallas_call(
        functools.partial(_stage1_kernel, Nb, H, W, Cin, Cout, has_sc, fuse_sc),
        grid=(G,),
        in_specs=in_specs1,
        out_specs=out_specs1,
        out_shape=out_shapes1,
        scratch_shapes=[pltpu.VMEM((Nb, H + 2, W + 16, Cin), mxu_dtype)],
        compiler_params=cparams,
    )(*args1)
    if has_sc:
        y1, s1, ss1, sc_raw, s_sc, ss_sc = res1
    else:
        y1, s1, ss1 = res1

    scale1, shift1 = _fold_bn(s1, ss1, params["g1"], params["b1"], count)

    # ---- stage 2: BN1 + ReLU fused into conv2, partial BN stats ----
    y2, s2, ss2 = pl.pallas_call(
        functools.partial(_stage2_kernel, Nb, H, W, Cout, mxu_dtype),
        grid=(G,),
        in_specs=[img_out_spec, vec_spec, vec_spec,
                  pl.BlockSpec((9 * Cout, Cout), lambda i: (0, 0))],
        out_specs=[img_out_spec, stat_spec, stat_spec],
        out_shape=[act_shape, stat_shape, stat_shape],
        scratch_shapes=[pltpu.VMEM((Nb, H + 2, W + 16, Cout), mxu_dtype)],
        compiler_params=cparams,
    )(y1, scale1, shift1, w2f)

    scale2, shift2 = _fold_bn(s2, ss2, params["g2"], params["b2"], count)
    if has_sc:
        scale_s, shift_s = _fold_bn(s_sc, ss_sc, params["gsc"], params["bsc"], count)
        shortcut = sc_raw
    else:                                   # identity shortcut (Cin == Cout), kept f32
        scale_s = jnp.ones((1, Cout), jnp.float32)
        shift_s = jnp.zeros((1, Cout), jnp.float32)
        shortcut = x32

    # ---- stage 3: BN2 + BN_shortcut + add + ReLU on lane-dense (N, H, W*C) slabs ----
    WC = W * Cout
    slab_spec = pl.BlockSpec((Nb, H, WC), lambda i: (i, 0, 0))
    vec_wc_spec = pl.BlockSpec((1, WC), lambda i: (0, 0))
    out = pl.pallas_call(
        _stage3_kernel,
        grid=(G,),
        in_specs=[slab_spec, vec_wc_spec, vec_wc_spec,
                  slab_spec, vec_wc_spec, vec_wc_spec],
        out_specs=slab_spec,
        out_shape=jax.ShapeDtypeStruct((N, H, WC), jnp.float32),
        compiler_params=cparams,
    )(y2.reshape(N, H, WC), jnp.tile(scale2, (1, W)), jnp.tile(shift2, (1, W)),
      shortcut.reshape(N, H, WC), jnp.tile(scale_s, (1, W)), jnp.tile(shift_s, (1, W)))
    # TODO(synk): input_output_aliases of the stage-3 output onto y2's dead buffer was
    # skipped because the dtypes differ (bf16 intermediate vs f32 output).
    return out.reshape(N, H, W, Cout)


@functools.partial(jax.jit, static_argnames=("stride", "mxu_dtype"))
def residual_block_pallas(x_nchw, params, stride=1, mxu_dtype=jnp.bfloat16):
    """Public PyTorch-layout (NCHW) wrapper around the NHWC Pallas pipeline."""
    x = jnp.transpose(x_nchw, (0, 2, 3, 1))
    out = residual_block_pallas_nhwc(x, params, stride=stride, mxu_dtype=mxu_dtype)
    return jnp.transpose(out, (0, 3, 1, 2))


# --------------------------------------------------------------------------------------
# Parameters + pure-JAX reference (same precision policy) for correctness checking
# --------------------------------------------------------------------------------------
def init_params(key, inchannel, outchannel, stride=1):
    ks = jax.random.split(key, 10)
    p = {
        "w1": jax.random.normal(ks[0], (3, 3, inchannel, outchannel), jnp.float32)
              * (1.0 / (3.0 * math.sqrt(inchannel))),
        "g1": 1.0 + 0.1 * jax.random.normal(ks[1], (outchannel,), jnp.float32),
        "b1": 0.1 * jax.random.normal(ks[2], (outchannel,), jnp.float32),
        "w2": jax.random.normal(ks[3], (3, 3, outchannel, outchannel), jnp.float32)
              * (1.0 / (3.0 * math.sqrt(outchannel))),
        "g2": 1.0 + 0.1 * jax.random.normal(ks[4], (outchannel,), jnp.float32),
        "b2": 0.1 * jax.random.normal(ks[5], (outchannel,), jnp.float32),
    }
    if stride != 1 or inchannel != outchannel:
        p["wsc"] = jax.random.normal(ks[6], (1, 1, inchannel, outchannel),
                                     jnp.float32) * (1.0 / math.sqrt(inchannel))
        p["gsc"] = 1.0 + 0.1 * jax.random.normal(ks[7], (outchannel,), jnp.float32)
        p["bsc"] = 0.1 * jax.random.normal(ks[8], (outchannel,), jnp.float32)
    return p


def residual_block_ref(x_nchw, params, stride=1, mxu_dtype=jnp.bfloat16):
    """Reference: conv inputs in `mxu_dtype`, f32 accumulation, training-mode BN
    (batch stats, biased variance, eps=1e-5) in f32 on the un-rounded conv outputs.
    mxu_dtype=float32 gives the exact PyTorch fp32 semantics."""
    x = jnp.transpose(x_nchw, (0, 2, 3, 1)).astype(jnp.float32)

    def conv(inp, w, s, pad):
        return lax.conv_general_dilated(
            inp.astype(mxu_dtype), w.astype(mxu_dtype), (s, s),
            ((pad, pad), (pad, pad)),
            dimension_numbers=("NHWC", "HWIO", "NHWC"),
            preferred_element_type=jnp.float32)

    def bn(y, g, b):
        mean = jnp.mean(y, axis=(0, 1, 2), keepdims=True)
        var = jnp.mean((y - mean) ** 2, axis=(0, 1, 2), keepdims=True)
        return (y - mean) * lax.rsqrt(var + EPS) * g + b

    y = conv(x, params["w1"], stride, 1)
    y = jax.nn.relu(bn(y, params["g1"], params["b1"]))
    y = conv(y, params["w2"], 1, 1)
    y = bn(y, params["g2"], params["b2"])
    if "wsc" in params:
        sc = bn(conv(x, params["wsc"], stride, 0), params["gsc"], params["bsc"])
    else:
        sc = x
    out = jax.nn.relu(y + sc)
    return jnp.transpose(out, (0, 3, 1, 2))


# --------------------------------------------------------------------------------------
if __name__ == "__main__":
    key = jax.random.PRNGKey(0)
    kx1, kx2, kp1, kp2 = jax.random.split(key, 4)

    # --- case 1: inchannel != outchannel -> fused 1x1-conv + BN shortcut, bf16 MXU ---
    N, Cin, Cout, H, W = 2, 4, 8, 16, 16
    x1 = jax.random.normal(kx1, (N, Cin, H, W), jnp.float32)
    p1 = init_params(kp1, Cin, Cout, stride=1)
    out1 = jax.block_until_ready(residual_block_pallas(x1, p1))
    ref1 = jax.block_until_ready(residual_block_ref(x1, p1))
    assert out1.shape == (N, Cout, H, W)
    # The kernel stores inter-stage activations (y1, y2, shortcut conv) in bf16 (perf
    # review), so BN is applied to bf16-rounded values while the reference normalizes
    # un-rounded f32 conv outputs -> a few bf16 ulps of extra deviation -> 2e-2 tol.
    assert jnp.allclose(out1, ref1, rtol=2e-2, atol=2e-2), (
        f"conv-shortcut path max|diff|={float(jnp.max(jnp.abs(out1 - ref1)))}")

    # --- case 2: inchannel == outchannel -> identity shortcut, bf16 MXU inputs ---
    x2 = jax.random.normal(kx2, (N, Cout, H, W), jnp.float32)
    p2 = init_params(kp2, Cout, Cout, stride=1)
    out2 = jax.block_until_ready(residual_block_pallas(x2, p2))
    ref2 = jax.block_until_ready(residual_block_ref(x2, p2))
    assert out2.shape == (N, Cout, H, W)
    assert jnp.allclose(out2, ref2, rtol=2e-2, atol=2e-2), (
        f"identity path max|diff|={float(jnp.max(jnp.abs(out2 - ref2)))}")

    # --- case 3: exact fp32 semantics (mxu_dtype=float32, f32 intermediates) ---
    out3 = jax.block_until_ready(
        residual_block_pallas(x1, p1, mxu_dtype=jnp.float32))
    ref3 = jax.block_until_ready(
        residual_block_ref(x1, p1, mxu_dtype=jnp.float32))
    assert jnp.allclose(out3, ref3, rtol=2e-3, atol=2e-3), (
        f"fp32 path max|diff|={float(jnp.max(jnp.abs(out3 - ref3)))}")

    print("KERNEL_OK")
</pallas_src>

<mosaic_0001>
module attributes {stable_mosaic.version = 11 : i64} {
  func.func @_stage1_kernel(%arg0: i32, %arg1: memref<2x16x16x4xbf16, #tpu.memory_space<vmem>>, %arg2: memref<36x16xbf16, #tpu.memory_space<vmem>>, %arg3: memref<2x16x16x8xbf16, #tpu.memory_space<vmem>>, %arg4: memref<1x1x8xf32, #tpu.memory_space<vmem>>, %arg5: memref<1x1x8xf32, #tpu.memory_space<vmem>>, %arg6: memref<2x16x16x8xbf16, #tpu.memory_space<vmem>>, %arg7: memref<1x1x8xf32, #tpu.memory_space<vmem>>, %arg8: memref<1x1x8xf32, #tpu.memory_space<vmem>>, %arg9: memref<2x18x32x4xbf16, #tpu.memory_space<vmem>>) attributes {dimension_semantics = [#tpu.dimension_semantics<parallel>], iteration_bounds = array<i64: 1>, scalar_prefetch = 0 : i64, scratch_operands = 1 : i64, tpu.core_type = #tpu.core_type<tc>, window_params = [{transform_indices = @transform_0, window_bounds = array<i64: 2, 16, 16, 4>}, {pipeline_mode = #tpu.pipeline_mode<synchronous>, transform_indices = @transform_1, window_bounds = array<i64: 36, 16>}, {transform_indices = @transform_2, window_bounds = array<i64: 2, 16, 16, 8>}, {transform_indices = @transform_3, window_bounds = array<i64: 1, 1, 8>}, {transform_indices = @transform_4, window_bounds = array<i64: 1, 1, 8>}, {transform_indices = @transform_5, window_bounds = array<i64: 2, 16, 16, 8>}, {transform_indices = @transform_6, window_bounds = array<i64: 1, 1, 8>}, {transform_indices = @transform_7, window_bounds = array<i64: 1, 1, 8>}]} {
    %c0 = arith.constant 0 : index
    %c0_0 = arith.constant 0 : index
    %c0_1 = arith.constant 0 : index
    %c0_2 = arith.constant 0 : index
    %0 = vector.load %arg1[%c0, %c0_0, %c0_1, %c0_2] : memref<2x16x16x4xbf16, #tpu.memory_space<vmem>>, vector<2x16x16x4xbf16>
    %cst = arith.constant 0.000000e+00 : bf16
    %1 = vector.broadcast %cst : bf16 to vector<2x1x18x4xbf16>
    %c0_3 = arith.constant 0 : index
    %c0_4 = arith.constant 0 : index
    %c7 = arith.constant 7 : index
    %c0_5 = arith.constant 0 : index
    %2 = vector.load %arg9[%c0_3, %c0_4, %c7, %c0_5] : memref<2x18x32x4xbf16, #tpu.memory_space<vmem>>, vector<2x1x18x4xbf16>
    tpu.vector_store %arg9[%c0_3, %c0_4, %c7, %c0_5], %1 {strides = array<i32>} : memref<2x18x32x4xbf16, #tpu.memory_space<vmem>>, vector<2x1x18x4xbf16>,
    %cst_6 = arith.constant 0.000000e+00 : bf16
    %3 = vector.broadcast %cst_6 : bf16 to vector<2x1x18x4xbf16>
    %c0_7 = arith.constant 0 : index
    %c17 = arith.constant 17 : index
    %c7_8 = arith.constant 7 : index
    %c0_9 = arith.constant 0 : index
    %4 = vector.load %arg9[%c0_7, %c17, %c7_8, %c0_9] : memref<2x18x32x4xbf16, #tpu.memory_space<vmem>>, vector<2x1x18x4xbf16>
    tpu.vector_store %arg9[%c0_7, %c17, %c7_8, %c0_9], %3 {strides = array<i32>} : memref<2x18x32x4xbf16, #tpu.memory_space<vmem>>, vector<2x1x18x4xbf16>,
    %cst_10 = arith.constant 0.000000e+00 : bf16
    %5 = vector.broadcast %cst_10 : bf16 to vector<2x18x1x4xbf16>
    %c0_11 = arith.constant 0 : index
    %c0_12 = arith.constant 0 : index
    %c7_13 = arith.constant 7 : index
    %c0_14 = arith.constant 0 : index
    %6 = vector.load %arg9[%c0_11, %c0_12, %c7_13, %c0_14] : memref<2x18x32x4xbf16, #tpu.memory_space<vmem>>, vector<2x18x1x4xbf16>
    tpu.vector_store %arg9[%c0_11, %c0_12, %c7_13, %c0_14], %5 {strides = array<i32>} : memref<2x18x32x4xbf16, #tpu.memory_space<vmem>>, vector<2x18x1x4xbf16>,
    %cst_15 = arith.constant 0.000000e+00 : bf16
    %7 = vector.broadcast %cst_15 : bf16 to vector<2x18x1x4xbf16>
    %c0_16 = arith.constant 0 : index
    %c0_17 = arith.constant 0 : index
    %c24 = arith.constant 24 : index
    %c0_18 = arith.constant 0 : index
    %8 = vector.load %arg9[%c0_16, %c0_17, %c24, %c0_18] : memref<2x18x32x4xbf16, #tpu.memory_space<vmem>>, vector<2x18x1x4xbf16>
    tpu.vector_store %arg9[%c0_16, %c0_17, %c24, %c0_18], %7 {strides = array<i32>} : memref<2x18x32x4xbf16, #tpu.memory_space<vmem>>, vector<2x18x1x4xbf16>,
    %c0_19 = arith.constant 0 : index
    %c1 = arith.constant 1 : index
    %c8 = arith.constant 8 : index
    %c0_20 = arith.constant 0 : index
    %9 = vector.load %arg9[%c0_19, %c1, %c8, %c0_20] : memref<2x18x32x4xbf16, #tpu.memory_space<vmem>>, vector<2x16x16x4xbf16>
    tpu.vector_store %arg9[%c0_19, %c1, %c8, %c0_20], %0 {strides = array<i32>} : memref<2x18x32x4xbf16, #tpu.memory_space<vmem>>, vector<2x16x16x4xbf16>,
    %c0_21 = arith.constant 0 : index
    %c0_22 = arith.constant 0 : index
    %c7_23 = arith.constant 7 : index
    %c0_24 = arith.constant 0 : index
    %10 = vector.load %arg9[%c0_21, %c0_22, %c7_23, %c0_24] : memref<2x18x32x4xbf16, #tpu.memory_space<vmem>>, vector<2x16x16x4xbf16>
    %c0_25 = arith.constant 0 : index
    %c0_26 = arith.constant 0 : index
    %c8_27 = arith.constant 8 : index
    %c0_28 = arith.constant 0 : index
    %11 = vector.load %arg9[%c0_25, %c0_26, %c8_27, %c0_28] : memref<2x18x32x4xbf16, #tpu.memory_space<vmem>>, vector<2x16x16x4xbf16>
    %c0_29 = arith.constant 0 : index
    %c0_30 = arith.constant 0 : index
    %c9 = arith.constant 9 : index
    %c0_31 = arith.constant 0 : index
    %12 = vector.load %arg9[%c0_29, %c0_30, %c9, %c0_31] : memref<2x18x32x4xbf16, #tpu.memory_space<vmem>>, vector<2x16x16x4xbf16>
    %c0_32 = arith.constant 0 : index
    %c1_33 = arith.constant 1 : index
    %c7_34 = arith.constant 7 : index
    %c0_35 = arith.constant 0 : index
    %13 = vector.load %arg9[%c0_32, %c1_33, %c7_34, %c0_35] : memref<2x18x32x4xbf16, #tpu.memory_space<vmem>>, vector<2x16x16x4xbf16>
    %c0_36 = arith.constant 0 : index
    %c1_37 = arith.constant 1 : index
    %c8_38 = arith.constant 8 : index
    %c0_39 = arith.constant 0 : index
    %14 = vector.load %arg9[%c0_36, %c1_37, %c8_38, %c0_39] : memref<2x18x32x4xbf16, #tpu.memory_space<vmem>>, vector<2x16x16x4xbf16>
    %c0_40 = arith.constant 0 : index
    %c1_41 = arith.constant 1 : index
    %c9_42 = arith.constant 9 : index
    %c0_43 = arith.constant 0 : index
    %15 = vector.load %arg9[%c0_40, %c1_41, %c9_42, %c0_43] : memref<2x18x32x4xbf16, #tpu.memory_space<vmem>>, vector<2x16x16x4xbf16>
    %c0_44 = arith.constant 0 : index
    %c2 = arith.constant 2 : index
    %c7_45 = arith.constant 7 : index
    %c0_46 = arith.constant 0 : index
    %16 = vector.load %arg9[%c0_44, %c2, %c7_45, %c0_46] : memref<2x18x32x4xbf16, #tpu.memory_space<vmem>>, vector<2x16x16x4xbf16>
    %c0_47 = arith.constant 0 : index
    %c2_48 = arith.constant 2 : index
    %c8_49 = arith.constant 8 : index
    %c0_50 = arith.constant 0 : index
    %17 = vector.load %arg9[%c0_47, %c2_48, %c8_49, %c0_50] : memref<2x18x32x4xbf16, #tpu.memory_space<vmem>>, vector<2x16x16x4xbf16>
    %c0_51 = arith.constant 0 : index
    %c2_52 = arith.constant 2 : index
    %c9_53 = arith.constant 9 : index
    %c0_54 = arith.constant 0 : index
    %18 = vector.load %arg9[%c0_51, %c2_52, %c9_53, %c0_54] : memref<2x18x32x4xbf16, #tpu.memory_space<vmem>>, vector<2x16x16x4xbf16>
    %19 = tpu.concatenate %10, %11, %12, %13, %14, %15, %16, %17, %18 in 3 : vector<2x16x16x4xbf16>, vector<2x16x16x4xbf16>, vector<2x16x16x4xbf16>, vector<2x16x16x4xbf16>, vector<2x16x16x4xbf16>, vector<2x16x16x4xbf16>, vector<2x16x16x4xbf16>, vector<2x16x16x4xbf16>, vector<2x16x16x4xbf16> -> vector<2x16x16x36xbf16>
    %20 = vector.shape_cast %19 : vector<2x16x16x36xbf16> to vector<512x36xbf16>
    %c0_55 = arith.constant 0 : index
    %c0_56 = arith.constant 0 : index
    %21 = vector.load %arg2[%c0_55, %c0_56] : memref<36x16xbf16, #tpu.memory_space<vmem>>, vector<36x16xbf16>
    %cst_57 = arith.constant dense<0.000000e+00> : vector<512x16xf32>
    %22 = tpu.matmul %20, %21, %cst_57 {dimension_numbers = #tpu.dot_dimension_numbers<[1], [0], [0], [1], [0, 0, 1, 1], [], []>} : vector<512x36xbf16>, vector<36x16xbf16>, vector<512x16xf32> -> vector<512x16xf32>
    %23 = vector.extract_strided_slice %22 {offsets = [0, 0], sizes = [512, 8], strides = [1, 1]} : vector<512x16xf32> to vector<512x8xf32>
    %24 = vector.shape_cast %23 : vector<512x8xf32> to vector<2x16x16x8xf32>
    %25 = arith.truncf %24 : vector<2x16x16x8xf32> to vector<2x16x16x8xbf16>
    %c0_58 = arith.constant 0 : index
    %c0_59 = arith.constant 0 : index
    %c0_60 = arith.constant 0 : index
    %c0_61 = arith.constant 0 : index
    %26 = vector.load %arg3[%c0_58, %c0_59, %c0_60, %c0_61] : memref<2x16x16x8xbf16, #tpu.memory_space<vmem>>, vector<2x16x16x8xbf16>
    tpu.vector_store %arg3[%c0_58, %c0_59, %c0_60, %c0_61], %25 {strides = array<i32>} : memref<2x16x16x8xbf16, #tpu.memory_space<vmem>>, vector<2x16x16x8xbf16>,
    %cst_62 = arith.constant dense<0.000000e+00> : vector<8xf32>
    %27 = vector.multi_reduction <add>, %23, %cst_62 [0] : vector<512x8xf32> to vector<8xf32>
    %28 = vector.shape_cast %27 : vector<8xf32> to vector<1x8xf32>
    %c0_63 = arith.constant 0 : index
    %c0_64 = arith.constant 0 : index
    %c0_65 = arith.constant 0 : index
    %29 = vector.load %arg4[%c0_63, %c0_64, %c0_65] : memref<1x1x8xf32, #tpu.memory_space<vmem>>, vector<1x1x8xf32>
    %30 = vector.shape_cast %29 : vector<1x1x8xf32> to vector<1x8xf32>
    %31 = vector.shape_cast %28 : vector<1x8xf32> to vector<1x1x8xf32>
    tpu.vector_store %arg4[%c0_63, %c0_64, %c0_65], %31 {strides = array<i32>} : memref<1x1x8xf32, #tpu.memory_space<vmem>>, vector<1x1x8xf32>,
    %32 = arith.mulf %23, %23 : vector<512x8xf32>
    %cst_66 = arith.constant dense<0.000000e+00> : vector<8xf32>
    %33 = vector.multi_reduction <add>, %32, %cst_66 [0] : vector<512x8xf32> to vector<8xf32>
    %34 = vector.shape_cast %33 : vector<8xf32> to vector<1x8xf32>
    %c0_67 = arith.constant 0 : index
    %c0_68 = arith.constant 0 : index
    %c0_69 = arith.constant 0 : index
    %35 = vector.load %arg5[%c0_67, %c0_68, %c0_69] : memref<1x1x8xf32, #tpu.memory_space<vmem>>, vector<1x1x8xf32>
    %36 = vector.shape_cast %35 : vector<1x1x8xf32> to vector<1x8xf32>
    %37 = vector.shape_cast %34 : vector<1x8xf32> to vector<1x1x8xf32>
    tpu.vector_store %arg5[%c0_67, %c0_68, %c0_69], %37 {strides = array<i32>} : memref<1x1x8xf32, #tpu.memory_space<vmem>>, vector<1x1x8xf32>,
    %38 = vector.extract_strided_slice %22 {offsets = [0, 8], sizes = [512, 8], strides = [1, 1]} : vector<512x16xf32> to vector<512x8xf32>
    %39 = vector.shape_cast %38 : vector<512x8xf32> to vector<2x16x16x8xf32>
    %40 = arith.truncf %39 : vector<2x16x16x8xf32> to vector<2x16x16x8xbf16>
    %c0_70 = arith.constant 0 : index
    %c0_71 = arith.constant 0 : index
    %c0_72 = arith.constant 0 : index
    %c0_73 = arith.constant 0 : index
    %41 = vector.load %arg6[%c0_70, %c0_71, %c0_72, %c0_73] : memref<2x16x16x8xbf16, #tpu.memory_space<vmem>>, vector<2x16x16x8xbf16>
    tpu.vector_store %arg6[%c0_70, %c0_71, %c0_72, %c0_73], %40 {strides = array<i32>} : memref<2x16x16x8xbf16, #tpu.memory_space<vmem>>, vector<2x16x16x8xbf16>,
    %cst_74 = arith.constant dense<0.000000e+00> : vector<8xf32>
    %42 = vector.multi_reduction <add>, %38, %cst_74 [0] : vector<512x8xf32> to vector<8xf32>
    %43 = vector.shape_cast %42 : vector<8xf32> to vector<1x8xf32>
    %c0_75 = arith.constant 0 : index
    %c0_76 = arith.constant 0 : index
    %c0_77 = arith.constant 0 : index
    %44 = vector.load %arg7[%c0_75, %c0_76, %c0_77] : memref<1x1x8xf32, #tpu.memory_space<vmem>>, vector<1x1x8xf32>
    %45 = vector.shape_cast %44 : vector<1x1x8xf32> to vector<1x8xf32>
    %46 = vector.shape_cast %43 : vector<1x8xf32> to vector<1x1x8xf32>
    tpu.vector_store %arg7[%c0_75, %c0_76, %c0_77], %46 {strides = array<i32>} : memref<1x1x8xf32, #tpu.memory_space<vmem>>, vector<1x1x8xf32>,
    %47 = arith.mulf %38, %38 : vector<512x8xf32>
    %cst_78 = arith.constant dense<0.000000e+00> : vector<8xf32>
    %48 = vector.multi_reduction <add>, %47, %cst_78 [0] : vector<512x8xf32> to vector<8xf32>
    %49 = vector.shape_cast %48 : vector<8xf32> to vector<1x8xf32>
    %c0_79 = arith.constant 0 : index
    %c0_80 = arith.constant 0 : index
    %c0_81 = arith.constant 0 : index
    %50 = vector.load %arg8[%c0_79, %c0_80, %c0_81] : memref<1x1x8xf32, #tpu.memory_space<vmem>>, vector<1x1x8xf32>
    %51 = vector.shape_cast %50 : vector<1x1x8xf32> to vector<1x8xf32>
    %52 = vector.shape_cast %49 : vector<1x8xf32> to vector<1x1x8xf32>
    tpu.vector_store %arg8[%c0_79, %c0_80, %c0_81], %52 {strides = array<i32>} : memref<1x1x8xf32, #tpu.memory_space<vmem>>, vector<1x1x8xf32>,
    return
  }
  func.func @transform_0(%arg0: i32) -> (i32, i32, i32, i32) {
    %c0_i32 = arith.constant 0 : i32
    %c0_i32_0 = arith.constant 0 : i32
    %c0_i32_1 = arith.constant 0 : i32
    %c0_i32_2 = arith.constant 0 : i32
    return %arg0, %c0_i32, %c0_i32_0, %c0_i32_1 : i32, i32, i32, i32
  }
  func.func @transform_1(%arg0: i32) -> (i32, i32) {
    %c0_i32 = arith.constant 0 : i32
    %c0_i32_0 = arith.constant 0 : i32
    %c0_i32_1 = arith.constant 0 : i32
    return %c0_i32, %c0_i32_0 : i32, i32
  }
  func.func @transform_2(%arg0: i32) -> (i32, i32, i32, i32) {
    %c0_i32 = arith.constant 0 : i32
    %c0_i32_0 = arith.constant 0 : i32
    %c0_i32_1 = arith.constant 0 : i32
    %c0_i32_2 = arith.constant 0 : i32
    return %arg0, %c0_i32, %c0_i32_0, %c0_i32_1 : i32, i32, i32, i32
  }
  func.func @transform_3(%arg0: i32) -> (i32, i32, i32) {
    %c0_i32 = arith.constant 0 : i32
    %c0_i32_0 = arith.constant 0 : i32
    %c0_i32_1 = arith.constant 0 : i32
    return %arg0, %c0_i32, %c0_i32_0 : i32, i32, i32
  }
  func.func @transform_4(%arg0: i32) -> (i32, i32, i32) {
    %c0_i32 = arith.constant 0 : i32
    %c0_i32_0 = arith.constant 0 : i32
    %c0_i32_1 = arith.constant 0 : i32
    return %arg0, %c0_i32, %c0_i32_0 : i32, i32, i32
  }
  func.func @transform_5(%arg0: i32) -> (i32, i32, i32, i32) {
    %c0_i32 = arith.constant 0 : i32
    %c0_i32_0 = arith.constant 0 : i32
    %c0_i32_1 = arith.constant 0 : i32
    %c0_i32_2 = arith.constant 0 : i32
    return %arg0, %c0_i32, %c0_i32_0, %c0_i32_1 : i32, i32, i32, i32
  }
  func.func @transform_6(%arg0: i32) -> (i32, i32, i32) {
    %c0_i32 = arith.constant 0 : i32
    %c0_i32_0 = arith.constant 0 : i32
    %c0_i32_1 = arith.constant 0 : i32
    return %arg0, %c0_i32, %c0_i32_0 : i32, i32, i32
  }
  func.func @transform_7(%arg0: i32) -> (i32, i32, i32) {
    %c0_i32 = arith.constant 0 : i32
    %c0_i32_0 = arith.constant 0 : i32
    %c0_i32_1 = arith.constant 0 : i32
    return %arg0, %c0_i32, %c0_i32_0 : i32, i32, i32
  }
}

module attributes {stable_mosaic.version = 11 : i64} {
  func.func @_stage2_kernel(%arg0: i32, %arg1: memref<2x16x16x8xbf16, #tpu.memory_space<vmem>>, %arg2: memref<1x8xf32, #tpu.memory_space<vmem>>, %arg3: memref<1x8xf32, #tpu.memory_space<vmem>>, %arg4: memref<72x8xbf16, #tpu.memory_space<vmem>>, %arg5: memref<2x16x16x8xbf16, #tpu.memory_space<vmem>>, %arg6: memref<1x1x8xf32, #tpu.memory_space<vmem>>, %arg7: memref<1x1x8xf32, #tpu.memory_space<vmem>>, %arg8: memref<2x18x32x8xbf16, #tpu.memory_space<vmem>>) attributes {dimension_semantics = [#tpu.dimension_semantics<parallel>], iteration_bounds = array<i64: 1>, scalar_prefetch = 0 : i64, scratch_operands = 1 : i64, tpu.core_type = #tpu.core_type<tc>, window_params = [{transform_indices = @transform_0, window_bounds = array<i64: 2, 16, 16, 8>}, {pipeline_mode = #tpu.pipeline_mode<synchronous>, transform_indices = @transform_1, window_bounds = array<i64: 1, 8>}, {pipeline_mode = #tpu.pipeline_mode<synchronous>, transform_indices = @transform_2, window_bounds = array<i64: 1, 8>}, {pipeline_mode = #tpu.pipeline_mode<synchronous>, transform_indices = @transform_3, window_bounds = array<i64: 72, 8>}, {transform_indices = @transform_4, window_bounds = array<i64: 2, 16, 16, 8>}, {transform_indices = @transform_5, window_bounds = array<i64: 1, 1, 8>}, {transform_indices = @transform_6, window_bounds = array<i64: 1, 1, 8>}]} {
    %c0 = arith.constant 0 : index
    %c0_0 = arith.constant 0 : index
    %c0_1 = arith.constant 0 : index
    %c0_2 = arith.constant 0 : index
    %0 = vector.load %arg1[%c0, %c0_0, %c0_1, %c0_2] : memref<2x16x16x8xbf16, #tpu.memory_space<vmem>>, vector<2x16x16x8xbf16>
    %1 = arith.extf %0 : vector<2x16x16x8xbf16> to vector<2x16x16x8xf32>
    %c0_3 = arith.constant 0 : index
    %c0_4 = arith.constant 0 : index
    %2 = vector.load %arg2[%c0_3, %c0_4] : memref<1x8xf32, #tpu.memory_space<vmem>>, vector<1x8xf32>
    %3 = vector.shape_cast %2 : vector<1x8xf32> to vector<1x1x1x8xf32>
    %4 = vector.broadcast %3 : vector<1x1x1x8xf32> to vector<2x16x16x8xf32>
    %5 = arith.mulf %1, %4 : vector<2x16x16x8xf32>
    %c0_5 = arith.constant 0 : index
    %c0_6 = arith.constant 0 : index
    %6 = vector.load %arg3[%c0_5, %c0_6] : memref<1x8xf32, #tpu.memory_space<vmem>>, vector<1x8xf32>
    %7 = vector.shape_cast %6 : vector<1x8xf32> to vector<1x1x1x8xf32>
    %8 = vector.broadcast %7 : vector<1x1x1x8xf32> to vector<2x16x16x8xf32>
    %9 = arith.addf %5, %8 : vector<2x16x16x8xf32>
    %cst = arith.constant 0.000000e+00 : f32
    %10 = vector.broadcast %cst : f32 to vector<2x16x16x8xf32>
    %11 = arith.maximumf %9, %10 : vector<2x16x16x8xf32>
    %12 = arith.truncf %11 : vector<2x16x16x8xf32> to vector<2x16x16x8xbf16>
    %cst_7 = arith.constant 0.000000e+00 : bf16
    %13 = vector.broadcast %cst_7 : bf16 to vector<2x1x18x8xbf16>
    %c0_8 = arith.constant 0 : index
    %c0_9 = arith.constant 0 : index
    %c7 = arith.constant 7 : index
    %c0_10 = arith.constant 0 : index
    %14 = vector.load %arg8[%c0_8, %c0_9, %c7, %c0_10] : memref<2x18x32x8xbf16, #tpu.memory_space<vmem>>, vector<2x1x18x8xbf16>
    tpu.vector_store %arg8[%c0_8, %c0_9, %c7, %c0_10], %13 {strides = array<i32>} : memref<2x18x32x8xbf16, #tpu.memory_space<vmem>>, vector<2x1x18x8xbf16>,
    %cst_11 = arith.constant 0.000000e+00 : bf16
    %15 = vector.broadcast %cst_11 : bf16 to vector<2x1x18x8xbf16>
    %c0_12 = arith.constant 0 : index
    %c17 = arith.constant 17 : index
    %c7_13 = arith.constant 7 : index
    %c0_14 = arith.constant 0 : index
    %16 = vector.load %arg8[%c0_12, %c17, %c7_13, %c0_14] : memref<2x18x32x8xbf16, #tpu.memory_space<vmem>>, vector<2x1x18x8xbf16>
    tpu.vector_store %arg8[%c0_12, %c17, %c7_13, %c0_14], %15 {strides = array<i32>} : memref<2x18x32x8xbf16, #tpu.memory_space<vmem>>, vector<2x1x18x8xbf16>,
    %cst_15 = arith.constant 0.000000e+00 : bf16
    %17 = vector.broadcast %cst_15 : bf16 to vector<2x18x1x8xbf16>
    %c0_16 = arith.constant 0 : index
    %c0_17 = arith.constant 0 : index
    %c7_18 = arith.constant 7 : index
    %c0_19 = arith.constant 0 : index
    %18 = vector.load %arg8[%c0_16, %c0_17, %c7_18, %c0_19] : memref<2x18x32x8xbf16, #tpu.memory_space<vmem>>, vector<2x18x1x8xbf16>
    tpu.vector_store %arg8[%c0_16, %c0_17, %c7_18, %c0_19], %17 {strides = array<i32>} : memref<2x18x32x8xbf16, #tpu.memory_space<vmem>>, vector<2x18x1x8xbf16>,
    %cst_20 = arith.constant 0.000000e+00 : bf16
    %19 = vector.broadcast %cst_20 : bf16 to vector<2x18x1x8xbf16>
    %c0_21 = arith.constant 0 : index
    %c0_22 = arith.constant 0 : index
    %c24 = arith.constant 24 : index
    %c0_23 = arith.constant 0 : index
    %20 = vector.load %arg8[%c0_21, %c0_22, %c24, %c0_23] : memref<2x18x32x8xbf16, #tpu.memory_space<vmem>>, vector<2x18x1x8xbf16>
    tpu.vector_store %arg8[%c0_21, %c0_22, %c24, %c0_23], %19 {strides = array<i32>} : memref<2x18x32x8xbf16, #tpu.memory_space<vmem>>, vector<2x18x1x8xbf16>,
    %c0_24 = arith.constant 0 : index
    %c1 = arith.constant 1 : index
    %c8 = arith.constant 8 : index
    %c0_25 = arith.constant 0 : index
    %21 = vector.load %arg8[%c0_24, %c1, %c8, %c0_25] : memref<2x18x32x8xbf16, #tpu.memory_space<vmem>>, vector<2x16x16x8xbf16>
    tpu.vector_store %arg8[%c0_24, %c1, %c8, %c0_25], %12 {strides = array<i32>} : memref<2x18x32x8xbf16, #tpu.memory_space<vmem>>, vector<2x16x16x8xbf16>,
    %c0_26 = arith.constant 0 : index
    %c0_27 = arith.constant 0 : index
    %c7_28 = arith.constant 7 : index
    %c0_29 = arith.constant 0 : index
    %22 = vector.load %arg8[%c0_26, %c0_27, %c7_28, %c0_29] : memref<2x18x32x8xbf16, #tpu.memory_space<vmem>>, vector<2x16x16x8xbf16>
    %c0_30 = arith.constant 0 : index
    %c0_31 = arith.constant 0 : index
    %c8_32 = arith.constant 8 : index
    %c0_33 = arith.constant 0 : index
    %23 = vector.load %arg8[%c0_30, %c0_31, %c8_32, %c0_33] : memref<2x18x32x8xbf16, #tpu.memory_space<vmem>>, vector<2x16x16x8xbf16>
    %c0_34 = arith.constant 0 : index
    %c0_35 = arith.constant 0 : index
    %c9 = arith.constant 9 : index
    %c0_36 = arith.constant 0 : index
    %24 = vector.load %arg8[%c0_34, %c0_35, %c9, %c0_36] : memref<2x18x32x8xbf16, #tpu.memory_space<vmem>>, vector<2x16x16x8xbf16>
    %c0_37 = arith.constant 0 : index
    %c1_38 = arith.constant 1 : index
    %c7_39 = arith.constant 7 : index
    %c0_40 = arith.constant 0 : index
    %25 = vector.load %arg8[%c0_37, %c1_38, %c7_39, %c0_40] : memref<2x18x32x8xbf16, #tpu.memory_space<vmem>>, vector<2x16x16x8xbf16>
    %c0_41 = arith.constant 0 : index
    %c1_42 = arith.constant 1 : index
    %c8_43 = arith.constant 8 : index
    %c0_44 = arith.constant 0 : index
    %26 = vector.load %arg8[%c0_41, %c1_42, %c8_43, %c0_44] : memref<2x18x32x8xbf16, #tpu.memory_space<vmem>>, vector<2x16x16x8xbf16>
    %c0_45 = arith.constant 0 : index
    %c1_46 = arith.constant 1 : index
    %c9_47 = arith.constant 9 : index
    %c0_48 = arith.constant 0 : index
    %27 = vector.load %arg8[%c0_45, %c1_46, %c9_47, %c0_48] : memref<2x18x32x8xbf16, #tpu.memory_space<vmem>>, vector<2x16x16x8xbf16>
    %c0_49 = arith.constant 0 : index
    %c2 = arith.constant 2 : index
    %c7_50 = arith.constant 7 : index
    %c0_51 = arith.constant 0 : index
    %28 = vector.load %arg8[%c0_49, %c2, %c7_50, %c0_51] : memref<2x18x32x8xbf16, #tpu.memory_space<vmem>>, vector<2x16x16x8xbf16>
    %c0_52 = arith.constant 0 : index
    %c2_53 = arith.constant 2 : index
    %c8_54 = arith.constant 8 : index
    %c0_55 = arith.constant 0 : index
    %29 = vector.load %arg8[%c0_52, %c2_53, %c8_54, %c0_55] : memref<2x18x32x8xbf16, #tpu.memory_space<vmem>>, vector<2x16x16x8xbf16>
    %c0_56 = arith.constant 0 : index
    %c2_57 = arith.constant 2 : index
    %c9_58 = arith.constant 9 : index
    %c0_59 = arith.constant 0 : index
    %30 = vector.load %arg8[%c0_56, %c2_57, %c9_58, %c0_59] : memref<2x18x32x8xbf16, #tpu.memory_space<vmem>>, vector<2x16x16x8xbf16>
    %31 = tpu.concatenate %22, %23, %24, %25, %26, %27, %28, %29, %30 in 3 : vector<2x16x16x8xbf16>, vector<2x16x16x8xbf16>, vector<2x16x16x8xbf16>, vector<2x16x16x8xbf16>, vector<2x16x16x8xbf16>, vector<2x16x16x8xbf16>, vector<2x16x16x8xbf16>, vector<2x16x16x8xbf16>, vector<2x16x16x8xbf16> -> vector<2x16x16x72xbf16>
    %32 = vector.shape_cast %31 : vector<2x16x16x72xbf16> to vector<512x72xbf16>
    %c0_60 = arith.constant 0 : index
    %c0_61 = arith.constant 0 : index
    %33 = vector.load %arg4[%c0_60, %c0_61] : memref<72x8xbf16, #tpu.memory_space<vmem>>, vector<72x8xbf16>
    %cst_62 = arith.constant dense<0.000000e+00> : vector<512x8xf32>
    %34 = tpu.matmul %32, %33, %cst_62 {dimension_numbers = #tpu.dot_dimension_numbers<[1], [0], [0], [1], [0, 0, 1, 1], [], []>} : vector<512x72xbf16>, vector<72x8xbf16>, vector<512x8xf32> -> vector<512x8xf32>
    %35 = vector.shape_cast %34 : vector<512x8xf32> to vector<2x16x16x8xf32>
    %36 = arith.truncf %35 : vector<2x16x16x8xf32> to vector<2x16x16x8xbf16>
    %c0_63 = arith.constant 0 : index
    %c0_64 = arith.constant 0 : index
    %c0_65 = arith.constant 0 : index
    %c0_66 = arith.constant 0 : index
    %37 = vector.load %arg5[%c0_63, %c0_64, %c0_65, %c0_66] : memref<2x16x16x8xbf16, #tpu.memory_space<vmem>>, vector<2x16x16x8xbf16>
    tpu.vector_store %arg5[%c0_63, %c0_64, %c0_65, %c0_66], %36 {strides = array<i32>} : memref<2x16x16x8xbf16, #tpu.memory_space<vmem>>, vector<2x16x16x8xbf16>,
    %cst_67 = arith.constant dense<0.000000e+00> : vector<8xf32>
    %38 = vector.multi_reduction <add>, %34, %cst_67 [0] : vector<512x8xf32> to vector<8xf32>
    %39 = vector.shape_cast %38 : vector<8xf32> to vector<1x8xf32>
    %c0_68 = arith.constant 0 : index
    %c0_69 = arith.constant 0 : index
    %c0_70 = arith.constant 0 : index
    %40 = vector.load %arg6[%c0_68, %c0_69, %c0_70] : memref<1x1x8xf32, #tpu.memory_space<vmem>>, vector<1x1x8xf32>
    %41 = vector.shape_cast %40 : vector<1x1x8xf32> to vector<1x8xf32>
    %42 = vector.shape_cast %39 : vector<1x8xf32> to vector<1x1x8xf32>
    tpu.vector_store %arg6[%c0_68, %c0_69, %c0_70], %42 {strides = array<i32>} : memref<1x1x8xf32, #tpu.memory_space<vmem>>, vector<1x1x8xf32>,
    %43 = arith.mulf %34, %34 : vector<512x8xf32>
    %cst_71 = arith.constant dense<0.000000e+00> : vector<8xf32>
    %44 = vector.multi_reduction <add>, %43, %cst_71 [0] : vector<512x8xf32> to vector<8xf32>
    %45 = vector.shape_cast %44 : vector<8xf32> to vector<1x8xf32>
    %c0_72 = arith.constant 0 : index
    %c0_73 = arith.constant 0 : index
    %c0_74 = arith.constant 0 : index
    %46 = vector.load %arg7[%c0_72, %c0_73, %c0_74] : memref<1x1x8xf32, #tpu.memory_space<vmem>>, vector<1x1x8xf32>
    %47 = vector.shape_cast %46 : vector<1x1x8xf32> to vector<1x8xf32>
    %48 = vector.shape_cast %45 : vector<1x8xf32> to vector<1x1x8xf32>
    tpu.vector_store %arg7[%c0_72, %c0_73, %c0_74], %48 {strides = array<i32>} : memref<1x1x8xf32, #tpu.memory_space<vmem>>, vector<1x1x8xf32>,
    return
  }
  func.func @transform_0(%arg0: i32) -> (i32, i32, i32, i32) {
    %c0_i32 = arith.constant 0 : i32
    %c0_i32_0 = arith.constant 0 : i32
    %c0_i32_1 = arith.constant 0 : i32
    %c0_i32_2 = arith.constant 0 : i32
    return %arg0, %c0_i32, %c0_i32_0, %c0_i32_1 : i32, i32, i32, i32
  }
  func.func @transform_1(%arg0: i32) -> (i32, i32) {
    %c0_i32 = arith.constant 0 : i32
    %c0_i32_0 = arith.constant 0 : i32
    %c0_i32_1 = arith.constant 0 : i32
    return %c0_i32, %c0_i32_0 : i32, i32
  }
  func.func @transform_2(%arg0: i32) -> (i32, i32) {
    %c0_i32 = arith.constant 0 : i32
    %c0_i32_0 = arith.constant 0 : i32
    %c0_i32_1 = arith.constant 0 : i32
    return %c0_i32, %c0_i32_0 : i32, i32
  }
  func.func @transform_3(%arg0: i32) -> (i32, i32) {
    %c0_i32 = arith.constant 0 : i32
    %c0_i32_0 = arith.constant 0 : i32
    %c0_i32_1 = arith.constant 0 : i32
    return %c0_i32, %c0_i32_0 : i32, i32
  }
  func.func @transform_4(%arg0: i32) -> (i32, i32, i32, i32) {
    %c0_i32 = arith.constant 0 : i32
    %c0_i32_0 = arith.constant 0 : i32
    %c0_i32_1 = arith.constant 0 : i32
    %c0_i32_2 = arith.constant 0 : i32
    return %arg0, %c0_i32, %c0_i32_0, %c0_i32_1 : i32, i32, i32, i32
  }
  func.func @transform_5(%arg0: i32) -> (i32, i32, i32) {
    %c0_i32 = arith.constant 0 : i32
    %c0_i32_0 = arith.constant 0 : i32
    %c0_i32_1 = arith.constant 0 : i32
    return %arg0, %c0_i32, %c0_i32_0 : i32, i32, i32
  }
  func.func @transform_6(%arg0: i32) -> (i32, i32, i32) {
    %c0_i32 = arith.constant 0 : i32
    %c0_i32_0 = arith.constant 0 : i32
    %c0_i32_1 = arith.constant 0 : i32
    return %arg0, %c0_i32, %c0_i32_0 : i32, i32, i32
  }
}

module attributes {stable_mosaic.version = 11 : i64} {
  func.func @_stage3_kernel(%arg0: i32, %arg1: memref<2x16x128xbf16, #tpu.memory_space<vmem>>, %arg2: memref<1x128xf32, #tpu.memory_space<vmem>>, %arg3: memref<1x128xf32, #tpu.memory_space<vmem>>, %arg4: memref<2x16x128xbf16, #tpu.memory_space<vmem>>, %arg5: memref<1x128xf32, #tpu.memory_space<vmem>>, %arg6: memref<1x128xf32, #tpu.memory_space<vmem>>, %arg7: memref<2x16x128xf32, #tpu.memory_space<vmem>>) attributes {dimension_semantics = [#tpu.dimension_semantics<parallel>], iteration_bounds = array<i64: 1>, scalar_prefetch = 0 : i64, scratch_operands = 0 : i64, tpu.core_type = #tpu.core_type<tc>, window_params = [{transform_indices = @transform_0, window_bounds = array<i64: 2, 16, 128>}, {pipeline_mode = #tpu.pipeline_mode<synchronous>, transform_indices = @transform_1, window_bounds = array<i64: 1, 128>}, {pipeline_mode = #tpu.pipeline_mode<synchronous>, transform_indices = @transform_2, window_bounds = array<i64: 1, 128>}, {transform_indices = @transform_3, window_bounds = array<i64: 2, 16, 128>}, {pipeline_mode = #tpu.pipeline_mode<synchronous>, transform_indices = @transform_4, window_bounds = array<i64: 1, 128>}, {pipeline_mode = #tpu.pipeline_mode<synchronous>, transform_indices = @transform_5, window_bounds = array<i64: 1, 128>}, {transform_indices = @transform_6, window_bounds = array<i64: 2, 16, 128>}]} {
    %c0 = arith.constant 0 : index
    %c0_0 = arith.constant 0 : index
    %c0_1 = arith.constant 0 : index
    %0 = vector.load %arg1[%c0, %c0_0, %c0_1] : memref<2x16x128xbf16, #tpu.memory_space<vmem>>, vector<2x16x128xbf16>
    %1 = arith.extf %0 : vector<2x16x128xbf16> to vector<2x16x128xf32>
    %c0_2 = arith.constant 0 : index
    %c0_3 = arith.constant 0 : index
    %2 = vector.load %arg2[%c0_2, %c0_3] : memref<1x128xf32, #tpu.memory_space<vmem>>, vector<1x128xf32>
    %3 = vector.shape_cast %2 : vector<1x128xf32> to vector<1x1x128xf32>
    %4 = vector.broadcast %3 : vector<1x1x128xf32> to vector<2x16x128xf32>
    %5 = arith.mulf %1, %4 : vector<2x16x128xf32>
    %c0_4 = arith.constant 0 : index
    %c0_5 = arith.constant 0 : index
    %6 = vector.load %arg3[%c0_4, %c0_5] : memref<1x128xf32, #tpu.memory_space<vmem>>, vector<1x128xf32>
    %7 = vector.shape_cast %6 : vector<1x128xf32> to vector<1x1x128xf32>
    %8 = vector.broadcast %7 : vector<1x1x128xf32> to vector<2x16x128xf32>
    %9 = arith.addf %5, %8 : vector<2x16x128xf32>
    %c0_6 = arith.constant 0 : index
    %c0_7 = arith.constant 0 : index
    %c0_8 = arith.constant 0 : index
    %10 = vector.load %arg4[%c0_6, %c0_7, %c0_8] : memref<2x16x128xbf16, #tpu.memory_space<vmem>>, vector<2x16x128xbf16>
    %11 = arith.extf %10 : vector<2x16x128xbf16> to vector<2x16x128xf32>
    %c0_9 = arith.constant 0 : index
    %c0_10 = arith.constant 0 : index
    %12 = vector.load %arg5[%c0_9, %c0_10] : memref<1x128xf32, #tpu.memory_space<vmem>>, vector<1x128xf32>
    %13 = vector.shape_cast %12 : vector<1x128xf32> to vector<1x1x128xf32>
    %14 = vector.broadcast %13 : vector<1x1x128xf32> to vector<2x16x128xf32>
    %15 = arith.mulf %11, %14 : vector<2x16x128xf32>
    %c0_11 = arith.constant 0 : index
    %c0_12 = arith.constant 0 : index
    %16 = vector.load %arg6[%c0_11, %c0_12] : memref<1x128xf32, #tpu.memory_space<vmem>>, vector<1x128xf32>
    %17 = vector.shape_cast %16 : vector<1x128xf32> to vector<1x1x128xf32>
    %18 = vector.broadcast %17 : vector<1x1x128xf32> to vector<2x16x128xf32>
    %19 = arith.addf %15, %18 : vector<2x16x128xf32>
    %20 = arith.addf %9, %19 : vector<2x16x128xf32>
    %cst = arith.constant 0.000000e+00 : f32
    %21 = vector.broadcast %cst : f32 to vector<2x16x128xf32>
    %22 = arith.maximumf %20, %21 : vector<2x16x128xf32>
    %c0_13 = arith.constant 0 : index
    %c0_14 = arith.constant 0 : index
    %c0_15 = arith.constant 0 : index
    %23 = vector.load %arg7[%c0_13, %c0_14, %c0_15] : memref<2x16x128xf32, #tpu.memory_space<vmem>>, vector<2x16x128xf32>
    tpu.vector_store %arg7[%c0_13, %c0_14, %c0_15], %22 {strides = array<i32>} : memref<2x16x128xf32, #tpu.memory_space<vmem>>, vector<2x16x128xf32>,
    return
  }
  func.func @transform_0(%arg0: i32) -> (i32, i32, i32) {
    %c0_i32 = arith.constant 0 : i32
    %c0_i32_0 = arith.constant 0 : i32
    %c0_i32_1 = arith.constant 0 : i32
    return %arg0, %c0_i32, %c0_i32_0 : i32, i32, i32
  }
  func.func @transform_1(%arg0: i32) -> (i32, i32) {
    %c0_i32 = arith.constant 0 : i32
    %c0_i32_0 = arith.constant 0 : i32
    %c0_i32_1 = arith.constant 0 : i32
    return %c0_i32, %c0_i32_0 : i32, i32
  }
  func.func @transform_2(%arg0: i32) -> (i32, i32) {
    %c0_i32 = arith.constant 0 : i32
    %c0_i32_0 = arith.constant 0 : i32
    %c0_i32_1 = arith.constant 0 : i32
    return %c0_i32, %c0_i32_0 : i32, i32
  }
  func.func @transform_3(%arg0: i32) -> (i32, i32, i32) {
    %c0_i32 = arith.constant 0 : i32
    %c0_i32_0 = arith.constant 0 : i32
    %c0_i32_1 = arith.constant 0 : i32
    return %arg0, %c0_i32, %c0_i32_0 : i32, i32, i32
  }
  func.func @transform_4(%arg0: i32) -> (i32, i32) {
    %c0_i32 = arith.constant 0 : i32
    %c0_i32_0 = arith.constant 0 : i32
    %c0_i32_1 = arith.constant 0 : i32
    return %c0_i32, %c0_i32_0 : i32, i32
  }
  func.func @transform_5(%arg0: i32) -> (i32, i32) {
    %c0_i32 = arith.constant 0 : i32
    %c0_i32_0 = arith.constant 0 : i32
    %c0_i32_1 = arith.constant 0 : i32
    return %c0_i32, %c0_i32_0 : i32, i32
  }
  func.func @transform_6(%arg0: i32) -> (i32, i32, i32) {
    %c0_i32 = arith.constant 0 : i32
    %c0_i32_0 = arith.constant 0 : i32
    %c0_i32_1 = arith.constant 0 : i32
    return %arg0, %c0_i32, %c0_i32_0 : i32, i32, i32
  }
}

</mosaic_0001>

<llo_original>
// kernel: residual_block_pallas.5
$region0: #{residual_block_pallas.5}
  #allocation0 [shape = 'u32[]', space=smem, size = 0x4, offset = 0x4, fixed_abs, tag = 'smem constant byte address 0x4 - core index']
  #allocation1 [shape = 'u32[72,128]{1,0:T(1,128)}', space=vmem, size = 0x9000, scoped, tag = 'internal scratch']
  %s0 = inlined_call_operand.vmem [shape: bf16[2,16,128], index: 0, kind: input, shape index: {}]
  %s1 = inlined_call_operand.vmem [shape: f32[1,128], index: 1, kind: input, shape index: {}]
  %s2 = inlined_call_operand.vmem [shape: f32[1,128], index: 2, kind: input, shape index: {}]
  %s3 = inlined_call_operand.vmem [shape: bf16[2,16,128], index: 3, kind: input, shape index: {}]
  %s4 = inlined_call_operand.vmem [shape: f32[1,128], index: 4, kind: input, shape index: {}]
  %s5 = inlined_call_operand.vmem [shape: f32[1,128], index: 5, kind: input, shape index: {}]
  %s6 = inlined_call_operand.vmem [shape: f32[2,16,128], index: 6, kind: output, shape index: {}]
  %s7 = sld [smem:[#allocation0]]
  $region34: #{residual_block_pallas.5} parent=0
    _
  %s9 = ssub.s32 1, %s7
  %s10 = scalar_select 0, %s9, %s7
  // Predicated region
  $region2: #{residual_block_pallas.5} parent=0 // pred_check
    _
  $region3: #{residual_block_pallas.5} parent=0 // pred_check_branch
    %12 = sbr.rel (0) target = $region5
  $region4: #{residual_block_pallas.5} parent=0 // pred_region
    _
  $region5: #{residual_block_pallas.5} parent=0 // pred_fallthru
    _
  // Predicated region
  $region6: #{residual_block_pallas.5} parent=0 // pred_check
    _
  $region7: #{residual_block_pallas.5} parent=0 // pred_check_branch
    %14 = sbr.rel (0) target = $region9
  $region8: #{residual_block_pallas.5} parent=0 // pred_region
    _
  $region9: #{residual_block_pallas.5} parent=0 // pred_fallthru
    _
  // Predicated region
  $region10: #{residual_block_pallas.5} parent=0 // pred_check
    _
  $region11: #{residual_block_pallas.5} parent=0 // pred_check_branch
    %16 = sbr.rel (0) target = $region13
  $region12: #{residual_block_pallas.5} parent=0 // pred_region
    _
  $region13: #{residual_block_pallas.5} parent=0 // pred_fallthru
    _
  // Predicated region
  $region14: #{residual_block_pallas.5} parent=0 // pred_check
    _
  $region15: #{residual_block_pallas.5} parent=0 // pred_check_branch
    %18 = sbr.rel (0) target = $region17
  $region16: #{residual_block_pallas.5} parent=0 // pred_region
    _
  $region17: #{residual_block_pallas.5} parent=0 // pred_fallthru
    _
  // Predicated region
  $region18: #{residual_block_pallas.5} parent=0 // pred_check
    _
  $region19: #{residual_block_pallas.5} parent=0 // pred_check_branch
    %20 = sbr.rel (0) target = $region21
  $region20: #{residual_block_pallas.5} parent=0 // pred_region
    _
  $region21: #{residual_block_pallas.5} parent=0 // pred_fallthru
    _
  // Predicated region
  $region22: #{residual_block_pallas.5} parent=0 // pred_check
    _
  $region23: #{residual_block_pallas.5} parent=0 // pred_check_branch
    %22 = sbr.rel (0) target = $region25
  $region24: #{residual_block_pallas.5} parent=0 // pred_region
    _
  $region25: #{residual_block_pallas.5} parent=0 // pred_fallthru
    _
  %v23 = vld [vmem:[%s0] sm:$0xf]
  %v24 = vld [vmem:[%s0 + $0x4] sm:$0xf]
  %v25 = vld [vmem:[%s0 + $0x8] sm:$0xf]
  %v26 = vld [vmem:[%s0 + $0xc] sm:$0xf]
  %v27 = vunpack.c.l.bf16 %v23
  %v28 = vunpack.c.l.bf16 %v24
  %v29 = vunpack.c.l.bf16 %v25
  %v30 = vunpack.c.l.bf16 %v26
  %v31 = vld [vmem:[%s1] sm:$0x1]
  %v33 = vperm.slane %v31, 0
  %v35 = vmul.f32 %v27, %v33
  %v36 = vmul.f32 %v28, %v33
  %v37 = vmul.f32 %v29, %v33
  %v38 = vmul.f32 %v30, %v33
  %v39 = vld [vmem:[%s2] sm:$0x1]
  %v41 = vperm.slane %v39, 0
  %v43 = vadd.f32 %v35, %v41
  %v44 = vadd.f32 %v36, %v41
  %v45 = vadd.f32 %v37, %v41
  %v46 = vadd.f32 %v38, %v41
  %v47 = vld [vmem:[%s3] sm:$0xf]
  %v48 = vld [vmem:[%s3 + $0x4] sm:$0xf]
  %v49 = vld [vmem:[%s3 + $0x8] sm:$0xf]
  %v50 = vld [vmem:[%s3 + $0xc] sm:$0xf]
  %v51 = vunpack.c.l.bf16 %v47
  %v52 = vunpack.c.l.bf16 %v48
  %v53 = vunpack.c.l.bf16 %v49
  %v54 = vunpack.c.l.bf16 %v50
  %v55 = vld [vmem:[%s4] sm:$0x1]
  %v57 = vperm.slane %v55, 0
  %v59 = vmul.f32 %v51, %v57
  %v60 = vmul.f32 %v52, %v57
  %v61 = vmul.f32 %v53, %v57
  %v62 = vmul.f32 %v54, %v57
  %v63 = vld [vmem:[%s5] sm:$0x1]
  %v65 = vperm.slane %v63, 0
  %v67 = vadd.f32 %v59, %v65
  %v68 = vadd.f32 %v60, %v65
  %v69 = vadd.f32 %v61, %v65
  %v70 = vadd.f32 %v62, %v65
  %v71 = vadd.f32 %v43, %v67
  %v72 = vadd.f32 %v44, %v68
  %v73 = vadd.f32 %v45, %v69
  %v74 = vadd.f32 %v46, %v70
  %v75 = vmax.f32 %v71, 0.0
  %v76 = vmax.f32 %v72, 0.0
  %v77 = vmax.f32 %v73, 0.0
  %v78 = vmax.f32 %v74, 0.0
  %79 = vst [vmem:[%s6] sm:$0xff] %v75
  %80 = vst [vmem:[%s6 + $0x8] sm:$0xff] %v76
  %81 = vst [vmem:[%s6 + $0x10] sm:$0xff] %v77
  %82 = vst [vmem:[%s6 + $0x18] sm:$0xff] %v78
  // Predicated region
  $region26: #{residual_block_pallas.5} parent=0 // pred_check
    _
  $region27: #{residual_block_pallas.5} parent=0 // pred_check_branch
    %84 = sbr.rel (0) target = $region29
  $region28: #{residual_block_pallas.5} parent=0 // pred_region
    _
  $region29: #{residual_block_pallas.5} parent=0 // pred_fallthru
    _
  // Predicated region
  $region30: #{residual_block_pallas.5} parent=0 // pred_check
    _
  $region31: #{residual_block_pallas.5} parent=0 // pred_check_branch
    %86 = sbr.rel (0) target = $region33
  $region32: #{residual_block_pallas.5} parent=0 // pred_region
    _
  $region33: #{residual_block_pallas.5} parent=0 // pred_fallthru
    _

// kernel: residual_block_pallas.3
$region0: #{residual_block_pallas.3}
  #allocation0 [shape = 'u32[]', space=smem, size = 0x4, offset = 0x4, fixed_abs, tag = 'smem constant byte address 0x4 - core index']
  #allocation1 [shape = 'u32[72,128]{1,0:T(1,128)}', space=vmem, size = 0x9000, scoped, tag = 'internal scratch']
  #allocation2 [shape = 'bf16[2,18,32,4]{3,2,1,0:T(8,128)(2,1)}', space=vmem, size = 0x48000, scoped, tag = 'scratch operand']
  %s0 = inlined_call_operand.vmem [shape: bf16[2,16,16,4], index: 0, kind: input, shape index: {}]
  %s1 = inlined_call_operand.vmem [shape: bf16[36,16], index: 1, kind: input, shape index: {}]
  %s2 = inlined_call_operand.vmem [shape: bf16[2,16,16,8], index: 2, kind: output, shape index: {0}]
  %s3 = inlined_call_operand.vmem [shape: f32[1,1,8], index: 3, kind: output, shape index: {1}]
  %s4 = inlined_call_operand.vmem [shape: f32[1,1,8], index: 4, kind: output, shape index: {2}]
  %s5 = inlined_call_operand.vmem [shape: bf16[2,16,16,8], index: 5, kind: output, shape index: {3}]
  %s6 = inlined_call_operand.vmem [shape: f32[1,1,8], index: 6, kind: output, shape index: {4}]
  %s7 = inlined_call_operand.vmem [shape: f32[1,1,8], index: 7, kind: output, shape index: {5}]
  %8 = xla_tuple %s2, %s3, %s4, %s5, %s6, %s7
  %s9 = sld [smem:[#allocation0]]
  $region58: #{residual_block_pallas.3} parent=0
    _
  %s11 = ssub.s32 1, %s9
  %s12 = scalar_select 0, %s11, %s9
  // Predicated region
  $region2: #{residual_block_pallas.3} parent=0 // pred_check
    _
  $region3: #{residual_block_pallas.3} parent=0 // pred_check_branch
    %14 = sbr.rel (0) target = $region5
  $region4: #{residual_block_pallas.3} parent=0 // pred_region
    _
  $region5: #{residual_block_pallas.3} parent=0 // pred_fallthru
    _
  // Predicated region
  $region6: #{residual_block_pallas.3} parent=0 // pred_check
    _
  $region7: #{residual_block_pallas.3} parent=0 // pred_check_branch
    %16 = sbr.rel (0) target = $region9
  $region8: #{residual_block_pallas.3} parent=0 // pred_region
    _
  $region9: #{residual_block_pallas.3} parent=0 // pred_fallthru
    _
  %v18 = vld [vmem:[%s0] sm:$0xf]
  %v19 = vld [vmem:[%s0 + $0x4] sm:$0xf]
  %v20 = vld [vmem:[%s0 + $0x8] sm:$0xf]
  %v21 = vld [vmem:[%s0 + $0xc] sm:$0xf]
  %v22 = vld [vmem:[%s0 + $0x10] sm:$0xf]
  %v23 = vld [vmem:[%s0 + $0x14] sm:$0xf]
  %v24 = vld [vmem:[%s0 + $0x18] sm:$0xf]
  %v25 = vld [vmem:[%s0 + $0x1c] sm:$0xf]
  %v26 = vld [vmem:[%s0 + $0x20] sm:$0xf]
  %v27 = vld [vmem:[%s0 + $0x24] sm:$0xf]
  %v28 = vld [vmem:[%s0 + $0x28] sm:$0xf]
  %v29 = vld [vmem:[%s0 + $0x2c] sm:$0xf]
  %v30 = vld [vmem:[%s0 + $0x30] sm:$0xf]
  %v31 = vld [vmem:[%s0 + $0x34] sm:$0xf]
  %v32 = vld [vmem:[%s0 + $0x38] sm:$0xf]
  %v33 = vld [vmem:[%s0 + $0x3c] sm:$0xf]
  %v34 = vld [vmem:[%s0 + $0x40] sm:$0xf]
  %v35 = vld [vmem:[%s0 + $0x44] sm:$0xf]
  %v36 = vld [vmem:[%s0 + $0x48] sm:$0xf]
  %v37 = vld [vmem:[%s0 + $0x4c] sm:$0xf]
  %v38 = vld [vmem:[%s0 + $0x50] sm:$0xf]
  %v39 = vld [vmem:[%s0 + $0x54] sm:$0xf]
  %v40 = vld [vmem:[%s0 + $0x58] sm:$0xf]
  %v41 = vld [vmem:[%s0 + $0x5c] sm:$0xf]
  %v42 = vld [vmem:[%s0 + $0x60] sm:$0xf]
  %v43 = vld [vmem:[%s0 + $0x64] sm:$0xf]
  %v44 = vld [vmem:[%s0 + $0x68] sm:$0xf]
  %v45 = vld [vmem:[%s0 + $0x6c] sm:$0xf]
  %v46 = vld [vmem:[%s0 + $0x70] sm:$0xf]
  %v47 = vld [vmem:[%s0 + $0x74] sm:$0xf]
  %v48 = vld [vmem:[%s0 + $0x78] sm:$0xf]
  %v49 = vld [vmem:[%s0 + $0x7c] sm:$0xf]
  %v50 = vld [vmem:[%s0 + $0x80] sm:$0xf]
  %v51 = vld [vmem:[%s0 + $0x84] sm:$0xf]
  %v52 = vld [vmem:[%s0 + $0x88] sm:$0xf]
  %v53 = vld [vmem:[%s0 + $0x8c] sm:$0xf]
  %v54 = vld [vmem:[%s0 + $0x90] sm:$0xf]
  %v55 = vld [vmem:[%s0 + $0x94] sm:$0xf]
  %v56 = vld [vmem:[%s0 + $0x98] sm:$0xf]
  %v57 = vld [vmem:[%s0 + $0x9c] sm:$0xf]
  %v58 = vld [vmem:[%s0 + $0xa0] sm:$0xf]
  %v59 = vld [vmem:[%s0 + $0xa4] sm:$0xf]
  %v60 = vld [vmem:[%s0 + $0xa8] sm:$0xf]
  %v61 = vld [vmem:[%s0 + $0xac] sm:$0xf]
  %v62 = vld [vmem:[%s0 + $0xb0] sm:$0xf]
  %v63 = vld [vmem:[%s0 + $0xb4] sm:$0xf]
  %v64 = vld [vmem:[%s0 + $0xb8] sm:$0xf]
  %v65 = vld [vmem:[%s0 + $0xbc] sm:$0xf]
  %v66 = vld [vmem:[%s0 + $0xc0] sm:$0xf]
  %v67 = vld [vmem:[%s0 + $0xc4] sm:$0xf]
  %v68 = vld [vmem:[%s0 + $0xc8] sm:$0xf]
  %v69 = vld [vmem:[%s0 + $0xcc] sm:$0xf]
  %v70 = vld [vmem:[%s0 + $0xd0] sm:$0xf]
  %v71 = vld [vmem:[%s0 + $0xd4] sm:$0xf]
  %v72 = vld [vmem:[%s0 + $0xd8] sm:$0xf]
  %v73 = vld [vmem:[%s0 + $0xdc] sm:$0xf]
  %v74 = vld [vmem:[%s0 + $0xe0] sm:$0xf]
  %v75 = vld [vmem:[%s0 + $0xe4] sm:$0xf]
  %v76 = vld [vmem:[%s0 + $0xe8] sm:$0xf]
  %v77 = vld [vmem:[%s0 + $0xec] sm:$0xf]
  %v78 = vld [vmem:[%s0 + $0xf0] sm:$0xf]
  %v79 = vld [vmem:[%s0 + $0xf4] sm:$0xf]
  %v80 = vld [vmem:[%s0 + $0xf8] sm:$0xf]
  %v81 = vld [vmem:[%s0 + $0xfc] sm:$0xf]
  %vm82 = vcmask 27651
  %vm83 = vsmask.f32 7950
  %vm84 = vmand %vm82, %vm83
  %v85 = vld [vmem:[#allocation2] sm:$0x8]
  %v86 = vsel %vm84, 0, %v85
  %87 = vst [vmem:[#allocation2] sm:$0x8] %v86
  %vm88 = vcmask 27648
  %89 = vst.msk [vmem:[#allocation2 + $0x4] sm:$0xf] %vm88, 0
  %90 = vst.msk [vmem:[#allocation2 + $0x8] sm:$0xf] %vm88, 0
  %vm91 = vcmask 24576
  %vm92 = vsmask.f32 256
  %vm93 = vmand %vm91, %vm92
  %v94 = vld [vmem:[#allocation2 + $0xc] sm:$0x1]
  %v95 = vsel %vm93, 0, %v94
  %96 = vst [vmem:[#allocation2 + $0xc] sm:$0x1] %v95
  %v97 = vld [vmem:[#allocation2 + $0x120] sm:$0x8]
  %v98 = vsel %vm84, 0, %v97
  %99 = vst [vmem:[#allocation2 + $0x120] sm:$0x8] %v98
  %100 = vst.msk [vmem:[#allocation2 + $0x124] sm:$0xf] %vm88, 0
  %101 = vst.msk [vmem:[#allocation2 + $0x128] sm:$0xf] %vm88, 0
  %v102 = vld [vmem:[#allocation2 + $0x12c] sm:$0x1]
  %v103 = vsel %vm93, 0, %v102
  %104 = vst [vmem:[#allocation2 + $0x12c] sm:$0x1] %v103
  %s105 = scalar_lea.vmem [#allocation2], 272
  %v106 = vld [vmem:[%s105] sm:$0x8]
  %v107 = vsel %vm84, 0, %v106
  %108 = vst [vmem:[%s105] sm:$0x8] %v107
  %109 = vst.msk [vmem:[%s105 + $0x4] sm:$0xf] %vm88, 0
  %110 = vst.msk [vmem:[%s105 + $0x8] sm:$0xf] %vm88, 0
  %v111 = vld [vmem:[%s105 + $0xc] sm:$0x1]
  %v112 = vsel %vm93, 0, %v111
  %113 = vst [vmem:[%s105 + $0xc] sm:$0x1] %v112
  %v114 = vld [vmem:[%s105 + $0x120] sm:$0x8]
  %v115 = vsel %vm84, 0, %v114
  %116 = vst [vmem:[%s105 + $0x120] sm:$0x8] %v115
  %117 = vst.msk [vmem:[%s105 + $0x124] sm:$0xf] %vm88, 0
  %118 = vst.msk [vmem:[%s105 + $0x128] sm:$0xf] %vm88, 0
  %v119 = vld [vmem:[%s105 + $0x12c] sm:$0x1]
  %v120 = vsel %vm93, 0, %v119
  %121 = vst [vmem:[%s105 + $0x12c] sm:$0x1] %v120
  %v122 = vld [vmem:[#allocation2] sm:$0x8]
  %v123 = vsel %vm84, 0, %v122
  %124 = vst [vmem:[#allocation2] sm:$0x8] %v123
  %v125 = vld [vmem:[#allocation2 + $0x10] sm:$0x8]
  %v126 = vsel %vm84, 0, %v125
  %127 = vst [vmem:[#allocation2 + $0x10] sm:$0x8] %v126
  %v128 = vld [vmem:[#allocation2 + $0x20] sm:$0x8]
  %v129 = vsel %vm84, 0, %v128
  %130 = vst [vmem:[#allocation2 + $0x20] sm:$0x8] %v129
  %v131 = vld [vmem:[#allocation2 + $0x30] sm:$0x8]
  %v132 = vsel %vm84, 0, %v131
  %133 = vst [vmem:[#allocation2 + $0x30] sm:$0x8] %v132
  %v134 = vld [vmem:[#allocation2 + $0x40] sm:$0x8]
  %v135 = vsel %vm84, 0, %v134
  %136 = vst [vmem:[#allocation2 + $0x40] sm:$0x8] %v135
  %v137 = vld [vmem:[#allocation2 + $0x50] sm:$0x8]
  %v138 = vsel %vm84, 0, %v137
  %139 = vst [vmem:[#allocation2 + $0x50] sm:$0x8] %v138
  %v140 = vld [vmem:[#allocation2 + $0x60] sm:$0x8]
  %v141 = vsel %vm84, 0, %v140
  %142 = vst [vmem:[#allocation2 + $0x60] sm:$0x8] %v141
  %v143 = vld [vmem:[#allocation2 + $0x70] sm:$0x8]
  %v144 = vsel %vm84, 0, %v143
  %145 = vst [vmem:[#allocation2 + $0x70] sm:$0x8] %v144
  %v146 = vld [vmem:[#allocation2 + $0x80] sm:$0x8]
  %v147 = vsel %vm84, 0, %v146
  %148 = vst [vmem:[#allocation2 + $0x80] sm:$0x8] %v147
  %v149 = vld [vmem:[#allocation2 + $0x90] sm:$0x8]
  %v150 = vsel %vm84, 0, %v149
  %151 = vst [vmem:[#allocation2 + $0x90] sm:$0x8] %v150
  %v152 = vld [vmem:[#allocation2 + $0xa0] sm:$0x8]
  %v153 = vsel %vm84, 0, %v152
  %154 = vst [vmem:[#allocation2 + $0xa0] sm:$0x8] %v153
  %v155 = vld [vmem:[#allocation2 + $0xb0] sm:$0x8]
  %v156 = vsel %vm84, 0, %v155
  %157 = vst [vmem:[#allocation2 + $0xb0] sm:$0x8] %v156
  %v158 = vld [vmem:[#allocation2 + $0xc0] sm:$0x8]
  %v159 = vsel %vm84, 0, %v158
  %160 = vst [vmem:[#allocation2 + $0xc0] sm:$0x8] %v159
  %v161 = vld [vmem:[#allocation2 + $0xd0] sm:$0x8]
  %v162 = vsel %vm84, 0, %v161
  %163 = vst [vmem:[#allocation2 + $0xd0] sm:$0x8] %v162
  %v164 = vld [vmem:[#allocation2 + $0xe0] sm:$0x8]
  %v165 = vsel %vm84, 0, %v164
  %166 = vst [vmem:[#allocation2 + $0xe0] sm:$0x8] %v165
  %v167 = vld [vmem:[#allocation2 + $0xf0] sm:$0x8]
  %v168 = vsel %vm84, 0, %v167
  %169 = vst [vmem:[#allocation2 + $0xf0] sm:$0x8] %v168
  %v170 = vld [vmem:[#allocation2 + $0x100] sm:$0x8]
  %v171 = vsel %vm84, 0, %v170
  %172 = vst [vmem:[#allocation2 + $0x100] sm:$0x8] %v171
  %v173 = vld [vmem:[#allocation2 + $0x110] sm:$0x8]
  %v174 = vsel %vm84, 0, %v173
  %175 = vst [vmem:[#allocation2 + $0x110] sm:$0x8] %v174
  %v176 = vld [vmem:[#allocation2 + $0x120] sm:$0x8]
  %v177 = vsel %vm84, 0, %v176
  %178 = vst [vmem:[#allocation2 + $0x120] sm:$0x8] %v177
  %v179 = vld [vmem:[#allocation2 + $0x130] sm:$0x8]
  %v180 = vsel %vm84, 0, %v179
  %181 = vst [vmem:[#allocation2 + $0x130] sm:$0x8] %v180
  %v182 = vld [vmem:[#allocation2 + $0x140] sm:$0x8]
  %v183 = vsel %vm84, 0, %v182
  %184 = vst [vmem:[#allocation2 + $0x140] sm:$0x8] %v183
  %v185 = vld [vmem:[#allocation2 + $0x150] sm:$0x8]
  %v186 = vsel %vm84, 0, %v185
  %187 = vst [vmem:[#allocation2 + $0x150] sm:$0x8] %v186
  %v188 = vld [vmem:[#allocation2 + $0x160] sm:$0x8]
  %v189 = vsel %vm84, 0, %v188
  %190 = vst [vmem:[#allocation2 + $0x160] sm:$0x8] %v189
  %v191 = vld [vmem:[#allocation2 + $0x170] sm:$0x8]
  %v192 = vsel %vm84, 0, %v191
  %193 = vst [vmem:[#allocation2 + $0x170] sm:$0x8] %v192
  %v194 = vld [vmem:[#allocation2 + $0x180] sm:$0x8]
  %v195 = vsel %vm84, 0, %v194
  %196 = vst [vmem:[#allocation2 + $0x180] sm:$0x8] %v195
  %v197 = vld [vmem:[#allocation2 + $0x190] sm:$0x8]
  %v198 = vsel %vm84, 0, %v197
  %199 = vst [vmem:[#allocation2 + $0x190] sm:$0x8] %v198
  %v200 = vld [vmem:[#allocation2 + $0x1a0] sm:$0x8]
  %v201 = vsel %vm84, 0, %v200
  %202 = vst [vmem:[#allocation2 + $0x1a0] sm:$0x8] %v201
  %v203 = vld [vmem:[#allocation2 + $0x1b0] sm:$0x8]
  %v204 = vsel %vm84, 0, %v203
  %205 = vst [vmem:[#allocation2 + $0x1b0] sm:$0x8] %v204
  %v206 = vld [vmem:[#allocation2 + $0x1c0] sm:$0x8]
  %v207 = vsel %vm84, 0, %v206
  %208 = vst [vmem:[#allocation2 + $0x1c0] sm:$0x8] %v207
  %v209 = vld [vmem:[#allocation2 + $0x1d0] sm:$0x8]
  %v210 = vsel %vm84, 0, %v209
  %211 = vst [vmem:[#allocation2 + $0x1d0] sm:$0x8] %v210
  %v212 = vld [vmem:[#allocation2 + $0x1e0] sm:$0x8]
  %v213 = vsel %vm84, 0, %v212
  %214 = vst [vmem:[#allocation2 + $0x1e0] sm:$0x8] %v213
  %v215 = vld [vmem:[#allocation2 + $0x1f0] sm:$0x8]
  %v216 = vsel %vm84, 0, %v215
  %217 = vst [vmem:[#allocation2 + $0x1f0] sm:$0x8] %v216
  %v218 = vld [vmem:[#allocation2 + $0x200] sm:$0x8]
  %v219 = vsel %vm84, 0, %v218
  %220 = vst [vmem:[#allocation2 + $0x200] sm:$0x8] %v219
  %v221 = vld [vmem:[#allocation2 + $0x210] sm:$0x8]
  %v222 = vsel %vm84, 0, %v221
  %223 = vst [vmem:[#allocation2 + $0x210] sm:$0x8] %v222
  %v224 = vld [vmem:[#allocation2 + $0x220] sm:$0x8]
  %v225 = vsel %vm84, 0, %v224
  %226 = vst [vmem:[#allocation2 + $0x220] sm:$0x8] %v225
  %v227 = vld [vmem:[#allocation2 + $0x230] sm:$0x8]
  %v228 = vsel %vm84, 0, %v227
  %229 = vst [vmem:[#allocation2 + $0x230] sm:$0x8] %v228
  %v230 = vld [vmem:[#allocation2 + $0xc] sm:$0x1]
  %v231 = vsel %vm93, 0, %v230
  %232 = vst [vmem:[#allocation2 + $0xc] sm:$0x1] %v231
  %v233 = vld [vmem:[#allocation2 + $0x1c] sm:$0x1]
  %v234 = vsel %vm93, 0, %v233
  %235 = vst [vmem:[#allocation2 + $0x1c] sm:$0x1] %v234
  %v236 = vld [vmem:[#allocation2 + $0x2c] sm:$0x1]
  %v237 = vsel %vm93, 0, %v236
  %238 = vst [vmem:[#allocation2 + $0x2c] sm:$0x1] %v237
  %v239 = vld [vmem:[#allocation2 + $0x3c] sm:$0x1]
  %v240 = vsel %vm93, 0, %v239
  %241 = vst [vmem:[#allocation2 + $0x3c] sm:$0x1] %v240
  %v242 = vld [vmem:[#allocation2 + $0x4c] sm:$0x1]
  %v243 = vsel %vm93, 0, %v242
  %244 = vst [vmem:[#allocation2 + $0x4c] sm:$0x1] %v243
  %v245 = vld [vmem:[#allocation2 + $0x5c] sm:$0x1]
  %v246 = vsel %vm93, 0, %v245
  %247 = vst [vmem:[#allocation2 + $0x5c] sm:$0x1] %v246
  %v248 = vld [vmem:[#allocation2 + $0x6c] sm:$0x1]
  %v249 = vsel %vm93, 0, %v248
  %250 = vst [vmem:[#allocation2 + $0x6c] sm:$0x1] %v249
  %v251 = vld [vmem:[#allocation2 + $0x7c] sm:$0x1]
  %v252 = vsel %vm93, 0, %v251
  %253 = vst [vmem:[#allocation2 + $0x7c] sm:$0x1] %v252
  %v254 = vld [vmem:[#allocation2 + $0x8c] sm:$0x1]
  %v255 = vsel %vm93, 0, %v254
  %256 = vst [vmem:[#allocation2 + $0x8c] sm:$0x1] %v255
  %v257 = vld [vmem:[#allocation2 + $0x9c] sm:$0x1]
  %v258 = vsel %vm93, 0, %v257
  %259 = vst [vmem:[#allocation2 + $0x9c] sm:$0x1] %v258
  %v260 = vld [vmem:[#allocation2 + $0xac] sm:$0x1]
  %v261 = vsel %vm93, 0, %v260
  %262 = vst [vmem:[#allocation2 + $0xac] sm:$0x1] %v261
  %v263 = vld [vmem:[#allocation2 + $0xbc] sm:$0x1]
  %v264 = vsel %vm93, 0, %v263
  %265 = vst [vmem:[#allocation2 + $0xbc] sm:$0x1] %v264
  %v266 = vld [vmem:[#allocation2 + $0xcc] sm:$0x1]
  %v267 = vsel %vm93, 0, %v266
  %268 = vst [vmem:[#allocation2 + $0xcc] sm:$0x1] %v267
  %v269 = vld [vmem:[#allocation2 + $0xdc] sm:$0x1]
  %v270 = vsel %vm93, 0, %v269
  %271 = vst [vmem:[#allocation2 + $0xdc] sm:$0x1] %v270
  %v272 = vld [vmem:[#allocation2 + $0xec] sm:$0x1]
  %v273 = vsel %vm93, 0, %v272
  %274 = vst [vmem:[#allocation2 + $0xec] sm:$0x1] %v273
  %v275 = vld [vmem:[#allocation2 + $0xfc] sm:$0x1]
  %v276 = vsel %vm93, 0, %v275
  %277 = vst [vmem:[#allocation2 + $0xfc] sm:$0x1] %v276
  %v278 = vld [vmem:[#allocation2 + $0x10c] sm:$0x1]
  %v279 = vsel %vm93, 0, %v278
  %280 = vst [vmem:[#allocation2 + $0x10c] sm:$0x1] %v279
  %v281 = vld [vmem:[#allocation2 + $0x11c] sm:$0x1]
  %v282 = vsel %vm93, 0, %v281
  %283 = vst [vmem:[#allocation2 + $0x11c] sm:$0x1] %v282
  %v284 = vld [vmem:[#allocation2 + $0x12c] sm:$0x1]
  %v285 = vsel %vm93, 0, %v284
  %286 = vst [vmem:[#allocation2 + $0x12c] sm:$0x1] %v285
  %v287 = vld [vmem:[#allocation2 + $0x13c] sm:$0x1]
  %v288 = vsel %vm93, 0, %v287
  %289 = vst [vmem:[#allocation2 + $0x13c] sm:$0x1] %v288
  %v290 = vld [vmem:[#allocation2 + $0x14c] sm:$0x1]
  %v291 = vsel %vm93, 0, %v290
  %292 = vst [vmem:[#allocation2 + $0x14c] sm:$0x1] %v291
  %v293 = vld [vmem:[#allocation2 + $0x15c] sm:$0x1]
  %v294 = vsel %vm93, 0, %v293
  %295 = vst [vmem:[#allocation2 + $0x15c] sm:$0x1] %v294
  %v296 = vld [vmem:[#allocation2 + $0x16c] sm:$0x1]
  %v297 = vsel %vm93, 0, %v296
  %298 = vst [vmem:[#allocation2 + $0x16c] sm:$0x1] %v297
  %v299 = vld [vmem:[#allocation2 + $0x17c] sm:$0x1]
  %v300 = vsel %vm93, 0, %v299
  %301 = vst [vmem:[#allocation2 + $0x17c] sm:$0x1] %v300
  %v302 = vld [vmem:[#allocation2 + $0x18c] sm:$0x1]
  %v303 = vsel %vm93, 0, %v302
  %304 = vst [vmem:[#allocation2 + $0x18c] sm:$0x1] %v303
  %v305 = vld [vmem:[#allocation2 + $0x19c] sm:$0x1]
  %v306 = vsel %vm93, 0, %v305
  %307 = vst [vmem:[#allocation2 + $0x19c] sm:$0x1] %v306
  %v308 = vld [vmem:[#allocation2 + $0x1ac] sm:$0x1]
  %v309 = vsel %vm93, 0, %v308
  %310 = vst [vmem:[#allocation2 + $0x1ac] sm:$0x1] %v309
  %v311 = vld [vmem:[#allocation2 + $0x1bc] sm:$0x1]
  %v312 = vsel %vm93, 0, %v311
  %313 = vst [vmem:[#allocation2 + $0x1bc] sm:$0x1] %v312
  %v314 = vld [vmem:[#allocation2 + $0x1cc] sm:$0x1]
  %v315 = vsel %vm93, 0, %v314
  %316 = vst [vmem:[#allocation2 + $0x1cc] sm:$0x1] %v315
  %v317 = vld [vmem:[#allocation2 + $0x1dc] sm:$0x1]
  %v318 = vsel %vm93, 0, %v317
  %319 = vst [vmem:[#allocation2 + $0x1dc] sm:$0x1] %v318
  %v320 = vld [vmem:[#allocation2 + $0x1ec] sm:$0x1]
  %v321 = vsel %vm93, 0, %v320
  %322 = vst [vmem:[#allocation2 + $0x1ec] sm:$0x1] %v321
  %v323 = vld [vmem:[#allocation2 + $0x1fc] sm:$0x1]
  %v324 = vsel %vm93, 0, %v323
  %325 = vst [vmem:[#allocation2 + $0x1fc] sm:$0x1] %v324
  %v326 = vld [vmem:[#allocation2 + $0x20c] sm:$0x1]
  %v327 = vsel %vm93, 0, %v326
  %328 = vst [vmem:[#allocation2 + $0x20c] sm:$0x1] %v327
  %v329 = vld [vmem:[#allocation2 + $0x21c] sm:$0x1]
  %v330 = vsel %vm93, 0, %v329
  %331 = vst [vmem:[#allocation2 + $0x21c] sm:$0x1] %v330
  %v332 = vld [vmem:[#allocation2 + $0x22c] sm:$0x1]
  %v333 = vsel %vm93, 0, %v332
  %334 = vst [vmem:[#allocation2 + $0x22c] sm:$0x1] %v333
  %v335 = vld [vmem:[#allocation2 + $0x23c] sm:$0x1]
  %v336 = vsel %vm93, 0, %v335
  %337 = vst [vmem:[#allocation2 + $0x23c] sm:$0x1] %v336
  %s338 = scalar_lea.vmem [#allocation2], 16
  %339 = vst.msk [vmem:[%s338 + $0x4] sm:$0xf] %vm88, %v18
  %340 = vst.msk [vmem:[%s338 + $0x8] sm:$0xf] %vm88, %v19
  %341 = vst.msk [vmem:[%s338 + $0x14] sm:$0xf] %vm88, %v20
  %342 = vst.msk [vmem:[%s338 + $0x18] sm:$0xf] %vm88, %v21
  %343 = vst.msk [vmem:[%s338 + $0x24] sm:$0xf] %vm88, %v22
  %344 = vst.msk [vmem:[%s338 + $0x28] sm:$0xf] %vm88, %v23
  %345 = vst.msk [vmem:[%s338 + $0x34] sm:$0xf] %vm88, %v24
  %346 = vst.msk [vmem:[%s338 + $0x38] sm:$0xf] %vm88, %v25
  %347 = vst.msk [vmem:[%s338 + $0x44] sm:$0xf] %vm88, %v26
  %348 = vst.msk [vmem:[%s338 + $0x48] sm:$0xf] %vm88, %v27
  %349 = vst.msk [vmem:[%s338 + $0x54] sm:$0xf] %vm88, %v28
  %350 = vst.msk [vmem:[%s338 + $0x58] sm:$0xf] %vm88, %v29
  %351 = vst.msk [vmem:[%s338 + $0x64] sm:$0xf] %vm88, %v30
  %352 = vst.msk [vmem:[%s338 + $0x68] sm:$0xf] %vm88, %v31
  %353 = vst.msk [vmem:[%s338 + $0x74] sm:$0xf] %vm88, %v32
  %354 = vst.msk [vmem:[%s338 + $0x78] sm:$0xf] %vm88, %v33
  %355 = vst.msk [vmem:[%s338 + $0x84] sm:$0xf] %vm88, %v34
  %356 = vst.msk [vmem:[%s338 + $0x88] sm:$0xf] %vm88, %v35
  %357 = vst.msk [vmem:[%s338 + $0x94] sm:$0xf] %vm88, %v36
  %358 = vst.msk [vmem:[%s338 + $0x98] sm:$0xf] %vm88, %v37
  %359 = vst.msk [vmem:[%s338 + $0xa4] sm:$0xf] %vm88, %v38
  %360 = vst.msk [vmem:[%s338 + $0xa8] sm:$0xf] %vm88, %v39
  %361 = vst.msk [vmem:[%s338 + $0xb4] sm:$0xf] %vm88, %v40
  %362 = vst.msk [vmem:[%s338 + $0xb8] sm:$0xf] %vm88, %v41
  %363 = vst.msk [vmem:[%s338 + $0xc4] sm:$0xf] %vm88, %v42
  %364 = vst.msk [vmem:[%s338 + $0xc8] sm:$0xf] %vm88, %v43
  %365 = vst.msk [vmem:[%s338 + $0xd4] sm:$0xf] %vm88, %v44
  %366 = vst.msk [vmem:[%s338 + $0xd8] sm:$0xf] %vm88, %v45
  %367 = vst.msk [vmem:[%s338 + $0xe4] sm:$0xf] %vm88, %v46
  %368 = vst.msk [vmem:[%s338 + $0xe8] sm:$0xf] %vm88, %v47
  %369 = vst.msk [vmem:[%s338 + $0xf4] sm:$0xf] %vm88, %v48
  %370 = vst.msk [vmem:[%s338 + $0xf8] sm:$0xf] %vm88, %v49
  %371 = vst.msk [vmem:[%s338 + $0x124] sm:$0xf] %vm88, %v50
  %372 = vst.msk [vmem:[%s338 + $0x128] sm:$0xf] %vm88, %v51
  %373 = vst.msk [vmem:[%s338 + $0x134] sm:$0xf] %vm88, %v52
  %374 = vst.msk [vmem:[%s338 + $0x138] sm:$0xf] %vm88, %v53
  %375 = vst.msk [vmem:[%s338 + $0x144] sm:$0xf] %vm88, %v54
  %376 = vst.msk [vmem:[%s338 + $0x148] sm:$0xf] %vm88, %v55
  %377 = vst.msk [vmem:[%s338 + $0x154] sm:$0xf] %vm88, %v56
  %378 = vst.msk [vmem:[%s338 + $0x158] sm:$0xf] %vm88, %v57
  %379 = vst.msk [vmem:[%s338 + $0x164] sm:$0xf] %vm88, %v58
  %380 = vst.msk [vmem:[%s338 + $0x168] sm:$0xf] %vm88, %v59
  %381 = vst.msk [vmem:[%s338 + $0x174] sm:$0xf] %vm88, %v60
  %382 = vst.msk [vmem:[%s338 + $0x178] sm:$0xf] %vm88, %v61
  %383 = vst.msk [vmem:[%s338 + $0x184] sm:$0xf] %vm88, %v62
  %384 = vst.msk [vmem:[%s338 + $0x188] sm:$0xf] %vm88, %v63
  %385 = vst.msk [vmem:[%s338 + $0x194] sm:$0xf] %vm88, %v64
  %386 = vst.msk [vmem:[%s338 + $0x198] sm:$0xf] %vm88, %v65
  %387 = vst.msk [vmem:[%s338 + $0x1a4] sm:$0xf] %vm88, %v66
  %388 = vst.msk [vmem:[%s338 + $0x1a8] sm:$0xf] %vm88, %v67
  %389 = vst.msk [vmem:[%s338 + $0x1b4] sm:$0xf] %vm88, %v68
  %390 = vst.msk [vmem:[%s338 + $0x1b8] sm:$0xf] %vm88, %v69
  %391 = vst.msk [vmem:[%s338 + $0x1c4] sm:$0xf] %vm88, %v70
  %392 = vst.msk [vmem:[%s338 + $0x1c8] sm:$0xf] %vm88, %v71
  %393 = vst.msk [vmem:[%s338 + $0x1d4] sm:$0xf] %vm88, %v72
  %394 = vst.msk [vmem:[%s338 + $0x1d8] sm:$0xf] %vm88, %v73
  %395 = vst.msk [vmem:[%s338 + $0x1e4] sm:$0xf] %vm88, %v74
  %396 = vst.msk [vmem:[%s338 + $0x1e8] sm:$0xf] %vm88, %v75
  %397 = vst.msk [vmem:[%s338 + $0x1f4] sm:$0xf] %vm88, %v76
  %398 = vst.msk [vmem:[%s338 + $0x1f8] sm:$0xf] %vm88, %v77
  %399 = vst.msk [vmem:[%s338 + $0x204] sm:$0xf] %vm88, %v78
  %400 = vst.msk [vmem:[%s338 + $0x208] sm:$0xf] %vm88, %v79
  %401 = vst.msk [vmem:[%s338 + $0x214] sm:$0xf] %vm88, %v80
  %402 = vst.msk [vmem:[%s338 + $0x218] sm:$0xf] %vm88, %v81
  %v403 = vld [vmem:[#allocation2] sm:$0x8]
  %v404 = vld [vmem:[#allocation2 + $0x4] sm:$0xf]
  %v405 = vld [vmem:[#allocation2 + $0x8] sm:$0xf]
  %v406 = vld [vmem:[#allocation2 + $0x10] sm:$0x8]
  %v407 = vld [vmem:[#allocation2 + $0x14] sm:$0xf]
  %v408 = vld [vmem:[#allocation2 + $0x18] sm:$0xf]
  %v409 = vld [vmem:[#allocation2 + $0x20] sm:$0x8]
  %v410 = vld [vmem:[#allocation2 + $0x24] sm:$0xf]
  %v411 = vld [vmem:[#allocation2 + $0x28] sm:$0xf]
  %v412 = vld [vmem:[#allocation2 + $0x30] sm:$0x8]
  %v413 = vld [vmem:[#allocation2 + $0x34] sm:$0xf]
  %v414 = vld [vmem:[#allocation2 + $0x38] sm:$0xf]
  %v415 = vld [vmem:[#allocation2 + $0x40] sm:$0x8]
  %v416 = vld [vmem:[#allocation2 + $0x44] sm:$0xf]
  %v417 = vld [vmem:[#allocation2 + $0x48] sm:$0xf]
  %v418 = vld [vmem:[#allocation2 + $0x50] sm:$0x8]
  %v419 = vld [vmem:[#allocation2 + $0x54] sm:$0xf]
  %v420 = vld [vmem:[#allocation2 + $0x58] sm:$0xf]
  %v421 = vld [vmem:[#allocation2 + $0x60] sm:$0x8]
  %v422 = vld [vmem:[#allocation2 + $0x64] sm:$0xf]
  %v423 = vld [vmem:[#allocation2 + $0x68] sm:$0xf]
  %v424 = vld [vmem:[#allocation2 + $0x70] sm:$0x8]
  %v425 = vld [vmem:[#allocation2 + $0x74] sm:$0xf]
  %v426 = vld [vmem:[#allocation2 + $0x78] sm:$0xf]
  %v427 = vld [vmem:[#allocation2 + $0x80] sm:$0x8]
  %v428 = vld [vmem:[#allocation2 + $0x84] sm:$0xf]
  %v429 = vld [vmem:[#allocation2 + $0x88] sm:$0xf]
  %v430 = vld [vmem:[#allocation2 + $0x90] sm:$0x8]
  %v431 = vld [vmem:[#allocation2 + $0x94] sm:$0xf]
  %v432 = vld [vmem:[#allocation2 + $0x98] sm:$0xf]
  %v433 = vld [vmem:[#allocation2 + $0xa0] sm:$0x8]
  %v434 = vld [vmem:[#allocation2 + $0xa4] sm:$0xf]
  %v435 = vld [vmem:[#allocation2 + $0xa8] sm:$0xf]
  %v436 = vld [vmem:[#allocation2 + $0xb0] sm:$0x8]
  %v437 = vld [vmem:[#allocation2 + $0xb4] sm:$0xf]
  %v438 = vld [vmem:[#allocation2 + $0xb8] sm:$0xf]
  %v439 = vld [vmem:[#allocation2 + $0xc0] sm:$0x8]
  %v440 = vld [vmem:[#allocation2 + $0xc4] sm:$0xf]
  %v441 = vld [vmem:[#allocation2 + $0xc8] sm:$0xf]
  %v442 = vld [vmem:[#allocation2 + $0xd0] sm:$0x8]
  %v443 = vld [vmem:[#allocation2 + $0xd4] sm:$0xf]
  %v444 = vld [vmem:[#allocation2 + $0xd8] sm:$0xf]
  %v445 = vld [vmem:[#allocation2 + $0xe0] sm:$0x8]
  %v446 = vld [vmem:[#allocation2 + $0xe4] sm:$0xf]
  %v447 = vld [vmem:[#allocation2 + $0xe8] sm:$0xf]
  %v448 = vld [vmem:[#allocation2 + $0xf0] sm:$0x8]
  %v449 = vld [vmem:[#allocation2 + $0xf4] sm:$0xf]
  %v450 = vld [vmem:[#allocation2 + $0xf8] sm:$0xf]
  %v451 = vld [vmem:[#allocation2 + $0x120] sm:$0x8]
  %v452 = vld [vmem:[#allocation2 + $0x124] sm:$0xf]
  %v453 = vld [vmem:[#allocation2 + $0x128] sm:$0xf]
  %v454 = vld [vmem:[#allocation2 + $0x130] sm:$0x8]
  %v455 = vld [vmem:[#allocation2 + $0x134] sm:$0xf]
  %v456 = vld [vmem:[#allocation2 + $0x138] sm:$0xf]
  %v457 = vld [vmem:[#allocation2 + $0x140] sm:$0x8]
  %v458 = vld [vmem:[#allocation2 + $0x144] sm:$0xf]
  %v459 = vld [vmem:[#allocation2 + $0x148] sm:$0xf]
  %v460 = vld [vmem:[#allocation2 + $0x150] sm:$0x8]
  %v461 = vld [vmem:[#allocation2 + $0x154] sm:$0xf]
  %v462 = vld [vmem:[#allocation2 + $0x158] sm:$0xf]
  %v463 = vld [vmem:[#allocation2 + $0x160] sm:$0x8]
  %v464 = vld [vmem:[#allocation2 + $0x164] sm:$0xf]
  %v465 = vld [vmem:[#allocation2 + $0x168] sm:$0xf]
  %v466 = vld [vmem:[#allocation2 + $0x170] sm:$0x8]
  %v467 = vld [vmem:[#allocation2 + $0x174] sm:$0xf]
  %v468 = vld [vmem:[#allocation2 + $0x178] sm:$0xf]
  %v469 = vld [vmem:[#allocation2 + $0x180] sm:$0x8]
  %v470 = vld [vmem:[#allocation2 + $0x184] sm:$0xf]
  %v471 = vld [vmem:[#allocation2 + $0x188] sm:$0xf]
  %v472 = vld [vmem:[#allocation2 + $0x190] sm:$0x8]
  %v473 = vld [vmem:[#allocation2 + $0x194] sm:$0xf]
  %v474 = vld [vmem:[#allocation2 + $0x198] sm:$0xf]
  %v475 = vld [vmem:[#allocation2 + $0x1a0] sm:$0x8]
  %v476 = vld [vmem:[#allocation2 + $0x1a4] sm:$0xf]
  %v477 = vld [vmem:[#allocation2 + $0x1a8] sm:$0xf]
  %v478 = vld [vmem:[#allocation2 + $0x1b0] sm:$0x8]
  %v479 = vld [vmem:[#allocation2 + $0x1b4] sm:$0xf]
  %v480 = vld [vmem:[#allocation2 + $0x1b8] sm:$0xf]
  %v481 = vld [vmem:[#allocation2 + $0x1c0] sm:$0x8]
  %v482 = vld [vmem:[#allocation2 + $0x1c4] sm:$0xf]
  %v483 = vld [vmem:[#allocation2 + $0x1c8] sm:$0xf]
  %v484 = vld [vmem:[#allocation2 + $0x1d0] sm:$0x8]
  %v485 = vld [vmem:[#allocation2 + $0x1d4] sm:$0xf]
  %v486 = vld [vmem:[#allocation2 + $0x1d8] sm:$0xf]
  %v487 = vld [vmem:[#allocation2 + $0x1e0] sm:$0x8]
  %v488 = vld [vmem:[#allocation2 + $0x1e4] sm:$0xf]
  %v489 = vld [vmem:[#allocation2 + $0x1e8] sm:$0xf]
  %v490 = vld [vmem:[#allocation2 + $0x1f0] sm:$0x8]
  %v491 = vld [vmem:[#allocation2 + $0x1f4] sm:$0xf]
  %v492 = vld [vmem:[#allocation2 + $0x1f8] sm:$0xf]
  %v493 = vld [vmem:[#allocation2 + $0x200] sm:$0x8]
  %v494 = vld [vmem:[#allocation2 + $0x204] sm:$0xf]
  %v495 = vld [vmem:[#allocation2 + $0x208] sm:$0xf]
  %v496 = vld [vmem:[#allocation2 + $0x210] sm:$0x8]
  %v497 = vld [vmem:[#allocation2 + $0x214] sm:$0xf]
  %v498 = vld [vmem:[#allocation2 + $0x218] sm:$0xf]
  %v499 = vld [vmem:[#allocation2 + $0xc] sm:$0x1]
  %v500 = vld [vmem:[#allocation2 + $0x1c] sm:$0x1]
  %v501 = vld [vmem:[#allocation2 + $0x2c] sm:$0x1]
  %v502 = vld [vmem:[#allocation2 + $0x3c] sm:$0x1]
  %v503 = vld [vmem:[#allocation2 + $0x4c] sm:$0x1]
  %v504 = vld [vmem:[#allocation2 + $0x5c] sm:$0x1]
  %v505 = vld [vmem:[#allocation2 + $0x6c] sm:$0x1]
  %v506 = vld [vmem:[#allocation2 + $0x7c] sm:$0x1]
  %v507 = vld [vmem:[#allocation2 + $0x8c] sm:$0x1]
  %v508 = vld [vmem:[#allocation2 + $0x9c] sm:$0x1]
  %v509 = vld [vmem:[#allocation2 + $0xac] sm:$0x1]
  %v510 = vld [vmem:[#allocation2 + $0xbc] sm:$0x1]
  %v511 = vld [vmem:[#allocation2 + $0xcc] sm:$0x1]
  %v512 = vld [vmem:[#allocation2 + $0xdc] sm:$0x1]
  %v513 = vld [vmem:[#allocation2 + $0xec] sm:$0x1]
  %v514 = vld [vmem:[#allocation2 + $0xfc] sm:$0x1]
  %v515 = vld [vmem:[#allocation2 + $0x12c] sm:$0x1]
  %v516 = vld [vmem:[#allocation2 + $0x13c] sm:$0x1]
  %v517 = vld [vmem:[#allocation2 + $0x14c] sm:$0x1]
  %v518 = vld [vmem:[#allocation2 + $0x15c] sm:$0x1]
  %v519 = vld [vmem:[#allocation2 + $0x16c] sm:$0x1]
  %v520 = vld [vmem:[#allocation2 + $0x17c] sm:$0x1]
  %v521 = vld [vmem:[#allocation2 + $0x18c] sm:$0x1]
  %v522 = vld [vmem:[#allocation2 + $0x19c] sm:$0x1]
  %v523 = vld [vmem:[#allocation2 + $0x1ac] sm:$0x1]
  %v524 = vld [vmem:[#allocation2 + $0x1bc] sm:$0x1]
  %v525 = vld [vmem:[#allocation2 + $0x1cc] sm:$0x1]
  %v526 = vld [vmem:[#allocation2 + $0x1dc] sm:$0x1]
  %v527 = vld [vmem:[#allocation2 + $0x1ec] sm:$0x1]
  %v528 = vld [vmem:[#allocation2 + $0x1fc] sm:$0x1]
  %v529 = vld [vmem:[#allocation2 + $0x20c] sm:$0x1]
  %v530 = vld [vmem:[#allocation2 + $0x21c] sm:$0x1]
  %v531 = vld [vmem:[%s338] sm:$0x8]
  %v532 = vld [vmem:[%s338 + $0x4] sm:$0xf]
  %v533 = vld [vmem:[%s338 + $0x8] sm:$0xf]
  %v534 = vld [vmem:[%s338 + $0x10] sm:$0x8]
  %v535 = vld [vmem:[%s338 + $0x14] sm:$0xf]
  %v536 = vld [vmem:[%s338 + $0x18] sm:$0xf]
  %v537 = vld [vmem:[%s338 + $0x20] sm:$0x8]
  %v538 = vld [vmem:[%s338 + $0x24] sm:$0xf]
  %v539 = vld [vmem:[%s338 + $0x28] sm:$0xf]
  %v540 = vld [vmem:[%s338 + $0x30] sm:$0x8]
  %v541 = vld [vmem:[%s338 + $0x34] sm:$0xf]
  %v542 = vld [vmem:[%s338 + $0x38] sm:$0xf]
  %v543 = vld [vmem:[%s338 + $0x40] sm:$0x8]
  %v544 = vld [vmem:[%s338 + $0x44] sm:$0xf]
  %v545 = vld [vmem:[%s338 + $0x48] sm:$0xf]
  %v546 = vld [vmem:[%s338 + $0x50] sm:$0x8]
  %v547 = vld [vmem:[%s338 + $0x54] sm:$0xf]
  %v548 = vld [vmem:[%s338 + $0x58] sm:$0xf]
  %v549 = vld [vmem:[%s338 + $0x60] sm:$0x8]
  %v550 = vld [vmem:[%s338 + $0x64] sm:$0xf]
  %v551 = vld [vmem:[%s338 + $0x68] sm:$0xf]
  %v552 = vld [vmem:[%s338 + $0x70] sm:$0x8]
  %v553 = vld [vmem:[%s338 + $0x74] sm:$0xf]
  %v554 = vld [vmem:[%s338 + $0x78] sm:$0xf]
  %v555 = vld [vmem:[%s338 + $0x80] sm:$0x8]
  %v556 = vld [vmem:[%s338 + $0x84] sm:$0xf]
  %v557 = vld [vmem:[%s338 + $0x88] sm:$0xf]
  %v558 = vld [vmem:[%s338 + $0x90] sm:$0x8]
  %v559 = vld [vmem:[%s338 + $0x94] sm:$0xf]
  %v560 = vld [vmem:[%s338 + $0x98] sm:$0xf]
  %v561 = vld [vmem:[%s338 + $0xa0] sm:$0x8]
  %v562 = vld [vmem:[%s338 + $0xa4] sm:$0xf]
  %v563 = vld [vmem:[%s338 + $0xa8] sm:$0xf]
  %v564 = vld [vmem:[%s338 + $0xb0] sm:$0x8]
  %v565 = vld [vmem:[%s338 + $0xb4] sm:$0xf]
  %v566 = vld [vmem:[%s338 + $0xb8] sm:$0xf]
  %v567 = vld [vmem:[%s338 + $0xc0] sm:$0x8]
  %v568 = vld [vmem:[%s338 + $0xc4] sm:$0xf]
  %v569 = vld [vmem:[%s338 + $0xc8] sm:$0xf]
  %v570 = vld [vmem:[%s338 + $0xd0] sm:$0x8]
  %v571 = vld [vmem:[%s338 + $0xd4] sm:$0xf]
  %v572 = vld [vmem:[%s338 + $0xd8] sm:$0xf]
  %v573 = vld [vmem:[%s338 + $0xe0] sm:$0x8]
  %v574 = vld [vmem:[%s338 + $0xe4] sm:$0xf]
  %v575 = vld [vmem:[%s338 + $0xe8] sm:$0xf]
  %v576 = vld [vmem:[%s338 + $0xf0] sm:$0x8]
  %v577 = vld [vmem:[%s338 + $0xf4] sm:$0xf]
  %v578 = vld [vmem:[%s338 + $0xf8] sm:$0xf]
  %v579 = vld [vmem:[%s338 + $0x120] sm:$0x8]
  %v580 = vld [vmem:[%s338 + $0x124] sm:$0xf]
  %v581 = vld [vmem:[%s338 + $0x128] sm:$0xf]
  %v582 = vld [vmem:[%s338 + $0x130] sm:$0x8]
  %v583 = vld [vmem:[%s338 + $0x134] sm:$0xf]
  %v584 = vld [vmem:[%s338 + $0x138] sm:$0xf]
  %v585 = vld [vmem:[%s338 + $0x140] sm:$0x8]
  %v586 = vld [vmem:[%s338 + $0x144] sm:$0xf]
  %v587 = vld [vmem:[%s338 + $0x148] sm:$0xf]
  %v588 = vld [vmem:[%s338 + $0x150] sm:$0x8]
  %v589 = vld [vmem:[%s338 + $0x154] sm:$0xf]
  %v590 = vld [vmem:[%s338 + $0x158] sm:$0xf]
  %v591 = vld [vmem:[%s338 + $0x160] sm:$0x8]
  %v592 = vld [vmem:[%s338 + $0x164] sm:$0xf]
  %v593 = vld [vmem:[%s338 + $0x168] sm:$0xf]
  %v594 = vld [vmem:[%s338 + $0x170] sm:$0x8]
  %v595 = vld [vmem:[%s338 + $0x174] sm:$0xf]
  %v596 = vld [vmem:[%s338 + $0x178] sm:$0xf]
  %v597 = vld [vmem:[%s338 + $0x180] sm:$0x8]
  %v598 = vld [vmem:[%s338 + $0x184] sm:$0xf]
  %v599 = vld [vmem:[%s338 + $0x188] sm:$0xf]
  %v600 = vld [vmem:[%s338 + $0x190] sm:$0x8]
  %v601 = vld [vmem:[%s338 + $0x194] sm:$0xf]
  %v602 = vld [vmem:[%s338 + $0x198] sm:$0xf]
  %v603 = vld [vmem:[%s338 + $0x1a0] sm:$0x8]
  %v604 = vld [vmem:[%s338 + $0x1a4] sm:$0xf]
  %v605 = vld [vmem:[%s338 + $0x1a8] sm:$0xf]
  %v606 = vld [vmem:[%s338 + $0x1b0] sm:$0x8]
  %v607 = vld [vmem:[%s338 + $0x1b4] sm:$0xf]
  %v608 = vld [vmem:[%s338 + $0x1b8] sm:$0xf]
  %v609 = vld [vmem:[%s338 + $0x1c0] sm:$0x8]
  %v610 = vld [vmem:[%s338 + $0x1c4] sm:$0xf]
  %v611 = vld [vmem:[%s338 + $0x1c8] sm:$0xf]
  %v612 = vld [vmem:[%s338 + $0x1d0] sm:$0x8]
  %v613 = vld [vmem:[%s338 + $0x1d4] sm:$0xf]
  %v614 = vld [vmem:[%s338 + $0x1d8] sm:$0xf]
  %v615 = vld [vmem:[%s338 + $0x1e0] sm:$0x8]
  %v616 = vld [vmem:[%s338 + $0x1e4] sm:$0xf]
  %v617 = vld [vmem:[%s338 + $0x1e8] sm:$0xf]
  %v618 = vld [vmem:[%s338 + $0x1f0] sm:$0x8]
  %v619 = vld [vmem:[%s338 + $0x1f4] sm:$0xf]
  %v620 = vld [vmem:[%s338 + $0x1f8] sm:$0xf]
  %v621 = vld [vmem:[%s338 + $0x200] sm:$0x8]
  %v622 = vld [vmem:[%s338 + $0x204] sm:$0xf]
  %v623 = vld [vmem:[%s338 + $0x208] sm:$0xf]
  %v624 = vld [vmem:[%s338 + $0x210] sm:$0x8]
  %v625 = vld [vmem:[%s338 + $0x214] sm:$0xf]
  %v626 = vld [vmem:[%s338 + $0x218] sm:$0xf]
  %v627 = vld [vmem:[%s338 + $0xc] sm:$0x1]
  %v628 = vld [vmem:[%s338 + $0x1c] sm:$0x1]
  %v629 = vld [vmem:[%s338 + $0x2c] sm:$0x1]
  %v630 = vld [vmem:[%s338 + $0x3c] sm:$0x1]
  %v631 = vld [vmem:[%s338 + $0x4c] sm:$0x1]
  %v632 = vld [vmem:[%s338 + $0x5c] sm:$0x1]
  %v633 = vld [vmem:[%s338 + $0x6c] sm:$0x1]
  %v634 = vld [vmem:[%s338 + $0x7c] sm:$0x1]
  %v635 = vld [vmem:[%s338 + $0x8c] sm:$0x1]
  %v636 = vld [vmem:[%s338 + $0x9c] sm:$0x1]
  %v637 = vld [vmem:[%s338 + $0xac] sm:$0x1]
  %v638 = vld [vmem:[%s338 + $0xbc] sm:$0x1]
  %v639 = vld [vmem:[%s338 + $0xcc] sm:$0x1]
  %v640 = vld [vmem:[%s338 + $0xdc] sm:$0x1]
  %v641 = vld [vmem:[%s338 + $0xec] sm:$0x1]
  %v642 = vld [vmem:[%s338 + $0xfc] sm:$0x1]
  %v643 = vld [vmem:[%s338 + $0x12c] sm:$0x1]
  %v644 = vld [vmem:[%s338 + $0x13c] sm:$0x1]
  %v645 = vld [vmem:[%s338 + $0x14c] sm:$0x1]
  %v646 = vld [vmem:[%s338 + $0x15c] sm:$0x1]
  %v647 = vld [vmem:[%s338 + $0x16c] sm:$0x1]
  %v648 = vld [vmem:[%s338 + $0x17c] sm:$0x1]
  %v649 = vld [vmem:[%s338 + $0x18c] sm:$0x1]
  %v650 = vld [vmem:[%s338 + $0x19c] sm:$0x1]
  %v651 = vld [vmem:[%s338 + $0x1ac] sm:$0x1]
  %v652 = vld [vmem:[%s338 + $0x1bc] sm:$0x1]
  %v653 = vld [vmem:[%s338 + $0x1cc] sm:$0x1]
  %v654 = vld [vmem:[%s338 + $0x1dc] sm:$0x1]
  %v655 = vld [vmem:[%s338 + $0x1ec] sm:$0x1]
  %v656 = vld [vmem:[%s338 + $0x1fc] sm:$0x1]
  %v657 = vld [vmem:[%s338 + $0x20c] sm:$0x1]
  %v658 = vld [vmem:[%s338 + $0x21c] sm:$0x1]
  %s659 = scalar_lea.vmem [#allocation2], 32
  %v660 = vld [vmem:[%s659] sm:$0x8]
  %v661 = vld [vmem:[%s659 + $0x4] sm:$0xf]
  %v662 = vld [vmem:[%s659 + $0x8] sm:$0xf]
  %v663 = vld [vmem:[%s659 + $0x10] sm:$0x8]
  %v664 = vld [vmem:[%s659 + $0x14] sm:$0xf]
  %v665 = vld [vmem:[%s659 + $0x18] sm:$0xf]
  %v666 = vld [vmem:[%s659 + $0x20] sm:$0x8]
  %v667 = vld [vmem:[%s659 + $0x24] sm:$0xf]
  %v668 = vld [vmem:[%s659 + $0x28] sm:$0xf]
  %v669 = vld [vmem:[%s659 + $0x30] sm:$0x8]
  %v670 = vld [vmem:[%s659 + $0x34] sm:$0xf]
  %v671 = vld [vmem:[%s659 + $0x38] sm:$0xf]
  %v672 = vld [vmem:[%s659 + $0x40] sm:$0x8]
  %v673 = vld [vmem:[%s659 + $0x44] sm:$0xf]
  %v674 = vld [vmem:[%s659 + $0x48] sm:$0xf]
  %v675 = vld [vmem:[%s659 + $0x50] sm:$0x8]
  %v676 = vld [vmem:[%s659 + $0x54] sm:$0xf]
  %v677 = vld [vmem:[%s659 + $0x58] sm:$0xf]
  %v678 = vld [vmem:[%s659 + $0x60] sm:$0x8]
  %v679 = vld [vmem:[%s659 + $0x64] sm:$0xf]
  %v680 = vld [vmem:[%s659 + $0x68] sm:$0xf]
  %v681 = vld [vmem:[%s659 + $0x70] sm:$0x8]
  %v682 = vld [vmem:[%s659 + $0x74] sm:$0xf]
  %v683 = vld [vmem:[%s659 + $0x78] sm:$0xf]
  %v684 = vld [vmem:[%s659 + $0x80] sm:$0x8]
  %v685 = vld [vmem:[%s659 + $0x84] sm:$0xf]
  %v686 = vld [vmem:[%s659 + $0x88] sm:$0xf]
  %v687 = vld [vmem:[%s659 + $0x90] sm:$0x8]
  %v688 = vld [vmem:[%s659 + $0x94] sm:$0xf]
  %v689 = vld [vmem:[%s659 + $0x98] sm:$0xf]
  %v690 = vld [vmem:[%s659 + $0xa0] sm:$0x8]
  %v691 = vld [vmem:[%s659 + $0xa4] sm:$0xf]
  %v692 = vld [vmem:[%s659 + $0xa8] sm:$0xf]
  %v693 = vld [vmem:[%s659 + $0xb0] sm:$0x8]
  %v694 = vld [vmem:[%s659 + $0xb4] sm:$0xf]
  %v695 = vld [vmem:[%s659 + $0xb8] sm:$0xf]
  %v696 = vld [vmem:[%s659 + $0xc0] sm:$0x8]
  %v697 = vld [vmem:[%s659 + $0xc4] sm:$0xf]
  %v698 = vld [vmem:[%s659 + $0xc8] sm:$0xf]
  %v699 = vld [vmem:[%s659 + $0xd0] sm:$0x8]
  %v700 = vld [vmem:[%s659 + $0xd4] sm:$0xf]
  %v701 = vld [vmem:[%s659 + $0xd8] sm:$0xf]
  %v702 = vld [vmem:[%s659 + $0xe0] sm:$0x8]
  %v703 = vld [vmem:[%s659 + $0xe4] sm:$0xf]
  %v704 = vld [vmem:[%s659 + $0xe8] sm:$0xf]
  %v705 = vld [vmem:[%s659 + $0xf0] sm:$0x8]
  %v706 = vld [vmem:[%s659 + $0xf4] sm:$0xf]
  %v707 = vld [vmem:[%s659 + $0xf8] sm:$0xf]
  %v708 = vld [vmem:[%s659 + $0x120] sm:$0x8]
  %v709 = vld [vmem:[%s659 + $0x124] sm:$0xf]
  %v710 = vld [vmem:[%s659 + $0x128] sm:$0xf]
  %v711 = vld [vmem:[%s659 + $0x130] sm:$0x8]
  %v712 = vld [vmem:[%s659 + $0x134] sm:$0xf]
  %v713 = vld [vmem:[%s659 + $0x138] sm:$0xf]
  %v714 = vld [vmem:[%s659 + $0x140] sm:$0x8]
  %v715 = vld [vmem:[%s659 + $0x144] sm:$0xf]
  %v716 = vld [vmem:[%s659 + $0x148] sm:$0xf]
  %v717 = vld [vmem:[%s659 + $0x150] sm:$0x8]
  %v718 = vld [vmem:[%s659 + $0x154] sm:$0xf]
  %v719 = vld [vmem:[%s659 + $0x158] sm:$0xf]
  %v720 = vld [vmem:[%s659 + $0x160] sm:$0x8]
  %v721 = vld [vmem:[%s659 + $0x164] sm:$0xf]
  %v722 = vld [vmem:[%s659 + $0x168] sm:$0xf]
  %v723 = vld [vmem:[%s659 + $0x170] sm:$0x8]
  %v724 = vld [vmem:[%s659 + $0x174] sm:$0xf]
  %v725 = vld [vmem:[%s659 + $0x178] sm:$0xf]
  %v726 = vld [vmem:[%s659 + $0x180] sm:$0x8]
  %v727 = vld [vmem:[%s659 + $0x184] sm:$0xf]
  %v728 = vld [vmem:[%s659 + $0x188] sm:$0xf]
  %v729 = vld [vmem:[%s659 + $0x190] sm:$0x8]
  %v730 = vld [vmem:[%s659 + $0x194] sm:$0xf]
  %v731 = vld [vmem:[%s659 + $0x198] sm:$0xf]
  %v732 = vld [vmem:[%s659 + $0x1a0] sm:$0x8]
  %v733 = vld [vmem:[%s659 + $0x1a4] sm:$0xf]
  %v734 = vld [vmem:[%s659 + $0x1a8] sm:$0xf]
  %v735 = vld [vmem:[%s659 + $0x1b0] sm:$0x8]
  %v736 = vld [vmem:[%s659 + $0x1b4] sm:$0xf]
  %v737 = vld [vmem:[%s659 + $0x1b8] sm:$0xf]
  %v738 = vld [vmem:[%s659 + $0x1c0] sm:$0x8]
  %v739 = vld [vmem:[%s659 + $0x1c4] sm:$0xf]
  %v740 = vld [vmem:[%s659 + $0x1c8] sm:$0xf]
  %v741 = vld [vmem:[%s659 + $0x1d0] sm:$0x8]
  %v742 = vld [vmem:[%s659 + $0x1d4] sm:$0xf]
  %v743 = vld [vmem:[%s659 + $0x1d8] sm:$0xf]
  %v744 = vld [vmem:[%s659 + $0x1e0] sm:$0x8]
  %v745 = vld [vmem:[%s659 + $0x1e4] sm:$0xf]
  %v746 = vld [vmem:[%s659 + $0x1e8] sm:$0xf]
  %v747 = vld [vmem:[%s659 + $0x1f0] sm:$0x8]
  %v748 = vld [vmem:[%s659 + $0x1f4] sm:$0xf]
  %v749 = vld [vmem:[%s659 + $0x1f8] sm:$0xf]
  %v750 = vld [vmem:[%s659 + $0x200] sm:$0x8]
  %v751 = vld [vmem:[%s659 + $0x204] sm:$0xf]
  %v752 = vld [vmem:[%s659 + $0x208] sm:$0xf]
  %v753 = vld [vmem:[%s659 + $0x210] sm:$0x8]
  %v754 = vld [vmem:[%s659 + $0x214] sm:$0xf]
  %v755 = vld [vmem:[%s659 + $0x218] sm:$0xf]
  %v756 = vld [vmem:[%s659 + $0xc] sm:$0x1]
  %v757 = vld [vmem:[%s659 + $0x1c] sm:$0x1]
  %v758 = vld [vmem:[%s659 + $0x2c] sm:$0x1]
  %v759 = vld [vmem:[%s659 + $0x3c] sm:$0x1]
  %v760 = vld [vmem:[%s659 + $0x4c] sm:$0x1]
  %v761 = vld [vmem:[%s659 + $0x5c] sm:$0x1]
  %v762 = vld [vmem:[%s659 + $0x6c] sm:$0x1]
  %v763 = vld [vmem:[%s659 + $0x7c] sm:$0x1]
  %v764 = vld [vmem:[%s659 + $0x8c] sm:$0x1]
  %v765 = vld [vmem:[%s659 + $0x9c] sm:$0x1]
  %v766 = vld [vmem:[%s659 + $0xac] sm:$0x1]
  %v767 = vld [vmem:[%s659 + $0xbc] sm:$0x1]
  %v768 = vld [vmem:[%s659 + $0xcc] sm:$0x1]
  %v769 = vld [vmem:[%s659 + $0xdc] sm:$0x1]
  %v770 = vld [vmem:[%s659 + $0xec] sm:$0x1]
  %v771 = vld [vmem:[%s659 + $0xfc] sm:$0x1]
  %v772 = vld [vmem:[%s659 + $0x12c] sm:$0x1]
  %v773 = vld [vmem:[%s659 + $0x13c] sm:$0x1]
  %v774 = vld [vmem:[%s659 + $0x14c] sm:$0x1]
  %v775 = vld [vmem:[%s659 + $0x15c] sm:$0x1]
  %v776 = vld [vmem:[%s659 + $0x16c] sm:$0x1]
  %v777 = vld [vmem:[%s659 + $0x17c] sm:$0x1]
  %v778 = vld [vmem:[%s659 + $0x18c] sm:$0x1]
  %v779 = vld [vmem:[%s659 + $0x19c] sm:$0x1]
  %v780 = vld [vmem:[%s659 + $0x1ac] sm:$0x1]
  %v781 = vld [vmem:[%s659 + $0x1bc] sm:$0x1]
  %v782 = vld [vmem:[%s659 + $0x1cc] sm:$0x1]
  %v783 = vld [vmem:[%s659 + $0x1dc] sm:$0x1]
  %v784 = vld [vmem:[%s659 + $0x1ec] sm:$0x1]
  %v785 = vld [vmem:[%s659 + $0x1fc] sm:$0x1]
  %v786 = vld [vmem:[%s659 + $0x20c] sm:$0x1]
  %v787 = vld [vmem:[%s659 + $0x21c] sm:$0x1]
  %v884 = vunpack.c.l.b16 %v403
  %v885 = vunpack.c.l.b16 %v404
  %v886 = vunpack.c.l.b16 %v405
  %v887 = vunpack.c.l.b16 %v406
  %v888 = vunpack.c.l.b16 %v407
  %v889 = vunpack.c.l.b16 %v408
  %v890 = vunpack.c.l.b16 %v409
  %v891 = vunpack.c.l.b16 %v410
  %v892 = vunpack.c.l.b16 %v411
  %v893 = vunpack.c.l.b16 %v412
  %v894 = vunpack.c.l.b16 %v413
  %v895 = vunpack.c.l.b16 %v414
  %v896 = vunpack.c.l.b16 %v415
  %v897 = vunpack.c.l.b16 %v416
  %v898 = vunpack.c.l.b16 %v417
  %v899 = vunpack.c.l.b16 %v418
  %v900 = vunpack.c.l.b16 %v419
  %v901 = vunpack.c.l.b16 %v420
  %v902 = vunpack.c.l.b16 %v421
  %v903 = vunpack.c.l.b16 %v422
  %v904 = vunpack.c.l.b16 %v423
  %v905 = vunpack.c.l.b16 %v424
  %v906 = vunpack.c.l.b16 %v425
  %v907 = vunpack.c.l.b16 %v426
  %v908 = vunpack.c.l.b16 %v427
  %v909 = vunpack.c.l.b16 %v428
  %v910 = vunpack.c.l.b16 %v429
  %v911 = vunpack.c.l.b16 %v430
  %v912 = vunpack.c.l.b16 %v431
  %v913 = vunpack.c.l.b16 %v432
  %v914 = vunpack.c.l.b16 %v433
  %v915 = vunpack.c.l.b16 %v434
  %v916 = vunpack.c.l.b16 %v435
  %v917 = vunpack.c.l.b16 %v436
  %v918 = vunpack.c.l.b16 %v437
  %v919 = vunpack.c.l.b16 %v438
  %v920 = vunpack.c.l.b16 %v439
  %v921 = vunpack.c.l.b16 %v440
  %v922 = vunpack.c.l.b16 %v441
  %v923 = vunpack.c.l.b16 %v442
  %v924 = vunpack.c.l.b16 %v443
  %v925 = vunpack.c.l.b16 %v444
  %v926 = vunpack.c.l.b16 %v445
  %v927 = vunpack.c.l.b16 %v446
  %v928 = vunpack.c.l.b16 %v447
  %v929 = vunpack.c.l.b16 %v448
  %v930 = vunpack.c.l.b16 %v449
  %v931 = vunpack.c.l.b16 %v450
  %v932 = vunpack.c.l.b16 %v451
  %v933 = vunpack.c.l.b16 %v452
  %v934 = vunpack.c.l.b16 %v453
  %v935 = vunpack.c.l.b16 %v454
  %v936 = vunpack.c.l.b16 %v455
  %v937 = vunpack.c.l.b16 %v456
  %v938 = vunpack.c.l.b16 %v457
  %v939 = vunpack.c.l.b16 %v458
  %v940 = vunpack.c.l.b16 %v459
  %v941 = vunpack.c.l.b16 %v460
  %v942 = vunpack.c.l.b16 %v461
  %v943 = vunpack.c.l.b16 %v462
  %v944 = vunpack.c.l.b16 %v463
  %v945 = vunpack.c.l.b16 %v464
  %v946 = vunpack.c.l.b16 %v465
  %v947 = vunpack.c.l.b16 %v466
  %v948 = vunpack.c.l.b16 %v467
  %v949 = vunpack.c.l.b16 %v468
  %v950 = vunpack.c.l.b16 %v469
  %v951 = vunpack.c.l.b16 %v470
  %v952 = vunpack.c.l.b16 %v471
  %v953 = vunpack.c.l.b16 %v472
  %v954 = vunpack.c.l.b16 %v473
  %v955 = vunpack.c.l.b16 %v474
  %v956 = vunpack.c.l.b16 %v475
  %v957 = vunpack.c.l.b16 %v476
  %v958 = vunpack.c.l.b16 %v477
  %v959 = vunpack.c.l.b16 %v478
  %v960 = vunpack.c.l.b16 %v479
  %v961 = vunpack.c.l.b16 %v480
  %v962 = vunpack.c.l.b16 %v481
  %v963 = vunpack.c.l.b16 %v482
  %v964 = vunpack.c.l.b16 %v483
  %v965 = vunpack.c.l.b16 %v484
  %v966 = vunpack.c.l.b16 %v485
  %v967 = vunpack.c.l.b16 %v486
  %v968 = vunpack.c.l.b16 %v487
  %v969 = vunpack.c.l.b16 %v488
  %v970 = vunpack.c.l.b16 %v489
  %v971 = vunpack.c.l.b16 %v490
  %v972 = vunpack.c.l.b16 %v491
  %v973 = vunpack.c.l.b16 %v492
  %v974 = vunpack.c.l.b16 %v493
  %v975 = vunpack.c.l.b16 %v494
  %v976 = vunpack.c.l.b16 %v495
  %v977 = vunpack.c.l.b16 %v496
  %v978 = vunpack.c.l.b16 %v497
  %v979 = vunpack.c.l.b16 %v498
  %v980 = vpack.c.b16 %v885, %v884
  %v981 = vpack.c.b16 %v886, %v886
  %v982 = vpack.c.b16 %v888, %v887
  %v983 = vpack.c.b16 %v889, %v889
  %v984 = vpack.c.b16 %v891, %v890
  %v985 = vpack.c.b16 %v892, %v892
  %v986 = vpack.c.b16 %v894, %v893
  %v987 = vpack.c.b16 %v895, %v895
  %v988 = vpack.c.b16 %v897, %v896
  %v989 = vpack.c.b16 %v898, %v898
  %v990 = vpack.c.b16 %v900, %v899
  %v991 = vpack.c.b16 %v901, %v901
  %v992 = vpack.c.b16 %v903, %v902
  %v993 = vpack.c.b16 %v904, %v904
  %v994 = vpack.c.b16 %v906, %v905
  %v995 = vpack.c.b16 %v907, %v907
  %v996 = vpack.c.b16 %v909, %v908
  %v997 = vpack.c.b16 %v910, %v910
  %v998 = vpack.c.b16 %v912, %v911
  %v999 = vpack.c.b16 %v913, %v913
  %v1000 = vpack.c.b16 %v915, %v914
  %v1001 = vpack.c.b16 %v916, %v916
  %v1002 = vpack.c.b16 %v918, %v917
  %v1003 = vpack.c.b16 %v919, %v919
  %v1004 = vpack.c.b16 %v921, %v920
  %v1005 = vpack.c.b16 %v922, %v922
  %v1006 = vpack.c.b16 %v924, %v923
  %v1007 = vpack.c.b16 %v925, %v925
  %v1008 = vpack.c.b16 %v927, %v926
  %v1009 = vpack.c.b16 %v928, %v928
  %v1010 = vpack.c.b16 %v930, %v929
  %v1011 = vpack.c.b16 %v931, %v931
  %v1012 = vpack.c.b16 %v933, %v932
  %v1013 = vpack.c.b16 %v934, %v934
  %v1014 = vpack.c.b16 %v936, %v935
  %v1015 = vpack.c.b16 %v937, %v937
  %v1016 = vpack.c.b16 %v939, %v938
  %v1017 = vpack.c.b16 %v940, %v940
  %v1018 = vpack.c.b16 %v942, %v941
  %v1019 = vpack.c.b16 %v943, %v943
  %v1020 = vpack.c.b16 %v945, %v944
  %v1021 = vpack.c.b16 %v946, %v946
  %v1022 = vpack.c.b16 %v948, %v947
  %v1023 = vpack.c.b16 %v949, %v949
  %v1024 = vpack.c.b16 %v951, %v950
  %v1025 = vpack.c.b16 %v952, %v952
  %v1026 = vpack.c.b16 %v954, %v953
  %v1027 = vpack.c.b16 %v955, %v955
  %v1028 = vpack.c.b16 %v957, %v956
  %v1029 = vpack.c.b16 %v958, %v958
  %v1030 = vpack.c.b16 %v960, %v959
  %v1031 = vpack.c.b16 %v961, %v961
  %v1032 = vpack.c.b16 %v963, %v962
  %v1033 = vpack.c.b16 %v964, %v964
  %v1034 = vpack.c.b16 %v966, %v965
  %v1035 = vpack.c.b16 %v967, %v967
  %v1036 = vpack.c.b16 %v969, %v968
  %v1037 = vpack.c.b16 %v970, %v970
  %v1038 = vpack.c.b16 %v972, %v971
  %v1039 = vpack.c.b16 %v973, %v973
  %v1040 = vpack.c.b16 %v975, %v974
  %v1041 = vpack.c.b16 %v976, %v976
  %v1042 = vpack.c.b16 %v978, %v977
  %v1043 = vpack.c.b16 %v979, %v979
  %v1044 = vpack.c.b16 %v886, %v885
  %v1045 = vpack.c.b16 %v889, %v888
  %v1046 = vpack.c.b16 %v892, %v891
  %v1047 = vpack.c.b16 %v895, %v894
  %v1048 = vpack.c.b16 %v898, %v897
  %v1049 = vpack.c.b16 %v901, %v900
  %v1050 = vpack.c.b16 %v904, %v903
  %v1051 = vpack.c.b16 %v907, %v906
  %v1052 = vpack.c.b16 %v910, %v909
  %v1053 = vpack.c.b16 %v913, %v912
  %v1054 = vpack.c.b16 %v916, %v915
  %v1055 = vpack.c.b16 %v919, %v918
  %v1056 = vpack.c.b16 %v922, %v921
  %v1057 = vpack.c.b16 %v925, %v924
  %v1058 = vpack.c.b16 %v928, %v927
  %v1059 = vpack.c.b16 %v931, %v930
  %v1060 = vpack.c.b16 %v934, %v933
  %v1061 = vpack.c.b16 %v937, %v936
  %v1062 = vpack.c.b16 %v940, %v939
  %v1063 = vpack.c.b16 %v943, %v942
  %v1064 = vpack.c.b16 %v946, %v945
  %v1065 = vpack.c.b16 %v949, %v948
  %v1066 = vpack.c.b16 %v952, %v951
  %v1067 = vpack.c.b16 %v955, %v954
  %v1068 = vpack.c.b16 %v958, %v957
  %v1069 = vpack.c.b16 %v961, %v960
  %v1070 = vpack.c.b16 %v964, %v963
  %v1071 = vpack.c.b16 %v967, %v966
  %v1072 = vpack.c.b16 %v970, %v969
  %v1073 = vpack.c.b16 %v973, %v972
  %v1074 = vpack.c.b16 %v976, %v975
  %v1075 = vpack.c.b16 %v979, %v978
  %v1077 = vshrl.u32 %v1044, 16
  %v1079 = vrot.slane %v1077, 4
  %v1080 = vshll.u32 %v1044, 16
  %v1082 = vrot.slane %v1080, 5
  %v1083 = vor.u32 %v1079, %v1082
  %v1085 = vshrl.u32 %v1045, 16
  %v1087 = vrot.slane %v1085, 4
  %v1088 = vshll.u32 %v1045, 16
  %v1090 = vrot.slane %v1088, 5
  %v1091 = vor.u32 %v1087, %v1090
  %v1093 = vshrl.u32 %v1046, 16
  %v1095 = vrot.slane %v1093, 4
  %v1096 = vshll.u32 %v1046, 16
  %v1098 = vrot.slane %v1096, 5
  %v1099 = vor.u32 %v1095, %v1098
  %v1101 = vshrl.u32 %v1047, 16
  %v1103 = vrot.slane %v1101, 4
  %v1104 = vshll.u32 %v1047, 16
  %v1106 = vrot.slane %v1104, 5
  %v1107 = vor.u32 %v1103, %v1106
  %v1109 = vshrl.u32 %v1048, 16
  %v1111 = vrot.slane %v1109, 4
  %v1112 = vshll.u32 %v1048, 16
  %v1114 = vrot.slane %v1112, 5
  %v1115 = vor.u32 %v1111, %v1114
  %v1117 = vshrl.u32 %v1049, 16
  %v1119 = vrot.slane %v1117, 4
  %v1120 = vshll.u32 %v1049, 16
  %v1122 = vrot.slane %v1120, 5
  %v1123 = vor.u32 %v1119, %v1122
  %v1125 = vshrl.u32 %v1050, 16
  %v1127 = vrot.slane %v1125, 4
  %v1128 = vshll.u32 %v1050, 16
  %v1130 = vrot.slane %v1128, 5
  %v1131 = vor.u32 %v1127, %v1130
  %v1133 = vshrl.u32 %v1051, 16
  %v1135 = vrot.slane %v1133, 4
  %v1136 = vshll.u32 %v1051, 16
  %v1138 = vrot.slane %v1136, 5
  %v1139 = vor.u32 %v1135, %v1138
  %v1141 = vshrl.u32 %v1052, 16
  %v1143 = vrot.slane %v1141, 4
  %v1144 = vshll.u32 %v1052, 16
  %v1146 = vrot.slane %v1144, 5
  %v1147 = vor.u32 %v1143, %v1146
  %v1149 = vshrl.u32 %v1053, 16
  %v1151 = vrot.slane %v1149, 4
  %v1152 = vshll.u32 %v1053, 16
  %v1154 = vrot.slane %v1152, 5
  %v1155 = vor.u32 %v1151, %v1154
  %v1157 = vshrl.u32 %v1054, 16
  %v1159 = vrot.slane %v1157, 4
  %v1160 = vshll.u32 %v1054, 16
  %v1162 = vrot.slane %v1160, 5
  %v1163 = vor.u32 %v1159, %v1162
  %v1165 = vshrl.u32 %v1055, 16
  %v1167 = vrot.slane %v1165, 4
  %v1168 = vshll.u32 %v1055, 16
  %v1170 = vrot.slane %v1168, 5
  %v1171 = vor.u32 %v1167, %v1170
  %v1173 = vshrl.u32 %v1056, 16
  %v1175 = vrot.slane %v1173, 4
  %v1176 = vshll.u32 %v1056, 16
  %v1178 = vrot.slane %v1176, 5
  %v1179 = vor.u32 %v1175, %v1178
  %v1181 = vshrl.u32 %v1057, 16
  %v1183 = vrot.slane %v1181, 4
  %v1184 = vshll.u32 %v1057, 16
  %v1186 = vrot.slane %v1184, 5
  %v1187 = vor.u32 %v1183, %v1186
  %v1189 = vshrl.u32 %v1058, 16
  %v1191 = vrot.slane %v1189, 4
  %v1192 = vshll.u32 %v1058, 16
  %v1194 = vrot.slane %v1192, 5
  %v1195 = vor.u32 %v1191, %v1194
  %v1197 = vshrl.u32 %v1059, 16
  %v1199 = vrot.slane %v1197, 4
  %v1200 = vshll.u32 %v1059, 16
  %v1202 = vrot.slane %v1200, 5
  %v1203 = vor.u32 %v1199, %v1202
  %v1205 = vshrl.u32 %v1060, 16
  %v1207 = vrot.slane %v1205, 4
  %v1208 = vshll.u32 %v1060, 16
  %v1210 = vrot.slane %v1208, 5
  %v1211 = vor.u32 %v1207, %v1210
  %v1213 = vshrl.u32 %v1061, 16
  %v1215 = vrot.slane %v1213, 4
  %v1216 = vshll.u32 %v1061, 16
  %v1218 = vrot.slane %v1216, 5
  %v1219 = vor.u32 %v1215, %v1218
  %v1221 = vshrl.u32 %v1062, 16
  %v1223 = vrot.slane %v1221, 4
  %v1224 = vshll.u32 %v1062, 16
  %v1226 = vrot.slane %v1224, 5
  %v1227 = vor.u32 %v1223, %v1226
  %v1229 = vshrl.u32 %v1063, 16
  %v1231 = vrot.slane %v1229, 4
  %v1232 = vshll.u32 %v1063, 16
  %v1234 = vrot.slane %v1232, 5
  %v1235 = vor.u32 %v1231, %v1234
  %v1237 = vshrl.u32 %v1064, 16
  %v1239 = vrot.slane %v1237, 4
  %v1240 = vshll.u32 %v1064, 16
  %v1242 = vrot.slane %v1240, 5
  %v1243 = vor.u32 %v1239, %v1242
  %v1245 = vshrl.u32 %v1065, 16
  %v1247 = vrot.slane %v1245, 4
  %v1248 = vshll.u32 %v1065, 16
  %v1250 = vrot.slane %v1248, 5
  %v1251 = vor.u32 %v1247, %v1250
  %v1253 = vshrl.u32 %v1066, 16
  %v1255 = vrot.slane %v1253, 4
  %v1256 = vshll.u32 %v1066, 16
  %v1258 = vrot.slane %v1256, 5
  %v1259 = vor.u32 %v1255, %v1258
  %v1261 = vshrl.u32 %v1067, 16
  %v1263 = vrot.slane %v1261, 4
  %v1264 = vshll.u32 %v1067, 16
  %v1266 = vrot.slane %v1264, 5
  %v1267 = vor.u32 %v1263, %v1266
  %v1269 = vshrl.u32 %v1068, 16
  %v1271 = vrot.slane %v1269, 4
  %v1272 = vshll.u32 %v1068, 16
  %v1274 = vrot.slane %v1272, 5
  %v1275 = vor.u32 %v1271, %v1274
  %v1277 = vshrl.u32 %v1069, 16
  %v1279 = vrot.slane %v1277, 4
  %v1280 = vshll.u32 %v1069, 16
  %v1282 = vrot.slane %v1280, 5
  %v1283 = vor.u32 %v1279, %v1282
  %v1285 = vshrl.u32 %v1070, 16
  %v1287 = vrot.slane %v1285, 4
  %v1288 = vshll.u32 %v1070, 16
  %v1290 = vrot.slane %v1288, 5
  %v1291 = vor.u32 %v1287, %v1290
  %v1293 = vshrl.u32 %v1071, 16
  %v1295 = vrot.slane %v1293, 4
  %v1296 = vshll.u32 %v1071, 16
  %v1298 = vrot.slane %v1296, 5
  %v1299 = vor.u32 %v1295, %v1298
  %v1301 = vshrl.u32 %v1072, 16
  %v1303 = vrot.slane %v1301, 4
  %v1304 = vshll.u32 %v1072, 16
  %v1306 = vrot.slane %v1304, 5
  %v1307 = vor.u32 %v1303, %v1306
  %v1309 = vshrl.u32 %v1073, 16
  %v1311 = vrot.slane %v1309, 4
  %v1312 = vshll.u32 %v1073, 16
  %v1314 = vrot.slane %v1312, 5
  %v1315 = vor.u32 %v1311, %v1314
  %v1317 = vshrl.u32 %v1074, 16
  %v1319 = vrot.slane %v1317, 4
  %v1320 = vshll.u32 %v1074, 16
  %v1322 = vrot.slane %v1320, 5
  %v1323 = vor.u32 %v1319, %v1322
  %v1325 = vshrl.u32 %v1075, 16
  %v1327 = vrot.slane %v1325, 4
  %v1328 = vshll.u32 %v1075, 16
  %v1330 = vrot.slane %v1328, 5
  %v1331 = vor.u32 %v1327, %v1330
  %1332 = vrot.lane.b32.xlu0 %v1083, 4
  %v1333 = vpop.permute.xlu0 %1332
  %1334 = vrot.lane.b32.xlu0 %v1091, 4
  %v1335 = vpop.permute.xlu0 %1334
  %1336 = vrot.lane.b32.xlu0 %v1099, 4
  %v1337 = vpop.permute.xlu0 %1336
  %1338 = vrot.lane.b32.xlu0 %v1107, 4
  %v1339 = vpop.permute.xlu0 %1338
  %1340 = vrot.lane.b32.xlu0 %v1115, 4
  %v1341 = vpop.permute.xlu0 %1340
  %1342 = vrot.lane.b32.xlu0 %v1123, 4
  %v1343 = vpop.permute.xlu0 %1342
  %1344 = vrot.lane.b32.xlu0 %v1131, 4
  %v1345 = vpop.permute.xlu0 %1344
  %1346 = vrot.lane.b32.xlu0 %v1139, 4
  %v1347 = vpop.permute.xlu0 %1346
  %1348 = vrot.lane.b32.xlu0 %v1147, 4
  %v1349 = vpop.permute.xlu0 %1348
  %1350 = vrot.lane.b32.xlu0 %v1155, 4
  %v1351 = vpop.permute.xlu0 %1350
  %1352 = vrot.lane.b32.xlu0 %v1163, 4
  %v1353 = vpop.permute.xlu0 %1352
  %1354 = vrot.lane.b32.xlu0 %v1171, 4
  %v1355 = vpop.permute.xlu0 %1354
  %1356 = vrot.lane.b32.xlu0 %v1179, 4
  %v1357 = vpop.permute.xlu0 %1356
  %1358 = vrot.lane.b32.xlu0 %v1187, 4
  %v1359 = vpop.permute.xlu0 %1358
  %1360 = vrot.lane.b32.xlu0 %v1195, 4
  %v1361 = vpop.permute.xlu0 %1360
  %1362 = vrot.lane.b32.xlu0 %v1203, 4
  %v1363 = vpop.permute.xlu0 %1362
  %1364 = vrot.lane.b32.xlu0 %v1211, 4
  %v1365 = vpop.permute.xlu0 %1364
  %1366 = vrot.lane.b32.xlu0 %v1219, 4
  %v1367 = vpop.permute.xlu0 %1366
  %1368 = vrot.lane.b32.xlu0 %v1227, 4
  %v1369 = vpop.permute.xlu0 %1368
  %1370 = vrot.lane.b32.xlu0 %v1235, 4
  %v1371 = vpop.permute.xlu0 %1370
  %1372 = vrot.lane.b32.xlu0 %v1243, 4
  %v1373 = vpop.permute.xlu0 %1372
  %1374 = vrot.lane.b32.xlu0 %v1251, 4
  %v1375 = vpop.permute.xlu0 %1374
  %1376 = vrot.lane.b32.xlu0 %v1259, 4
  %v1377 = vpop.permute.xlu0 %1376
  %1378 = vrot.lane.b32.xlu0 %v1267, 4
  %v1379 = vpop.permute.xlu0 %1378
  %1380 = vrot.lane.b32.xlu0 %v1275, 4
  %v1381 = vpop.permute.xlu0 %1380
  %1382 = vrot.lane.b32.xlu0 %v1283, 4
  %v1383 = vpop.permute.xlu0 %1382
  %1384 = vrot.lane.b32.xlu0 %v1291, 4
  %v1385 = vpop.permute.xlu0 %1384
  %1386 = vrot.lane.b32.xlu0 %v1299, 4
  %v1387 = vpop.permute.xlu0 %1386
  %1388 = vrot.lane.b32.xlu0 %v1307, 4
  %v1389 = vpop.permute.xlu0 %1388
  %1390 = vrot.lane.b32.xlu0 %v1315, 4
  %v1391 = vpop.permute.xlu0 %1390
  %1392 = vrot.lane.b32.xlu0 %v1323, 4
  %v1393 = vpop.permute.xlu0 %1392
  %1394 = vrot.lane.b32.xlu0 %v1331, 4
  %v1395 = vpop.permute.xlu0 %1394
  %v1428 = vunpack.c.l.b16 %v499
  %v1429 = vunpack.c.l.b16 %v500
  %v1430 = vunpack.c.l.b16 %v501
  %v1431 = vunpack.c.l.b16 %v502
  %v1432 = vunpack.c.l.b16 %v503
  %v1433 = vunpack.c.l.b16 %v504
  %v1434 = vunpack.c.l.b16 %v505
  %v1435 = vunpack.c.l.b16 %v506
  %v1436 = vunpack.c.l.b16 %v507
  %v1437 = vunpack.c.l.b16 %v508
  %v1438 = vunpack.c.l.b16 %v509
  %v1439 = vunpack.c.l.b16 %v510
  %v1440 = vunpack.c.l.b16 %v511
  %v1441 = vunpack.c.l.b16 %v512
  %v1442 = vunpack.c.l.b16 %v513
  %v1443 = vunpack.c.l.b16 %v514
  %v1444 = vunpack.c.l.b16 %v515
  %v1445 = vunpack.c.l.b16 %v516
  %v1446 = vunpack.c.l.b16 %v517
  %v1447 = vunpack.c.l.b16 %v518
  %v1448 = vunpack.c.l.b16 %v519
  %v1449 = vunpack.c.l.b16 %v520
  %v1450 = vunpack.c.l.b16 %v521
  %v1451 = vunpack.c.l.b16 %v522
  %v1452 = vunpack.c.l.b16 %v523
  %v1453 = vunpack.c.l.b16 %v524
  %v1454 = vunpack.c.l.b16 %v525
  %v1455 = vunpack.c.l.b16 %v526
  %v1456 = vunpack.c.l.b16 %v527
  %v1457 = vunpack.c.l.b16 %v528
  %v1458 = vunpack.c.l.b16 %v529
  %v1459 = vunpack.c.l.b16 %v530
  %v1460 = vpack.c.b16 %v1428, %v1428
  %v1461 = vpack.c.b16 %v1429, %v1429
  %v1462 = vpack.c.b16 %v1430, %v1430
  %v1463 = vpack.c.b16 %v1431, %v1431
  %v1464 = vpack.c.b16 %v1432, %v1432
  %v1465 = vpack.c.b16 %v1433, %v1433
  %v1466 = vpack.c.b16 %v1434, %v1434
  %v1467 = vpack.c.b16 %v1435, %v1435
  %v1468 = vpack.c.b16 %v1436, %v1436
  %v1469 = vpack.c.b16 %v1437, %v1437
  %v1470 = vpack.c.b16 %v1438, %v1438
  %v1471 = vpack.c.b16 %v1439, %v1439
  %v1472 = vpack.c.b16 %v1440, %v1440
  %v1473 = vpack.c.b16 %v1441, %v1441
  %v1474 = vpack.c.b16 %v1442, %v1442
  %v1475 = vpack.c.b16 %v1443, %v1443
  %v1476 = vpack.c.b16 %v1444, %v1444
  %v1477 = vpack.c.b16 %v1445, %v1445
  %v1478 = vpack.c.b16 %v1446, %v1446
  %v1479 = vpack.c.b16 %v1447, %v1447
  %v1480 = vpack.c.b16 %v1448, %v1448
  %v1481 = vpack.c.b16 %v1449, %v1449
  %v1482 = vpack.c.b16 %v1450, %v1450
  %v1483 = vpack.c.b16 %v1451, %v1451
  %v1484 = vpack.c.b16 %v1452, %v1452
  %v1485 = vpack.c.b16 %v1453, %v1453
  %v1486 = vpack.c.b16 %v1454, %v1454
  %v1487 = vpack.c.b16 %v1455, %v1455
  %v1488 = vpack.c.b16 %v1456, %v1456
  %v1489 = vpack.c.b16 %v1457, %v1457
  %v1490 = vpack.c.b16 %v1458, %v1458
  %v1491 = vpack.c.b16 %v1459, %v1459
  %vm1492 = vcmask 1042432
  %v1493 = vrot.slane %v1044, 5
  %v1494 = vrot.slane %v1460, 5
  %v1495 = vsel %vm1492, %v1493, %v1494
  %v1496 = vrot.slane %v1045, 5
  %v1497 = vrot.slane %v1461, 5
  %v1498 = vsel %vm1492, %v1496, %v1497
  %v1499 = vrot.slane %v1046, 5
  %v1500 = vrot.slane %v1462, 5
  %v1501 = vsel %vm1492, %v1499, %v1500
  %v1502 = vrot.slane %v1047, 5
  %v1503 = vrot.slane %v1463, 5
  %v1504 = vsel %vm1492, %v1502, %v1503
  %v1505 = vrot.slane %v1048, 5
  %v1506 = vrot.slane %v1464, 5
  %v1507 = vsel %vm1492, %v1505, %v1506
  %v1508 = vrot.slane %v1049, 5
  %v1509 = vrot.slane %v1465, 5
  %v1510 = vsel %vm1492, %v1508, %v1509
  %v1511 = vrot.slane %v1050, 5
  %v1512 = vrot.slane %v1466, 5
  %v1513 = vsel %vm1492, %v1511, %v1512
  %v1514 = vrot.slane %v1051, 5
  %v1515 = vrot.slane %v1467, 5
  %v1516 = vsel %vm1492, %v1514, %v1515
  %v1517 = vrot.slane %v1052, 5
  %v1518 = vrot.slane %v1468, 5
  %v1519 = vsel %vm1492, %v1517, %v1518
  %v1520 = vrot.slane %v1053, 5
  %v1521 = vrot.slane %v1469, 5
  %v1522 = vsel %vm1492, %v1520, %v1521
  %v1523 = vrot.slane %v1054, 5
  %v1524 = vrot.slane %v1470, 5
  %v1525 = vsel %vm1492, %v1523, %v1524
  %v1526 = vrot.slane %v1055, 5
  %v1527 = vrot.slane %v1471, 5
  %v1528 = vsel %vm1492, %v1526, %v1527
  %v1529 = vrot.slane %v1056, 5
  %v1530 = vrot.slane %v1472, 5
  %v1531 = vsel %vm1492, %v1529, %v1530
  %v1532 = vrot.slane %v1057, 5
  %v1533 = vrot.slane %v1473, 5
  %v1534 = vsel %vm1492, %v1532, %v1533
  %v1535 = vrot.slane %v1058, 5
  %v1536 = vrot.slane %v1474, 5
  %v1537 = vsel %vm1492, %v1535, %v1536
  %v1538 = vrot.slane %v1059, 5
  %v1539 = vrot.slane %v1475, 5
  %v1540 = vsel %vm1492, %v1538, %v1539
  %v1541 = vrot.slane %v1060, 5
  %v1542 = vrot.slane %v1476, 5
  %v1543 = vsel %vm1492, %v1541, %v1542
  %v1544 = vrot.slane %v1061, 5
  %v1545 = vrot.slane %v1477, 5
  %v1546 = vsel %vm1492, %v1544, %v1545
  %v1547 = vrot.slane %v1062, 5
  %v1548 = vrot.slane %v1478, 5
  %v1549 = vsel %vm1492, %v1547, %v1548
  %v1550 = vrot.slane %v1063, 5
  %v1551 = vrot.slane %v1479, 5
  %v1552 = vsel %vm1492, %v1550, %v1551
  %v1553 = vrot.slane %v1064, 5
  %v1554 = vrot.slane %v1480, 5
  %v1555 = vsel %vm1492, %v1553, %v1554
  %v1556 = vrot.slane %v1065, 5
  %v1557 = vrot.slane %v1481, 5
  %v1558 = vsel %vm1492, %v1556, %v1557
  %v1559 = vrot.slane %v1066, 5
  %v1560 = vrot.slane %v1482, 5
  %v1561 = vsel %vm1492, %v1559, %v1560
  %v1562 = vrot.slane %v1067, 5
  %v1563 = vrot.slane %v1483, 5
  %v1564 = vsel %vm1492, %v1562, %v1563
  %v1565 = vrot.slane %v1068, 5
  %v1566 = vrot.slane %v1484, 5
  %v1567 = vsel %vm1492, %v1565, %v1566
  %v1568 = vrot.slane %v1069, 5
  %v1569 = vrot.slane %v1485, 5
  %v1570 = vsel %vm1492, %v1568, %v1569
  %v1571 = vrot.slane %v1070, 5
  %v1572 = vrot.slane %v1486, 5
  %v1573 = vsel %vm1492, %v1571, %v1572
  %v1574 = vrot.slane %v1071, 5
  %v1575 = vrot.slane %v1487, 5
  %v1576 = vsel %vm1492, %v1574, %v1575
  %v1577 = vrot.slane %v1072, 5
  %v1578 = vrot.slane %v1488, 5
  %v1579 = vsel %vm1492, %v1577, %v1578
  %v1580 = vrot.slane %v1073, 5
  %v1581 = vrot.slane %v1489, 5
  %v1582 = vsel %vm1492, %v1580, %v1581
  %v1583 = vrot.slane %v1074, 5
  %v1584 = vrot.slane %v1490, 5
  %v1585 = vsel %vm1492, %v1583, %v1584
  %v1586 = vrot.slane %v1075, 5
  %v1587 = vrot.slane %v1491, 5
  %v1588 = vsel %vm1492, %v1586, %v1587
  %1589 = vrot.lane.b32.xlu0 %v1493, 8
  %v1590 = vpop.permute.xlu0 %1589
  %1591 = vrot.lane.b32.xlu0 %v1495, 8
  %v1592 = vpop.permute.xlu0 %1591
  %1593 = vrot.lane.b32.xlu0 %v1496, 8
  %v1594 = vpop.permute.xlu0 %1593
  %1595 = vrot.lane.b32.xlu0 %v1498, 8
  %v1596 = vpop.permute.xlu0 %1595
  %1597 = vrot.lane.b32.xlu0 %v1499, 8
  %v1598 = vpop.permute.xlu0 %1597
  %1599 = vrot.lane.b32.xlu0 %v1501, 8
  %v1600 = vpop.permute.xlu0 %1599
  %1601 = vrot.lane.b32.xlu0 %v1502, 8
  %v1602 = vpop.permute.xlu0 %1601
  %1603 = vrot.lane.b32.xlu0 %v1504, 8
  %v1604 = vpop.permute.xlu0 %1603
  %1605 = vrot.lane.b32.xlu0 %v1505, 8
  %v1606 = vpop.permute.xlu0 %1605
  %1607 = vrot.lane.b32.xlu0 %v1507, 8
  %v1608 = vpop.permute.xlu0 %1607
  %1609 = vrot.lane.b32.xlu0 %v1508, 8
  %v1610 = vpop.permute.xlu0 %1609
  %1611 = vrot.lane.b32.xlu0 %v1510, 8
  %v1612 = vpop.permute.xlu0 %1611
  %1613 = vrot.lane.b32.xlu0 %v1511, 8
  %v1614 = vpop.permute.xlu0 %1613
  %1615 = vrot.lane.b32.xlu0 %v1513, 8
  %v1616 = vpop.permute.xlu0 %1615
  %1617 = vrot.lane.b32.xlu0 %v1514, 8
  %v1618 = vpop.permute.xlu0 %1617
  %1619 = vrot.lane.b32.xlu0 %v1516, 8
  %v1620 = vpop.permute.xlu0 %1619
  %1621 = vrot.lane.b32.xlu0 %v1517, 8
  %v1622 = vpop.permute.xlu0 %1621
  %1623 = vrot.lane.b32.xlu0 %v1519, 8
  %v1624 = vpop.permute.xlu0 %1623
  %1625 = vrot.lane.b32.xlu0 %v1520, 8
  %v1626 = vpop.permute.xlu0 %1625
  %1627 = vrot.lane.b32.xlu0 %v1522, 8
  %v1628 = vpop.permute.xlu0 %1627
  %1629 = vrot.lane.b32.xlu0 %v1523, 8
  %v1630 = vpop.permute.xlu0 %1629
  %1631 = vrot.lane.b32.xlu0 %v1525, 8
  %v1632 = vpop.permute.xlu0 %1631
  %1633 = vrot.lane.b32.xlu0 %v1526, 8
  %v1634 = vpop.permute.xlu0 %1633
  %1635 = vrot.lane.b32.xlu0 %v1528, 8
  %v1636 = vpop.permute.xlu0 %1635
  %1637 = vrot.lane.b32.xlu0 %v1529, 8
  %v1638 = vpop.permute.xlu0 %1637
  %1639 = vrot.lane.b32.xlu0 %v1531, 8
  %v1640 = vpop.permute.xlu0 %1639
  %1641 = vrot.lane.b32.xlu0 %v1532, 8
  %v1642 = vpop.permute.xlu0 %1641
  %1643 = vrot.lane.b32.xlu0 %v1534, 8
  %v1644 = vpop.permute.xlu0 %1643
  %1645 = vrot.lane.b32.xlu0 %v1535, 8
  %v1646 = vpop.permute.xlu0 %1645
  %1647 = vrot.lane.b32.xlu0 %v1537, 8
  %v1648 = vpop.permute.xlu0 %1647
  %1649 = vrot.lane.b32.xlu0 %v1538, 8
  %v1650 = vpop.permute.xlu0 %1649
  %1651 = vrot.lane.b32.xlu0 %v1540, 8
  %v1652 = vpop.permute.xlu0 %1651
  %1653 = vrot.lane.b32.xlu0 %v1541, 8
  %v1654 = vpop.permute.xlu0 %1653
  %1655 = vrot.lane.b32.xlu0 %v1543, 8
  %v1656 = vpop.permute.xlu0 %1655
  %1657 = vrot.lane.b32.xlu0 %v1544, 8
  %v1658 = vpop.permute.xlu0 %1657
  %1659 = vrot.lane.b32.xlu0 %v1546, 8
  %v1660 = vpop.permute.xlu0 %1659
  %1661 = vrot.lane.b32.xlu0 %v1547, 8
  %v1662 = vpop.permute.xlu0 %1661
  %1663 = vrot.lane.b32.xlu0 %v1549, 8
  %v1664 = vpop.permute.xlu0 %1663
  %1665 = vrot.lane.b32.xlu0 %v1550, 8
  %v1666 = vpop.permute.xlu0 %1665
  %1667 = vrot.lane.b32.xlu0 %v1552, 8
  %v1668 = vpop.permute.xlu0 %1667
  %1669 = vrot.lane.b32.xlu0 %v1553, 8
  %v1670 = vpop.permute.xlu0 %1669
  %1671 = vrot.lane.b32.xlu0 %v1555, 8
  %v1672 = vpop.permute.xlu0 %1671
  %1673 = vrot.lane.b32.xlu0 %v1556, 8
  %v1674 = vpop.permute.xlu0 %1673
  %1675 = vrot.lane.b32.xlu0 %v1558, 8
  %v1676 = vpop.permute.xlu0 %1675
  %1677 = vrot.lane.b32.xlu0 %v1559, 8
  %v1678 = vpop.permute.xlu0 %1677
  %1679 = vrot.lane.b32.xlu0 %v1561, 8
  %v1680 = vpop.permute.xlu0 %1679
  %1681 = vrot.lane.b32.xlu0 %v1562, 8
  %v1682 = vpop.permute.xlu0 %1681
  %1683 = vrot.lane.b32.xlu0 %v1564, 8
  %v1684 = vpop.permute.xlu0 %1683
  %1685 = vrot.lane.b32.xlu0 %v1565, 8
  %v1686 = vpop.permute.xlu0 %1685
  %1687 = vrot.lane.b32.xlu0 %v1567, 8
  %v1688 = vpop.permute.xlu0 %1687
  %1689 = vrot.lane.b32.xlu0 %v1568, 8
  %v1690 = vpop.permute.xlu0 %1689
  %1691 = vrot.lane.b32.xlu0 %v1570, 8
  %v1692 = vpop.permute.xlu0 %1691
  %1693 = vrot.lane.b32.xlu0 %v1571, 8
  %v1694 = vpop.permute.xlu0 %1693
  %1695 = vrot.lane.b32.xlu0 %v1573, 8
  %v1696 = vpop.permute.xlu0 %1695
  %1697 = vrot.lane.b32.xlu0 %v1574, 8
  %v1698 = vpop.permute.xlu0 %1697
  %1699 = vrot.lane.b32.xlu0 %v1576, 8
  %v1700 = vpop.permute.xlu0 %1699
  %1701 = vrot.lane.b32.xlu0 %v1577, 8
  %v1702 = vpop.permute.xlu0 %1701
  %1703 = vrot.lane.b32.xlu0 %v1579, 8
  %v1704 = vpop.permute.xlu0 %1703
  %1705 = vrot.lane.b32.xlu0 %v1580, 8
  %v1706 = vpop.permute.xlu0 %1705
  %1707 = vrot.lane.b32.xlu0 %v1582, 8
  %v1708 = vpop.permute.xlu0 %1707
  %1709 = vrot.lane.b32.xlu0 %v1583, 8
  %v1710 = vpop.permute.xlu0 %1709
  %1711 = vrot.lane.b32.xlu0 %v1585, 8
  %v1712 = vpop.permute.xlu0 %1711
  %1713 = vrot.lane.b32.xlu0 %v1586, 8
  %v1714 = vpop.permute.xlu0 %1713
  %1715 = vrot.lane.b32.xlu0 %v1588, 8
  %v1716 = vpop.permute.xlu0 %1715
  %v1813 = vunpack.c.l.b16 %v531
  %v1814 = vunpack.c.l.b16 %v532
  %v1815 = vunpack.c.l.b16 %v533
  %v1816 = vunpack.c.l.b16 %v534
  %v1817 = vunpack.c.l.b16 %v535
  %v1818 = vunpack.c.l.b16 %v536
  %v1819 = vunpack.c.l.b16 %v537
  %v1820 = vunpack.c.l.b16 %v538
  %v1821 = vunpack.c.l.b16 %v539
  %v1822 = vunpack.c.l.b16 %v540
  %v1823 = vunpack.c.l.b16 %v541
  %v1824 = vunpack.c.l.b16 %v542
  %v1825 = vunpack.c.l.b16 %v543
  %v1826 = vunpack.c.l.b16 %v544
  %v1827 = vunpack.c.l.b16 %v545
  %v1828 = vunpack.c.l.b16 %v546
  %v1829 = vunpack.c.l.b16 %v547
  %v1830 = vunpack.c.l.b16 %v548
  %v1831 = vunpack.c.l.b16 %v549
  %v1832 = vunpack.c.l.b16 %v550
  %v1833 = vunpack.c.l.b16 %v551
  %v1834 = vunpack.c.l.b16 %v552
  %v1835 = vunpack.c.l.b16 %v553
  %v1836 = vunpack.c.l.b16 %v554
  %v1837 = vunpack.c.l.b16 %v555
  %v1838 = vunpack.c.l.b16 %v556
  %v1839 = vunpack.c.l.b16 %v557
  %v1840 = vunpack.c.l.b16 %v558
  %v1841 = vunpack.c.l.b16 %v559
  %v1842 = vunpack.c.l.b16 %v560
  %v1843 = vunpack.c.l.b16 %v561
  %v1844 = vunpack.c.l.b16 %v562
  %v1845 = vunpack.c.l.b16 %v563
  %v1846 = vunpack.c.l.b16 %v564
  %v1847 = vunpack.c.l.b16 %v565
  %v1848 = vunpack.c.l.b16 %v566
  %v1849 = vunpack.c.l.b16 %v567
  %v1850 = vunpack.c.l.b16 %v568
  %v1851 = vunpack.c.l.b16 %v569
  %v1852 = vunpack.c.l.b16 %v570
  %v1853 = vunpack.c.l.b16 %v571
  %v1854 = vunpack.c.l.b16 %v572
  %v1855 = vunpack.c.l.b16 %v573
  %v1856 = vunpack.c.l.b16 %v574
  %v1857 = vunpack.c.l.b16 %v575
  %v1858 = vunpack.c.l.b16 %v576
  %v1859 = vunpack.c.l.b16 %v577
  %v1860 = vunpack.c.l.b16 %v578
  %v1861 = vunpack.c.l.b16 %v579
  %v1862 = vunpack.c.l.b16 %v580
  %v1863 = vunpack.c.l.b16 %v581
  %v1864 = vunpack.c.l.b16 %v582
  %v1865 = vunpack.c.l.b16 %v583
  %v1866 = vunpack.c.l.b16 %v584
  %v1867 = vunpack.c.l.b16 %v585
  %v1868 = vunpack.c.l.b16 %v586
  %v1869 = vunpack.c.l.b16 %v587
  %v1870 = vunpack.c.l.b16 %v588
  %v1871 = vunpack.c.l.b16 %v589
  %v1872 = vunpack.c.l.b16 %v590
  %v1873 = vunpack.c.l.b16 %v591
  %v1874 = vunpack.c.l.b16 %v592
  %v1875 = vunpack.c.l.b16 %v593
  %v1876 = vunpack.c.l.b16 %v594
  %v1877 = vunpack.c.l.b16 %v595
  %v1878 = vunpack.c.l.b16 %v596
  %v1879 = vunpack.c.l.b16 %v597
  %v1880 = vunpack.c.l.b16 %v598
  %v1881 = vunpack.c.l.b16 %v599
  %v1882 = vunpack.c.l.b16 %v600
  %v1883 = vunpack.c.l.b16 %v601
  %v1884 = vunpack.c.l.b16 %v602
  %v1885 = vunpack.c.l.b16 %v603
  %v1886 = vunpack.c.l.b16 %v604
  %v1887 = vunpack.c.l.b16 %v605
  %v1888 = vunpack.c.l.b16 %v606
  %v1889 = vunpack.c.l.b16 %v607
  %v1890 = vunpack.c.l.b16 %v608
  %v1891 = vunpack.c.l.b16 %v609
  %v1892 = vunpack.c.l.b16 %v610
  %v1893 = vunpack.c.l.b16 %v611
  %v1894 = vunpack.c.l.b16 %v612
  %v1895 = vunpack.c.l.b16 %v613
  %v1896 = vunpack.c.l.b16 %v614
  %v1897 = vunpack.c.l.b16 %v615
  %v1898 = vunpack.c.l.b16 %v616
  %v1899 = vunpack.c.l.b16 %v617
  %v1900 = vunpack.c.l.b16 %v618
  %v1901 = vunpack.c.l.b16 %v619
  %v1902 = vunpack.c.l.b16 %v620
  %v1903 = vunpack.c.l.b16 %v621
  %v1904 = vunpack.c.l.b16 %v622
  %v1905 = vunpack.c.l.b16 %v623
  %v1906 = vunpack.c.l.b16 %v624
  %v1907 = vunpack.c.l.b16 %v625
  %v1908 = vunpack.c.l.b16 %v626
  %v1909 = vpack.c.b16 %v1814, %v1813
  %v1910 = vpack.c.b16 %v1815, %v1815
  %v1911 = vpack.c.b16 %v1817, %v1816
  %v1912 = vpack.c.b16 %v1818, %v1818
  %v1913 = vpack.c.b16 %v1820, %v1819
  %v1914 = vpack.c.b16 %v1821, %v1821
  %v1915 = vpack.c.b16 %v1823, %v1822
  %v1916 = vpack.c.b16 %v1824, %v1824
  %v1917 = vpack.c.b16 %v1826, %v1825
  %v1918 = vpack.c.b16 %v1827, %v1827
  %v1919 = vpack.c.b16 %v1829, %v1828
  %v1920 = vpack.c.b16 %v1830, %v1830
  %v1921 = vpack.c.b16 %v1832, %v1831
  %v1922 = vpack.c.b16 %v1833, %v1833
  %v1923 = vpack.c.b16 %v1835, %v1834
  %v1924 = vpack.c.b16 %v1836, %v1836
  %v1925 = vpack.c.b16 %v1838, %v1837
  %v1926 = vpack.c.b16 %v1839, %v1839
  %v1927 = vpack.c.b16 %v1841, %v1840
  %v1928 = vpack.c.b16 %v1842, %v1842
  %v1929 = vpack.c.b16 %v1844, %v1843
  %v1930 = vpack.c.b16 %v1845, %v1845
  %v1931 = vpack.c.b16 %v1847, %v1846
  %v1932 = vpack.c.b16 %v1848, %v1848
  %v1933 = vpack.c.b16 %v1850, %v1849
  %v1934 = vpack.c.b16 %v1851, %v1851
  %v1935 = vpack.c.b16 %v1853, %v1852
  %v1936 = vpack.c.b16 %v1854, %v1854
  %v1937 = vpack.c.b16 %v1856, %v1855
  %v1938 = vpack.c.b16 %v1857, %v1857
  %v1939 = vpack.c.b16 %v1859, %v1858
  %v1940 = vpack.c.b16 %v1860, %v1860
  %v1941 = vpack.c.b16 %v1862, %v1861
  %v1942 = vpack.c.b16 %v1863, %v1863
  %v1943 = vpack.c.b16 %v1865, %v1864
  %v1944 = vpack.c.b16 %v1866, %v1866
  %v1945 = vpack.c.b16 %v1868, %v1867
  %v1946 = vpack.c.b16 %v1869, %v1869
  %v1947 = vpack.c.b16 %v1871, %v1870
  %v1948 = vpack.c.b16 %v1872, %v1872
  %v1949 = vpack.c.b16 %v1874, %v1873
  %v1950 = vpack.c.b16 %v1875, %v1875
  %v1951 = vpack.c.b16 %v1877, %v1876
  %v1952 = vpack.c.b16 %v1878, %v1878
  %v1953 = vpack.c.b16 %v1880, %v1879
  %v1954 = vpack.c.b16 %v1881, %v1881
  %v1955 = vpack.c.b16 %v1883, %v1882
  %v1956 = vpack.c.b16 %v1884, %v1884
  %v1957 = vpack.c.b16 %v1886, %v1885
  %v1958 = vpack.c.b16 %v1887, %v1887
  %v1959 = vpack.c.b16 %v1889, %v1888
  %v1960 = vpack.c.b16 %v1890, %v1890
  %v1961 = vpack.c.b16 %v1892, %v1891
  %v1962 = vpack.c.b16 %v1893, %v1893
  %v1963 = vpack.c.b16 %v1895, %v1894
  %v1964 = vpack.c.b16 %v1896, %v1896
  %v1965 = vpack.c.b16 %v1898, %v1897
  %v1966 = vpack.c.b16 %v1899, %v1899
  %v1967 = vpack.c.b16 %v1901, %v1900
  %v1968 = vpack.c.b16 %v1902, %v1902
  %v1969 = vpack.c.b16 %v1904, %v1903
  %v1970 = vpack.c.b16 %v1905, %v1905
  %v1971 = vpack.c.b16 %v1907, %v1906
  %v1972 = vpack.c.b16 %v1908, %v1908
  %1973 = vrot.lane.b32.xlu0 %v1909, 12
  %v1974 = vpop.permute.xlu0 %1973
  %1975 = vrot.lane.b32.xlu0 %v1910, 12
  %v1976 = vpop.permute.xlu0 %1975
  %1977 = vrot.lane.b32.xlu0 %v1911, 12
  %v1978 = vpop.permute.xlu0 %1977
  %1979 = vrot.lane.b32.xlu0 %v1912, 12
  %v1980 = vpop.permute.xlu0 %1979
  %1981 = vrot.lane.b32.xlu0 %v1913, 12
  %v1982 = vpop.permute.xlu0 %1981
  %1983 = vrot.lane.b32.xlu0 %v1914, 12
  %v1984 = vpop.permute.xlu0 %1983
  %1985 = vrot.lane.b32.xlu0 %v1915, 12
  %v1986 = vpop.permute.xlu0 %1985
  %1987 = vrot.lane.b32.xlu0 %v1916, 12
  %v1988 = vpop.permute.xlu0 %1987
  %1989 = vrot.lane.b32.xlu0 %v1917, 12
  %v1990 = vpop.permute.xlu0 %1989
  %1991 = vrot.lane.b32.xlu0 %v1918, 12
  %v1992 = vpop.permute.xlu0 %1991
  %1993 = vrot.lane.b32.xlu0 %v1919, 12
  %v1994 = vpop.permute.xlu0 %1993
  %1995 = vrot.lane.b32.xlu0 %v1920, 12
  %v1996 = vpop.permute.xlu0 %1995
  %1997 = vrot.lane.b32.xlu0 %v1921, 12
  %v1998 = vpop.permute.xlu0 %1997
  %1999 = vrot.lane.b32.xlu0 %v1922, 12
  %v2000 = vpop.permute.xlu0 %1999
  %2001 = vrot.lane.b32.xlu0 %v1923, 12
  %v2002 = vpop.permute.xlu0 %2001
  %2003 = vrot.lane.b32.xlu0 %v1924, 12
  %v2004 = vpop.permute.xlu0 %2003
  %2005 = vrot.lane.b32.xlu0 %v1925, 12
  %v2006 = vpop.permute.xlu0 %2005
  %2007 = vrot.lane.b32.xlu0 %v1926, 12
  %v2008 = vpop.permute.xlu0 %2007
  %2009 = vrot.lane.b32.xlu0 %v1927, 12
  %v2010 = vpop.permute.xlu0 %2009
  %2011 = vrot.lane.b32.xlu0 %v1928, 12
  %v2012 = vpop.permute.xlu0 %2011
  %2013 = vrot.lane.b32.xlu0 %v1929, 12
  %v2014 = vpop.permute.xlu0 %2013
  %2015 = vrot.lane.b32.xlu0 %v1930, 12
  %v2016 = vpop.permute.xlu0 %2015
  %2017 = vrot.lane.b32.xlu0 %v1931, 12
  %v2018 = vpop.permute.xlu0 %2017
  %2019 = vrot.lane.b32.xlu0 %v1932, 12
  %v2020 = vpop.permute.xlu0 %2019
  %2021 = vrot.lane.b32.xlu0 %v1933, 12
  %v2022 = vpop.permute.xlu0 %2021
  %2023 = vrot.lane.b32.xlu0 %v1934, 12
  %v2024 = vpop.permute.xlu0 %2023
  %2025 = vrot.lane.b32.xlu0 %v1935, 12
  %v2026 = vpop.permute.xlu0 %2025
  %2027 = vrot.lane.b32.xlu0 %v1936, 12
  %v2028 = vpop.permute.xlu0 %2027
  %2029 = vrot.lane.b32.xlu0 %v1937, 12
  %v2030 = vpop.permute.xlu0 %2029
  %2031 = vrot.lane.b32.xlu0 %v1938, 12
  %v2032 = vpop.permute.xlu0 %2031
  %2033 = vrot.lane.b32.xlu0 %v1939, 12
  %v2034 = vpop.permute.xlu0 %2033
  %2035 = vrot.lane.b32.xlu0 %v1940, 12
  %v2036 = vpop.permute.xlu0 %2035
  %2037 = vrot.lane.b32.xlu0 %v1941, 12
  %v2038 = vpop.permute.xlu0 %2037
  %2039 = vrot.lane.b32.xlu0 %v1942, 12
  %v2040 = vpop.permute.xlu0 %2039
  %2041 = vrot.lane.b32.xlu0 %v1943, 12
  %v2042 = vpop.permute.xlu0 %2041
  %2043 = vrot.lane.b32.xlu0 %v1944, 12
  %v2044 = vpop.permute.xlu0 %2043
  %2045 = vrot.lane.b32.xlu0 %v1945, 12
  %v2046 = vpop.permute.xlu0 %2045
  %2047 = vrot.lane.b32.xlu0 %v1946, 12
  %v2048 = vpop.permute.xlu0 %2047
  %2049 = vrot.lane.b32.xlu0 %v1947, 12
  %v2050 = vpop.permute.xlu0 %2049
  %2051 = vrot.lane.b32.xlu0 %v1948, 12
  %v2052 = vpop.permute.xlu0 %2051
  %2053 = vrot.lane.b32.xlu0 %v1949, 12
  %v2054 = vpop.permute.xlu0 %2053
  %2055 = vrot.lane.b32.xlu0 %v1950, 12
  %v2056 = vpop.permute.xlu0 %2055
  %2057 = vrot.lane.b32.xlu0 %v1951, 12
  %v2058 = vpop.permute.xlu0 %2057
  %2059 = vrot.lane.b32.xlu0 %v1952, 12
  %v2060 = vpop.permute.xlu0 %2059
  %2061 = vrot.lane.b32.xlu0 %v1953, 12
  %v2062 = vpop.permute.xlu0 %2061
  %2063 = vrot.lane.b32.xlu0 %v1954, 12
  %v2064 = vpop.permute.xlu0 %2063
  %2065 = vrot.lane.b32.xlu0 %v1955, 12
  %v2066 = vpop.permute.xlu0 %2065
  %2067 = vrot.lane.b32.xlu0 %v1956, 12
  %v2068 = vpop.permute.xlu0 %2067
  %2069 = vrot.lane.b32.xlu0 %v1957, 12
  %v2070 = vpop.permute.xlu0 %2069
  %2071 = vrot.lane.b32.xlu0 %v1958, 12
  %v2072 = vpop.permute.xlu0 %2071
  %2073 = vrot.lane.b32.xlu0 %v1959, 12
  %v2074 = vpop.permute.xlu0 %2073
  %2075 = vrot.lane.b32.xlu0 %v1960, 12
  %v2076 = vpop.permute.xlu0 %2075
  %2077 = vrot.lane.b32.xlu0 %v1961, 12
  %v2078 = vpop.permute.xlu0 %2077
  %2079 = vrot.lane.b32.xlu0 %v1962, 12
  %v2080 = vpop.permute.xlu0 %2079
  %2081 = vrot.lane.b32.xlu0 %v1963, 12
  %v2082 = vpop.permute.xlu0 %2081
  %2083 = vrot.lane.b32.xlu0 %v1964, 12
  %v2084 = vpop.permute.xlu0 %2083
  %2085 = vrot.lane.b32.xlu0 %v1965, 12
  %v2086 = vpop.permute.xlu0 %2085
  %2087 = vrot.lane.b32.xlu0 %v1966, 12
  %v2088 = vpop.permute.xlu0 %2087
  %2089 = vrot.lane.b32.xlu0 %v1967, 12
  %v2090 = vpop.permute.xlu0 %2089
  %2091 = vrot.lane.b32.xlu0 %v1968, 12
  %v2092 = vpop.permute.xlu0 %2091
  %2093 = vrot.lane.b32.xlu0 %v1969, 12
  %v2094 = vpop.permute.xlu0 %2093
  %2095 = vrot.lane.b32.xlu0 %v1970, 12
  %v2096 = vpop.permute.xlu0 %2095
  %2097 = vrot.lane.b32.xlu0 %v1971, 12
  %v2098 = vpop.permute.xlu0 %2097
  %2099 = vrot.lane.b32.xlu0 %v1972, 12
  %v2100 = vpop.permute.xlu0 %2099
  %v2101 = vpack.c.b16 %v1815, %v1814
  %v2102 = vpack.c.b16 %v1818, %v1817
  %v2103 = vpack.c.b16 %v1821, %v1820
  %v2104 = vpack.c.b16 %v1824, %v1823
  %v2105 = vpack.c.b16 %v1827, %v1826
  %v2106 = vpack.c.b16 %v1830, %v1829
  %v2107 = vpack.c.b16 %v1833, %v1832
  %v2108 = vpack.c.b16 %v1836, %v1835
  %v2109 = vpack.c.b16 %v1839, %v1838
  %v2110 = vpack.c.b16 %v1842, %v1841
  %v2111 = vpack.c.b16 %v1845, %v1844
  %v2112 = vpack.c.b16 %v1848, %v1847
  %v2113 = vpack.c.b16 %v1851, %v1850
  %v2114 = vpack.c.b16 %v1854, %v1853
  %v2115 = vpack.c.b16 %v1857, %v1856
  %v2116 = vpack.c.b16 %v1860, %v1859
  %v2117 = vpack.c.b16 %v1863, %v1862
  %v2118 = vpack.c.b16 %v1866, %v1865
  %v2119 = vpack.c.b16 %v1869, %v1868
  %v2120 = vpack.c.b16 %v1872, %v1871
  %v2121 = vpack.c.b16 %v1875, %v1874
  %v2122 = vpack.c.b16 %v1878, %v1877
  %v2123 = vpack.c.b16 %v1881, %v1880
  %v2124 = vpack.c.b16 %v1884, %v1883
  %v2125 = vpack.c.b16 %v1887, %v1886
  %v2126 = vpack.c.b16 %v1890, %v1889
  %v2127 = vpack.c.b16 %v1893, %v1892
  %v2128 = vpack.c.b16 %v1896, %v1895
  %v2129 = vpack.c.b16 %v1899, %v1898
  %v2130 = vpack.c.b16 %v1902, %v1901
  %v2131 = vpack.c.b16 %v1905, %v1904
  %v2132 = vpack.c.b16 %v1908, %v1907
  %v2134 = vshrl.u32 %v2101, 16
  %v2136 = vrot.slane %v2134, 4
  %v2137 = vshll.u32 %v2101, 16
  %v2139 = vrot.slane %v2137, 5
  %v2140 = vor.u32 %v2136, %v2139
  %v2142 = vshrl.u32 %v2102, 16
  %v2144 = vrot.slane %v2142, 4
  %v2145 = vshll.u32 %v2102, 16
  %v2147 = vrot.slane %v2145, 5
  %v2148 = vor.u32 %v2144, %v2147
  %v2150 = vshrl.u32 %v2103, 16
  %v2152 = vrot.slane %v2150, 4
  %v2153 = vshll.u32 %v2103, 16
  %v2155 = vrot.slane %v2153, 5
  %v2156 = vor.u32 %v2152, %v2155
  %v2158 = vshrl.u32 %v2104, 16
  %v2160 = vrot.slane %v2158, 4
  %v2161 = vshll.u32 %v2104, 16
  %v2163 = vrot.slane %v2161, 5
  %v2164 = vor.u32 %v2160, %v2163
  %v2166 = vshrl.u32 %v2105, 16
  %v2168 = vrot.slane %v2166, 4
  %v2169 = vshll.u32 %v2105, 16
  %v2171 = vrot.slane %v2169, 5
  %v2172 = vor.u32 %v2168, %v2171
  %v2174 = vshrl.u32 %v2106, 16
  %v2176 = vrot.slane %v2174, 4
  %v2177 = vshll.u32 %v2106, 16
  %v2179 = vrot.slane %v2177, 5
  %v2180 = vor.u32 %v2176, %v2179
  %v2182 = vshrl.u32 %v2107, 16
  %v2184 = vrot.slane %v2182, 4
  %v2185 = vshll.u32 %v2107, 16
  %v2187 = vrot.slane %v2185, 5
  %v2188 = vor.u32 %v2184, %v2187
  %v2190 = vshrl.u32 %v2108, 16
  %v2192 = vrot.slane %v2190, 4
  %v2193 = vshll.u32 %v2108, 16
  %v2195 = vrot.slane %v2193, 5
  %v2196 = vor.u32 %v2192, %v2195
  %v2198 = vshrl.u32 %v2109, 16
  %v2200 = vrot.slane %v2198, 4
  %v2201 = vshll.u32 %v2109, 16
  %v2203 = vrot.slane %v2201, 5
  %v2204 = vor.u32 %v2200, %v2203
  %v2206 = vshrl.u32 %v2110, 16
  %v2208 = vrot.slane %v2206, 4
  %v2209 = vshll.u32 %v2110, 16
  %v2211 = vrot.slane %v2209, 5
  %v2212 = vor.u32 %v2208, %v2211
  %v2214 = vshrl.u32 %v2111, 16
  %v2216 = vrot.slane %v2214, 4
  %v2217 = vshll.u32 %v2111, 16
  %v2219 = vrot.slane %v2217, 5
  %v2220 = vor.u32 %v2216, %v2219
  %v2222 = vshrl.u32 %v2112, 16
  %v2224 = vrot.slane %v2222, 4
  %v2225 = vshll.u32 %v2112, 16
  %v2227 = vrot.slane %v2225, 5
  %v2228 = vor.u32 %v2224, %v2227
  %v2230 = vshrl.u32 %v2113, 16
  %v2232 = vrot.slane %v2230, 4
  %v2233 = vshll.u32 %v2113, 16
  %v2235 = vrot.slane %v2233, 5
  %v2236 = vor.u32 %v2232, %v2235
  %v2238 = vshrl.u32 %v2114, 16
  %v2240 = vrot.slane %v2238, 4
  %v2241 = vshll.u32 %v2114, 16
  %v2243 = vrot.slane %v2241, 5
  %v2244 = vor.u32 %v2240, %v2243
  %v2246 = vshrl.u32 %v2115, 16
  %v2248 = vrot.slane %v2246, 4
  %v2249 = vshll.u32 %v2115, 16
  %v2251 = vrot.slane %v2249, 5
  %v2252 = vor.u32 %v2248, %v2251
  %v2254 = vshrl.u32 %v2116, 16
  %v2256 = vrot.slane %v2254, 4
  %v2257 = vshll.u32 %v2116, 16
  %v2259 = vrot.slane %v2257, 5
  %v2260 = vor.u32 %v2256, %v2259
  %v2262 = vshrl.u32 %v2117, 16
  %v2264 = vrot.slane %v2262, 4
  %v2265 = vshll.u32 %v2117, 16
  %v2267 = vrot.slane %v2265, 5
  %v2268 = vor.u32 %v2264, %v2267
  %v2270 = vshrl.u32 %v2118, 16
  %v2272 = vrot.slane %v2270, 4
  %v2273 = vshll.u32 %v2118, 16
  %v2275 = vrot.slane %v2273, 5
  %v2276 = vor.u32 %v2272, %v2275
  %v2278 = vshrl.u32 %v2119, 16
  %v2280 = vrot.slane %v2278, 4
  %v2281 = vshll.u32 %v2119, 16
  %v2283 = vrot.slane %v2281, 5
  %v2284 = vor.u32 %v2280, %v2283
  %v2286 = vshrl.u32 %v2120, 16
  %v2288 = vrot.slane %v2286, 4
  %v2289 = vshll.u32 %v2120, 16
  %v2291 = vrot.slane %v2289, 5
  %v2292 = vor.u32 %v2288, %v2291
  %v2294 = vshrl.u32 %v2121, 16
  %v2296 = vrot.slane %v2294, 4
  %v2297 = vshll.u32 %v2121, 16
  %v2299 = vrot.slane %v2297, 5
  %v2300 = vor.u32 %v2296, %v2299
  %v2302 = vshrl.u32 %v2122, 16
  %v2304 = vrot.slane %v2302, 4
  %v2305 = vshll.u32 %v2122, 16
  %v2307 = vrot.slane %v2305, 5
  %v2308 = vor.u32 %v2304, %v2307
  %v2310 = vshrl.u32 %v2123, 16
  %v2312 = vrot.slane %v2310, 4
  %v2313 = vshll.u32 %v2123, 16
  %v2315 = vrot.slane %v2313, 5
  %v2316 = vor.u32 %v2312, %v2315
  %v2318 = vshrl.u32 %v2124, 16
  %v2320 = vrot.slane %v2318, 4
  %v2321 = vshll.u32 %v2124, 16
  %v2323 = vrot.slane %v2321, 5
  %v2324 = vor.u32 %v2320, %v2323
  %v2326 = vshrl.u32 %v2125, 16
  %v2328 = vrot.slane %v2326, 4
  %v2329 = vshll.u32 %v2125, 16
  %v2331 = vrot.slane %v2329, 5
  %v2332 = vor.u32 %v2328, %v2331
  %v2334 = vshrl.u32 %v2126, 16
  %v2336 = vrot.slane %v2334, 4
  %v2337 = vshll.u32 %v2126, 16
  %v2339 = vrot.slane %v2337, 5
  %v2340 = vor.u32 %v2336, %v2339
  %v2342 = vshrl.u32 %v2127, 16
  %v2344 = vrot.slane %v2342, 4
  %v2345 = vshll.u32 %v2127, 16
  %v2347 = vrot.slane %v2345, 5
  %v2348 = vor.u32 %v2344, %v2347
  %v2350 = vshrl.u32 %v2128, 16
  %v2352 = vrot.slane %v2350, 4
  %v2353 = vshll.u32 %v2128, 16
  %v2355 = vrot.slane %v2353, 5
  %v2356 = vor.u32 %v2352, %v2355
  %v2358 = vshrl.u32 %v2129, 16
  %v2360 = vrot.slane %v2358, 4
  %v2361 = vshll.u32 %v2129, 16
  %v2363 = vrot.slane %v2361, 5
  %v2364 = vor.u32 %v2360, %v2363
  %v2366 = vshrl.u32 %v2130, 16
  %v2368 = vrot.slane %v2366, 4
  %v2369 = vshll.u32 %v2130, 16
  %v2371 = vrot.slane %v2369, 5
  %v2372 = vor.u32 %v2368, %v2371
  %v2374 = vshrl.u32 %v2131, 16
  %v2376 = vrot.slane %v2374, 4
  %v2377 = vshll.u32 %v2131, 16
  %v2379 = vrot.slane %v2377, 5
  %v2380 = vor.u32 %v2376, %v2379
  %v2382 = vshrl.u32 %v2132, 16
  %v2384 = vrot.slane %v2382, 4
  %v2385 = vshll.u32 %v2132, 16
  %v2387 = vrot.slane %v2385, 5
  %v2388 = vor.u32 %v2384, %v2387
  %2389 = vrot.lane.b32.xlu0 %v2140, 16
  %v2390 = vpop.permute.xlu0 %2389
  %2391 = vrot.lane.b32.xlu0 %v2148, 16
  %v2392 = vpop.permute.xlu0 %2391
  %2393 = vrot.lane.b32.xlu0 %v2156, 16
  %v2394 = vpop.permute.xlu0 %2393
  %2395 = vrot.lane.b32.xlu0 %v2164, 16
  %v2396 = vpop.permute.xlu0 %2395
  %2397 = vrot.lane.b32.xlu0 %v2172, 16
  %v2398 = vpop.permute.xlu0 %2397
  %2399 = vrot.lane.b32.xlu0 %v2180, 16
  %v2400 = vpop.permute.xlu0 %2399
  %2401 = vrot.lane.b32.xlu0 %v2188, 16
  %v2402 = vpop.permute.xlu0 %2401
  %2403 = vrot.lane.b32.xlu0 %v2196, 16
  %v2404 = vpop.permute.xlu0 %2403
  %2405 = vrot.lane.b32.xlu0 %v2204, 16
  %v2406 = vpop.permute.xlu0 %2405
  %2407 = vrot.lane.b32.xlu0 %v2212, 16
  %v2408 = vpop.permute.xlu0 %2407
  %2409 = vrot.lane.b32.xlu0 %v2220, 16
  %v2410 = vpop.permute.xlu0 %2409
  %2411 = vrot.lane.b32.xlu0 %v2228, 16
  %v2412 = vpop.permute.xlu0 %2411
  %2413 = vrot.lane.b32.xlu0 %v2236, 16
  %v2414 = vpop.permute.xlu0 %2413
  %2415 = vrot.lane.b32.xlu0 %v2244, 16
  %v2416 = vpop.permute.xlu0 %2415
  %2417 = vrot.lane.b32.xlu0 %v2252, 16
  %v2418 = vpop.permute.xlu0 %2417
  %2419 = vrot.lane.b32.xlu0 %v2260, 16
  %v2420 = vpop.permute.xlu0 %2419
  %2421 = vrot.lane.b32.xlu0 %v2268, 16
  %v2422 = vpop.permute.xlu0 %2421
  %2423 = vrot.lane.b32.xlu0 %v2276, 16
  %v2424 = vpop.permute.xlu0 %2423
  %2425 = vrot.lane.b32.xlu0 %v2284, 16
  %v2426 = vpop.permute.xlu0 %2425
  %2427 = vrot.lane.b32.xlu0 %v2292, 16
  %v2428 = vpop.permute.xlu0 %2427
  %2429 = vrot.lane.b32.xlu0 %v2300, 16
  %v2430 = vpop.permute.xlu0 %2429
  %2431 = vrot.lane.b32.xlu0 %v2308, 16
  %v2432 = vpop.permute.xlu0 %2431
  %2433 = vrot.lane.b32.xlu0 %v2316, 16
  %v2434 = vpop.permute.xlu0 %2433
  %2435 = vrot.lane.b32.xlu0 %v2324, 16
  %v2436 = vpop.permute.xlu0 %2435
  %2437 = vrot.lane.b32.xlu0 %v2332, 16
  %v2438 = vpop.permute.xlu0 %2437
  %2439 = vrot.lane.b32.xlu0 %v2340, 16
  %v2440 = vpop.permute.xlu0 %2439
  %2441 = vrot.lane.b32.xlu0 %v2348, 16
  %v2442 = vpop.permute.xlu0 %2441
  %2443 = vrot.lane.b32.xlu0 %v2356, 16
  %v2444 = vpop.permute.xlu0 %2443
  %2445 = vrot.lane.b32.xlu0 %v2364, 16
  %v2446 = vpop.permute.xlu0 %2445
  %2447 = vrot.lane.b32.xlu0 %v2372, 16
  %v2448 = vpop.permute.xlu0 %2447
  %2449 = vrot.lane.b32.xlu0 %v2380, 16
  %v2450 = vpop.permute.xlu0 %2449
  %2451 = vrot.lane.b32.xlu0 %v2388, 16
  %v2452 = vpop.permute.xlu0 %2451
  %v2485 = vunpack.c.l.b16 %v627
  %v2486 = vunpack.c.l.b16 %v628
  %v2487 = vunpack.c.l.b16 %v629
  %v2488 = vunpack.c.l.b16 %v630
  %v2489 = vunpack.c.l.b16 %v631
  %v2490 = vunpack.c.l.b16 %v632
  %v2491 = vunpack.c.l.b16 %v633
  %v2492 = vunpack.c.l.b16 %v634
  %v2493 = vunpack.c.l.b16 %v635
  %v2494 = vunpack.c.l.b16 %v636
  %v2495 = vunpack.c.l.b16 %v637
  %v2496 = vunpack.c.l.b16 %v638
  %v2497 = vunpack.c.l.b16 %v639
  %v2498 = vunpack.c.l.b16 %v640
  %v2499 = vunpack.c.l.b16 %v641
  %v2500 = vunpack.c.l.b16 %v642
  %v2501 = vunpack.c.l.b16 %v643
  %v2502 = vunpack.c.l.b16 %v644
  %v2503 = vunpack.c.l.b16 %v645
  %v2504 = vunpack.c.l.b16 %v646
  %v2505 = vunpack.c.l.b16 %v647
  %v2506 = vunpack.c.l.b16 %v648
  %v2507 = vunpack.c.l.b16 %v649
  %v2508 = vunpack.c.l.b16 %v650
  %v2509 = vunpack.c.l.b16 %v651
  %v2510 = vunpack.c.l.b16 %v652
  %v2511 = vunpack.c.l.b16 %v653
  %v2512 = vunpack.c.l.b16 %v654
  %v2513 = vunpack.c.l.b16 %v655
  %v2514 = vunpack.c.l.b16 %v656
  %v2515 = vunpack.c.l.b16 %v657
  %v2516 = vunpack.c.l.b16 %v658
  %v2517 = vpack.c.b16 %v2485, %v2485
  %v2518 = vpack.c.b16 %v2486, %v2486
  %v2519 = vpack.c.b16 %v2487, %v2487
  %v2520 = vpack.c.b16 %v2488, %v2488
  %v2521 = vpack.c.b16 %v2489, %v2489
  %v2522 = vpack.c.b16 %v2490, %v2490
  %v2523 = vpack.c.b16 %v2491, %v2491
  %v2524 = vpack.c.b16 %v2492, %v2492
  %v2525 = vpack.c.b16 %v2493, %v2493
  %v2526 = vpack.c.b16 %v2494, %v2494
  %v2527 = vpack.c.b16 %v2495, %v2495
  %v2528 = vpack.c.b16 %v2496, %v2496
  %v2529 = vpack.c.b16 %v2497, %v2497
  %v2530 = vpack.c.b16 %v2498, %v2498
  %v2531 = vpack.c.b16 %v2499, %v2499
  %v2532 = vpack.c.b16 %v2500, %v2500
  %v2533 = vpack.c.b16 %v2501, %v2501
  %v2534 = vpack.c.b16 %v2502, %v2502
  %v2535 = vpack.c.b16 %v2503, %v2503
  %v2536 = vpack.c.b16 %v2504, %v2504
  %v2537 = vpack.c.b16 %v2505, %v2505
  %v2538 = vpack.c.b16 %v2506, %v2506
  %v2539 = vpack.c.b16 %v2507, %v2507
  %v2540 = vpack.c.b16 %v2508, %v2508
  %v2541 = vpack.c.b16 %v2509, %v2509
  %v2542 = vpack.c.b16 %v2510, %v2510
  %v2543 = vpack.c.b16 %v2511, %v2511
  %v2544 = vpack.c.b16 %v2512, %v2512
  %v2545 = vpack.c.b16 %v2513, %v2513
  %v2546 = vpack.c.b16 %v2514, %v2514
  %v2547 = vpack.c.b16 %v2515, %v2515
  %v2548 = vpack.c.b16 %v2516, %v2516
  %v2549 = vrot.slane %v2101, 5
  %v2550 = vrot.slane %v2517, 5
  %v2551 = vsel %vm1492, %v2549, %v2550
  %v2552 = vrot.slane %v2102, 5
  %v2553 = vrot.slane %v2518, 5
  %v2554 = vsel %vm1492, %v2552, %v2553
  %v2555 = vrot.slane %v2103, 5
  %v2556 = vrot.slane %v2519, 5
  %v2557 = vsel %vm1492, %v2555, %v2556
  %v2558 = vrot.slane %v2104, 5
  %v2559 = vrot.slane %v2520, 5
  %v2560 = vsel %vm1492, %v2558, %v2559
  %v2561 = vrot.slane %v2105, 5
  %v2562 = vrot.slane %v2521, 5
  %v2563 = vsel %vm1492, %v2561, %v2562
  %v2564 = vrot.slane %v2106, 5
  %v2565 = vrot.slane %v2522, 5
  %v2566 = vsel %vm1492, %v2564, %v2565
  %v2567 = vrot.slane %v2107, 5
  %v2568 = vrot.slane %v2523, 5
  %v2569 = vsel %vm1492, %v2567, %v2568
  %v2570 = vrot.slane %v2108, 5
  %v2571 = vrot.slane %v2524, 5
  %v2572 = vsel %vm1492, %v2570, %v2571
  %v2573 = vrot.slane %v2109, 5
  %v2574 = vrot.slane %v2525, 5
  %v2575 = vsel %vm1492, %v2573, %v2574
  %v2576 = vrot.slane %v2110, 5
  %v2577 = vrot.slane %v2526, 5
  %v2578 = vsel %vm1492, %v2576, %v2577
  %v2579 = vrot.slane %v2111, 5
  %v2580 = vrot.slane %v2527, 5
  %v2581 = vsel %vm1492, %v2579, %v2580
  %v2582 = vrot.slane %v2112, 5
  %v2583 = vrot.slane %v2528, 5
  %v2584 = vsel %vm1492, %v2582, %v2583
  %v2585 = vrot.slane %v2113, 5
  %v2586 = vrot.slane %v2529, 5
  %v2587 = vsel %vm1492, %v2585, %v2586
  %v2588 = vrot.slane %v2114, 5
  %v2589 = vrot.slane %v2530, 5
  %v2590 = vsel %vm1492, %v2588, %v2589
  %v2591 = vrot.slane %v2115, 5
  %v2592 = vrot.slane %v2531, 5
  %v2593 = vsel %vm1492, %v2591, %v2592
  %v2594 = vrot.slane %v2116, 5
  %v2595 = vrot.slane %v2532, 5
  %v2596 = vsel %vm1492, %v2594, %v2595
  %v2597 = vrot.slane %v2117, 5
  %v2598 = vrot.slane %v2533, 5
  %v2599 = vsel %vm1492, %v2597, %v2598
  %v2600 = vrot.slane %v2118, 5
  %v2601 = vrot.slane %v2534, 5
  %v2602 = vsel %vm1492, %v2600, %v2601
  %v2603 = vrot.slane %v2119, 5
  %v2604 = vrot.slane %v2535, 5
  %v2605 = vsel %vm1492, %v2603, %v2604
  %v2606 = vrot.slane %v2120, 5
  %v2607 = vrot.slane %v2536, 5
  %v2608 = vsel %vm1492, %v2606, %v2607
  %v2609 = vrot.slane %v2121, 5
  %v2610 = vrot.slane %v2537, 5
  %v2611 = vsel %vm1492, %v2609, %v2610
  %v2612 = vrot.slane %v2122, 5
  %v2613 = vrot.slane %v2538, 5
  %v2614 = vsel %vm1492, %v2612, %v2613
  %v2615 = vrot.slane %v2123, 5
  %v2616 = vrot.slane %v2539, 5
  %v2617 = vsel %vm1492, %v2615, %v2616
  %v2618 = vrot.slane %v2124, 5
  %v2619 = vrot.slane %v2540, 5
  %v2620 = vsel %vm1492, %v2618, %v2619
  %v2621 = vrot.slane %v2125, 5
  %v2622 = vrot.slane %v2541, 5
  %v2623 = vsel %vm1492, %v2621, %v2622
  %v2624 = vrot.slane %v2126, 5
  %v2625 = vrot.slane %v2542, 5
  %v2626 = vsel %vm1492, %v2624, %v2625
  %v2627 = vrot.slane %v2127, 5
  %v2628 = vrot.slane %v2543, 5
  %v2629 = vsel %vm1492, %v2627, %v2628
  %v2630 = vrot.slane %v2128, 5
  %v2631 = vrot.slane %v2544, 5
  %v2632 = vsel %vm1492, %v2630, %v2631
  %v2633 = vrot.slane %v2129, 5
  %v2634 = vrot.slane %v2545, 5
  %v2635 = vsel %vm1492, %v2633, %v2634
  %v2636 = vrot.slane %v2130, 5
  %v2637 = vrot.slane %v2546, 5
  %v2638 = vsel %vm1492, %v2636, %v2637
  %v2639 = vrot.slane %v2131, 5
  %v2640 = vrot.slane %v2547, 5
  %v2641 = vsel %vm1492, %v2639, %v2640
  %v2642 = vrot.slane %v2132, 5
  %v2643 = vrot.slane %v2548, 5
  %v2644 = vsel %vm1492, %v2642, %v2643
  %2645 = vrot.lane.b32.xlu0 %v2549, 20
  %v2646 = vpop.permute.xlu0 %2645
  %2647 = vrot.lane.b32.xlu0 %v2551, 20
  %v2648 = vpop.permute.xlu0 %2647
  %2649 = vrot.lane.b32.xlu0 %v2552, 20
  %v2650 = vpop.permute.xlu0 %2649
  %2651 = vrot.lane.b32.xlu0 %v2554, 20
  %v2652 = vpop.permute.xlu0 %2651
  %2653 = vrot.lane.b32.xlu0 %v2555, 20
  %v2654 = vpop.permute.xlu0 %2653
  %2655 = vrot.lane.b32.xlu0 %v2557, 20
  %v2656 = vpop.permute.xlu0 %2655
  %2657 = vrot.lane.b32.xlu0 %v2558, 20
  %v2658 = vpop.permute.xlu0 %2657
  %2659 = vrot.lane.b32.xlu0 %v2560, 20
  %v2660 = vpop.permute.xlu0 %2659
  %2661 = vrot.lane.b32.xlu0 %v2561, 20
  %v2662 = vpop.permute.xlu0 %2661
  %2663 = vrot.lane.b32.xlu0 %v2563, 20
  %v2664 = vpop.permute.xlu0 %2663
  %2665 = vrot.lane.b32.xlu0 %v2564, 20
  %v2666 = vpop.permute.xlu0 %2665
  %2667 = vrot.lane.b32.xlu0 %v2566, 20
  %v2668 = vpop.permute.xlu0 %2667
  %2669 = vrot.lane.b32.xlu0 %v2567, 20
  %v2670 = vpop.permute.xlu0 %2669
  %2671 = vrot.lane.b32.xlu0 %v2569, 20
  %v2672 = vpop.permute.xlu0 %2671
  %2673 = vrot.lane.b32.xlu0 %v2570, 20
  %v2674 = vpop.permute.xlu0 %2673
  %2675 = vrot.lane.b32.xlu0 %v2572, 20
  %v2676 = vpop.permute.xlu0 %2675
  %2677 = vrot.lane.b32.xlu0 %v2573, 20
  %v2678 = vpop.permute.xlu0 %2677
  %2679 = vrot.lane.b32.xlu0 %v2575, 20
  %v2680 = vpop.permute.xlu0 %2679
  %2681 = vrot.lane.b32.xlu0 %v2576, 20
  %v2682 = vpop.permute.xlu0 %2681
  %2683 = vrot.lane.b32.xlu0 %v2578, 20
  %v2684 = vpop.permute.xlu0 %2683
  %2685 = vrot.lane.b32.xlu0 %v2579, 20
  %v2686 = vpop.permute.xlu0 %2685
  %2687 = vrot.lane.b32.xlu0 %v2581, 20
  %v2688 = vpop.permute.xlu0 %2687
  %2689 = vrot.lane.b32.xlu0 %v2582, 20
  %v2690 = vpop.permute.xlu0 %2689
  %2691 = vrot.lane.b32.xlu0 %v2584, 20
  %v2692 = vpop.permute.xlu0 %2691
  %2693 = vrot.lane.b32.xlu0 %v2585, 20
  %v2694 = vpop.permute.xlu0 %2693
  %2695 = vrot.lane.b32.xlu0 %v2587, 20
  %v2696 = vpop.permute.xlu0 %2695
  %2697 = vrot.lane.b32.xlu0 %v2588, 20
  %v2698 = vpop.permute.xlu0 %2697
  %2699 = vrot.lane.b32.xlu0 %v2590, 20
  %v2700 = vpop.permute.xlu0 %2699
  %2701 = vrot.lane.b32.xlu0 %v2591, 20
  %v2702 = vpop.permute.xlu0 %2701
  %2703 = vrot.lane.b32.xlu0 %v2593, 20
  %v2704 = vpop.permute.xlu0 %2703
  %2705 = vrot.lane.b32.xlu0 %v2594, 20
  %v2706 = vpop.permute.xlu0 %2705
  %2707 = vrot.lane.b32.xlu0 %v2596, 20
  %v2708 = vpop.permute.xlu0 %2707
  %2709 = vrot.lane.b32.xlu0 %v2597, 20
  %v2710 = vpop.permute.xlu0 %2709
  %2711 = vrot.lane.b32.xlu0 %v2599, 20
  %v2712 = vpop.permute.xlu0 %2711
  %2713 = vrot.lane.b32.xlu0 %v2600, 20
  %v2714 = vpop.permute.xlu0 %2713
  %2715 = vrot.lane.b32.xlu0 %v2602, 20
  %v2716 = vpop.permute.xlu0 %2715
  %2717 = vrot.lane.b32.xlu0 %v2603, 20
  %v2718 = vpop.permute.xlu0 %2717
  %2719 = vrot.lane.b32.xlu0 %v2605, 20
  %v2720 = vpop.permute.xlu0 %2719
  %2721 = vrot.lane.b32.xlu0 %v2606, 20
  %v2722 = vpop.permute.xlu0 %2721
  %2723 = vrot.lane.b32.xlu0 %v2608, 20
  %v2724 = vpop.permute.xlu0 %2723
  %2725 = vrot.lane.b32.xlu0 %v2609, 20
  %v2726 = vpop.permute.xlu0 %2725
  %2727 = vrot.lane.b32.xlu0 %v2611, 20
  %v2728 = vpop.permute.xlu0 %2727
  %2729 = vrot.lane.b32.xlu0 %v2612, 20
  %v2730 = vpop.permute.xlu0 %2729
  %2731 = vrot.lane.b32.xlu0 %v2614, 20
  %v2732 = vpop.permute.xlu0 %2731
  %2733 = vrot.lane.b32.xlu0 %v2615, 20
  %v2734 = vpop.permute.xlu0 %2733
  %2735 = vrot.lane.b32.xlu0 %v2617, 20
  %v2736 = vpop.permute.xlu0 %2735
  %2737 = vrot.lane.b32.xlu0 %v2618, 20
  %v2738 = vpop.permute.xlu0 %2737
  %2739 = vrot.lane.b32.xlu0 %v2620, 20
  %v2740 = vpop.permute.xlu0 %2739
  %2741 = vrot.lane.b32.xlu0 %v2621, 20
  %v2742 = vpop.permute.xlu0 %2741
  %2743 = vrot.lane.b32.xlu0 %v2623, 20
  %v2744 = vpop.permute.xlu0 %2743
  %2745 = vrot.lane.b32.xlu0 %v2624, 20
  %v2746 = vpop.permute.xlu0 %2745
  %2747 = vrot.lane.b32.xlu0 %v2626, 20
  %v2748 = vpop.permute.xlu0 %2747
  %2749 = vrot.lane.b32.xlu0 %v2627, 20
  %v2750 = vpop.permute.xlu0 %2749
  %2751 = vrot.lane.b32.xlu0 %v2629, 20
  %v2752 = vpop.permute.xlu0 %2751
  %2753 = vrot.lane.b32.xlu0 %v2630, 20
  %v2754 = vpop.permute.xlu0 %2753
  %2755 = vrot.lane.b32.xlu0 %v2632, 20
  %v2756 = vpop.permute.xlu0 %2755
  %2757 = vrot.lane.b32.xlu0 %v2633, 20
  %v2758 = vpop.permute.xlu0 %2757
  %2759 = vrot.lane.b32.xlu0 %v2635, 20
  %v2760 = vpop.permute.xlu0 %2759
  %2761 = vrot.lane.b32.xlu0 %v2636, 20
  %v2762 = vpop.permute.xlu0 %2761
  %2763 = vrot.lane.b32.xlu0 %v2638, 20
  %v2764 = vpop.permute.xlu0 %2763
  %2765 = vrot.lane.b32.xlu0 %v2639, 20
  %v2766 = vpop.permute.xlu0 %2765
  %2767 = vrot.lane.b32.xlu0 %v2641, 20
  %v2768 = vpop.permute.xlu0 %2767
  %2769 = vrot.lane.b32.xlu0 %v2642, 20
  %v2770 = vpop.permute.xlu0 %2769
  %2771 = vrot.lane.b32.xlu0 %v2644, 20
  %v2772 = vpop.permute.xlu0 %2771
  %v2869 = vunpack.c.l.b16 %v660
  %v2870 = vunpack.c.l.b16 %v661
  %v2871 = vunpack.c.l.b16 %v662
  %v2872 = vunpack.c.l.b16 %v663
  %v2873 = vunpack.c.l.b16 %v664
  %v2874 = vunpack.c.l.b16 %v665
  %v2875 = vunpack.c.l.b16 %v666
  %v2876 = vunpack.c.l.b16 %v667
  %v2877 = vunpack.c.l.b16 %v668
  %v2878 = vunpack.c.l.b16 %v669
  %v2879 = vunpack.c.l.b16 %v670
  %v2880 = vunpack.c.l.b16 %v671
  %v2881 = vunpack.c.l.b16 %v672
  %v2882 = vunpack.c.l.b16 %v673
  %v2883 = vunpack.c.l.b16 %v674
  %v2884 = vunpack.c.l.b16 %v675
  %v2885 = vunpack.c.l.b16 %v676
  %v2886 = vunpack.c.l.b16 %v677
  %v2887 = vunpack.c.l.b16 %v678
  %v2888 = vunpack.c.l.b16 %v679
  %v2889 = vunpack.c.l.b16 %v680
  %v2890 = vunpack.c.l.b16 %v681
  %v2891 = vunpack.c.l.b16 %v682
  %v2892 = vunpack.c.l.b16 %v683
  %v2893 = vunpack.c.l.b16 %v684
  %v2894 = vunpack.c.l.b16 %v685
  %v2895 = vunpack.c.l.b16 %v686
  %v2896 = vunpack.c.l.b16 %v687
  %v2897 = vunpack.c.l.b16 %v688
  %v2898 = vunpack.c.l.b16 %v689
  %v2899 = vunpack.c.l.b16 %v690
  %v2900 = vunpack.c.l.b16 %v691
  %v2901 = vunpack.c.l.b16 %v692
  %v2902 = vunpack.c.l.b16 %v693
  %v2903 = vunpack.c.l.b16 %v694
  %v2904 = vunpack.c.l.b16 %v695
  %v2905 = vunpack.c.l.b16 %v696
  %v2906 = vunpack.c.l.b16 %v697
  %v2907 = vunpack.c.l.b16 %v698
  %v2908 = vunpack.c.l.b16 %v699
  %v2909 = vunpack.c.l.b16 %v700
  %v2910 = vunpack.c.l.b16 %v701
  %v2911 = vunpack.c.l.b16 %v702
  %v2912 = vunpack.c.l.b16 %v703
  %v2913 = vunpack.c.l.b16 %v704
  %v2914 = vunpack.c.l.b16 %v705
  %v2915 = vunpack.c.l.b16 %v706
  %v2916 = vunpack.c.l.b16 %v707
  %v2917 = vunpack.c.l.b16 %v708
  %v2918 = vunpack.c.l.b16 %v709
  %v2919 = vunpack.c.l.b16 %v710
  %v2920 = vunpack.c.l.b16 %v711
  %v2921 = vunpack.c.l.b16 %v712
  %v2922 = vunpack.c.l.b16 %v713
  %v2923 = vunpack.c.l.b16 %v714
  %v2924 = vunpack.c.l.b16 %v715
  %v2925 = vunpack.c.l.b16 %v716
  %v2926 = vunpack.c.l.b16 %v717
  %v2927 = vunpack.c.l.b16 %v718
  %v2928 = vunpack.c.l.b16 %v719
  %v2929 = vunpack.c.l.b16 %v720
  %v2930 = vunpack.c.l.b16 %v721
  %v2931 = vunpack.c.l.b16 %v722
  %v2932 = vunpack.c.l.b16 %v723
  %v2933 = vunpack.c.l.b16 %v724
  %v2934 = vunpack.c.l.b16 %v725
  %v2935 = vunpack.c.l.b16 %v726
  %v2936 = vunpack.c.l.b16 %v727
  %v2937 = vunpack.c.l.b16 %v728
  %v2938 = vunpack.c.l.b16 %v729
  %v2939 = vunpack.c.l.b16 %v730
  %v2940 = vunpack.c.l.b16 %v731
  %v2941 = vunpack.c.l.b16 %v732
  %v2942 = vunpack.c.l.b16 %v733
  %v2943 = vunpack.c.l.b16 %v734
  %v2944 = vunpack.c.l.b16 %v735
  %v2945 = vunpack.c.l.b16 %v736
  %v2946 = vunpack.c.l.b16 %v737
  %v2947 = vunpack.c.l.b16 %v738
  %v2948 = vunpack.c.l.b16 %v739
  %v2949 = vunpack.c.l.b16 %v740
  %v2950 = vunpack.c.l.b16 %v741
  %v2951 = vunpack.c.l.b16 %v742
  %v2952 = vunpack.c.l.b16 %v743
  %v2953 = vunpack.c.l.b16 %v744
  %v2954 = vunpack.c.l.b16 %v745
  %v2955 = vunpack.c.l.b16 %v746
  %v2956 = vunpack.c.l.b16 %v747
  %v2957 = vunpack.c.l.b16 %v748
  %v2958 = vunpack.c.l.b16 %v749
  %v2959 = vunpack.c.l.b16 %v750
  %v2960 = vunpack.c.l.b16 %v751
  %v2961 = vunpack.c.l.b16 %v752
  %v2962 = vunpack.c.l.b16 %v753
  %v2963 = vunpack.c.l.b16 %v754
  %v2964 = vunpack.c.l.b16 %v755
  %v2965 = vpack.c.b16 %v2870, %v2869
  %v2966 = vpack.c.b16 %v2871, %v2871
  %v2967 = vpack.c.b16 %v2873, %v2872
  %v2968 = vpack.c.b16 %v2874, %v2874
  %v2969 = vpack.c.b16 %v2876, %v2875
  %v2970 = vpack.c.b16 %v2877, %v2877
  %v2971 = vpack.c.b16 %v2879, %v2878
  %v2972 = vpack.c.b16 %v2880, %v2880
  %v2973 = vpack.c.b16 %v2882, %v2881
  %v2974 = vpack.c.b16 %v2883, %v2883
  %v2975 = vpack.c.b16 %v2885, %v2884
  %v2976 = vpack.c.b16 %v2886, %v2886
  %v2977 = vpack.c.b16 %v2888, %v2887
  %v2978 = vpack.c.b16 %v2889, %v2889
  %v2979 = vpack.c.b16 %v2891, %v2890
  %v2980 = vpack.c.b16 %v2892, %v2892
  %v2981 = vpack.c.b16 %v2894, %v2893
  %v2982 = vpack.c.b16 %v2895, %v2895
  %v2983 = vpack.c.b16 %v2897, %v2896
  %v2984 = vpack.c.b16 %v2898, %v2898
  %v2985 = vpack.c.b16 %v2900, %v2899
  %v2986 = vpack.c.b16 %v2901, %v2901
  %v2987 = vpack.c.b16 %v2903, %v2902
  %v2988 = vpack.c.b16 %v2904, %v2904
  %v2989 = vpack.c.b16 %v2906, %v2905
  %v2990 = vpack.c.b16 %v2907, %v2907
  %v2991 = vpack.c.b16 %v2909, %v2908
  %v2992 = vpack.c.b16 %v2910, %v2910
  %v2993 = vpack.c.b16 %v2912, %v2911
  %v2994 = vpack.c.b16 %v2913, %v2913
  %v2995 = vpack.c.b16 %v2915, %v2914
  %v2996 = vpack.c.b16 %v2916, %v2916
  %v2997 = vpack.c.b16 %v2918, %v2917
  %v2998 = vpack.c.b16 %v2919, %v2919
  %v2999 = vpack.c.b16 %v2921, %v2920
  %v3000 = vpack.c.b16 %v2922, %v2922
  %v3001 = vpack.c.b16 %v2924, %v2923
  %v3002 = vpack.c.b16 %v2925, %v2925
  %v3003 = vpack.c.b16 %v2927, %v2926
  %v3004 = vpack.c.b16 %v2928, %v2928
  %v3005 = vpack.c.b16 %v2930, %v2929
  %v3006 = vpack.c.b16 %v2931, %v2931
  %v3007 = vpack.c.b16 %v2933, %v2932
  %v3008 = vpack.c.b16 %v2934, %v2934
  %v3009 = vpack.c.b16 %v2936, %v2935
  %v3010 = vpack.c.b16 %v2937, %v2937
  %v3011 = vpack.c.b16 %v2939, %v2938
  %v3012 = vpack.c.b16 %v2940, %v2940
  %v3013 = vpack.c.b16 %v2942, %v2941
  %v3014 = vpack.c.b16 %v2943, %v2943
  %v3015 = vpack.c.b16 %v2945, %v2944
  %v3016 = vpack.c.b16 %v2946, %v2946
  %v3017 = vpack.c.b16 %v2948, %v2947
  %v3018 = vpack.c.b16 %v2949, %v2949
  %v3019 = vpack.c.b16 %v2951, %v2950
  %v3020 = vpack.c.b16 %v2952, %v2952
  %v3021 = vpack.c.b16 %v2954, %v2953
  %v3022 = vpack.c.b16 %v2955, %v2955
  %v3023 = vpack.c.b16 %v2957, %v2956
  %v3024 = vpack.c.b16 %v2958, %v2958
  %v3025 = vpack.c.b16 %v2960, %v2959
  %v3026 = vpack.c.b16 %v2961, %v2961
  %v3027 = vpack.c.b16 %v2963, %v2962
  %v3028 = vpack.c.b16 %v2964, %v2964
  %3029 = vrot.lane.b32.xlu0 %v2965, 24
  %v3030 = vpop.permute.xlu0 %3029
  %3031 = vrot.lane.b32.xlu0 %v2966, 24
  %v3032 = vpop.permute.xlu0 %3031
  %3033 = vrot.lane.b32.xlu0 %v2967, 24
  %v3034 = vpop.permute.xlu0 %3033
  %3035 = vrot.lane.b32.xlu0 %v2968, 24
  %v3036 = vpop.permute.xlu0 %3035
  %3037 = vrot.lane.b32.xlu0 %v2969, 24
  %v3038 = vpop.permute.xlu0 %3037
  %3039 = vrot.lane.b32.xlu0 %v2970, 24
  %v3040 = vpop.permute.xlu0 %3039
  %3041 = vrot.lane.b32.xlu0 %v2971, 24
  %v3042 = vpop.permute.xlu0 %3041
  %3043 = vrot.lane.b32.xlu0 %v2972, 24
  %v3044 = vpop.permute.xlu0 %3043
  %3045 = vrot.lane.b32.xlu0 %v2973, 24
  %v3046 = vpop.permute.xlu0 %3045
  %3047 = vrot.lane.b32.xlu0 %v2974, 24
  %v3048 = vpop.permute.xlu0 %3047
  %3049 = vrot.lane.b32.xlu0 %v2975, 24
  %v3050 = vpop.permute.xlu0 %3049
  %3051 = vrot.lane.b32.xlu0 %v2976, 24
  %v3052 = vpop.permute.xlu0 %3051
  %3053 = vrot.lane.b32.xlu0 %v2977, 24
  %v3054 = vpop.permute.xlu0 %3053
  %3055 = vrot.lane.b32.xlu0 %v2978, 24
  %v3056 = vpop.permute.xlu0 %3055
  %3057 = vrot.lane.b32.xlu0 %v2979, 24
  %v3058 = vpop.permute.xlu0 %3057
  %3059 = vrot.lane.b32.xlu0 %v2980, 24
  %v3060 = vpop.permute.xlu0 %3059
  %3061 = vrot.lane.b32.xlu0 %v2981, 24
  %v3062 = vpop.permute.xlu0 %3061
  %3063 = vrot.lane.b32.xlu0 %v2982, 24
  %v3064 = vpop.permute.xlu0 %3063
  %3065 = vrot.lane.b32.xlu0 %v2983, 24
  %v3066 = vpop.permute.xlu0 %3065
  %3067 = vrot.lane.b32.xlu0 %v2984, 24
  %v3068 = vpop.permute.xlu0 %3067
  %3069 = vrot.lane.b32.xlu0 %v2985, 24
  %v3070 = vpop.permute.xlu0 %3069
  %3071 = vrot.lane.b32.xlu0 %v2986, 24
  %v3072 = vpop.permute.xlu0 %3071
  %3073 = vrot.lane.b32.xlu0 %v2987, 24
  %v3074 = vpop.permute.xlu0 %3073
  %3075 = vrot.lane.b32.xlu0 %v2988, 24
  %v3076 = vpop.permute.xlu0 %3075
  %3077 = vrot.lane.b32.xlu0 %v2989, 24
  %v3078 = vpop.permute.xlu0 %3077
  %3079 = vrot.lane.b32.xlu0 %v2990, 24
  %v3080 = vpop.permute.xlu0 %3079
  %3081 = vrot.lane.b32.xlu0 %v2991, 24
  %v3082 = vpop.permute.xlu0 %3081
  %3083 = vrot.lane.b32.xlu0 %v2992, 24
  %v3084 = vpop.permute.xlu0 %3083
  %3085 = vrot.lane.b32.xlu0 %v2993, 24
  %v3086 = vpop.permute.xlu0 %3085
  %3087 = vrot.lane.b32.xlu0 %v2994, 24
  %v3088 = vpop.permute.xlu0 %3087
  %3089 = vrot.lane.b32.xlu0 %v2995, 24
  %v3090 = vpop.permute.xlu0 %3089
  %3091 = vrot.lane.b32.xlu0 %v2996, 24
  %v3092 = vpop.permute.xlu0 %3091
  %3093 = vrot.lane.b32.xlu0 %v2997, 24
  %v3094 = vpop.permute.xlu0 %3093
  %3095 = vrot.lane.b32.xlu0 %v2998, 24
  %v3096 = vpop.permute.xlu0 %3095
  %3097 = vrot.lane.b32.xlu0 %v2999, 24
  %v3098 = vpop.permute.xlu0 %3097
  %3099 = vrot.lane.b32.xlu0 %v3000, 24
  %v3100 = vpop.permute.xlu0 %3099
  %3101 = vrot.lane.b32.xlu0 %v3001, 24
  %v3102 = vpop.permute.xlu0 %3101
  %3103 = vrot.lane.b32.xlu0 %v3002, 24
  %v3104 = vpop.permute.xlu0 %3103
  %3105 = vrot.lane.b32.xlu0 %v3003, 24
  %v3106 = vpop.permute.xlu0 %3105
  %3107 = vrot.lane.b32.xlu0 %v3004, 24
  %v3108 = vpop.permute.xlu0 %3107
  %3109 = vrot.lane.b32.xlu0 %v3005, 24
  %v3110 = vpop.permute.xlu0 %3109
  %3111 = vrot.lane.b32.xlu0 %v3006, 24
  %v3112 = vpop.permute.xlu0 %3111
  %3113 = vrot.lane.b32.xlu0 %v3007, 24
  %v3114 = vpop.permute.xlu0 %3113
  %3115 = vrot.lane.b32.xlu0 %v3008, 24
  %v3116 = vpop.permute.xlu0 %3115
  %3117 = vrot.lane.b32.xlu0 %v3009, 24
  %v3118 = vpop.permute.xlu0 %3117
  %3119 = vrot.lane.b32.xlu0 %v3010, 24
  %v3120 = vpop.permute.xlu0 %3119
  %3121 = vrot.lane.b32.xlu0 %v3011, 24
  %v3122 = vpop.permute.xlu0 %3121
  %3123 = vrot.lane.b32.xlu0 %v3012, 24
  %v3124 = vpop.permute.xlu0 %3123
  %3125 = vrot.lane.b32.xlu0 %v3013, 24
  %v3126 = vpop.permute.xlu0 %3125
  %3127 = vrot.lane.b32.xlu0 %v3014, 24
  %v3128 = vpop.permute.xlu0 %3127
  %3129 = vrot.lane.b32.xlu0 %v3015, 24
  %v3130 = vpop.permute.xlu0 %3129
  %3131 = vrot.lane.b32.xlu0 %v3016, 24
  %v3132 = vpop.permute.xlu0 %3131
  %3133 = vrot.lane.b32.xlu0 %v3017, 24
  %v3134 = vpop.permute.xlu0 %3133
  %3135 = vrot.lane.b32.xlu0 %v3018, 24
  %v3136 = vpop.permute.xlu0 %3135
  %3137 = vrot.lane.b32.xlu0 %v3019, 24
  %v3138 = vpop.permute.xlu0 %3137
  %3139 = vrot.lane.b32.xlu0 %v3020, 24
  %v3140 = vpop.permute.xlu0 %3139
  %3141 = vrot.lane.b32.xlu0 %v3021, 24
  %v3142 = vpop.permute.xlu0 %3141
  %3143 = vrot.lane.b32.xlu0 %v3022, 24
  %v3144 = vpop.permute.xlu0 %3143
  %3145 = vrot.lane.b32.xlu0 %v3023, 24
  %v3146 = vpop.permute.xlu0 %3145
  %3147 = vrot.lane.b32.xlu0 %v3024, 24
  %v3148 = vpop.permute.xlu0 %3147
  %3149 = vrot.lane.b32.xlu0 %v3025, 24
  %v3150 = vpop.permute.xlu0 %3149
  %3151 = vrot.lane.b32.xlu0 %v3026, 24
  %v3152 = vpop.permute.xlu0 %3151
  %3153 = vrot.lane.b32.xlu0 %v3027, 24
  %v3154 = vpop.permute.xlu0 %3153
  %3155 = vrot.lane.b32.xlu0 %v3028, 24
  %v3156 = vpop.permute.xlu0 %3155
  %v3157 = vpack.c.b16 %v2871, %v2870
  %v3158 = vpack.c.b16 %v2874, %v2873
  %v3159 = vpack.c.b16 %v2877, %v2876
  %v3160 = vpack.c.b16 %v2880, %v2879
  %v3161 = vpack.c.b16 %v2883, %v2882
  %v3162 = vpack.c.b16 %v2886, %v2885
  %v3163 = vpack.c.b16 %v2889, %v2888
  %v3164 = vpack.c.b16 %v2892, %v2891
  %v3165 = vpack.c.b16 %v2895, %v2894
  %v3166 = vpack.c.b16 %v2898, %v2897
  %v3167 = vpack.c.b16 %v2901, %v2900
  %v3168 = vpack.c.b16 %v2904, %v2903
  %v3169 = vpack.c.b16 %v2907, %v2906
  %v3170 = vpack.c.b16 %v2910, %v2909
  %v3171 = vpack.c.b16 %v2913, %v2912
  %v3172 = vpack.c.b16 %v2916, %v2915
  %v3173 = vpack.c.b16 %v2919, %v2918
  %v3174 = vpack.c.b16 %v2922, %v2921
  %v3175 = vpack.c.b16 %v2925, %v2924
  %v3176 = vpack.c.b16 %v2928, %v2927
  %v3177 = vpack.c.b16 %v2931, %v2930
  %v3178 = vpack.c.b16 %v2934, %v2933
  %v3179 = vpack.c.b16 %v2937, %v2936
  %v3180 = vpack.c.b16 %v2940, %v2939
  %v3181 = vpack.c.b16 %v2943, %v2942
  %v3182 = vpack.c.b16 %v2946, %v2945
  %v3183 = vpack.c.b16 %v2949, %v2948
  %v3184 = vpack.c.b16 %v2952, %v2951
  %v3185 = vpack.c.b16 %v2955, %v2954
  %v3186 = vpack.c.b16 %v2958, %v2957
  %v3187 = vpack.c.b16 %v2961, %v2960
  %v3188 = vpack.c.b16 %v2964, %v2963
  %v3190 = vshrl.u32 %v3157, 16
  %v3192 = vrot.slane %v3190, 4
  %v3193 = vshll.u32 %v3157, 16
  %v3195 = vrot.slane %v3193, 5
  %v3196 = vor.u32 %v3192, %v3195
  %v3198 = vshrl.u32 %v3158, 16
  %v3200 = vrot.slane %v3198, 4
  %v3201 = vshll.u32 %v3158, 16
  %v3203 = vrot.slane %v3201, 5
  %v3204 = vor.u32 %v3200, %v3203
  %v3206 = vshrl.u32 %v3159, 16
  %v3208 = vrot.slane %v3206, 4
  %v3209 = vshll.u32 %v3159, 16
  %v3211 = vrot.slane %v3209, 5
  %v3212 = vor.u32 %v3208, %v3211
  %v3214 = vshrl.u32 %v3160, 16
  %v3216 = vrot.slane %v3214, 4
  %v3217 = vshll.u32 %v3160, 16
  %v3219 = vrot.slane %v3217, 5
  %v3220 = vor.u32 %v3216, %v3219
  %v3222 = vshrl.u32 %v3161, 16
  %v3224 = vrot.slane %v3222, 4
  %v3225 = vshll.u32 %v3161, 16
  %v3227 = vrot.slane %v3225, 5
  %v3228 = vor.u32 %v3224, %v3227
  %v3230 = vshrl.u32 %v3162, 16
  %v3232 = vrot.slane %v3230, 4
  %v3233 = vshll.u32 %v3162, 16
  %v3235 = vrot.slane %v3233, 5
  %v3236 = vor.u32 %v3232, %v3235
  %v3238 = vshrl.u32 %v3163, 16
  %v3240 = vrot.slane %v3238, 4
  %v3241 = vshll.u32 %v3163, 16
  %v3243 = vrot.slane %v3241, 5
  %v3244 = vor.u32 %v3240, %v3243
  %v3246 = vshrl.u32 %v3164, 16
  %v3248 = vrot.slane %v3246, 4
  %v3249 = vshll.u32 %v3164, 16
  %v3251 = vrot.slane %v3249, 5
  %v3252 = vor.u32 %v3248, %v3251
  %v3254 = vshrl.u32 %v3165, 16
  %v3256 = vrot.slane %v3254, 4
  %v3257 = vshll.u32 %v3165, 16
  %v3259 = vrot.slane %v3257, 5
  %v3260 = vor.u32 %v3256, %v3259
  %v3262 = vshrl.u32 %v3166, 16
  %v3264 = vrot.slane %v3262, 4
  %v3265 = vshll.u32 %v3166, 16
  %v3267 = vrot.slane %v3265, 5
  %v3268 = vor.u32 %v3264, %v3267
  %v3270 = vshrl.u32 %v3167, 16
  %v3272 = vrot.slane %v3270, 4
  %v3273 = vshll.u32 %v3167, 16
  %v3275 = vrot.slane %v3273, 5
  %v3276 = vor.u32 %v3272, %v3275
  %v3278 = vshrl.u32 %v3168, 16
  %v3280 = vrot.slane %v3278, 4
  %v3281 = vshll.u32 %v3168, 16
  %v3283 = vrot.slane %v3281, 5
  %v3284 = vor.u32 %v3280, %v3283
  %v3286 = vshrl.u32 %v3169, 16
  %v3288 = vrot.slane %v3286, 4
  %v3289 = vshll.u32 %v3169, 16
  %v3291 = vrot.slane %v3289, 5
  %v3292 = vor.u32 %v3288, %v3291
  %v3294 = vshrl.u32 %v3170, 16
  %v3296 = vrot.slane %v3294, 4
  %v3297 = vshll.u32 %v3170, 16
  %v3299 = vrot.slane %v3297, 5
  %v3300 = vor.u32 %v3296, %v3299
  %v3302 = vshrl.u32 %v3171, 16
  %v3304 = vrot.slane %v3302, 4
  %v3305 = vshll.u32 %v3171, 16
  %v3307 = vrot.slane %v3305, 5
  %v3308 = vor.u32 %v3304, %v3307
  %v3310 = vshrl.u32 %v3172, 16
  %v3312 = vrot.slane %v3310, 4
  %v3313 = vshll.u32 %v3172, 16
  %v3315 = vrot.slane %v3313, 5
  %v3316 = vor.u32 %v3312, %v3315
  %v3318 = vshrl.u32 %v3173, 16
  %v3320 = vrot.slane %v3318, 4
  %v3321 = vshll.u32 %v3173, 16
  %v3323 = vrot.slane %v3321, 5
  %v3324 = vor.u32 %v3320, %v3323
  %v3326 = vshrl.u32 %v3174, 16
  %v3328 = vrot.slane %v3326, 4
  %v3329 = vshll.u32 %v3174, 16
  %v3331 = vrot.slane %v3329, 5
  %v3332 = vor.u32 %v3328, %v3331
  %v3334 = vshrl.u32 %v3175, 16
  %v3336 = vrot.slane %v3334, 4
  %v3337 = vshll.u32 %v3175, 16
  %v3339 = vrot.slane %v3337, 5
  %v3340 = vor.u32 %v3336, %v3339
  %v3342 = vshrl.u32 %v3176, 16
  %v3344 = vrot.slane %v3342, 4
  %v3345 = vshll.u32 %v3176, 16
  %v3347 = vrot.slane %v3345, 5
  %v3348 = vor.u32 %v3344, %v3347
  %v3350 = vshrl.u32 %v3177, 16
  %v3352 = vrot.slane %v3350, 4
  %v3353 = vshll.u32 %v3177, 16
  %v3355 = vrot.slane %v3353, 5
  %v3356 = vor.u32 %v3352, %v3355
  %v3358 = vshrl.u32 %v3178, 16
  %v3360 = vrot.slane %v3358, 4
  %v3361 = vshll.u32 %v3178, 16
  %v3363 = vrot.slane %v3361, 5
  %v3364 = vor.u32 %v3360, %v3363
  %v3366 = vshrl.u32 %v3179, 16
  %v3368 = vrot.slane %v3366, 4
  %v3369 = vshll.u32 %v3179, 16
  %v3371 = vrot.slane %v3369, 5
  %v3372 = vor.u32 %v3368, %v3371
  %v3374 = vshrl.u32 %v3180, 16
  %v3376 = vrot.slane %v3374, 4
  %v3377 = vshll.u32 %v3180, 16
  %v3379 = vrot.slane %v3377, 5
  %v3380 = vor.u32 %v3376, %v3379
  %v3382 = vshrl.u32 %v3181, 16
  %v3384 = vrot.slane %v3382, 4
  %v3385 = vshll.u32 %v3181, 16
  %v3387 = vrot.slane %v3385, 5
  %v3388 = vor.u32 %v3384, %v3387
  %v3390 = vshrl.u32 %v3182, 16
  %v3392 = vrot.slane %v3390, 4
  %v3393 = vshll.u32 %v3182, 16
  %v3395 = vrot.slane %v3393, 5
  %v3396 = vor.u32 %v3392, %v3395
  %v3398 = vshrl.u32 %v3183, 16
  %v3400 = vrot.slane %v3398, 4
  %v3401 = vshll.u32 %v3183, 16
  %v3403 = vrot.slane %v3401, 5
  %v3404 = vor.u32 %v3400, %v3403
  %v3406 = vshrl.u32 %v3184, 16
  %v3408 = vrot.slane %v3406, 4
  %v3409 = vshll.u32 %v3184, 16
  %v3411 = vrot.slane %v3409, 5
  %v3412 = vor.u32 %v3408, %v3411
  %v3414 = vshrl.u32 %v3185, 16
  %v3416 = vrot.slane %v3414, 4
  %v3417 = vshll.u32 %v3185, 16
  %v3419 = vrot.slane %v3417, 5
  %v3420 = vor.u32 %v3416, %v3419
  %v3422 = vshrl.u32 %v3186, 16
  %v3424 = vrot.slane %v3422, 4
  %v3425 = vshll.u32 %v3186, 16
  %v3427 = vrot.slane %v3425, 5
  %v3428 = vor.u32 %v3424, %v3427
  %v3430 = vshrl.u32 %v3187, 16
  %v3432 = vrot.slane %v3430, 4
  %v3433 = vshll.u32 %v3187, 16
  %v3435 = vrot.slane %v3433, 5
  %v3436 = vor.u32 %v3432, %v3435
  %v3438 = vshrl.u32 %v3188, 16
  %v3440 = vrot.slane %v3438, 4
  %v3441 = vshll.u32 %v3188, 16
  %v3443 = vrot.slane %v3441, 5
  %v3444 = vor.u32 %v3440, %v3443
  %3445 = vrot.lane.b32.xlu0 %v3196, 28
  %v3446 = vpop.permute.xlu0 %3445
  %3447 = vrot.lane.b32.xlu0 %v3204, 28
  %v3448 = vpop.permute.xlu0 %3447
  %3449 = vrot.lane.b32.xlu0 %v3212, 28
  %v3450 = vpop.permute.xlu0 %3449
  %3451 = vrot.lane.b32.xlu0 %v3220, 28
  %v3452 = vpop.permute.xlu0 %3451
  %3453 = vrot.lane.b32.xlu0 %v3228, 28
  %v3454 = vpop.permute.xlu0 %3453
  %3455 = vrot.lane.b32.xlu0 %v3236, 28
  %v3456 = vpop.permute.xlu0 %3455
  %3457 = vrot.lane.b32.xlu0 %v3244, 28
  %v3458 = vpop.permute.xlu0 %3457
  %3459 = vrot.lane.b32.xlu0 %v3252, 28
  %v3460 = vpop.permute.xlu0 %3459
  %3461 = vrot.lane.b32.xlu0 %v3260, 28
  %v3462 = vpop.permute.xlu0 %3461
  %3463 = vrot.lane.b32.xlu0 %v3268, 28
  %v3464 = vpop.permute.xlu0 %3463
  %3465 = vrot.lane.b32.xlu0 %v3276, 28
  %v3466 = vpop.permute.xlu0 %3465
  %3467 = vrot.lane.b32.xlu0 %v3284, 28
  %v3468 = vpop.permute.xlu0 %3467
  %3469 = vrot.lane.b32.xlu0 %v3292, 28
  %v3470 = vpop.permute.xlu0 %3469
  %3471 = vrot.lane.b32.xlu0 %v3300, 28
  %v3472 = vpop.permute.xlu0 %3471
  %3473 = vrot.lane.b32.xlu0 %v3308, 28
  %v3474 = vpop.permute.xlu0 %3473
  %3475 = vrot.lane.b32.xlu0 %v3316, 28
  %v3476 = vpop.permute.xlu0 %3475
  %3477 = vrot.lane.b32.xlu0 %v3324, 28
  %v3478 = vpop.permute.xlu0 %3477
  %3479 = vrot.lane.b32.xlu0 %v3332, 28
  %v3480 = vpop.permute.xlu0 %3479
  %3481 = vrot.lane.b32.xlu0 %v3340, 28
  %v3482 = vpop.permute.xlu0 %3481
  %3483 = vrot.lane.b32.xlu0 %v3348, 28
  %v3484 = vpop.permute.xlu0 %3483
  %3485 = vrot.lane.b32.xlu0 %v3356, 28
  %v3486 = vpop.permute.xlu0 %3485
  %3487 = vrot.lane.b32.xlu0 %v3364, 28
  %v3488 = vpop.permute.xlu0 %3487
  %3489 = vrot.lane.b32.xlu0 %v3372, 28
  %v3490 = vpop.permute.xlu0 %3489
  %3491 = vrot.lane.b32.xlu0 %v3380, 28
  %v3492 = vpop.permute.xlu0 %3491
  %3493 = vrot.lane.b32.xlu0 %v3388, 28
  %v3494 = vpop.permute.xlu0 %3493
  %3495 = vrot.lane.b32.xlu0 %v3396, 28
  %v3496 = vpop.permute.xlu0 %3495
  %3497 = vrot.lane.b32.xlu0 %v3404, 28
  %v3498 = vpop.permute.xlu0 %3497
  %3499 = vrot.lane.b32.xlu0 %v3412, 28
  %v3500 = vpop.permute.xlu0 %3499
  %3501 = vrot.lane.b32.xlu0 %v3420, 28
  %v3502 = vpop.permute.xlu0 %3501
  %3503 = vrot.lane.b32.xlu0 %v3428, 28
  %v3504 = vpop.permute.xlu0 %3503
  %3505 = vrot.lane.b32.xlu0 %v3436, 28
  %v3506 = vpop.permute.xlu0 %3505
  %3507 = vrot.lane.b32.xlu0 %v3444, 28
  %v3508 = vpop.permute.xlu0 %3507
  %v3541 = vunpack.c.l.b16 %v756
  %v3542 = vunpack.c.l.b16 %v757
  %v3543 = vunpack.c.l.b16 %v758
  %v3544 = vunpack.c.l.b16 %v759
  %v3545 = vunpack.c.l.b16 %v760
  %v3546 = vunpack.c.l.b16 %v761
  %v3547 = vunpack.c.l.b16 %v762
  %v3548 = vunpack.c.l.b16 %v763
  %v3549 = vunpack.c.l.b16 %v764
  %v3550 = vunpack.c.l.b16 %v765
  %v3551 = vunpack.c.l.b16 %v766
  %v3552 = vunpack.c.l.b16 %v767
  %v3553 = vunpack.c.l.b16 %v768
  %v3554 = vunpack.c.l.b16 %v769
  %v3555 = vunpack.c.l.b16 %v770
  %v3556 = vunpack.c.l.b16 %v771
  %v3557 = vunpack.c.l.b16 %v772
  %v3558 = vunpack.c.l.b16 %v773
  %v3559 = vunpack.c.l.b16 %v774
  %v3560 = vunpack.c.l.b16 %v775
  %v3561 = vunpack.c.l.b16 %v776
  %v3562 = vunpack.c.l.b16 %v777
  %v3563 = vunpack.c.l.b16 %v778
  %v3564 = vunpack.c.l.b16 %v779
  %v3565 = vunpack.c.l.b16 %v780
  %v3566 = vunpack.c.l.b16 %v781
  %v3567 = vunpack.c.l.b16 %v782
  %v3568 = vunpack.c.l.b16 %v783
  %v3569 = vunpack.c.l.b16 %v784
  %v3570 = vunpack.c.l.b16 %v785
  %v3571 = vunpack.c.l.b16 %v786
  %v3572 = vunpack.c.l.b16 %v787
  %v3573 = vpack.c.b16 %v3541, %v3541
  %v3574 = vpack.c.b16 %v3542, %v3542
  %v3575 = vpack.c.b16 %v3543, %v3543
  %v3576 = vpack.c.b16 %v3544, %v3544
  %v3577 = vpack.c.b16 %v3545, %v3545
  %v3578 = vpack.c.b16 %v3546, %v3546
  %v3579 = vpack.c.b16 %v3547, %v3547
  %v3580 = vpack.c.b16 %v3548, %v3548
  %v3581 = vpack.c.b16 %v3549, %v3549
  %v3582 = vpack.c.b16 %v3550, %v3550
  %v3583 = vpack.c.b16 %v3551, %v3551
  %v3584 = vpack.c.b16 %v3552, %v3552
  %v3585 = vpack.c.b16 %v3553, %v3553
  %v3586 = vpack.c.b16 %v3554, %v3554
  %v3587 = vpack.c.b16 %v3555, %v3555
  %v3588 = vpack.c.b16 %v3556, %v3556
  %v3589 = vpack.c.b16 %v3557, %v3557
  %v3590 = vpack.c.b16 %v3558, %v3558
  %v3591 = vpack.c.b16 %v3559, %v3559
  %v3592 = vpack.c.b16 %v3560, %v3560
  %v3593 = vpack.c.b16 %v3561, %v3561
  %v3594 = vpack.c.b16 %v3562, %v3562
  %v3595 = vpack.c.b16 %v3563, %v3563
  %v3596 = vpack.c.b16 %v3564, %v3564
  %v3597 = vpack.c.b16 %v3565, %v3565
  %v3598 = vpack.c.b16 %v3566, %v3566
  %v3599 = vpack.c.b16 %v3567, %v3567
  %v3600 = vpack.c.b16 %v3568, %v3568
  %v3601 = vpack.c.b16 %v3569, %v3569
  %v3602 = vpack.c.b16 %v3570, %v3570
  %v3603 = vpack.c.b16 %v3571, %v3571
  %v3604 = vpack.c.b16 %v3572, %v3572
  %v3605 = vrot.slane %v3157, 5
  %v3606 = vrot.slane %v3573, 5
  %v3607 = vsel %vm1492, %v3605, %v3606
  %v3608 = vrot.slane %v3158, 5
  %v3609 = vrot.slane %v3574, 5
  %v3610 = vsel %vm1492, %v3608, %v3609
  %v3611 = vrot.slane %v3159, 5
  %v3612 = vrot.slane %v3575, 5
  %v3613 = vsel %vm1492, %v3611, %v3612
  %v3614 = vrot.slane %v3160, 5
  %v3615 = vrot.slane %v3576, 5
  %v3616 = vsel %vm1492, %v3614, %v3615
  %v3617 = vrot.slane %v3161, 5
  %v3618 = vrot.slane %v3577, 5
  %v3619 = vsel %vm1492, %v3617, %v3618
  %v3620 = vrot.slane %v3162, 5
  %v3621 = vrot.slane %v3578, 5
  %v3622 = vsel %vm1492, %v3620, %v3621
  %v3623 = vrot.slane %v3163, 5
  %v3624 = vrot.slane %v3579, 5
  %v3625 = vsel %vm1492, %v3623, %v3624
  %v3626 = vrot.slane %v3164, 5
  %v3627 = vrot.slane %v3580, 5
  %v3628 = vsel %vm1492, %v3626, %v3627
  %v3629 = vrot.slane %v3165, 5
  %v3630 = vrot.slane %v3581, 5
  %v3631 = vsel %vm1492, %v3629, %v3630
  %v3632 = vrot.slane %v3166, 5
  %v3633 = vrot.slane %v3582, 5
  %v3634 = vsel %vm1492, %v3632, %v3633
  %v3635 = vrot.slane %v3167, 5
  %v3636 = vrot.slane %v3583, 5
  %v3637 = vsel %vm1492, %v3635, %v3636
  %v3638 = vrot.slane %v3168, 5
  %v3639 = vrot.slane %v3584, 5
  %v3640 = vsel %vm1492, %v3638, %v3639
  %v3641 = vrot.slane %v3169, 5
  %v3642 = vrot.slane %v3585, 5
  %v3643 = vsel %vm1492, %v3641, %v3642
  %v3644 = vrot.slane %v3170, 5
  %v3645 = vrot.slane %v3586, 5
  %v3646 = vsel %vm1492, %v3644, %v3645
  %v3647 = vrot.slane %v3171, 5
  %v3648 = vrot.slane %v3587, 5
  %v3649 = vsel %vm1492, %v3647, %v3648
  %v3650 = vrot.slane %v3172, 5
  %v3651 = vrot.slane %v3588, 5
  %v3652 = vsel %vm1492, %v3650, %v3651
  %v3653 = vrot.slane %v3173, 5
  %v3654 = vrot.slane %v3589, 5
  %v3655 = vsel %vm1492, %v3653, %v3654
  %v3656 = vrot.slane %v3174, 5
  %v3657 = vrot.slane %v3590, 5
  %v3658 = vsel %vm1492, %v3656, %v3657
  %v3659 = vrot.slane %v3175, 5
  %v3660 = vrot.slane %v3591, 5
  %v3661 = vsel %vm1492, %v3659, %v3660
  %v3662 = vrot.slane %v3176, 5
  %v3663 = vrot.slane %v3592, 5
  %v3664 = vsel %vm1492, %v3662, %v3663
  %v3665 = vrot.slane %v3177, 5
  %v3666 = vrot.slane %v3593, 5
  %v3667 = vsel %vm1492, %v3665, %v3666
  %v3668 = vrot.slane %v3178, 5
  %v3669 = vrot.slane %v3594, 5
  %v3670 = vsel %vm1492, %v3668, %v3669
  %v3671 = vrot.slane %v3179, 5
  %v3672 = vrot.slane %v3595, 5
  %v3673 = vsel %vm1492, %v3671, %v3672
  %v3674 = vrot.slane %v3180, 5
  %v3675 = vrot.slane %v3596, 5
  %v3676 = vsel %vm1492, %v3674, %v3675
  %v3677 = vrot.slane %v3181, 5
  %v3678 = vrot.slane %v3597, 5
  %v3679 = vsel %vm1492, %v3677, %v3678
  %v3680 = vrot.slane %v3182, 5
  %v3681 = vrot.slane %v3598, 5
  %v3682 = vsel %vm1492, %v3680, %v3681
  %v3683 = vrot.slane %v3183, 5
  %v3684 = vrot.slane %v3599, 5
  %v3685 = vsel %vm1492, %v3683, %v3684
  %v3686 = vrot.slane %v3184, 5
  %v3687 = vrot.slane %v3600, 5
  %v3688 = vsel %vm1492, %v3686, %v3687
  %v3689 = vrot.slane %v3185, 5
  %v3690 = vrot.slane %v3601, 5
  %v3691 = vsel %vm1492, %v3689, %v3690
  %v3692 = vrot.slane %v3186, 5
  %v3693 = vrot.slane %v3602, 5
  %v3694 = vsel %vm1492, %v3692, %v3693
  %v3695 = vrot.slane %v3187, 5
  %v3696 = vrot.slane %v3603, 5
  %v3697 = vsel %vm1492, %v3695, %v3696
  %v3698 = vrot.slane %v3188, 5
  %v3699 = vrot.slane %v3604, 5
  %v3700 = vsel %vm1492, %v3698, %v3699
  %3701 = vrot.lane.b32.xlu0 %v3605, 32
  %v3702 = vpop.permute.xlu0 %3701
  %3703 = vrot.lane.b32.xlu0 %v3607, 32
  %v3704 = vpop.permute.xlu0 %3703
  %3705 = vrot.lane.b32.xlu0 %v3608, 32
  %v3706 = vpop.permute.xlu0 %3705
  %3707 = vrot.lane.b32.xlu0 %v3610, 32
  %v3708 = vpop.permute.xlu0 %3707
  %3709 = vrot.lane.b32.xlu0 %v3611, 32
  %v3710 = vpop.permute.xlu0 %3709
  %3711 = vrot.lane.b32.xlu0 %v3613, 32
  %v3712 = vpop.permute.xlu0 %3711
  %3713 = vrot.lane.b32.xlu0 %v3614, 32
  %v3714 = vpop.permute.xlu0 %3713
  %3715 = vrot.lane.b32.xlu0 %v3616, 32
  %v3716 = vpop.permute.xlu0 %3715
  %3717 = vrot.lane.b32.xlu0 %v3617, 32
  %v3718 = vpop.permute.xlu0 %3717
  %3719 = vrot.lane.b32.xlu0 %v3619, 32
  %v3720 = vpop.permute.xlu0 %3719
  %3721 = vrot.lane.b32.xlu0 %v3620, 32
  %v3722 = vpop.permute.xlu0 %3721
  %3723 = vrot.lane.b32.xlu0 %v3622, 32
  %v3724 = vpop.permute.xlu0 %3723
  %3725 = vrot.lane.b32.xlu0 %v3623, 32
  %v3726 = vpop.permute.xlu0 %3725
  %3727 = vrot.lane.b32.xlu0 %v3625, 32
  %v3728 = vpop.permute.xlu0 %3727
  %3729 = vrot.lane.b32.xlu0 %v3626, 32
  %v3730 = vpop.permute.xlu0 %3729
  %3731 = vrot.lane.b32.xlu0 %v3628, 32
  %v3732 = vpop.permute.xlu0 %3731
  %3733 = vrot.lane.b32.xlu0 %v3629, 32
  %v3734 = vpop.permute.xlu0 %3733
  %3735 = vrot.lane.b32.xlu0 %v3631, 32
  %v3736 = vpop.permute.xlu0 %3735
  %3737 = vrot.lane.b32.xlu0 %v3632, 32
  %v3738 = vpop.permute.xlu0 %3737
  %3739 = vrot.lane.b32.xlu0 %v3634, 32
  %v3740 = vpop.permute.xlu0 %3739
  %3741 = vrot.lane.b32.xlu0 %v3635, 32
  %v3742 = vpop.permute.xlu0 %3741
  %3743 = vrot.lane.b32.xlu0 %v3637, 32
  %v3744 = vpop.permute.xlu0 %3743
  %3745 = vrot.lane.b32.xlu0 %v3638, 32
  %v3746 = vpop.permute.xlu0 %3745
  %3747 = vrot.lane.b32.xlu0 %v3640, 32
  %v3748 = vpop.permute.xlu0 %3747
  %3749 = vrot.lane.b32.xlu0 %v3641, 32
  %v3750 = vpop.permute.xlu0 %3749
  %3751 = vrot.lane.b32.xlu0 %v3643, 32
  %v3752 = vpop.permute.xlu0 %3751
  %3753 = vrot.lane.b32.xlu0 %v3644, 32
  %v3754 = vpop.permute.xlu0 %3753
  %3755 = vrot.lane.b32.xlu0 %v3646, 32
  %v3756 = vpop.permute.xlu0 %3755
  %3757 = vrot.lane.b32.xlu0 %v3647, 32
  %v3758 = vpop.permute.xlu0 %3757
  %3759 = vrot.lane.b32.xlu0 %v3649, 32
  %v3760 = vpop.permute.xlu0 %3759
  %3761 = vrot.lane.b32.xlu0 %v3650, 32
  %v3762 = vpop.permute.xlu0 %3761
  %3763 = vrot.lane.b32.xlu0 %v3652, 32
  %v3764 = vpop.permute.xlu0 %3763
  %3765 = vrot.lane.b32.xlu0 %v3653, 32
  %v3766 = vpop.permute.xlu0 %3765
  %3767 = vrot.lane.b32.xlu0 %v3655, 32
  %v3768 = vpop.permute.xlu0 %3767
  %3769 = vrot.lane.b32.xlu0 %v3656, 32
  %v3770 = vpop.permute.xlu0 %3769
  %3771 = vrot.lane.b32.xlu0 %v3658, 32
  %v3772 = vpop.permute.xlu0 %3771
  %3773 = vrot.lane.b32.xlu0 %v3659, 32
  %v3774 = vpop.permute.xlu0 %3773
  %3775 = vrot.lane.b32.xlu0 %v3661, 32
  %v3776 = vpop.permute.xlu0 %3775
  %3777 = vrot.lane.b32.xlu0 %v3662, 32
  %v3778 = vpop.permute.xlu0 %3777
  %3779 = vrot.lane.b32.xlu0 %v3664, 32
  %v3780 = vpop.permute.xlu0 %3779
  %3781 = vrot.lane.b32.xlu0 %v3665, 32
  %v3782 = vpop.permute.xlu0 %3781
  %3783 = vrot.lane.b32.xlu0 %v3667, 32
  %v3784 = vpop.permute.xlu0 %3783
  %3785 = vrot.lane.b32.xlu0 %v3668, 32
  %v3786 = vpop.permute.xlu0 %3785
  %3787 = vrot.lane.b32.xlu0 %v3670, 32
  %v3788 = vpop.permute.xlu0 %3787
  %3789 = vrot.lane.b32.xlu0 %v3671, 32
  %v3790 = vpop.permute.xlu0 %3789
  %3791 = vrot.lane.b32.xlu0 %v3673, 32
  %v3792 = vpop.permute.xlu0 %3791
  %3793 = vrot.lane.b32.xlu0 %v3674, 32
  %v3794 = vpop.permute.xlu0 %3793
  %3795 = vrot.lane.b32.xlu0 %v3676, 32
  %v3796 = vpop.permute.xlu0 %3795
  %3797 = vrot.lane.b32.xlu0 %v3677, 32
  %v3798 = vpop.permute.xlu0 %3797
  %3799 = vrot.lane.b32.xlu0 %v3679, 32
  %v3800 = vpop.permute.xlu0 %3799
  %3801 = vrot.lane.b32.xlu0 %v3680, 32
  %v3802 = vpop.permute.xlu0 %3801
  %3803 = vrot.lane.b32.xlu0 %v3682, 32
  %v3804 = vpop.permute.xlu0 %3803
  %3805 = vrot.lane.b32.xlu0 %v3683, 32
  %v3806 = vpop.permute.xlu0 %3805
  %3807 = vrot.lane.b32.xlu0 %v3685, 32
  %v3808 = vpop.permute.xlu0 %3807
  %3809 = vrot.lane.b32.xlu0 %v3686, 32
  %v3810 = vpop.permute.xlu0 %3809
  %3811 = vrot.lane.b32.xlu0 %v3688, 32
  %v3812 = vpop.permute.xlu0 %3811
  %3813 = vrot.lane.b32.xlu0 %v3689, 32
  %v3814 = vpop.permute.xlu0 %3813
  %3815 = vrot.lane.b32.xlu0 %v3691, 32
  %v3816 = vpop.permute.xlu0 %3815
  %3817 = vrot.lane.b32.xlu0 %v3692, 32
  %v3818 = vpop.permute.xlu0 %3817
  %3819 = vrot.lane.b32.xlu0 %v3694, 32
  %v3820 = vpop.permute.xlu0 %3819
  %3821 = vrot.lane.b32.xlu0 %v3695, 32
  %v3822 = vpop.permute.xlu0 %3821
  %3823 = vrot.lane.b32.xlu0 %v3697, 32
  %v3824 = vpop.permute.xlu0 %3823
  %3825 = vrot.lane.b32.xlu0 %v3698, 32
  %v3826 = vpop.permute.xlu0 %3825
  %3827 = vrot.lane.b32.xlu0 %v3700, 32
  %v3828 = vpop.permute.xlu0 %3827
  %vm3829 = vcmask 31744
  %v3832 = vsel %vm3829, %v980, %v1333
  %v3834 = vsel %vm3829, %v981, %v1333
  %v3837 = vsel %vm3829, %v982, %v1335
  %v3839 = vsel %vm3829, %v983, %v1335
  %v3842 = vsel %vm3829, %v984, %v1337
  %v3844 = vsel %vm3829, %v985, %v1337
  %v3847 = vsel %vm3829, %v986, %v1339
  %v3849 = vsel %vm3829, %v987, %v1339
  %v3852 = vsel %vm3829, %v988, %v1341
  %v3854 = vsel %vm3829, %v989, %v1341
  %v3857 = vsel %vm3829, %v990, %v1343
  %v3859 = vsel %vm3829, %v991, %v1343
  %v3862 = vsel %vm3829, %v992, %v1345
  %v3864 = vsel %vm3829, %v993, %v1345
  %v3867 = vsel %vm3829, %v994, %v1347
  %v3869 = vsel %vm3829, %v995, %v1347
  %v3872 = vsel %vm3829, %v996, %v1349
  %v3874 = vsel %vm3829, %v997, %v1349
  %v3877 = vsel %vm3829, %v998, %v1351
  %v3879 = vsel %vm3829, %v999, %v1351
  %v3882 = vsel %vm3829, %v1000, %v1353
  %v3884 = vsel %vm3829, %v1001, %v1353
  %v3887 = vsel %vm3829, %v1002, %v1355
  %v3889 = vsel %vm3829, %v1003, %v1355
  %v3892 = vsel %vm3829, %v1004, %v1357
  %v3894 = vsel %vm3829, %v1005, %v1357
  %v3897 = vsel %vm3829, %v1006, %v1359
  %v3899 = vsel %vm3829, %v1007, %v1359
  %v3902 = vsel %vm3829, %v1008, %v1361
  %v3904 = vsel %vm3829, %v1009, %v1361
  %v3907 = vsel %vm3829, %v1010, %v1363
  %v3909 = vsel %vm3829, %v1011, %v1363
  %v3912 = vsel %vm3829, %v1012, %v1365
  %v3914 = vsel %vm3829, %v1013, %v1365
  %v3917 = vsel %vm3829, %v1014, %v1367
  %v3919 = vsel %vm3829, %v1015, %v1367
  %v3922 = vsel %vm3829, %v1016, %v1369
  %v3924 = vsel %vm3829, %v1017, %v1369
  %v3927 = vsel %vm3829, %v1018, %v1371
  %v3929 = vsel %vm3829, %v1019, %v1371
  %v3932 = vsel %vm3829, %v1020, %v1373
  %v3934 = vsel %vm3829, %v1021, %v1373
  %v3937 = vsel %vm3829, %v1022, %v1375
  %v3939 = vsel %vm3829, %v1023, %v1375
  %v3942 = vsel %vm3829, %v1024, %v1377
  %v3944 = vsel %vm3829, %v1025, %v1377
  %v3947 = vsel %vm3829, %v1026, %v1379
  %v3949 = vsel %vm3829, %v1027, %v1379
  %v3952 = vsel %vm3829, %v1028, %v1381
  %v3954 = vsel %vm3829, %v1029, %v1381
  %v3957 = vsel %vm3829, %v1030, %v1383
  %v3959 = vsel %vm3829, %v1031, %v1383
  %v3962 = vsel %vm3829, %v1032, %v1385
  %v3964 = vsel %vm3829, %v1033, %v1385
  %v3967 = vsel %vm3829, %v1034, %v1387
  %v3969 = vsel %vm3829, %v1035, %v1387
  %v3972 = vsel %vm3829, %v1036, %v1389
  %v3974 = vsel %vm3829, %v1037, %v1389
  %v3977 = vsel %vm3829, %v1038, %v1391
  %v3979 = vsel %vm3829, %v1039, %v1391
  %v3982 = vsel %vm3829, %v1040, %v1393
  %v3984 = vsel %vm3829, %v1041, %v1393
  %v3987 = vsel %vm3829, %v1042, %v1395
  %v3989 = vsel %vm3829, %v1043, %v1395
  %vm3990 = vcmask 64512
  %v3992 = vsel %vm3990, %v3832, %v1590
  %v3994 = vsel %vm3990, %v3834, %v1592
  %v3996 = vsel %vm3990, %v3837, %v1594
  %v3998 = vsel %vm3990, %v3839, %v1596
  %v4000 = vsel %vm3990, %v3842, %v1598
  %v4002 = vsel %vm3990, %v3844, %v1600
  %v4004 = vsel %vm3990, %v3847, %v1602
  %v4006 = vsel %vm3990, %v3849, %v1604
  %v4008 = vsel %vm3990, %v3852, %v1606
  %v4010 = vsel %vm3990, %v3854, %v1608
  %v4012 = vsel %vm3990, %v3857, %v1610
  %v4014 = vsel %vm3990, %v3859, %v1612
  %v4016 = vsel %vm3990, %v3862, %v1614
  %v4018 = vsel %vm3990, %v3864, %v1616
  %v4020 = vsel %vm3990, %v3867, %v1618
  %v4022 = vsel %vm3990, %v3869, %v1620
  %v4024 = vsel %vm3990, %v3872, %v1622
  %v4026 = vsel %vm3990, %v3874, %v1624
  %v4028 = vsel %vm3990, %v3877, %v1626
  %v4030 = vsel %vm3990, %v3879, %v1628
  %v4032 = vsel %vm3990, %v3882, %v1630
  %v4034 = vsel %vm3990, %v3884, %v1632
  %v4036 = vsel %vm3990, %v3887, %v1634
  %v4038 = vsel %vm3990, %v3889, %v1636
  %v4040 = vsel %vm3990, %v3892, %v1638
  %v4042 = vsel %vm3990, %v3894, %v1640
  %v4044 = vsel %vm3990, %v3897, %v1642
  %v4046 = vsel %vm3990, %v3899, %v1644
  %v4048 = vsel %vm3990, %v3902, %v1646
  %v4050 = vsel %vm3990, %v3904, %v1648
  %v4052 = vsel %vm3990, %v3907, %v1650
  %v4054 = vsel %vm3990, %v3909, %v1652
  %v4056 = vsel %vm3990, %v3912, %v1654
  %v4058 = vsel %vm3990, %v3914, %v1656
  %v4060 = vsel %vm3990, %v3917, %v1658
  %v4062 = vsel %vm3990, %v3919, %v1660
  %v4064 = vsel %vm3990, %v3922, %v1662
  %v4066 = vsel %vm3990, %v3924, %v1664
  %v4068 = vsel %vm3990, %v3927, %v1666
  %v4070 = vsel %vm3990, %v3929, %v1668
  %v4072 = vsel %vm3990, %v3932, %v1670
  %v4074 = vsel %vm3990, %v3934, %v1672
  %v4076 = vsel %vm3990, %v3937, %v1674
  %v4078 = vsel %vm3990, %v3939, %v1676
  %v4080 = vsel %vm3990, %v3942, %v1678
  %v4082 = vsel %vm3990, %v3944, %v1680
  %v4084 = vsel %vm3990, %v3947, %v1682
  %v4086 = vsel %vm3990, %v3949, %v1684
  %v4088 = vsel %vm3990, %v3952, %v1686
  %v4090 = vsel %vm3990, %v3954, %v1688
  %v4092 = vsel %vm3990, %v3957, %v1690
  %v4094 = vsel %vm3990, %v3959, %v1692
  %v4096 = vsel %vm3990, %v3962, %v1694
  %v4098 = vsel %vm3990, %v3964, %v1696
  %v4100 = vsel %vm3990, %v3967, %v1698
  %v4102 = vsel %vm3990, %v3969, %v1700
  %v4104 = vsel %vm3990, %v3972, %v1702
  %v4106 = vsel %vm3990, %v3974, %v1704
  %v4108 = vsel %vm3990, %v3977, %v1706
  %v4110 = vsel %vm3990, %v3979, %v1708
  %v4112 = vsel %vm3990, %v3982, %v1710
  %v4114 = vsel %vm3990, %v3984, %v1712
  %v4116 = vsel %vm3990, %v3987, %v1714
  %v4118 = vsel %vm3990, %v3989, %v1716
  %vm4119 = vcmask 97280
  %v4121 = vsel %vm4119, %v3992, %v1974
  %v4123 = vsel %vm4119, %v3994, %v1976
  %v4125 = vsel %vm4119, %v3996, %v1978
  %v4127 = vsel %vm4119, %v3998, %v1980
  %v4129 = vsel %vm4119, %v4000, %v1982
  %v4131 = vsel %vm4119, %v4002, %v1984
  %v4133 = vsel %vm4119, %v4004, %v1986
  %v4135 = vsel %vm4119, %v4006, %v1988
  %v4137 = vsel %vm4119, %v4008, %v1990
  %v4139 = vsel %vm4119, %v4010, %v1992
  %v4141 = vsel %vm4119, %v4012, %v1994
  %v4143 = vsel %vm4119, %v4014, %v1996
  %v4145 = vsel %vm4119, %v4016, %v1998
  %v4147 = vsel %vm4119, %v4018, %v2000
  %v4149 = vsel %vm4119, %v4020, %v2002
  %v4151 = vsel %vm4119, %v4022, %v2004
  %v4153 = vsel %vm4119, %v4024, %v2006
  %v4155 = vsel %vm4119, %v4026, %v2008
  %v4157 = vsel %vm4119, %v4028, %v2010
  %v4159 = vsel %vm4119, %v4030, %v2012
  %v4161 = vsel %vm4119, %v4032, %v2014
  %v4163 = vsel %vm4119, %v4034, %v2016
  %v4165 = vsel %vm4119, %v4036, %v2018
  %v4167 = vsel %vm4119, %v4038, %v2020
  %v4169 = vsel %vm4119, %v4040, %v2022
  %v4171 = vsel %vm4119, %v4042, %v2024
  %v4173 = vsel %vm4119, %v4044, %v2026
  %v4175 = vsel %vm4119, %v4046, %v2028
  %v4177 = vsel %vm4119, %v4048, %v2030
  %v4179 = vsel %vm4119, %v4050, %v2032
  %v4181 = vsel %vm4119, %v4052, %v2034
  %v4183 = vsel %vm4119, %v4054, %v2036
  %v4185 = vsel %vm4119, %v4056, %v2038
  %v4187 = vsel %vm4119, %v4058, %v2040
  %v4189 = vsel %vm4119, %v4060, %v2042
  %v4191 = vsel %vm4119, %v4062, %v2044
  %v4193 = vsel %vm4119, %v4064, %v2046
  %v4195 = vsel %vm4119, %v4066, %v2048
  %v4197 = vsel %vm4119, %v4068, %v2050
  %v4199 = vsel %vm4119, %v4070, %v2052
  %v4201 = vsel %vm4119, %v4072, %v2054
  %v4203 = vsel %vm4119, %v4074, %v2056
  %v4205 = vsel %vm4119, %v4076, %v2058
  %v4207 = vsel %vm4119, %v4078, %v2060
  %v4209 = vsel %vm4119, %v4080, %v2062
  %v4211 = vsel %vm4119, %v4082, %v2064
  %v4213 = vsel %vm4119, %v4084, %v2066
  %v4215 = vsel %vm4119, %v4086, %v2068
  %v4217 = vsel %vm4119, %v4088, %v2070
  %v4219 = vsel %vm4119, %v4090, %v2072
  %v4221 = vsel %vm4119, %v4092, %v2074
  %v4223 = vsel %vm4119, %v4094, %v2076
  %v4225 = vsel %vm4119, %v4096, %v2078
  %v4227 = vsel %vm4119, %v4098, %v2080
  %v4229 = vsel %vm4119, %v4100, %v2082
  %v4231 = vsel %vm4119, %v4102, %v2084
  %v4233 = vsel %vm4119, %v4104, %v2086
  %v4235 = vsel %vm4119, %v4106, %v2088
  %v4237 = vsel %vm4119, %v4108, %v2090
  %v4239 = vsel %vm4119, %v4110, %v2092
  %v4241 = vsel %vm4119, %v4112, %v2094
  %v4243 = vsel %vm4119, %v4114, %v2096
  %v4245 = vsel %vm4119, %v4116, %v2098
  %v4247 = vsel %vm4119, %v4118, %v2100
  %vm4248 = vcmask 130048
  %v4250 = vsel %vm4248, %v4121, %v2390
  %v4251 = vsel %vm4248, %v4123, %v2390
  %v4253 = vsel %vm4248, %v4125, %v2392
  %v4254 = vsel %vm4248, %v4127, %v2392
  %v4256 = vsel %vm4248, %v4129, %v2394
  %v4257 = vsel %vm4248, %v4131, %v2394
  %v4259 = vsel %vm4248, %v4133, %v2396
  %v4260 = vsel %vm4248, %v4135, %v2396
  %v4262 = vsel %vm4248, %v4137, %v2398
  %v4263 = vsel %vm4248, %v4139, %v2398
  %v4265 = vsel %vm4248, %v4141, %v2400
  %v4266 = vsel %vm4248, %v4143, %v2400
  %v4268 = vsel %vm4248, %v4145, %v2402
  %v4269 = vsel %vm4248, %v4147, %v2402
  %v4271 = vsel %vm4248, %v4149, %v2404
  %v4272 = vsel %vm4248, %v4151, %v2404
  %v4274 = vsel %vm4248, %v4153, %v2406
  %v4275 = vsel %vm4248, %v4155, %v2406
  %v4277 = vsel %vm4248, %v4157, %v2408
  %v4278 = vsel %vm4248, %v4159, %v2408
  %v4280 = vsel %vm4248, %v4161, %v2410
  %v4281 = vsel %vm4248, %v4163, %v2410
  %v4283 = vsel %vm4248, %v4165, %v2412
  %v4284 = vsel %vm4248, %v4167, %v2412
  %v4286 = vsel %vm4248, %v4169, %v2414
  %v4287 = vsel %vm4248, %v4171, %v2414
  %v4289 = vsel %vm4248, %v4173, %v2416
  %v4290 = vsel %vm4248, %v4175, %v2416
  %v4292 = vsel %vm4248, %v4177, %v2418
  %v4293 = vsel %vm4248, %v4179, %v2418
  %v4295 = vsel %vm4248, %v4181, %v2420
  %v4296 = vsel %vm4248, %v4183, %v2420
  %v4298 = vsel %vm4248, %v4185, %v2422
  %v4299 = vsel %vm4248, %v4187, %v2422
  %v4301 = vsel %vm4248, %v4189, %v2424
  %v4302 = vsel %vm4248, %v4191, %v2424
  %v4304 = vsel %vm4248, %v4193, %v2426
  %v4305 = vsel %vm4248, %v4195, %v2426
  %v4307 = vsel %vm4248, %v4197, %v2428
  %v4308 = vsel %vm4248, %v4199, %v2428
  %v4310 = vsel %vm4248, %v4201, %v2430
  %v4311 = vsel %vm4248, %v4203, %v2430
  %v4313 = vsel %vm4248, %v4205, %v2432
  %v4314 = vsel %vm4248, %v4207, %v2432
  %v4316 = vsel %vm4248, %v4209, %v2434
  %v4317 = vsel %vm4248, %v4211, %v2434
  %v4319 = vsel %vm4248, %v4213, %v2436
  %v4320 = vsel %vm4248, %v4215, %v2436
  %v4322 = vsel %vm4248, %v4217, %v2438
  %v4323 = vsel %vm4248, %v4219, %v2438
  %v4325 = vsel %vm4248, %v4221, %v2440
  %v4326 = vsel %vm4248, %v4223, %v2440
  %v4328 = vsel %vm4248, %v4225, %v2442
  %v4329 = vsel %vm4248, %v4227, %v2442
  %v4331 = vsel %vm4248, %v4229, %v2444
  %v4332 = vsel %vm4248, %v4231, %v2444
  %v4334 = vsel %vm4248, %v4233, %v2446
  %v4335 = vsel %vm4248, %v4235, %v2446
  %v4337 = vsel %vm4248, %v4237, %v2448
  %v4338 = vsel %vm4248, %v4239, %v2448
  %v4340 = vsel %vm4248, %v4241, %v2450
  %v4341 = vsel %vm4248, %v4243, %v2450
  %v4343 = vsel %vm4248, %v4245, %v2452
  %v4344 = vsel %vm4248, %v4247, %v2452
  %vm4345 = vcmask 162816
  %v4347 = vsel %vm4345, %v4250, %v2646
  %v4349 = vsel %vm4345, %v4251, %v2648
  %v4351 = vsel %vm4345, %v4253, %v2650
  %v4353 = vsel %vm4345, %v4254, %v2652
  %v4355 = vsel %vm4345, %v4256, %v2654
  %v4357 = vsel %vm4345, %v4257, %v2656
  %v4359 = vsel %vm4345, %v4259, %v2658
  %v4361 = vsel %vm4345, %v4260, %v2660
  %v4363 = vsel %vm4345, %v4262, %v2662
  %v4365 = vsel %vm4345, %v4263, %v2664
  %v4367 = vsel %vm4345, %v4265, %v2666
  %v4369 = vsel %vm4345, %v4266, %v2668
  %v4371 = vsel %vm4345, %v4268, %v2670
  %v4373 = vsel %vm4345, %v4269, %v2672
  %v4375 = vsel %vm4345, %v4271, %v2674
  %v4377 = vsel %vm4345, %v4272, %v2676
  %v4379 = vsel %vm4345, %v4274, %v2678
  %v4381 = vsel %vm4345, %v4275, %v2680
  %v4383 = vsel %vm4345, %v4277, %v2682
  %v4385 = vsel %vm4345, %v4278, %v2684
  %v4387 = vsel %vm4345, %v4280, %v2686
  %v4389 = vsel %vm4345, %v4281, %v2688
  %v4391 = vsel %vm4345, %v4283, %v2690
  %v4393 = vsel %vm4345, %v4284, %v2692
  %v4395 = vsel %vm4345, %v4286, %v2694
  %v4397 = vsel %vm4345, %v4287, %v2696
  %v4399 = vsel %vm4345, %v4289, %v2698
  %v4401 = vsel %vm4345, %v4290, %v2700
  %v4403 = vsel %vm4345, %v4292, %v2702
  %v4405 = vsel %vm4345, %v4293, %v2704
  %v4407 = vsel %vm4345, %v4295, %v2706
  %v4409 = vsel %vm4345, %v4296, %v2708
  %v4411 = vsel %vm4345, %v4298, %v2710
  %v4413 = vsel %vm4345, %v4299, %v2712
  %v4415 = vsel %vm4345, %v4301, %v2714
  %v4417 = vsel %vm4345, %v4302, %v2716
  %v4419 = vsel %vm4345, %v4304, %v2718
  %v4421 = vsel %vm4345, %v4305, %v2720
  %v4423 = vsel %vm4345, %v4307, %v2722
  %v4425 = vsel %vm4345, %v4308, %v2724
  %v4427 = vsel %vm4345, %v4310, %v2726
  %v4429 = vsel %vm4345, %v4311, %v2728
  %v4431 = vsel %vm4345, %v4313, %v2730
  %v4433 = vsel %vm4345, %v4314, %v2732
  %v4435 = vsel %vm4345, %v4316, %v2734
  %v4437 = vsel %vm4345, %v4317, %v2736
  %v4439 = vsel %vm4345, %v4319, %v2738
  %v4441 = vsel %vm4345, %v4320, %v2740
  %v4443 = vsel %vm4345, %v4322, %v2742
  %v4445 = vsel %vm4345, %v4323, %v2744
  %v4447 = vsel %vm4345, %v4325, %v2746
  %v4449 = vsel %vm4345, %v4326, %v2748
  %v4451 = vsel %vm4345, %v4328, %v2750
  %v4453 = vsel %vm4345, %v4329, %v2752
  %v4455 = vsel %vm4345, %v4331, %v2754
  %v4457 = vsel %vm4345, %v4332, %v2756
  %v4459 = vsel %vm4345, %v4334, %v2758
  %v4461 = vsel %vm4345, %v4335, %v2760
  %v4463 = vsel %vm4345, %v4337, %v2762
  %v4465 = vsel %vm4345, %v4338, %v2764
  %v4467 = vsel %vm4345, %v4340, %v2766
  %v4469 = vsel %vm4345, %v4341, %v2768
  %v4471 = vsel %vm4345, %v4343, %v2770
  %v4473 = vsel %vm4345, %v4344, %v2772
  %vm4474 = vcmask 195584
  %v4476 = vsel %vm4474, %v4347, %v3030
  %v4478 = vsel %vm4474, %v4349, %v3032
  %v4480 = vsel %vm4474, %v4351, %v3034
  %v4482 = vsel %vm4474, %v4353, %v3036
  %v4484 = vsel %vm4474, %v4355, %v3038
  %v4486 = vsel %vm4474, %v4357, %v3040
  %v4488 = vsel %vm4474, %v4359, %v3042
  %v4490 = vsel %vm4474, %v4361, %v3044
  %v4492 = vsel %vm4474, %v4363, %v3046
  %v4494 = vsel %vm4474, %v4365, %v3048
  %v4496 = vsel %vm4474, %v4367, %v3050
  %v4498 = vsel %vm4474, %v4369, %v3052
  %v4500 = vsel %vm4474, %v4371, %v3054
  %v4502 = vsel %vm4474, %v4373, %v3056
  %v4504 = vsel %vm4474, %v4375, %v3058
  %v4506 = vsel %vm4474, %v4377, %v3060
  %v4508 = vsel %vm4474, %v4379, %v3062
  %v4510 = vsel %vm4474, %v4381, %v3064
  %v4512 = vsel %vm4474, %v4383, %v3066
  %v4514 = vsel %vm4474, %v4385, %v3068
  %v4516 = vsel %vm4474, %v4387, %v3070
  %v4518 = vsel %vm4474, %v4389, %v3072
  %v4520 = vsel %vm4474, %v4391, %v3074
  %v4522 = vsel %vm4474, %v4393, %v3076
  %v4524 = vsel %vm4474, %v4395, %v3078
  %v4526 = vsel %vm4474, %v4397, %v3080
  %v4528 = vsel %vm4474, %v4399, %v3082
  %v4530 = vsel %vm4474, %v4401, %v3084
  %v4532 = vsel %vm4474, %v4403, %v3086
  %v4534 = vsel %vm4474, %v4405, %v3088
  %v4536 = vsel %vm4474, %v4407, %v3090
  %v4538 = vsel %vm4474, %v4409, %v3092
  %v4540 = vsel %vm4474, %v4411, %v3094
  %v4542 = vsel %vm4474, %v4413, %v3096
  %v4544 = vsel %vm4474, %v4415, %v3098
  %v4546 = vsel %vm4474, %v4417, %v3100
  %v4548 = vsel %vm4474, %v4419, %v3102
  %v4550 = vsel %vm4474, %v4421, %v3104
  %v4552 = vsel %vm4474, %v4423, %v3106
  %v4554 = vsel %vm4474, %v4425, %v3108
  %v4556 = vsel %vm4474, %v4427, %v3110
  %v4558 = vsel %vm4474, %v4429, %v3112
  %v4560 = vsel %vm4474, %v4431, %v3114
  %v4562 = vsel %vm4474, %v4433, %v3116
  %v4564 = vsel %vm4474, %v4435, %v3118
  %v4566 = vsel %vm4474, %v4437, %v3120
  %v4568 = vsel %vm4474, %v4439, %v3122
  %v4570 = vsel %vm4474, %v4441, %v3124
  %v4572 = vsel %vm4474, %v4443, %v3126
  %v4574 = vsel %vm4474, %v4445, %v3128
  %v4576 = vsel %vm4474, %v4447, %v3130
  %v4578 = vsel %vm4474, %v4449, %v3132
  %v4580 = vsel %vm4474, %v4451, %v3134
  %v4582 = vsel %vm4474, %v4453, %v3136
  %v4584 = vsel %vm4474, %v4455, %v3138
  %v4586 = vsel %vm4474, %v4457, %v3140
  %v4588 = vsel %vm4474, %v4459, %v3142
  %v4590 = vsel %vm4474, %v4461, %v3144
  %v4592 = vsel %vm4474, %v4463, %v3146
  %v4594 = vsel %vm4474, %v4465, %v3148
  %v4596 = vsel %vm4474, %v4467, %v3150
  %v4598 = vsel %vm4474, %v4469, %v3152
  %v4600 = vsel %vm4474, %v4471, %v3154
  %v4602 = vsel %vm4474, %v4473, %v3156
  %vm4603 = vcmask 228352
  %v4605 = vsel %vm4603, %v4476, %v3446
  %v4606 = vsel %vm4603, %v4478, %v3446
  %v4608 = vsel %vm4603, %v4480, %v3448
  %v4609 = vsel %vm4603, %v4482, %v3448
  %v4611 = vsel %vm4603, %v4484, %v3450
  %v4612 = vsel %vm4603, %v4486, %v3450
  %v4614 = vsel %vm4603, %v4488, %v3452
  %v4615 = vsel %vm4603, %v4490, %v3452
  %v4617 = vsel %vm4603, %v4492, %v3454
  %v4618 = vsel %vm4603, %v4494, %v3454
  %v4620 = vsel %vm4603, %v4496, %v3456
  %v4621 = vsel %vm4603, %v4498, %v3456
  %v4623 = vsel %vm4603, %v4500, %v3458
  %v4624 = vsel %vm4603, %v4502, %v3458
  %v4626 = vsel %vm4603, %v4504, %v3460
  %v4627 = vsel %vm4603, %v4506, %v3460
  %v4629 = vsel %vm4603, %v4508, %v3462
  %v4630 = vsel %vm4603, %v4510, %v3462
  %v4632 = vsel %vm4603, %v4512, %v3464
  %v4633 = vsel %vm4603, %v4514, %v3464
  %v4635 = vsel %vm4603, %v4516, %v3466
  %v4636 = vsel %vm4603, %v4518, %v3466
  %v4638 = vsel %vm4603, %v4520, %v3468
  %v4639 = vsel %vm4603, %v4522, %v3468
  %v4641 = vsel %vm4603, %v4524, %v3470
  %v4642 = vsel %vm4603, %v4526, %v3470
  %v4644 = vsel %vm4603, %v4528, %v3472
  %v4645 = vsel %vm4603, %v4530, %v3472
  %v4647 = vsel %vm4603, %v4532, %v3474
  %v4648 = vsel %vm4603, %v4534, %v3474
  %v4650 = vsel %vm4603, %v4536, %v3476
  %v4651 = vsel %vm4603, %v4538, %v3476
  %v4653 = vsel %vm4603, %v4540, %v3478
  %v4654 = vsel %vm4603, %v4542, %v3478
  %v4656 = vsel %vm4603, %v4544, %v3480
  %v4657 = vsel %vm4603, %v4546, %v3480
  %v4659 = vsel %vm4603, %v4548, %v3482
  %v4660 = vsel %vm4603, %v4550, %v3482
  %v4662 = vsel %vm4603, %v4552, %v3484
  %v4663 = vsel %vm4603, %v4554, %v3484
  %v4665 = vsel %vm4603, %v4556, %v3486
  %v4666 = vsel %vm4603, %v4558, %v3486
  %v4668 = vsel %vm4603, %v4560, %v3488
  %v4669 = vsel %vm4603, %v4562, %v3488
  %v4671 = vsel %vm4603, %v4564, %v3490
  %v4672 = vsel %vm4603, %v4566, %v3490
  %v4674 = vsel %vm4603, %v4568, %v3492
  %v4675 = vsel %vm4603, %v4570, %v3492
  %v4677 = vsel %vm4603, %v4572, %v3494
  %v4678 = vsel %vm4603, %v4574, %v3494
  %v4680 = vsel %vm4603, %v4576, %v3496
  %v4681 = vsel %vm4603, %v4578, %v3496
  %v4683 = vsel %vm4603, %v4580, %v3498
  %v4684 = vsel %vm4603, %v4582, %v3498
  %v4686 = vsel %vm4603, %v4584, %v3500
  %v4687 = vsel %vm4603, %v4586, %v3500
  %v4689 = vsel %vm4603, %v4588, %v3502
  %v4690 = vsel %vm4603, %v4590, %v3502
  %v4692 = vsel %vm4603, %v4592, %v3504
  %v4693 = vsel %vm4603, %v4594, %v3504
  %v4695 = vsel %vm4603, %v4596, %v3506
  %v4696 = vsel %vm4603, %v4598, %v3506
  %v4698 = vsel %vm4603, %v4600, %v3508
  %v4699 = vsel %vm4603, %v4602, %v3508
  %vm4700 = vcmask 261120
  %v4702 = vsel %vm4700, %v4605, %v3702
  %v4704 = vsel %vm4700, %v4606, %v3704
  %v4706 = vsel %vm4700, %v4608, %v3706
  %v4708 = vsel %vm4700, %v4609, %v3708
  %v4710 = vsel %vm4700, %v4611, %v3710
  %v4712 = vsel %vm4700, %v4612, %v3712
  %v4714 = vsel %vm4700, %v4614, %v3714
  %v4716 = vsel %vm4700, %v4615, %v3716
  %v4718 = vsel %vm4700, %v4617, %v3718
  %v4720 = vsel %vm4700, %v4618, %v3720
  %v4722 = vsel %vm4700, %v4620, %v3722
  %v4724 = vsel %vm4700, %v4621, %v3724
  %v4726 = vsel %vm4700, %v4623, %v3726
  %v4728 = vsel %vm4700, %v4624, %v3728
  %v4730 = vsel %vm4700, %v4626, %v3730
  %v4732 = vsel %vm4700, %v4627, %v3732
  %v4734 = vsel %vm4700, %v4629, %v3734
  %v4736 = vsel %vm4700, %v4630, %v3736
  %v4738 = vsel %vm4700, %v4632, %v3738
  %v4740 = vsel %vm4700, %v4633, %v3740
  %v4742 = vsel %vm4700, %v4635, %v3742
  %v4744 = vsel %vm4700, %v4636, %v3744
  %v4746 = vsel %vm4700, %v4638, %v3746
  %v4748 = vsel %vm4700, %v4639, %v3748
  %v4750 = vsel %vm4700, %v4641, %v3750
  %v4752 = vsel %vm4700, %v4642, %v3752
  %v4754 = vsel %vm4700, %v4644, %v3754
  %v4756 = vsel %vm4700, %v4645, %v3756
  %v4758 = vsel %vm4700, %v4647, %v3758
  %v4760 = vsel %vm4700, %v4648, %v3760
  %v4762 = vsel %vm4700, %v4650, %v3762
  %v4764 = vsel %vm4700, %v4651, %v3764
  %v4766 = vsel %vm4700, %v4653, %v3766
  %v4768 = vsel %vm4700, %v4654, %v3768
  %v4770 = vsel %vm4700, %v4656, %v3770
  %v4772 = vsel %vm4700, %v4657, %v3772
  %v4774 = vsel %vm4700, %v4659, %v3774
  %v4776 = vsel %vm4700, %v4660, %v3776
  %v4778 = vsel %vm4700, %v4662, %v3778
  %v4780 = vsel %vm4700, %v4663, %v3780
  %v4782 = vsel %vm4700, %v4665, %v3782
  %v4784 = vsel %vm4700, %v4666, %v3784
  %v4786 = vsel %vm4700, %v4668, %v3786
  %v4788 = vsel %vm4700, %v4669, %v3788
  %v4790 = vsel %vm4700, %v4671, %v3790
  %v4792 = vsel %vm4700, %v4672, %v3792
  %v4794 = vsel %vm4700, %v4674, %v3794
  %v4796 = vsel %vm4700, %v4675, %v3796
  %v4798 = vsel %vm4700, %v4677, %v3798
  %v4800 = vsel %vm4700, %v4678, %v3800
  %v4802 = vsel %vm4700, %v4680, %v3802
  %v4804 = vsel %vm4700, %v4681, %v3804
  %v4806 = vsel %vm4700, %v4683, %v3806
  %v4808 = vsel %vm4700, %v4684, %v3808
  %v4810 = vsel %vm4700, %v4686, %v3810
  %v4812 = vsel %vm4700, %v4687, %v3812
  %v4814 = vsel %vm4700, %v4689, %v3814
  %v4816 = vsel %vm4700, %v4690, %v3816
  %v4818 = vsel %vm4700, %v4692, %v3818
  %v4820 = vsel %vm4700, %v4693, %v3820
  %v4822 = vsel %vm4700, %v4695, %v3822
  %v4824 = vsel %vm4700, %v4696, %v3824
  %v4826 = vsel %vm4700, %v4698, %v3826
  %v4828 = vsel %vm4700, %v4699, %v3828
  %vm4829 = vsmask.f32 4352
  %v4830 = vshrl.u32 %v4702, 16
  %v4832 = vrot.slane %v4830, 3
  %v4833 = vshll.u32 %v4702, 16
  %v4835 = vrot.slane %v4833, 4
  %v4836 = vor.u32 %v4832, %v4835
  %v4837 = vshrl.u32 %v4704, 16
  %v4839 = vrot.slane %v4837, 3
  %v4840 = vshll.u32 %v4704, 16
  %v4842 = vrot.slane %v4840, 4
  %v4843 = vor.u32 %v4839, %v4842
  %v4844 = vsel %vm4829, %v4836, %v4843
  %v4845 = vshrl.u32 %v4706, 16
  %v4847 = vrot.slane %v4845, 3
  %v4848 = vshll.u32 %v4706, 16
  %v4850 = vrot.slane %v4848, 4
  %v4851 = vor.u32 %v4847, %v4850
  %v4852 = vshrl.u32 %v4708, 16
  %v4854 = vrot.slane %v4852, 3
  %v4855 = vshll.u32 %v4708, 16
  %v4857 = vrot.slane %v4855, 4
  %v4858 = vor.u32 %v4854, %v4857
  %v4859 = vsel %vm4829, %v4851, %v4858
  %v4860 = vshrl.u32 %v4710, 16
  %v4862 = vrot.slane %v4860, 3
  %v4863 = vshll.u32 %v4710, 16
  %v4865 = vrot.slane %v4863, 4
  %v4866 = vor.u32 %v4862, %v4865
  %v4867 = vshrl.u32 %v4712, 16
  %v4869 = vrot.slane %v4867, 3
  %v4870 = vshll.u32 %v4712, 16
  %v4872 = vrot.slane %v4870, 4
  %v4873 = vor.u32 %v4869, %v4872
  %v4874 = vsel %vm4829, %v4866, %v4873
  %v4875 = vshrl.u32 %v4714, 16
  %v4877 = vrot.slane %v4875, 3
  %v4878 = vshll.u32 %v4714, 16
  %v4880 = vrot.slane %v4878, 4
  %v4881 = vor.u32 %v4877, %v4880
  %v4882 = vshrl.u32 %v4716, 16
  %v4884 = vrot.slane %v4882, 3
  %v4885 = vshll.u32 %v4716, 16
  %v4887 = vrot.slane %v4885, 4
  %v4888 = vor.u32 %v4884, %v4887
  %v4889 = vsel %vm4829, %v4881, %v4888
  %v4890 = vshrl.u32 %v4718, 16
  %v4892 = vrot.slane %v4890, 3
  %v4893 = vshll.u32 %v4718, 16
  %v4895 = vrot.slane %v4893, 4
  %v4896 = vor.u32 %v4892, %v4895
  %v4897 = vshrl.u32 %v4720, 16
  %v4899 = vrot.slane %v4897, 3
  %v4900 = vshll.u32 %v4720, 16
  %v4902 = vrot.slane %v4900, 4
  %v4903 = vor.u32 %v4899, %v4902
  %v4904 = vsel %vm4829, %v4896, %v4903
  %v4905 = vshrl.u32 %v4722, 16
  %v4907 = vrot.slane %v4905, 3
  %v4908 = vshll.u32 %v4722, 16
  %v4910 = vrot.slane %v4908, 4
  %v4911 = vor.u32 %v4907, %v4910
  %v4912 = vshrl.u32 %v4724, 16
  %v4914 = vrot.slane %v4912, 3
  %v4915 = vshll.u32 %v4724, 16
  %v4917 = vrot.slane %v4915, 4
  %v4918 = vor.u32 %v4914, %v4917
  %v4919 = vsel %vm4829, %v4911, %v4918
  %v4920 = vshrl.u32 %v4726, 16
  %v4922 = vrot.slane %v4920, 3
  %v4923 = vshll.u32 %v4726, 16
  %v4925 = vrot.slane %v4923, 4
  %v4926 = vor.u32 %v4922, %v4925
  %v4927 = vshrl.u32 %v4728, 16
  %v4929 = vrot.slane %v4927, 3
  %v4930 = vshll.u32 %v4728, 16
  %v4932 = vrot.slane %v4930, 4
  %v4933 = vor.u32 %v4929, %v4932
  %v4934 = vsel %vm4829, %v4926, %v4933
  %v4935 = vshrl.u32 %v4730, 16
  %v4937 = vrot.slane %v4935, 3
  %v4938 = vshll.u32 %v4730, 16
  %v4940 = vrot.slane %v4938, 4
  %v4941 = vor.u32 %v4937, %v4940
  %v4942 = vshrl.u32 %v4732, 16
  %v4944 = vrot.slane %v4942, 3
  %v4945 = vshll.u32 %v4732, 16
  %v4947 = vrot.slane %v4945, 4
  %v4948 = vor.u32 %v4944, %v4947
  %v4949 = vsel %vm4829, %v4941, %v4948
  %v4950 = vshrl.u32 %v4734, 16
  %v4952 = vrot.slane %v4950, 3
  %v4953 = vshll.u32 %v4734, 16
  %v4955 = vrot.slane %v4953, 4
  %v4956 = vor.u32 %v4952, %v4955
  %v4957 = vshrl.u32 %v4736, 16
  %v4959 = vrot.slane %v4957, 3
  %v4960 = vshll.u32 %v4736, 16
  %v4962 = vrot.slane %v4960, 4
  %v4963 = vor.u32 %v4959, %v4962
  %v4964 = vsel %vm4829, %v4956, %v4963
  %v4965 = vshrl.u32 %v4738, 16
  %v4967 = vrot.slane %v4965, 3
  %v4968 = vshll.u32 %v4738, 16
  %v4970 = vrot.slane %v4968, 4
  %v4971 = vor.u32 %v4967, %v4970
  %v4972 = vshrl.u32 %v4740, 16
  %v4974 = vrot.slane %v4972, 3
  %v4975 = vshll.u32 %v4740, 16
  %v4977 = vrot.slane %v4975, 4
  %v4978 = vor.u32 %v4974, %v4977
  %v4979 = vsel %vm4829, %v4971, %v4978
  %v4980 = vshrl.u32 %v4742, 16
  %v4982 = vrot.slane %v4980, 3
  %v4983 = vshll.u32 %v4742, 16
  %v4985 = vrot.slane %v4983, 4
  %v4986 = vor.u32 %v4982, %v4985
  %v4987 = vshrl.u32 %v4744, 16
  %v4989 = vrot.slane %v4987, 3
  %v4990 = vshll.u32 %v4744, 16
  %v4992 = vrot.slane %v4990, 4
  %v4993 = vor.u32 %v4989, %v4992
  %v4994 = vsel %vm4829, %v4986, %v4993
  %v4995 = vshrl.u32 %v4746, 16
  %v4997 = vrot.slane %v4995, 3
  %v4998 = vshll.u32 %v4746, 16
  %v5000 = vrot.slane %v4998, 4
  %v5001 = vor.u32 %v4997, %v5000
  %v5002 = vshrl.u32 %v4748, 16
  %v5004 = vrot.slane %v5002, 3
  %v5005 = vshll.u32 %v4748, 16
  %v5007 = vrot.slane %v5005, 4
  %v5008 = vor.u32 %v5004, %v5007
  %v5009 = vsel %vm4829, %v5001, %v5008
  %v5010 = vshrl.u32 %v4750, 16
  %v5012 = vrot.slane %v5010, 3
  %v5013 = vshll.u32 %v4750, 16
  %v5015 = vrot.slane %v5013, 4
  %v5016 = vor.u32 %v5012, %v5015
  %v5017 = vshrl.u32 %v4752, 16
  %v5019 = vrot.slane %v5017, 3
  %v5020 = vshll.u32 %v4752, 16
  %v5022 = vrot.slane %v5020, 4
  %v5023 = vor.u32 %v5019, %v5022
  %v5024 = vsel %vm4829, %v5016, %v5023
  %v5025 = vshrl.u32 %v4754, 16
  %v5027 = vrot.slane %v5025, 3
  %v5028 = vshll.u32 %v4754, 16
  %v5030 = vrot.slane %v5028, 4
  %v5031 = vor.u32 %v5027, %v5030
  %v5032 = vshrl.u32 %v4756, 16
  %v5034 = vrot.slane %v5032, 3
  %v5035 = vshll.u32 %v4756, 16
  %v5037 = vrot.slane %v5035, 4
  %v5038 = vor.u32 %v5034, %v5037
  %v5039 = vsel %vm4829, %v5031, %v5038
  %v5040 = vshrl.u32 %v4758, 16
  %v5042 = vrot.slane %v5040, 3
  %v5043 = vshll.u32 %v4758, 16
  %v5045 = vrot.slane %v5043, 4
  %v5046 = vor.u32 %v5042, %v5045
  %v5047 = vshrl.u32 %v4760, 16
  %v5049 = vrot.slane %v5047, 3
  %v5050 = vshll.u32 %v4760, 16
  %v5052 = vrot.slane %v5050, 4
  %v5053 = vor.u32 %v5049, %v5052
  %v5054 = vsel %vm4829, %v5046, %v5053
  %v5055 = vshrl.u32 %v4762, 16
  %v5057 = vrot.slane %v5055, 3
  %v5058 = vshll.u32 %v4762, 16
  %v5060 = vrot.slane %v5058, 4
  %v5061 = vor.u32 %v5057, %v5060
  %v5062 = vshrl.u32 %v4764, 16
  %v5064 = vrot.slane %v5062, 3
  %v5065 = vshll.u32 %v4764, 16
  %v5067 = vrot.slane %v5065, 4
  %v5068 = vor.u32 %v5064, %v5067
  %v5069 = vsel %vm4829, %v5061, %v5068
  %v5070 = vshrl.u32 %v4766, 16
  %v5072 = vrot.slane %v5070, 3
  %v5073 = vshll.u32 %v4766, 16
  %v5075 = vrot.slane %v5073, 4
  %v5076 = vor.u32 %v5072, %v5075
  %v5077 = vshrl.u32 %v4768, 16
  %v5079 = vrot.slane %v5077, 3
  %v5080 = vshll.u32 %v4768, 16
  %v5082 = vrot.slane %v5080, 4
  %v5083 = vor.u32 %v5079, %v5082
  %v5084 = vsel %vm4829, %v5076, %v5083
  %v5085 = vshrl.u32 %v4770, 16
  %v5087 = vrot.slane %v5085, 3
  %v5088 = vshll.u32 %v4770, 16
  %v5090 = vrot.slane %v5088, 4
  %v5091 = vor.u32 %v5087, %v5090
  %v5092 = vshrl.u32 %v4772, 16
  %v5094 = vrot.slane %v5092, 3
  %v5095 = vshll.u32 %v4772, 16
  %v5097 = vrot.slane %v5095, 4
  %v5098 = vor.u32 %v5094, %v5097
  %v5099 = vsel %vm4829, %v5091, %v5098
  %v5100 = vshrl.u32 %v4774, 16
  %v5102 = vrot.slane %v5100, 3
  %v5103 = vshll.u32 %v4774, 16
  %v5105 = vrot.slane %v5103, 4
  %v5106 = vor.u32 %v5102, %v5105
  %v5107 = vshrl.u32 %v4776, 16
  %v5109 = vrot.slane %v5107, 3
  %v5110 = vshll.u32 %v4776, 16
  %v5112 = vrot.slane %v5110, 4
  %v5113 = vor.u32 %v5109, %v5112
  %v5114 = vsel %vm4829, %v5106, %v5113
  %v5115 = vshrl.u32 %v4778, 16
  %v5117 = vrot.slane %v5115, 3
  %v5118 = vshll.u32 %v4778, 16
  %v5120 = vrot.slane %v5118, 4
  %v5121 = vor.u32 %v5117, %v5120
  %v5122 = vshrl.u32 %v4780, 16
  %v5124 = vrot.slane %v5122, 3
  %v5125 = vshll.u32 %v4780, 16
  %v5127 = vrot.slane %v5125, 4
  %v5128 = vor.u32 %v5124, %v5127
  %v5129 = vsel %vm4829, %v5121, %v5128
  %v5130 = vshrl.u32 %v4782, 16
  %v5132 = vrot.slane %v5130, 3
  %v5133 = vshll.u32 %v4782, 16
  %v5135 = vrot.slane %v5133, 4
  %v5136 = vor.u32 %v5132, %v5135
  %v5137 = vshrl.u32 %v4784, 16
  %v5139 = vrot.slane %v5137, 3
  %v5140 = vshll.u32 %v4784, 16
  %v5142 = vrot.slane %v5140, 4
  %v5143 = vor.u32 %v5139, %v5142
  %v5144 = vsel %vm4829, %v5136, %v5143
  %v5145 = vshrl.u32 %v4786, 16
  %v5147 = vrot.slane %v5145, 3
  %v5148 = vshll.u32 %v4786, 16
  %v5150 = vrot.slane %v5148, 4
  %v5151 = vor.u32 %v5147, %v5150
  %v5152 = vshrl.u32 %v4788, 16
  %v5154 = vrot.slane %v5152, 3
  %v5155 = vshll.u32 %v4788, 16
  %v5157 = vrot.slane %v5155, 4
  %v5158 = vor.u32 %v5154, %v5157
  %v5159 = vsel %vm4829, %v5151, %v5158
  %v5160 = vshrl.u32 %v4790, 16
  %v5162 = vrot.slane %v5160, 3
  %v5163 = vshll.u32 %v4790, 16
  %v5165 = vrot.slane %v5163, 4
  %v5166 = vor.u32 %v5162, %v5165
  %v5167 = vshrl.u32 %v4792, 16
  %v5169 = vrot.slane %v5167, 3
  %v5170 = vshll.u32 %v4792, 16
  %v5172 = vrot.slane %v5170, 4
  %v5173 = vor.u32 %v5169, %v5172
  %v5174 = vsel %vm4829, %v5166, %v5173
  %v5175 = vshrl.u32 %v4794, 16
  %v5177 = vrot.slane %v5175, 3
  %v5178 = vshll.u32 %v4794, 16
  %v5180 = vrot.slane %v5178, 4
  %v5181 = vor.u32 %v5177, %v5180
  %v5182 = vshrl.u32 %v4796, 16
  %v5184 = vrot.slane %v5182, 3
  %v5185 = vshll.u32 %v4796, 16
  %v5187 = vrot.slane %v5185, 4
  %v5188 = vor.u32 %v5184, %v5187
  %v5189 = vsel %vm4829, %v5181, %v5188
  %v5190 = vshrl.u32 %v4798, 16
  %v5192 = vrot.slane %v5190, 3
  %v5193 = vshll.u32 %v4798, 16
  %v5195 = vrot.slane %v5193, 4
  %v5196 = vor.u32 %v5192, %v5195
  %v5197 = vshrl.u32 %v4800, 16
  %v5199 = vrot.slane %v5197, 3
  %v5200 = vshll.u32 %v4800, 16
  %v5202 = vrot.slane %v5200, 4
  %v5203 = vor.u32 %v5199, %v5202
  %v5204 = vsel %vm4829, %v5196, %v5203
  %v5205 = vshrl.u32 %v4802, 16
  %v5207 = vrot.slane %v5205, 3
  %v5208 = vshll.u32 %v4802, 16
  %v5210 = vrot.slane %v5208, 4
  %v5211 = vor.u32 %v5207, %v5210
  %v5212 = vshrl.u32 %v4804, 16
  %v5214 = vrot.slane %v5212, 3
  %v5215 = vshll.u32 %v4804, 16
  %v5217 = vrot.slane %v5215, 4
  %v5218 = vor.u32 %v5214, %v5217
  %v5219 = vsel %vm4829, %v5211, %v5218
  %v5220 = vshrl.u32 %v4806, 16
  %v5222 = vrot.slane %v5220, 3
  %v5223 = vshll.u32 %v4806, 16
  %v5225 = vrot.slane %v5223, 4
  %v5226 = vor.u32 %v5222, %v5225
  %v5227 = vshrl.u32 %v4808, 16
  %v5229 = vrot.slane %v5227, 3
  %v5230 = vshll.u32 %v4808, 16
  %v5232 = vrot.slane %v5230, 4
  %v5233 = vor.u32 %v5229, %v5232
  %v5234 = vsel %vm4829, %v5226, %v5233
  %v5235 = vshrl.u32 %v4810, 16
  %v5237 = vrot.slane %v5235, 3
  %v5238 = vshll.u32 %v4810, 16
  %v5240 = vrot.slane %v5238, 4
  %v5241 = vor.u32 %v5237, %v5240
  %v5242 = vshrl.u32 %v4812, 16
  %v5244 = vrot.slane %v5242, 3
  %v5245 = vshll.u32 %v4812, 16
  %v5247 = vrot.slane %v5245, 4
  %v5248 = vor.u32 %v5244, %v5247
  %v5249 = vsel %vm4829, %v5241, %v5248
  %v5250 = vshrl.u32 %v4814, 16
  %v5252 = vrot.slane %v5250, 3
  %v5253 = vshll.u32 %v4814, 16
  %v5255 = vrot.slane %v5253, 4
  %v5256 = vor.u32 %v5252, %v5255
  %v5257 = vshrl.u32 %v4816, 16
  %v5259 = vrot.slane %v5257, 3
  %v5260 = vshll.u32 %v4816, 16
  %v5262 = vrot.slane %v5260, 4
  %v5263 = vor.u32 %v5259, %v5262
  %v5264 = vsel %vm4829, %v5256, %v5263
  %v5265 = vshrl.u32 %v4818, 16
  %v5267 = vrot.slane %v5265, 3
  %v5268 = vshll.u32 %v4818, 16
  %v5270 = vrot.slane %v5268, 4
  %v5271 = vor.u32 %v5267, %v5270
  %v5272 = vshrl.u32 %v4820, 16
  %v5274 = vrot.slane %v5272, 3
  %v5275 = vshll.u32 %v4820, 16
  %v5277 = vrot.slane %v5275, 4
  %v5278 = vor.u32 %v5274, %v5277
  %v5279 = vsel %vm4829, %v5271, %v5278
  %v5280 = vshrl.u32 %v4822, 16
  %v5282 = vrot.slane %v5280, 3
  %v5283 = vshll.u32 %v4822, 16
  %v5285 = vrot.slane %v5283, 4
  %v5286 = vor.u32 %v5282, %v5285
  %v5287 = vshrl.u32 %v4824, 16
  %v5289 = vrot.slane %v5287, 3
  %v5290 = vshll.u32 %v4824, 16
  %v5292 = vrot.slane %v5290, 4
  %v5293 = vor.u32 %v5289, %v5292
  %v5294 = vsel %vm4829, %v5286, %v5293
  %v5295 = vshrl.u32 %v4826, 16
  %v5297 = vrot.slane %v5295, 3
  %v5298 = vshll.u32 %v4826, 16
  %v5300 = vrot.slane %v5298, 4
  %v5301 = vor.u32 %v5297, %v5300
  %v5302 = vshrl.u32 %v4828, 16
  %v5304 = vrot.slane %v5302, 3
  %v5305 = vshll.u32 %v4828, 16
  %v5307 = vrot.slane %v5305, 4
  %v5308 = vor.u32 %v5304, %v5307
  %v5309 = vsel %vm4829, %v5301, %v5308
  %v5310 = vld [vmem:[%s1] sm:$0xf]
  %v5311 = vld [vmem:[%s1 + $0x4] sm:$0xf]
  %v5312 = vld [vmem:[%s1 + $0x8] sm:$0xf]
  %v5313 = vld [vmem:[%s1 + $0xc] sm:$0xf]
  %v5314 = vld [vmem:[%s1 + $0x10] sm:$0x3]
  %v5320 = vunpack.c.l.b16 %v5310
  %v5321 = vunpack.c.l.b16 %v5311
  %v5322 = vunpack.c.l.b16 %v5312
  %v5323 = vunpack.c.l.b16 %v5313
  %v5324 = vunpack.c.l.b16 %v5314
  %v5325 = vpack.c.b16 %v5321, %v5320
  %v5326 = vpack.c.b16 %v5323, %v5322
  %v5327 = vpack.c.b16 %v5324, %v5324
  %vm5330 = vcmask 293888
  %v5332 = vsel %vm5330, %v4844, 0
  %v5335 = vsel %vm5330, %v4859, 0
  %v5338 = vsel %vm5330, %v4874, 0
  %v5341 = vsel %vm5330, %v4889, 0
  %v5344 = vsel %vm5330, %v4904, 0
  %v5347 = vsel %vm5330, %v4919, 0
  %v5350 = vsel %vm5330, %v4934, 0
  %v5353 = vsel %vm5330, %v4949, 0
  %v5356 = vsel %vm5330, %v4964, 0
  %v5359 = vsel %vm5330, %v4979, 0
  %v5362 = vsel %vm5330, %v4994, 0
  %v5365 = vsel %vm5330, %v5009, 0
  %v5368 = vsel %vm5330, %v5024, 0
  %v5371 = vsel %vm5330, %v5039, 0
  %v5374 = vsel %vm5330, %v5054, 0
  %v5377 = vsel %vm5330, %v5069, 0
  %v5380 = vsel %vm5330, %v5084, 0
  %v5383 = vsel %vm5330, %v5099, 0
  %v5386 = vsel %vm5330, %v5114, 0
  %v5389 = vsel %vm5330, %v5129, 0
  %v5392 = vsel %vm5330, %v5144, 0
  %v5395 = vsel %vm5330, %v5159, 0
  %v5398 = vsel %vm5330, %v5174, 0
  %v5401 = vsel %vm5330, %v5189, 0
  %v5404 = vsel %vm5330, %v5204, 0
  %v5407 = vsel %vm5330, %v5219, 0
  %v5410 = vsel %vm5330, %v5234, 0
  %v5413 = vsel %vm5330, %v5249, 0
  %v5416 = vsel %vm5330, %v5264, 0
  %v5419 = vsel %vm5330, %v5279, 0
  %v5422 = vsel %vm5330, %v5294, 0
  %v5425 = vsel %vm5330, %v5309, 0
  %vm5427 = vcmask 1041408
  %v5429 = vsel %vm5427, %v5327, 0
  %5431 = vmatpush.bf16.msra.mxu0 0
  %5432 = vmatpush.bf16.msra.mxu0 0
  %5433 = vmatpush.bf16.msra.mxu0 0
  %5434 = vmatpush.bf16.msra.mxu0 0
  %5435 = vmatpush.bf16.msra.mxu0 0
  %5436 = vmatpush.bf16.msra.mxu0 %v5429
  %5437 = vmatpush.bf16.msra.mxu0 %v5326
  %5438 = vmatpush.bf16.msra.mxu0 %v5325
  %5439 = vmatmul.bf16.gmra.mxu0 %v5332
  %v5440 = vpop.f32.mrf.mxu0
  %v5441 = vadd.f32 0.0, %v5440
  %v5442 = vpop.f32.mrf.mxu0
  %v5443 = vadd.f32 0.0, %v5442
  %5444 = vmatmul.bf16.gmra.mxu0 %v5335
  %v5445 = vpop.f32.mrf.mxu0
  %v5446 = vadd.f32 0.0, %v5445
  %v5447 = vpop.f32.mrf.mxu0
  %v5448 = vadd.f32 0.0, %v5447
  %5449 = vmatmul.bf16.gmra.mxu0 %v5338
  %v5450 = vpop.f32.mrf.mxu0
  %v5451 = vadd.f32 0.0, %v5450
  %v5452 = vpop.f32.mrf.mxu0
  %v5453 = vadd.f32 0.0, %v5452
  %5454 = vmatmul.bf16.gmra.mxu0 %v5341
  %v5455 = vpop.f32.mrf.mxu0
  %v5456 = vadd.f32 0.0, %v5455
  %v5457 = vpop.f32.mrf.mxu0
  %v5458 = vadd.f32 0.0, %v5457
  %5459 = vmatmul.bf16.gmra.mxu0 %v5344
  %v5460 = vpop.f32.mrf.mxu0
  %v5461 = vadd.f32 0.0, %v5460
  %v5462 = vpop.f32.mrf.mxu0
  %v5463 = vadd.f32 0.0, %v5462
  %5464 = vmatmul.bf16.gmra.mxu0 %v5347
  %v5465 = vpop.f32.mrf.mxu0
  %v5466 = vadd.f32 0.0, %v5465
  %v5467 = vpop.f32.mrf.mxu0
  %v5468 = vadd.f32 0.0, %v5467
  %5469 = vmatmul.bf16.gmra.mxu0 %v5350
  %v5470 = vpop.f32.mrf.mxu0
  %v5471 = vadd.f32 0.0, %v5470
  %v5472 = vpop.f32.mrf.mxu0
  %v5473 = vadd.f32 0.0, %v5472
  %5474 = vmatmul.bf16.gmra.mxu0 %v5353
  %v5475 = vpop.f32.mrf.mxu0
  %v5476 = vadd.f32 0.0, %v5475
  %v5477 = vpop.f32.mrf.mxu0
  %v5478 = vadd.f32 0.0, %v5477
  %5479 = vmatmul.bf16.gmra.mxu0 %v5356
  %v5480 = vpop.f32.mrf.mxu0
  %v5481 = vadd.f32 0.0, %v5480
  %v5482 = vpop.f32.mrf.mxu0
  %v5483 = vadd.f32 0.0, %v5482
  %5484 = vmatmul.bf16.gmra.mxu0 %v5359
  %v5485 = vpop.f32.mrf.mxu0
  %v5486 = vadd.f32 0.0, %v5485
  %v5487 = vpop.f32.mrf.mxu0
  %v5488 = vadd.f32 0.0, %v5487
  %5489 = vmatmul.bf16.gmra.mxu0 %v5362
  %v5490 = vpop.f32.mrf.mxu0
  %v5491 = vadd.f32 0.0, %v5490
  %v5492 = vpop.f32.mrf.mxu0
  %v5493 = vadd.f32 0.0, %v5492
  %5494 = vmatmul.bf16.gmra.mxu0 %v5365
  %v5495 = vpop.f32.mrf.mxu0
  %v5496 = vadd.f32 0.0, %v5495
  %v5497 = vpop.f32.mrf.mxu0
  %v5498 = vadd.f32 0.0, %v5497
  %5499 = vmatmul.bf16.gmra.mxu0 %v5368
  %v5500 = vpop.f32.mrf.mxu0
  %v5501 = vadd.f32 0.0, %v5500
  %v5502 = vpop.f32.mrf.mxu0
  %v5503 = vadd.f32 0.0, %v5502
  %5504 = vmatmul.bf16.gmra.mxu0 %v5371
  %v5505 = vpop.f32.mrf.mxu0
  %v5506 = vadd.f32 0.0, %v5505
  %v5507 = vpop.f32.mrf.mxu0
  %v5508 = vadd.f32 0.0, %v5507
  %5509 = vmatmul.bf16.gmra.mxu0 %v5374
  %v5510 = vpop.f32.mrf.mxu0
  %v5511 = vadd.f32 0.0, %v5510
  %v5512 = vpop.f32.mrf.mxu0
  %v5513 = vadd.f32 0.0, %v5512
  %5514 = vmatmul.bf16.gmra.mxu0 %v5377
  %v5515 = vpop.f32.mrf.mxu0
  %v5516 = vadd.f32 0.0, %v5515
  %v5517 = vpop.f32.mrf.mxu0
  %v5518 = vadd.f32 0.0, %v5517
  %5519 = vmatmul.bf16.gmra.mxu0 %v5380
  %v5520 = vpop.f32.mrf.mxu0
  %v5521 = vadd.f32 0.0, %v5520
  %v5522 = vpop.f32.mrf.mxu0
  %v5523 = vadd.f32 0.0, %v5522
  %5524 = vmatmul.bf16.gmra.mxu0 %v5383
  %v5525 = vpop.f32.mrf.mxu0
  %v5526 = vadd.f32 0.0, %v5525
  %v5527 = vpop.f32.mrf.mxu0
  %v5528 = vadd.f32 0.0, %v5527
  %5529 = vmatmul.bf16.gmra.mxu0 %v5386
  %v5530 = vpop.f32.mrf.mxu0
  %v5531 = vadd.f32 0.0, %v5530
  %v5532 = vpop.f32.mrf.mxu0
  %v5533 = vadd.f32 0.0, %v5532
  %5534 = vmatmul.bf16.gmra.mxu0 %v5389
  %v5535 = vpop.f32.mrf.mxu0
  %v5536 = vadd.f32 0.0, %v5535
  %v5537 = vpop.f32.mrf.mxu0
  %v5538 = vadd.f32 0.0, %v5537
  %5539 = vmatmul.bf16.gmra.mxu0 %v5392
  %v5540 = vpop.f32.mrf.mxu0
  %v5541 = vadd.f32 0.0, %v5540
  %v5542 = vpop.f32.mrf.mxu0
  %v5543 = vadd.f32 0.0, %v5542
  %5544 = vmatmul.bf16.gmra.mxu0 %v5395
  %v5545 = vpop.f32.mrf.mxu0
  %v5546 = vadd.f32 0.0, %v5545
  %v5547 = vpop.f32.mrf.mxu0
  %v5548 = vadd.f32 0.0, %v5547
  %5549 = vmatmul.bf16.gmra.mxu0 %v5398
  %v5550 = vpop.f32.mrf.mxu0
  %v5551 = vadd.f32 0.0, %v5550
  %v5552 = vpop.f32.mrf.mxu0
  %v5553 = vadd.f32 0.0, %v5552
  %5554 = vmatmul.bf16.gmra.mxu0 %v5401
  %v5555 = vpop.f32.mrf.mxu0
  %v5556 = vadd.f32 0.0, %v5555
  %v5557 = vpop.f32.mrf.mxu0
  %v5558 = vadd.f32 0.0, %v5557
  %5559 = vmatmul.bf16.gmra.mxu0 %v5404
  %v5560 = vpop.f32.mrf.mxu0
  %v5561 = vadd.f32 0.0, %v5560
  %v5562 = vpop.f32.mrf.mxu0
  %v5563 = vadd.f32 0.0, %v5562
  %5564 = vmatmul.bf16.gmra.mxu0 %v5407
  %v5565 = vpop.f32.mrf.mxu0
  %v5566 = vadd.f32 0.0, %v5565
  %v5567 = vpop.f32.mrf.mxu0
  %v5568 = vadd.f32 0.0, %v5567
  %5569 = vmatmul.bf16.gmra.mxu0 %v5410
  %v5570 = vpop.f32.mrf.mxu0
  %v5571 = vadd.f32 0.0, %v5570
  %v5572 = vpop.f32.mrf.mxu0
  %v5573 = vadd.f32 0.0, %v5572
  %5574 = vmatmul.bf16.gmra.mxu0 %v5413
  %v5575 = vpop.f32.mrf.mxu0
  %v5576 = vadd.f32 0.0, %v5575
  %v5577 = vpop.f32.mrf.mxu0
  %v5578 = vadd.f32 0.0, %v5577
  %5579 = vmatmul.bf16.gmra.mxu0 %v5416
  %v5580 = vpop.f32.mrf.mxu0
  %v5581 = vadd.f32 0.0, %v5580
  %v5582 = vpop.f32.mrf.mxu0
  %v5583 = vadd.f32 0.0, %v5582
  %5584 = vmatmul.bf16.gmra.mxu0 %v5419
  %v5585 = vpop.f32.mrf.mxu0
  %v5586 = vadd.f32 0.0, %v5585
  %v5587 = vpop.f32.mrf.mxu0
  %v5588 = vadd.f32 0.0, %v5587
  %5589 = vmatmul.bf16.gmra.mxu0 %v5422
  %v5590 = vpop.f32.mrf.mxu0
  %v5591 = vadd.f32 0.0, %v5590
  %v5592 = vpop.f32.mrf.mxu0
  %v5593 = vadd.f32 0.0, %v5592
  %5594 = vmatmul.bf16.gmra.mxu0 %v5425
  %v5595 = vpop.f32.mrf.mxu0
  %v5596 = vadd.f32 0.0, %v5595
  %v5597 = vpop.f32.mrf.mxu0
  %v5598 = vadd.f32 0.0, %v5597
  %5599 = vdwg.mxu0
  %v5600 = vpack.c.bf16 %v5441, %v5441
  %v5601 = vpack.c.bf16 %v5443, %v5443
  %v5602 = vpack.c.bf16 %v5446, %v5446
  %v5603 = vpack.c.bf16 %v5448, %v5448
  %v5604 = vpack.c.bf16 %v5451, %v5451
  %v5605 = vpack.c.bf16 %v5453, %v5453
  %v5606 = vpack.c.bf16 %v5456, %v5456
  %v5607 = vpack.c.bf16 %v5458, %v5458
  %v5608 = vpack.c.bf16 %v5461, %v5461
  %v5609 = vpack.c.bf16 %v5463, %v5463
  %v5610 = vpack.c.bf16 %v5466, %v5466
  %v5611 = vpack.c.bf16 %v5468, %v5468
  %v5612 = vpack.c.bf16 %v5471, %v5471
  %v5613 = vpack.c.bf16 %v5473, %v5473
  %v5614 = vpack.c.bf16 %v5476, %v5476
  %v5615 = vpack.c.bf16 %v5478, %v5478
  %v5616 = vpack.c.bf16 %v5481, %v5481
  %v5617 = vpack.c.bf16 %v5483, %v5483
  %v5618 = vpack.c.bf16 %v5486, %v5486
  %v5619 = vpack.c.bf16 %v5488, %v5488
  %v5620 = vpack.c.bf16 %v5491, %v5491
  %v5621 = vpack.c.bf16 %v5493, %v5493
  %v5622 = vpack.c.bf16 %v5496, %v5496
  %v5623 = vpack.c.bf16 %v5498, %v5498
  %v5624 = vpack.c.bf16 %v5501, %v5501
  %v5625 = vpack.c.bf16 %v5503, %v5503
  %v5626 = vpack.c.bf16 %v5506, %v5506
  %v5627 = vpack.c.bf16 %v5508, %v5508
  %v5628 = vpack.c.bf16 %v5511, %v5511
  %v5629 = vpack.c.bf16 %v5513, %v5513
  %v5630 = vpack.c.bf16 %v5516, %v5516
  %v5631 = vpack.c.bf16 %v5518, %v5518
  %v5632 = vpack.c.bf16 %v5521, %v5521
  %v5633 = vpack.c.bf16 %v5523, %v5523
  %v5634 = vpack.c.bf16 %v5526, %v5526
  %v5635 = vpack.c.bf16 %v5528, %v5528
  %v5636 = vpack.c.bf16 %v5531, %v5531
  %v5637 = vpack.c.bf16 %v5533, %v5533
  %v5638 = vpack.c.bf16 %v5536, %v5536
  %v5639 = vpack.c.bf16 %v5538, %v5538
  %v5640 = vpack.c.bf16 %v5541, %v5541
  %v5641 = vpack.c.bf16 %v5543, %v5543
  %v5642 = vpack.c.bf16 %v5546, %v5546
  %v5643 = vpack.c.bf16 %v5548, %v5548
  %v5644 = vpack.c.bf16 %v5551, %v5551
  %v5645 = vpack.c.bf16 %v5553, %v5553
  %v5646 = vpack.c.bf16 %v5556, %v5556
  %v5647 = vpack.c.bf16 %v5558, %v5558
  %v5648 = vpack.c.bf16 %v5561, %v5561
  %v5649 = vpack.c.bf16 %v5563, %v5563
  %v5650 = vpack.c.bf16 %v5566, %v5566
  %v5651 = vpack.c.bf16 %v5568, %v5568
  %v5652 = vpack.c.bf16 %v5571, %v5571
  %v5653 = vpack.c.bf16 %v5573, %v5573
  %v5654 = vpack.c.bf16 %v5576, %v5576
  %v5655 = vpack.c.bf16 %v5578, %v5578
  %v5656 = vpack.c.bf16 %v5581, %v5581
  %v5657 = vpack.c.bf16 %v5583, %v5583
  %v5658 = vpack.c.bf16 %v5586, %v5586
  %v5659 = vpack.c.bf16 %v5588, %v5588
  %v5660 = vpack.c.bf16 %v5591, %v5591
  %v5661 = vpack.c.bf16 %v5593, %v5593
  %v5662 = vpack.c.bf16 %v5596, %v5596
  %v5663 = vpack.c.bf16 %v5598, %v5598
  %vm5664 = vcmask 60416
  %5665 = vst.msk [vmem:[%s2] sm:$0xf] %vm5664, %v5600
  %5666 = vst.msk [vmem:[%s2 + $0x4] sm:$0xf] %vm5664, %v5601
  %5667 = vst.msk [vmem:[%s2 + $0x8] sm:$0xf] %vm5664, %v5602
  %5668 = vst.msk [vmem:[%s2 + $0xc] sm:$0xf] %vm5664, %v5603
  %5669 = vst.msk [vmem:[%s2 + $0x10] sm:$0xf] %vm5664, %v5604
  %5670 = vst.msk [vmem:[%s2 + $0x14] sm:$0xf] %vm5664, %v5605
  %5671 = vst.msk [vmem:[%s2 + $0x18] sm:$0xf] %vm5664, %v5606
  %5672 = vst.msk [vmem:[%s2 + $0x1c] sm:$0xf] %vm5664, %v5607
  %5673 = vst.msk [vmem:[%s2 + $0x20] sm:$0xf] %vm5664, %v5608
  %5674 = vst.msk [vmem:[%s2 + $0x24] sm:$0xf] %vm5664, %v5609
  %5675 = vst.msk [vmem:[%s2 + $0x28] sm:$0xf] %vm5664, %v5610
  %5676 = vst.msk [vmem:[%s2 + $0x2c] sm:$0xf] %vm5664, %v5611
  %5677 = vst.msk [vmem:[%s2 + $0x30] sm:$0xf] %vm5664, %v5612
  %5678 = vst.msk [vmem:[%s2 + $0x34] sm:$0xf] %vm5664, %v5613
  %5679 = vst.msk [vmem:[%s2 + $0x38] sm:$0xf] %vm5664, %v5614
  %5680 = vst.msk [vmem:[%s2 + $0x3c] sm:$0xf] %vm5664, %v5615
  %5681 = vst.msk [vmem:[%s2 + $0x40] sm:$0xf] %vm5664, %v5616
  %5682 = vst.msk [vmem:[%s2 + $0x44] sm:$0xf] %vm5664, %v5617
  %5683 = vst.msk [vmem:[%s2 + $0x48] sm:$0xf] %vm5664, %v5618
  %5684 = vst.msk [vmem:[%s2 + $0x4c] sm:$0xf] %vm5664, %v5619
  %5685 = vst.msk [vmem:[%s2 + $0x50] sm:$0xf] %vm5664, %v5620
  %5686 = vst.msk [vmem:[%s2 + $0x54] sm:$0xf] %vm5664, %v5621
  %5687 = vst.msk [vmem:[%s2 + $0x58] sm:$0xf] %vm5664, %v5622
  %5688 = vst.msk [vmem:[%s2 + $0x5c] sm:$0xf] %vm5664, %v5623
  %5689 = vst.msk [vmem:[%s2 + $0x60] sm:$0xf] %vm5664, %v5624
  %5690 = vst.msk [vmem:[%s2 + $0x64] sm:$0xf] %vm5664, %v5625
  %5691 = vst.msk [vmem:[%s2 + $0x68] sm:$0xf] %vm5664, %v5626
  %5692 = vst.msk [vmem:[%s2 + $0x6c] sm:$0xf] %vm5664, %v5627
  %5693 = vst.msk [vmem:[%s2 + $0x70] sm:$0xf] %vm5664, %v5628
  %5694 = vst.msk [vmem:[%s2 + $0x74] sm:$0xf] %vm5664, %v5629
  %5695 = vst.msk [vmem:[%s2 + $0x78] sm:$0xf] %vm5664, %v5630
  %5696 = vst.msk [vmem:[%s2 + $0x7c] sm:$0xf] %vm5664, %v5631
  %5697 = vst.msk [vmem:[%s2 + $0x80] sm:$0xf] %vm5664, %v5632
  %5698 = vst.msk [vmem:[%s2 + $0x84] sm:$0xf] %vm5664, %v5633
  %5699 = vst.msk [vmem:[%s2 + $0x88] sm:$0xf] %vm5664, %v5634
  %5700 = vst.msk [vmem:[%s2 + $0x8c] sm:$0xf] %vm5664, %v5635
  %5701 = vst.msk [vmem:[%s2 + $0x90] sm:$0xf] %vm5664, %v5636
  %5702 = vst.msk [vmem:[%s2 + $0x94] sm:$0xf] %vm5664, %v5637
  %5703 = vst.msk [vmem:[%s2 + $0x98] sm:$0xf] %vm5664, %v5638
  %5704 = vst.msk [vmem:[%s2 + $0x9c] sm:$0xf] %vm5664, %v5639
  %5705 = vst.msk [vmem:[%s2 + $0xa0] sm:$0xf] %vm5664, %v5640
  %5706 = vst.msk [vmem:[%s2 + $0xa4] sm:$0xf] %vm5664, %v5641
  %5707 = vst.msk [vmem:[%s2 + $0xa8] sm:$0xf] %vm5664, %v5642
  %5708 = vst.msk [vmem:[%s2 + $0xac] sm:$0xf] %vm5664, %v5643
  %5709 = vst.msk [vmem:[%s2 + $0xb0] sm:$0xf] %vm5664, %v5644
  %5710 = vst.msk [vmem:[%s2 + $0xb4] sm:$0xf] %vm5664, %v5645
  %5711 = vst.msk [vmem:[%s2 + $0xb8] sm:$0xf] %vm5664, %v5646
  %5712 = vst.msk [vmem:[%s2 + $0xbc] sm:$0xf] %vm5664, %v5647
  %5713 = vst.msk [vmem:[%s2 + $0xc0] sm:$0xf] %vm5664, %v5648
  %5714 = vst.msk [vmem:[%s2 + $0xc4] sm:$0xf] %vm5664, %v5649
  %5715 = vst.msk [vmem:[%s2 + $0xc8] sm:$0xf] %vm5664, %v5650
  %5716 = vst.msk [vmem:[%s2 + $0xcc] sm:$0xf] %vm5664, %v5651
  %5717 = vst.msk [vmem:[%s2 + $0xd0] sm:$0xf] %vm5664, %v5652
  %5718 = vst.msk [vmem:[%s2 + $0xd4] sm:$0xf] %vm5664, %v5653
  %5719 = vst.msk [vmem:[%s2 + $0xd8] sm:$0xf] %vm5664, %v5654
  %5720 = vst.msk [vmem:[%s2 + $0xdc] sm:$0xf] %vm5664, %v5655
  %5721 = vst.msk [vmem:[%s2 + $0xe0] sm:$0xf] %vm5664, %v5656
  %5722 = vst.msk [vmem:[%s2 + $0xe4] sm:$0xf] %vm5664, %v5657
  %5723 = vst.msk [vmem:[%s2 + $0xe8] sm:$0xf] %vm5664, %v5658
  %5724 = vst.msk [vmem:[%s2 + $0xec] sm:$0xf] %vm5664, %v5659
  %5725 = vst.msk [vmem:[%s2 + $0xf0] sm:$0xf] %vm5664, %v5660
  %5726 = vst.msk [vmem:[%s2 + $0xf4] sm:$0xf] %vm5664, %v5661
  %5727 = vst.msk [vmem:[%s2 + $0xf8] sm:$0xf] %vm5664, %v5662
  %5728 = vst.msk [vmem:[%s2 + $0xfc] sm:$0xf] %vm5664, %v5663
  %v5729 = vsel %vm3990, %v5441, 0.0
  %v5730 = vsel %vm3990, %v5443, 0.0
  %v5731 = vadd.f32 %v5729, %v5730
  %v5732 = vsel %vm3990, %v5446, 0.0
  %v5733 = vadd.f32 %v5731, %v5732
  %v5734 = vsel %vm3990, %v5448, 0.0
  %v5735 = vadd.f32 %v5733, %v5734
  %v5736 = vsel %vm3990, %v5451, 0.0
  %v5737 = vadd.f32 %v5735, %v5736
  %v5738 = vsel %vm3990, %v5453, 0.0
  %v5739 = vadd.f32 %v5737, %v5738
  %v5740 = vsel %vm3990, %v5456, 0.0
  %v5741 = vadd.f32 %v5739, %v5740
  %v5742 = vsel %vm3990, %v5458, 0.0
  %v5743 = vadd.f32 %v5741, %v5742
  %v5744 = vsel %vm3990, %v5461, 0.0
  %v5745 = vadd.f32 %v5743, %v5744
  %v5746 = vsel %vm3990, %v5463, 0.0
  %v5747 = vadd.f32 %v5745, %v5746
  %v5748 = vsel %vm3990, %v5466, 0.0
  %v5749 = vadd.f32 %v5747, %v5748
  %v5750 = vsel %vm3990, %v5468, 0.0
  %v5751 = vadd.f32 %v5749, %v5750
  %v5752 = vsel %vm3990, %v5471, 0.0
  %v5753 = vadd.f32 %v5751, %v5752
  %v5754 = vsel %vm3990, %v5473, 0.0
  %v5755 = vadd.f32 %v5753, %v5754
  %v5756 = vsel %vm3990, %v5476, 0.0
  %v5757 = vadd.f32 %v5755, %v5756
  %v5758 = vsel %vm3990, %v5478, 0.0
  %v5759 = vadd.f32 %v5757, %v5758
  %v5760 = vsel %vm3990, %v5481, 0.0
  %v5761 = vadd.f32 %v5759, %v5760
  %v5762 = vsel %vm3990, %v5483, 0.0
  %v5763 = vadd.f32 %v5761, %v5762
  %v5764 = vsel %vm3990, %v5486, 0.0
  %v5765 = vadd.f32 %v5763, %v5764
  %v5766 = vsel %vm3990, %v5488, 0.0
  %v5767 = vadd.f32 %v5765, %v5766
  %v5768 = vsel %vm3990, %v5491, 0.0
  %v5769 = vadd.f32 %v5767, %v5768
  %v5770 = vsel %vm3990, %v5493, 0.0
  %v5771 = vadd.f32 %v5769, %v5770
  %v5772 = vsel %vm3990, %v5496, 0.0
  %v5773 = vadd.f32 %v5771, %v5772
  %v5774 = vsel %vm3990, %v5498, 0.0
  %v5775 = vadd.f32 %v5773, %v5774
  %v5776 = vsel %vm3990, %v5501, 0.0
  %v5777 = vadd.f32 %v5775, %v5776
  %v5778 = vsel %vm3990, %v5503, 0.0
  %v5779 = vadd.f32 %v5777, %v5778
  %v5780 = vsel %vm3990, %v5506, 0.0
  %v5781 = vadd.f32 %v5779, %v5780
  %v5782 = vsel %vm3990, %v5508, 0.0
  %v5783 = vadd.f32 %v5781, %v5782
  %v5784 = vsel %vm3990, %v5511, 0.0
  %v5785 = vadd.f32 %v5783, %v5784
  %v5786 = vsel %vm3990, %v5513, 0.0
  %v5787 = vadd.f32 %v5785, %v5786
  %v5788 = vsel %vm3990, %v5516, 0.0
  %v5789 = vadd.f32 %v5787, %v5788
  %v5790 = vsel %vm3990, %v5518, 0.0
  %v5791 = vadd.f32 %v5789, %v5790
  %v5792 = vsel %vm3990, %v5521, 0.0
  %v5793 = vadd.f32 %v5791, %v5792
  %v5794 = vsel %vm3990, %v5523, 0.0
  %v5795 = vadd.f32 %v5793, %v5794
  %v5796 = vsel %vm3990, %v5526, 0.0
  %v5797 = vadd.f32 %v5795, %v5796
  %v5798 = vsel %vm3990, %v5528, 0.0
  %v5799 = vadd.f32 %v5797, %v5798
  %v5800 = vsel %vm3990, %v5531, 0.0
  %v5801 = vadd.f32 %v5799, %v5800
  %v5802 = vsel %vm3990, %v5533, 0.0
  %v5803 = vadd.f32 %v5801, %v5802
  %v5804 = vsel %vm3990, %v5536, 0.0
  %v5805 = vadd.f32 %v5803, %v5804
  %v5806 = vsel %vm3990, %v5538, 0.0
  %v5807 = vadd.f32 %v5805, %v5806
  %v5808 = vsel %vm3990, %v5541, 0.0
  %v5809 = vadd.f32 %v5807, %v5808
  %v5810 = vsel %vm3990, %v5543, 0.0
  %v5811 = vadd.f32 %v5809, %v5810
  %v5812 = vsel %vm3990, %v5546, 0.0
  %v5813 = vadd.f32 %v5811, %v5812
  %v5814 = vsel %vm3990, %v5548, 0.0
  %v5815 = vadd.f32 %v5813, %v5814
  %v5816 = vsel %vm3990, %v5551, 0.0
  %v5817 = vadd.f32 %v5815, %v5816
  %v5818 = vsel %vm3990, %v5553, 0.0
  %v5819 = vadd.f32 %v5817, %v5818
  %v5820 = vsel %vm3990, %v5556, 0.0
  %v5821 = vadd.f32 %v5819, %v5820
  %v5822 = vsel %vm3990, %v5558, 0.0
  %v5823 = vadd.f32 %v5821, %v5822
  %v5824 = vsel %vm3990, %v5561, 0.0
  %v5825 = vadd.f32 %v5823, %v5824
  %v5826 = vsel %vm3990, %v5563, 0.0
  %v5827 = vadd.f32 %v5825, %v5826
  %v5828 = vsel %vm3990, %v5566, 0.0
  %v5829 = vadd.f32 %v5827, %v5828
  %v5830 = vsel %vm3990, %v5568, 0.0
  %v5831 = vadd.f32 %v5829, %v5830
  %v5832 = vsel %vm3990, %v5571, 0.0
  %v5833 = vadd.f32 %v5831, %v5832
  %v5834 = vsel %vm3990, %v5573, 0.0
  %v5835 = vadd.f32 %v5833, %v5834
  %v5836 = vsel %vm3990, %v5576, 0.0
  %v5837 = vadd.f32 %v5835, %v5836
  %v5838 = vsel %vm3990, %v5578, 0.0
  %v5839 = vadd.f32 %v5837, %v5838
  %v5840 = vsel %vm3990, %v5581, 0.0
  %v5841 = vadd.f32 %v5839, %v5840
  %v5842 = vsel %vm3990, %v5583, 0.0
  %v5843 = vadd.f32 %v5841, %v5842
  %v5844 = vsel %vm3990, %v5586, 0.0
  %v5845 = vadd.f32 %v5843, %v5844
  %v5846 = vsel %vm3990, %v5588, 0.0
  %v5847 = vadd.f32 %v5845, %v5846
  %v5848 = vsel %vm3990, %v5591, 0.0
  %v5849 = vadd.f32 %v5847, %v5848
  %v5850 = vsel %vm3990, %v5593, 0.0
  %v5851 = vadd.f32 %v5849, %v5850
  %v5852 = vsel %vm3990, %v5596, 0.0
  %v5853 = vadd.f32 %v5851, %v5852
  %v5854 = vsel %vm3990, %v5598, 0.0
  %v5855 = vadd.f32 %v5853, %v5854
  %v5856 = vrot.slane %v5855, 4
  %v5857 = vadd.f32 %v5855, %v5856
  %v5858 = vrot.slane %v5857, 2
  %v5859 = vadd.f32 %v5857, %v5858
  %v5860 = vrot.slane %v5859, 1
  %v5861 = vadd.f32 %v5859, %v5860
  %vm5862 = vcmask 57344
  %5863 = vst.msk [vmem:[%s3] sm:$0x1] %vm5862, %v5861
  %v5864 = vmul.f32 %v5441, %v5441
  %v5865 = vmul.f32 %v5443, %v5443
  %v5866 = vmul.f32 %v5446, %v5446
  %v5867 = vmul.f32 %v5448, %v5448
  %v5868 = vmul.f32 %v5451, %v5451
  %v5869 = vmul.f32 %v5453, %v5453
  %v5870 = vmul.f32 %v5456, %v5456
  %v5871 = vmul.f32 %v5458, %v5458
  %v5872 = vmul.f32 %v5461, %v5461
  %v5873 = vmul.f32 %v5463, %v5463
  %v5874 = vmul.f32 %v5466, %v5466
  %v5875 = vmul.f32 %v5468, %v5468
  %v5876 = vmul.f32 %v5471, %v5471
  %v5877 = vmul.f32 %v5473, %v5473
  %v5878 = vmul.f32 %v5476, %v5476
  %v5879 = vmul.f32 %v5478, %v5478
  %v5880 = vmul.f32 %v5481, %v5481
  %v5881 = vmul.f32 %v5483, %v5483
  %v5882 = vmul.f32 %v5486, %v5486
  %v5883 = vmul.f32 %v5488, %v5488
  %v5884 = vmul.f32 %v5491, %v5491
  %v5885 = vmul.f32 %v5493, %v5493
  %v5886 = vmul.f32 %v5496, %v5496
  %v5887 = vmul.f32 %v5498, %v5498
  %v5888 = vmul.f32 %v5501, %v5501
  %v5889 = vmul.f32 %v5503, %v5503
  %v5890 = vmul.f32 %v5506, %v5506
  %v5891 = vmul.f32 %v5508, %v5508
  %v5892 = vmul.f32 %v5511, %v5511
  %v5893 = vmul.f32 %v5513, %v5513
  %v5894 = vmul.f32 %v5516, %v5516
  %v5895 = vmul.f32 %v5518, %v5518
  %v5896 = vmul.f32 %v5521, %v5521
  %v5897 = vmul.f32 %v5523, %v5523
  %v5898 = vmul.f32 %v5526, %v5526
  %v5899 = vmul.f32 %v5528, %v5528
  %v5900 = vmul.f32 %v5531, %v5531
  %v5901 = vmul.f32 %v5533, %v5533
  %v5902 = vmul.f32 %v5536, %v5536
  %v5903 = vmul.f32 %v5538, %v5538
  %v5904 = vmul.f32 %v5541, %v5541
  %v5905 = vmul.f32 %v5543, %v5543
  %v5906 = vmul.f32 %v5546, %v5546
  %v5907 = vmul.f32 %v5548, %v5548
  %v5908 = vmul.f32 %v5551, %v5551
  %v5909 = vmul.f32 %v5553, %v5553
  %v5910 = vmul.f32 %v5556, %v5556
  %v5911 = vmul.f32 %v5558, %v5558
  %v5912 = vmul.f32 %v5561, %v5561
  %v5913 = vmul.f32 %v5563, %v5563
  %v5914 = vmul.f32 %v5566, %v5566
  %v5915 = vmul.f32 %v5568, %v5568
  %v5916 = vmul.f32 %v5571, %v5571
  %v5917 = vmul.f32 %v5573, %v5573
  %v5918 = vmul.f32 %v5576, %v5576
  %v5919 = vmul.f32 %v5578, %v5578
  %v5920 = vmul.f32 %v5581, %v5581
  %v5921 = vmul.f32 %v5583, %v5583
  %v5922 = vmul.f32 %v5586, %v5586
  %v5923 = vmul.f32 %v5588, %v5588
  %v5924 = vmul.f32 %v5591, %v5591
  %v5925 = vmul.f32 %v5593, %v5593
  %v5926 = vmul.f32 %v5596, %v5596
  %v5927 = vmul.f32 %v5598, %v5598
  %v5928 = vsel %vm3990, %v5864, 0.0
  %v5929 = vsel %vm3990, %v5865, 0.0
  %v5930 = vadd.f32 %v5928, %v5929
  %v5931 = vsel %vm3990, %v5866, 0.0
  %v5932 = vadd.f32 %v5930, %v5931
  %v5933 = vsel %vm3990, %v5867, 0.0
  %v5934 = vadd.f32 %v5932, %v5933
  %v5935 = vsel %vm3990, %v5868, 0.0
  %v5936 = vadd.f32 %v5934, %v5935
  %v5937 = vsel %vm3990, %v5869, 0.0
  %v5938 = vadd.f32 %v5936, %v5937
  %v5939 = vsel %vm3990, %v5870, 0.0
  %v5940 = vadd.f32 %v5938, %v5939
  %v5941 = vsel %vm3990, %v5871, 0.0
  %v5942 = vadd.f32 %v5940, %v5941
  %v5943 = vsel %vm3990, %v5872, 0.0
  %v5944 = vadd.f32 %v5942, %v5943
  %v5945 = vsel %vm3990, %v5873, 0.0
  %v5946 = vadd.f32 %v5944, %v5945
  %v5947 = vsel %vm3990, %v5874, 0.0
  %v5948 = vadd.f32 %v5946, %v5947
  %v5949 = vsel %vm3990, %v5875, 0.0
  %v5950 = vadd.f32 %v5948, %v5949
  %v5951 = vsel %vm3990, %v5876, 0.0
  %v5952 = vadd.f32 %v5950, %v5951
  %v5953 = vsel %vm3990, %v5877, 0.0
  %v5954 = vadd.f32 %v5952, %v5953
  %v5955 = vsel %vm3990, %v5878, 0.0
  %v5956 = vadd.f32 %v5954, %v5955
  %v5957 = vsel %vm3990, %v5879, 0.0
  %v5958 = vadd.f32 %v5956, %v5957
  %v5959 = vsel %vm3990, %v5880, 0.0
  %v5960 = vadd.f32 %v5958, %v5959
  %v5961 = vsel %vm3990, %v5881, 0.0
  %v5962 = vadd.f32 %v5960, %v5961
  %v5963 = vsel %vm3990, %v5882, 0.0
  %v5964 = vadd.f32 %v5962, %v5963
  %v5965 = vsel %vm3990, %v5883, 0.0
  %v5966 = vadd.f32 %v5964, %v5965
  %v5967 = vsel %vm3990, %v5884, 0.0
  %v5968 = vadd.f32 %v5966, %v5967
  %v5969 = vsel %vm3990, %v5885, 0.0
  %v5970 = vadd.f32 %v5968, %v5969
  %v5971 = vsel %vm3990, %v5886, 0.0
  %v5972 = vadd.f32 %v5970, %v5971
  %v5973 = vsel %vm3990, %v5887, 0.0
  %v5974 = vadd.f32 %v5972, %v5973
  %v5975 = vsel %vm3990, %v5888, 0.0
  %v5976 = vadd.f32 %v5974, %v5975
  %v5977 = vsel %vm3990, %v5889, 0.0
  %v5978 = vadd.f32 %v5976, %v5977
  %v5979 = vsel %vm3990, %v5890, 0.0
  %v5980 = vadd.f32 %v5978, %v5979
  %v5981 = vsel %vm3990, %v5891, 0.0
  %v5982 = vadd.f32 %v5980, %v5981
  %v5983 = vsel %vm3990, %v5892, 0.0
  %v5984 = vadd.f32 %v5982, %v5983
  %v5985 = vsel %vm3990, %v5893, 0.0
  %v5986 = vadd.f32 %v5984, %v5985
  %v5987 = vsel %vm3990, %v5894, 0.0
  %v5988 = vadd.f32 %v5986, %v5987
  %v5989 = vsel %vm3990, %v5895, 0.0
  %v5990 = vadd.f32 %v5988, %v5989
  %v5991 = vsel %vm3990, %v5896, 0.0
  %v5992 = vadd.f32 %v5990, %v5991
  %v5993 = vsel %vm3990, %v5897, 0.0
  %v5994 = vadd.f32 %v5992, %v5993
  %v5995 = vsel %vm3990, %v5898, 0.0
  %v5996 = vadd.f32 %v5994, %v5995
  %v5997 = vsel %vm3990, %v5899, 0.0
  %v5998 = vadd.f32 %v5996, %v5997
  %v5999 = vsel %vm3990, %v5900, 0.0
  %v6000 = vadd.f32 %v5998, %v5999
  %v6001 = vsel %vm3990, %v5901, 0.0
  %v6002 = vadd.f32 %v6000, %v6001
  %v6003 = vsel %vm3990, %v5902, 0.0
  %v6004 = vadd.f32 %v6002, %v6003
  %v6005 = vsel %vm3990, %v5903, 0.0
  %v6006 = vadd.f32 %v6004, %v6005
  %v6007 = vsel %vm3990, %v5904, 0.0
  %v6008 = vadd.f32 %v6006, %v6007
  %v6009 = vsel %vm3990, %v5905, 0.0
  %v6010 = vadd.f32 %v6008, %v6009
  %v6011 = vsel %vm3990, %v5906, 0.0
  %v6012 = vadd.f32 %v6010, %v6011
  %v6013 = vsel %vm3990, %v5907, 0.0
  %v6014 = vadd.f32 %v6012, %v6013
  %v6015 = vsel %vm3990, %v5908, 0.0
  %v6016 = vadd.f32 %v6014, %v6015
  %v6017 = vsel %vm3990, %v5909, 0.0
  %v6018 = vadd.f32 %v6016, %v6017
  %v6019 = vsel %vm3990, %v5910, 0.0
  %v6020 = vadd.f32 %v6018, %v6019
  %v6021 = vsel %vm3990, %v5911, 0.0
  %v6022 = vadd.f32 %v6020, %v6021
  %v6023 = vsel %vm3990, %v5912, 0.0
  %v6024 = vadd.f32 %v6022, %v6023
  %v6025 = vsel %vm3990, %v5913, 0.0
  %v6026 = vadd.f32 %v6024, %v6025
  %v6027 = vsel %vm3990, %v5914, 0.0
  %v6028 = vadd.f32 %v6026, %v6027
  %v6029 = vsel %vm3990, %v5915, 0.0
  %v6030 = vadd.f32 %v6028, %v6029
  %v6031 = vsel %vm3990, %v5916, 0.0
  %v6032 = vadd.f32 %v6030, %v6031
  %v6033 = vsel %vm3990, %v5917, 0.0
  %v6034 = vadd.f32 %v6032, %v6033
  %v6035 = vsel %vm3990, %v5918, 0.0
  %v6036 = vadd.f32 %v6034, %v6035
  %v6037 = vsel %vm3990, %v5919, 0.0
  %v6038 = vadd.f32 %v6036, %v6037
  %v6039 = vsel %vm3990, %v5920, 0.0
  %v6040 = vadd.f32 %v6038, %v6039
  %v6041 = vsel %vm3990, %v5921, 0.0
  %v6042 = vadd.f32 %v6040, %v6041
  %v6043 = vsel %vm3990, %v5922, 0.0
  %v6044 = vadd.f32 %v6042, %v6043
  %v6045 = vsel %vm3990, %v5923, 0.0
  %v6046 = vadd.f32 %v6044, %v6045
  %v6047 = vsel %vm3990, %v5924, 0.0
  %v6048 = vadd.f32 %v6046, %v6047
  %v6049 = vsel %vm3990, %v5925, 0.0
  %v6050 = vadd.f32 %v6048, %v6049
  %v6051 = vsel %vm3990, %v5926, 0.0
  %v6052 = vadd.f32 %v6050, %v6051
  %v6053 = vsel %vm3990, %v5927, 0.0
  %v6054 = vadd.f32 %v6052, %v6053
  %v6055 = vrot.slane %v6054, 4
  %v6056 = vadd.f32 %v6054, %v6055
  %v6057 = vrot.slane %v6056, 2
  %v6058 = vadd.f32 %v6056, %v6057
  %v6059 = vrot.slane %v6058, 1
  %v6060 = vadd.f32 %v6058, %v6059
  %6061 = vst.msk [vmem:[%s4] sm:$0x1] %vm5862, %v6060
  %6126 = vrot.lane.b32.xlu0 %v5600, 120
  %v6127 = vpop.permute.xlu0 %6126
  %6128 = vrot.lane.b32.xlu0 %v5601, 120
  %v6129 = vpop.permute.xlu0 %6128
  %6130 = vrot.lane.b32.xlu0 %v5602, 120
  %v6131 = vpop.permute.xlu0 %6130
  %6132 = vrot.lane.b32.xlu0 %v5603, 120
  %v6133 = vpop.permute.xlu0 %6132
  %6134 = vrot.lane.b32.xlu0 %v5604, 120
  %v6135 = vpop.permute.xlu0 %6134
  %6136 = vrot.lane.b32.xlu0 %v5605, 120
  %v6137 = vpop.permute.xlu0 %6136
  %6138 = vrot.lane.b32.xlu0 %v5606, 120
  %v6139 = vpop.permute.xlu0 %6138
  %6140 = vrot.lane.b32.xlu0 %v5607, 120
  %v6141 = vpop.permute.xlu0 %6140
  %6142 = vrot.lane.b32.xlu0 %v5608, 120
  %v6143 = vpop.permute.xlu0 %6142
  %6144 = vrot.lane.b32.xlu0 %v5609, 120
  %v6145 = vpop.permute.xlu0 %6144
  %6146 = vrot.lane.b32.xlu0 %v5610, 120
  %v6147 = vpop.permute.xlu0 %6146
  %6148 = vrot.lane.b32.xlu0 %v5611, 120
  %v6149 = vpop.permute.xlu0 %6148
  %6150 = vrot.lane.b32.xlu0 %v5612, 120
  %v6151 = vpop.permute.xlu0 %6150
  %6152 = vrot.lane.b32.xlu0 %v5613, 120
  %v6153 = vpop.permute.xlu0 %6152
  %6154 = vrot.lane.b32.xlu0 %v5614, 120
  %v6155 = vpop.permute.xlu0 %6154
  %6156 = vrot.lane.b32.xlu0 %v5615, 120
  %v6157 = vpop.permute.xlu0 %6156
  %6158 = vrot.lane.b32.xlu0 %v5616, 120
  %v6159 = vpop.permute.xlu0 %6158
  %6160 = vrot.lane.b32.xlu0 %v5617, 120
  %v6161 = vpop.permute.xlu0 %6160
  %6162 = vrot.lane.b32.xlu0 %v5618, 120
  %v6163 = vpop.permute.xlu0 %6162
  %6164 = vrot.lane.b32.xlu0 %v5619, 120
  %v6165 = vpop.permute.xlu0 %6164
  %6166 = vrot.lane.b32.xlu0 %v5620, 120
  %v6167 = vpop.permute.xlu0 %6166
  %6168 = vrot.lane.b32.xlu0 %v5621, 120
  %v6169 = vpop.permute.xlu0 %6168
  %6170 = vrot.lane.b32.xlu0 %v5622, 120
  %v6171 = vpop.permute.xlu0 %6170
  %6172 = vrot.lane.b32.xlu0 %v5623, 120
  %v6173 = vpop.permute.xlu0 %6172
  %6174 = vrot.lane.b32.xlu0 %v5624, 120
  %v6175 = vpop.permute.xlu0 %6174
  %6176 = vrot.lane.b32.xlu0 %v5625, 120
  %v6177 = vpop.permute.xlu0 %6176
  %6178 = vrot.lane.b32.xlu0 %v5626, 120
  %v6179 = vpop.permute.xlu0 %6178
  %6180 = vrot.lane.b32.xlu0 %v5627, 120
  %v6181 = vpop.permute.xlu0 %6180
  %6182 = vrot.lane.b32.xlu0 %v5628, 120
  %v6183 = vpop.permute.xlu0 %6182
  %6184 = vrot.lane.b32.xlu0 %v5629, 120
  %v6185 = vpop.permute.xlu0 %6184
  %6186 = vrot.lane.b32.xlu0 %v5630, 120
  %v6187 = vpop.permute.xlu0 %6186
  %6188 = vrot.lane.b32.xlu0 %v5631, 120
  %v6189 = vpop.permute.xlu0 %6188
  %6190 = vrot.lane.b32.xlu0 %v5632, 120
  %v6191 = vpop.permute.xlu0 %6190
  %6192 = vrot.lane.b32.xlu0 %v5633, 120
  %v6193 = vpop.permute.xlu0 %6192
  %6194 = vrot.lane.b32.xlu0 %v5634, 120
  %v6195 = vpop.permute.xlu0 %6194
  %6196 = vrot.lane.b32.xlu0 %v5635, 120
  %v6197 = vpop.permute.xlu0 %6196
  %6198 = vrot.lane.b32.xlu0 %v5636, 120
  %v6199 = vpop.permute.xlu0 %6198
  %6200 = vrot.lane.b32.xlu0 %v5637, 120
  %v6201 = vpop.permute.xlu0 %6200
  %6202 = vrot.lane.b32.xlu0 %v5638, 120
  %v6203 = vpop.permute.xlu0 %6202
  %6204 = vrot.lane.b32.xlu0 %v5639, 120
  %v6205 = vpop.permute.xlu0 %6204
  %6206 = vrot.lane.b32.xlu0 %v5640, 120
  %v6207 = vpop.permute.xlu0 %6206
  %6208 = vrot.lane.b32.xlu0 %v5641, 120
  %v6209 = vpop.permute.xlu0 %6208
  %6210 = vrot.lane.b32.xlu0 %v5642, 120
  %v6211 = vpop.permute.xlu0 %6210
  %6212 = vrot.lane.b32.xlu0 %v5643, 120
  %v6213 = vpop.permute.xlu0 %6212
  %6214 = vrot.lane.b32.xlu0 %v5644, 120
  %v6215 = vpop.permute.xlu0 %6214
  %6216 = vrot.lane.b32.xlu0 %v5645, 120
  %v6217 = vpop.permute.xlu0 %6216
  %6218 = vrot.lane.b32.xlu0 %v5646, 120
  %v6219 = vpop.permute.xlu0 %6218
  %6220 = vrot.lane.b32.xlu0 %v5647, 120
  %v6221 = vpop.permute.xlu0 %6220
  %6222 = vrot.lane.b32.xlu0 %v5648, 120
  %v6223 = vpop.permute.xlu0 %6222
  %6224 = vrot.lane.b32.xlu0 %v5649, 120
  %v6225 = vpop.permute.xlu0 %6224
  %6226 = vrot.lane.b32.xlu0 %v5650, 120
  %v6227 = vpop.permute.xlu0 %6226
  %6228 = vrot.lane.b32.xlu0 %v5651, 120
  %v6229 = vpop.permute.xlu0 %6228
  %6230 = vrot.lane.b32.xlu0 %v5652, 120
  %v6231 = vpop.permute.xlu0 %6230
  %6232 = vrot.lane.b32.xlu0 %v5653, 120
  %v6233 = vpop.permute.xlu0 %6232
  %6234 = vrot.lane.b32.xlu0 %v5654, 120
  %v6235 = vpop.permute.xlu0 %6234
  %6236 = vrot.lane.b32.xlu0 %v5655, 120
  %v6237 = vpop.permute.xlu0 %6236
  %6238 = vrot.lane.b32.xlu0 %v5656, 120
  %v6239 = vpop.permute.xlu0 %6238
  %6240 = vrot.lane.b32.xlu0 %v5657, 120
  %v6241 = vpop.permute.xlu0 %6240
  %6242 = vrot.lane.b32.xlu0 %v5658, 120
  %v6243 = vpop.permute.xlu0 %6242
  %6244 = vrot.lane.b32.xlu0 %v5659, 120
  %v6245 = vpop.permute.xlu0 %6244
  %6246 = vrot.lane.b32.xlu0 %v5660, 120
  %v6247 = vpop.permute.xlu0 %6246
  %6248 = vrot.lane.b32.xlu0 %v5661, 120
  %v6249 = vpop.permute.xlu0 %6248
  %6250 = vrot.lane.b32.xlu0 %v5662, 120
  %v6251 = vpop.permute.xlu0 %6250
  %6252 = vrot.lane.b32.xlu0 %v5663, 120
  %v6253 = vpop.permute.xlu0 %6252
  %6318 = vst.msk [vmem:[%s5] sm:$0xf] %vm5664, %v6127
  %6319 = vst.msk [vmem:[%s5 + $0x4] sm:$0xf] %vm5664, %v6129
  %6320 = vst.msk [vmem:[%s5 + $0x8] sm:$0xf] %vm5664, %v6131
  %6321 = vst.msk [vmem:[%s5 + $0xc] sm:$0xf] %vm5664, %v6133
  %6322 = vst.msk [vmem:[%s5 + $0x10] sm:$0xf] %vm5664, %v6135
  %6323 = vst.msk [vmem:[%s5 + $0x14] sm:$0xf] %vm5664, %v6137
  %6324 = vst.msk [vmem:[%s5 + $0x18] sm:$0xf] %vm5664, %v6139
  %6325 = vst.msk [vmem:[%s5 + $0x1c] sm:$0xf] %vm5664, %v6141
  %6326 = vst.msk [vmem:[%s5 + $0x20] sm:$0xf] %vm5664, %v6143
  %6327 = vst.msk [vmem:[%s5 + $0x24] sm:$0xf] %vm5664, %v6145
  %6328 = vst.msk [vmem:[%s5 + $0x28] sm:$0xf] %vm5664, %v6147
  %6329 = vst.msk [vmem:[%s5 + $0x2c] sm:$0xf] %vm5664, %v6149
  %6330 = vst.msk [vmem:[%s5 + $0x30] sm:$0xf] %vm5664, %v6151
  %6331 = vst.msk [vmem:[%s5 + $0x34] sm:$0xf] %vm5664, %v6153
  %6332 = vst.msk [vmem:[%s5 + $0x38] sm:$0xf] %vm5664, %v6155
  %6333 = vst.msk [vmem:[%s5 + $0x3c] sm:$0xf] %vm5664, %v6157
  %6334 = vst.msk [vmem:[%s5 + $0x40] sm:$0xf] %vm5664, %v6159
  %6335 = vst.msk [vmem:[%s5 + $0x44] sm:$0xf] %vm5664, %v6161
  %6336 = vst.msk [vmem:[%s5 + $0x48] sm:$0xf] %vm5664, %v6163
  %6337 = vst.msk [vmem:[%s5 + $0x4c] sm:$0xf] %vm5664, %v6165
  %6338 = vst.msk [vmem:[%s5 + $0x50] sm:$0xf] %vm5664, %v6167
  %6339 = vst.msk [vmem:[%s5 + $0x54] sm:$0xf] %vm5664, %v6169
  %6340 = vst.msk [vmem:[%s5 + $0x58] sm:$0xf] %vm5664, %v6171
  %6341 = vst.msk [vmem:[%s5 + $0x5c] sm:$0xf] %vm5664, %v6173
  %6342 = vst.msk [vmem:[%s5 + $0x60] sm:$0xf] %vm5664, %v6175
  %6343 = vst.msk [vmem:[%s5 + $0x64] sm:$0xf] %vm5664, %v6177
  %6344 = vst.msk [vmem:[%s5 + $0x68] sm:$0xf] %vm5664, %v6179
  %6345 = vst.msk [vmem:[%s5 + $0x6c] sm:$0xf] %vm5664, %v6181
  %6346 = vst.msk [vmem:[%s5 + $0x70] sm:$0xf] %vm5664, %v6183
  %6347 = vst.msk [vmem:[%s5 + $0x74] sm:$0xf] %vm5664, %v6185
  %6348 = vst.msk [vmem:[%s5 + $0x78] sm:$0xf] %vm5664, %v6187
  %6349 = vst.msk [vmem:[%s5 + $0x7c] sm:$0xf] %vm5664, %v6189
  %6350 = vst.msk [vmem:[%s5 + $0x80] sm:$0xf] %vm5664, %v6191
  %6351 = vst.msk [vmem:[%s5 + $0x84] sm:$0xf] %vm5664, %v6193
  %6352 = vst.msk [vmem:[%s5 + $0x88] sm:$0xf] %vm5664, %v6195
  %6353 = vst.msk [vmem:[%s5 + $0x8c] sm:$0xf] %vm5664, %v6197
  %6354 = vst.msk [vmem:[%s5 + $0x90] sm:$0xf] %vm5664, %v6199
  %6355 = vst.msk [vmem:[%s5 + $0x94] sm:$0xf] %vm5664, %v6201
  %6356 = vst.msk [vmem:[%s5 + $0x98] sm:$0xf] %vm5664, %v6203
  %6357 = vst.msk [vmem:[%s5 + $0x9c] sm:$0xf] %vm5664, %v6205
  %6358 = vst.msk [vmem:[%s5 + $0xa0] sm:$0xf] %vm5664, %v6207
  %6359 = vst.msk [vmem:[%s5 + $0xa4] sm:$0xf] %vm5664, %v6209
  %6360 = vst.msk [vmem:[%s5 + $0xa8] sm:$0xf] %vm5664, %v6211
  %6361 = vst.msk [vmem:[%s5 + $0xac] sm:$0xf] %vm5664, %v6213
  %6362 = vst.msk [vmem:[%s5 + $0xb0] sm:$0xf] %vm5664, %v6215
  %6363 = vst.msk [vmem:[%s5 + $0xb4] sm:$0xf] %vm5664, %v6217
  %6364 = vst.msk [vmem:[%s5 + $0xb8] sm:$0xf] %vm5664, %v6219
  %6365 = vst.msk [vmem:[%s5 + $0xbc] sm:$0xf] %vm5664, %v6221
  %6366 = vst.msk [vmem:[%s5 + $0xc0] sm:$0xf] %vm5664, %v6223
  %6367 = vst.msk [vmem:[%s5 + $0xc4] sm:$0xf] %vm5664, %v6225
  %6368 = vst.msk [vmem:[%s5 + $0xc8] sm:$0xf] %vm5664, %v6227
  %6369 = vst.msk [vmem:[%s5 + $0xcc] sm:$0xf] %vm5664, %v6229
  %6370 = vst.msk [vmem:[%s5 + $0xd0] sm:$0xf] %vm5664, %v6231
  %6371 = vst.msk [vmem:[%s5 + $0xd4] sm:$0xf] %vm5664, %v6233
  %6372 = vst.msk [vmem:[%s5 + $0xd8] sm:$0xf] %vm5664, %v6235
  %6373 = vst.msk [vmem:[%s5 + $0xdc] sm:$0xf] %vm5664, %v6237
  %6374 = vst.msk [vmem:[%s5 + $0xe0] sm:$0xf] %vm5664, %v6239
  %6375 = vst.msk [vmem:[%s5 + $0xe4] sm:$0xf] %vm5664, %v6241
  %6376 = vst.msk [vmem:[%s5 + $0xe8] sm:$0xf] %vm5664, %v6243
  %6377 = vst.msk [vmem:[%s5 + $0xec] sm:$0xf] %vm5664, %v6245
  %6378 = vst.msk [vmem:[%s5 + $0xf0] sm:$0xf] %vm5664, %v6247
  %6379 = vst.msk [vmem:[%s5 + $0xf4] sm:$0xf] %vm5664, %v6249
  %6380 = vst.msk [vmem:[%s5 + $0xf8] sm:$0xf] %vm5664, %v6251
  %6381 = vst.msk [vmem:[%s5 + $0xfc] sm:$0xf] %vm5664, %v6253
  %vm6382 = vcmask 130112
  %v6383 = vsel %vm6382, %v5441, 0.0
  %v6384 = vsel %vm6382, %v5443, 0.0
  %v6385 = vadd.f32 %v6383, %v6384
  %v6386 = vsel %vm6382, %v5446, 0.0
  %v6387 = vadd.f32 %v6385, %v6386
  %v6388 = vsel %vm6382, %v5448, 0.0
  %v6389 = vadd.f32 %v6387, %v6388
  %v6390 = vsel %vm6382, %v5451, 0.0
  %v6391 = vadd.f32 %v6389, %v6390
  %v6392 = vsel %vm6382, %v5453, 0.0
  %v6393 = vadd.f32 %v6391, %v6392
  %v6394 = vsel %vm6382, %v5456, 0.0
  %v6395 = vadd.f32 %v6393, %v6394
  %v6396 = vsel %vm6382, %v5458, 0.0
  %v6397 = vadd.f32 %v6395, %v6396
  %v6398 = vsel %vm6382, %v5461, 0.0
  %v6399 = vadd.f32 %v6397, %v6398
  %v6400 = vsel %vm6382, %v5463, 0.0
  %v6401 = vadd.f32 %v6399, %v6400
  %v6402 = vsel %vm6382, %v5466, 0.0
  %v6403 = vadd.f32 %v6401, %v6402
  %v6404 = vsel %vm6382, %v5468, 0.0
  %v6405 = vadd.f32 %v6403, %v6404
  %v6406 = vsel %vm6382, %v5471, 0.0
  %v6407 = vadd.f32 %v6405, %v6406
  %v6408 = vsel %vm6382, %v5473, 0.0
  %v6409 = vadd.f32 %v6407, %v6408
  %v6410 = vsel %vm6382, %v5476, 0.0
  %v6411 = vadd.f32 %v6409, %v6410
  %v6412 = vsel %vm6382, %v5478, 0.0
  %v6413 = vadd.f32 %v6411, %v6412
  %v6414 = vsel %vm6382, %v5481, 0.0
  %v6415 = vadd.f32 %v6413, %v6414
  %v6416 = vsel %vm6382, %v5483, 0.0
  %v6417 = vadd.f32 %v6415, %v6416
  %v6418 = vsel %vm6382, %v5486, 0.0
  %v6419 = vadd.f32 %v6417, %v6418
  %v6420 = vsel %vm6382, %v5488, 0.0
  %v6421 = vadd.f32 %v6419, %v6420
  %v6422 = vsel %vm6382, %v5491, 0.0
  %v6423 = vadd.f32 %v6421, %v6422
  %v6424 = vsel %vm6382, %v5493, 0.0
  %v6425 = vadd.f32 %v6423, %v6424
  %v6426 = vsel %vm6382, %v5496, 0.0
  %v6427 = vadd.f32 %v6425, %v6426
  %v6428 = vsel %vm6382, %v5498, 0.0
  %v6429 = vadd.f32 %v6427, %v6428
  %v6430 = vsel %vm6382, %v5501, 0.0
  %v6431 = vadd.f32 %v6429, %v6430
  %v6432 = vsel %vm6382, %v5503, 0.0
  %v6433 = vadd.f32 %v6431, %v6432
  %v6434 = vsel %vm6382, %v5506, 0.0
  %v6435 = vadd.f32 %v6433, %v6434
  %v6436 = vsel %vm6382, %v5508, 0.0
  %v6437 = vadd.f32 %v6435, %v6436
  %v6438 = vsel %vm6382, %v5511, 0.0
  %v6439 = vadd.f32 %v6437, %v6438
  %v6440 = vsel %vm6382, %v5513, 0.0
  %v6441 = vadd.f32 %v6439, %v6440
  %v6442 = vsel %vm6382, %v5516, 0.0
  %v6443 = vadd.f32 %v6441, %v6442
  %v6444 = vsel %vm6382, %v5518, 0.0
  %v6445 = vadd.f32 %v6443, %v6444
  %v6446 = vsel %vm6382, %v5521, 0.0
  %v6447 = vadd.f32 %v6445, %v6446
  %v6448 = vsel %vm6382, %v5523, 0.0
  %v6449 = vadd.f32 %v6447, %v6448
  %v6450 = vsel %vm6382, %v5526, 0.0
  %v6451 = vadd.f32 %v6449, %v6450
  %v6452 = vsel %vm6382, %v5528, 0.0
  %v6453 = vadd.f32 %v6451, %v6452
  %v6454 = vsel %vm6382, %v5531, 0.0
  %v6455 = vadd.f32 %v6453, %v6454
  %v6456 = vsel %vm6382, %v5533, 0.0
  %v6457 = vadd.f32 %v6455, %v6456
  %v6458 = vsel %vm6382, %v5536, 0.0
  %v6459 = vadd.f32 %v6457, %v6458
  %v6460 = vsel %vm6382, %v5538, 0.0
  %v6461 = vadd.f32 %v6459, %v6460
  %v6462 = vsel %vm6382, %v5541, 0.0
  %v6463 = vadd.f32 %v6461, %v6462
  %v6464 = vsel %vm6382, %v5543, 0.0
  %v6465 = vadd.f32 %v6463, %v6464
  %v6466 = vsel %vm6382, %v5546, 0.0
  %v6467 = vadd.f32 %v6465, %v6466
  %v6468 = vsel %vm6382, %v5548, 0.0
  %v6469 = vadd.f32 %v6467, %v6468
  %v6470 = vsel %vm6382, %v5551, 0.0
  %v6471 = vadd.f32 %v6469, %v6470
  %v6472 = vsel %vm6382, %v5553, 0.0
  %v6473 = vadd.f32 %v6471, %v6472
  %v6474 = vsel %vm6382, %v5556, 0.0
  %v6475 = vadd.f32 %v6473, %v6474
  %v6476 = vsel %vm6382, %v5558, 0.0
  %v6477 = vadd.f32 %v6475, %v6476
  %v6478 = vsel %vm6382, %v5561, 0.0
  %v6479 = vadd.f32 %v6477, %v6478
  %v6480 = vsel %vm6382, %v5563, 0.0
  %v6481 = vadd.f32 %v6479, %v6480
  %v6482 = vsel %vm6382, %v5566, 0.0
  %v6483 = vadd.f32 %v6481, %v6482
  %v6484 = vsel %vm6382, %v5568, 0.0
  %v6485 = vadd.f32 %v6483, %v6484
  %v6486 = vsel %vm6382, %v5571, 0.0
  %v6487 = vadd.f32 %v6485, %v6486
  %v6488 = vsel %vm6382, %v5573, 0.0
  %v6489 = vadd.f32 %v6487, %v6488
  %v6490 = vsel %vm6382, %v5576, 0.0
  %v6491 = vadd.f32 %v6489, %v6490
  %v6492 = vsel %vm6382, %v5578, 0.0
  %v6493 = vadd.f32 %v6491, %v6492
  %v6494 = vsel %vm6382, %v5581, 0.0
  %v6495 = vadd.f32 %v6493, %v6494
  %v6496 = vsel %vm6382, %v5583, 0.0
  %v6497 = vadd.f32 %v6495, %v6496
  %v6498 = vsel %vm6382, %v5586, 0.0
  %v6499 = vadd.f32 %v6497, %v6498
  %v6500 = vsel %vm6382, %v5588, 0.0
  %v6501 = vadd.f32 %v6499, %v6500
  %v6502 = vsel %vm6382, %v5591, 0.0
  %v6503 = vadd.f32 %v6501, %v6502
  %v6504 = vsel %vm6382, %v5593, 0.0
  %v6505 = vadd.f32 %v6503, %v6504
  %v6506 = vsel %vm6382, %v5596, 0.0
  %v6507 = vadd.f32 %v6505, %v6506
  %v6508 = vsel %vm6382, %v5598, 0.0
  %v6509 = vadd.f32 %v6507, %v6508
  %v6510 = vrot.slane %v6509, 4
  %v6511 = vadd.f32 %v6509, %v6510
  %v6512 = vrot.slane %v6511, 2
  %v6513 = vadd.f32 %v6511, %v6512
  %v6514 = vrot.slane %v6513, 1
  %v6515 = vadd.f32 %v6513, %v6514
  %6517 = vrot.lane.b32.xlu0 %v6515, 120
  %v6518 = vpop.permute.xlu0 %6517
  %6520 = vst.msk [vmem:[%s6] sm:$0x1] %vm5862, %v6518
  %v6521 = vsel %vm6382, %v5864, 0.0
  %v6522 = vsel %vm6382, %v5865, 0.0
  %v6523 = vadd.f32 %v6521, %v6522
  %v6524 = vsel %vm6382, %v5866, 0.0
  %v6525 = vadd.f32 %v6523, %v6524
  %v6526 = vsel %vm6382, %v5867, 0.0
  %v6527 = vadd.f32 %v6525, %v6526
  %v6528 = vsel %vm6382, %v5868, 0.0
  %v6529 = vadd.f32 %v6527, %v6528
  %v6530 = vsel %vm6382, %v5869, 0.0
  %v6531 = vadd.f32 %v6529, %v6530
  %v6532 = vsel %vm6382, %v5870, 0.0
  %v6533 = vadd.f32 %v6531, %v6532
  %v6534 = vsel %vm6382, %v5871, 0.0
  %v6535 = vadd.f32 %v6533, %v6534
  %v6536 = vsel %vm6382, %v5872, 0.0
  %v6537 = vadd.f32 %v6535, %v6536
  %v6538 = vsel %vm6382, %v5873, 0.0
  %v6539 = vadd.f32 %v6537, %v6538
  %v6540 = vsel %vm6382, %v5874, 0.0
  %v6541 = vadd.f32 %v6539, %v6540
  %v6542 = vsel %vm6382, %v5875, 0.0
  %v6543 = vadd.f32 %v6541, %v6542
  %v6544 = vsel %vm6382, %v5876, 0.0
  %v6545 = vadd.f32 %v6543, %v6544
  %v6546 = vsel %vm6382, %v5877, 0.0
  %v6547 = vadd.f32 %v6545, %v6546
  %v6548 = vsel %vm6382, %v5878, 0.0
  %v6549 = vadd.f32 %v6547, %v6548
  %v6550 = vsel %vm6382, %v5879, 0.0
  %v6551 = vadd.f32 %v6549, %v6550
  %v6552 = vsel %vm6382, %v5880, 0.0
  %v6553 = vadd.f32 %v6551, %v6552
  %v6554 = vsel %vm6382, %v5881, 0.0
  %v6555 = vadd.f32 %v6553, %v6554
  %v6556 = vsel %vm6382, %v5882, 0.0
  %v6557 = vadd.f32 %v6555, %v6556
  %v6558 = vsel %vm6382, %v5883, 0.0
  %v6559 = vadd.f32 %v6557, %v6558
  %v6560 = vsel %vm6382, %v5884, 0.0
  %v6561 = vadd.f32 %v6559, %v6560
  %v6562 = vsel %vm6382, %v5885, 0.0
  %v6563 = vadd.f32 %v6561, %v6562
  %v6564 = vsel %vm6382, %v5886, 0.0
  %v6565 = vadd.f32 %v6563, %v6564
  %v6566 = vsel %vm6382, %v5887, 0.0
  %v6567 = vadd.f32 %v6565, %v6566
  %v6568 = vsel %vm6382, %v5888, 0.0
  %v6569 = vadd.f32 %v6567, %v6568
  %v6570 = vsel %vm6382, %v5889, 0.0
  %v6571 = vadd.f32 %v6569, %v6570
  %v6572 = vsel %vm6382, %v5890, 0.0
  %v6573 = vadd.f32 %v6571, %v6572
  %v6574 = vsel %vm6382, %v5891, 0.0
  %v6575 = vadd.f32 %v6573, %v6574
  %v6576 = vsel %vm6382, %v5892, 0.0
  %v6577 = vadd.f32 %v6575, %v6576
  %v6578 = vsel %vm6382, %v5893, 0.0
  %v6579 = vadd.f32 %v6577, %v6578
  %v6580 = vsel %vm6382, %v5894, 0.0
  %v6581 = vadd.f32 %v6579, %v6580
  %v6582 = vsel %vm6382, %v5895, 0.0
  %v6583 = vadd.f32 %v6581, %v6582
  %v6584 = vsel %vm6382, %v5896, 0.0
  %v6585 = vadd.f32 %v6583, %v6584
  %v6586 = vsel %vm6382, %v5897, 0.0
  %v6587 = vadd.f32 %v6585, %v6586
  %v6588 = vsel %vm6382, %v5898, 0.0
  %v6589 = vadd.f32 %v6587, %v6588
  %v6590 = vsel %vm6382, %v5899, 0.0
  %v6591 = vadd.f32 %v6589, %v6590
  %v6592 = vsel %vm6382, %v5900, 0.0
  %v6593 = vadd.f32 %v6591, %v6592
  %v6594 = vsel %vm6382, %v5901, 0.0
  %v6595 = vadd.f32 %v6593, %v6594
  %v6596 = vsel %vm6382, %v5902, 0.0
  %v6597 = vadd.f32 %v6595, %v6596
  %v6598 = vsel %vm6382, %v5903, 0.0
  %v6599 = vadd.f32 %v6597, %v6598
  %v6600 = vsel %vm6382, %v5904, 0.0
  %v6601 = vadd.f32 %v6599, %v6600
  %v6602 = vsel %vm6382, %v5905, 0.0
  %v6603 = vadd.f32 %v6601, %v6602
  %v6604 = vsel %vm6382, %v5906, 0.0
  %v6605 = vadd.f32 %v6603, %v6604
  %v6606 = vsel %vm6382, %v5907, 0.0
  %v6607 = vadd.f32 %v6605, %v6606
  %v6608 = vsel %vm6382, %v5908, 0.0
  %v6609 = vadd.f32 %v6607, %v6608
  %v6610 = vsel %vm6382, %v5909, 0.0
  %v6611 = vadd.f32 %v6609, %v6610
  %v6612 = vsel %vm6382, %v5910, 0.0
  %v6613 = vadd.f32 %v6611, %v6612
  %v6614 = vsel %vm6382, %v5911, 0.0
  %v6615 = vadd.f32 %v6613, %v6614
  %v6616 = vsel %vm6382, %v5912, 0.0
  %v6617 = vadd.f32 %v6615, %v6616
  %v6618 = vsel %vm6382, %v5913, 0.0
  %v6619 = vadd.f32 %v6617, %v6618
  %v6620 = vsel %vm6382, %v5914, 0.0
  %v6621 = vadd.f32 %v6619, %v6620
  %v6622 = vsel %vm6382, %v5915, 0.0
  %v6623 = vadd.f32 %v6621, %v6622
  %v6624 = vsel %vm6382, %v5916, 0.0
  %v6625 = vadd.f32 %v6623, %v6624
  %v6626 = vsel %vm6382, %v5917, 0.0
  %v6627 = vadd.f32 %v6625, %v6626
  %v6628 = vsel %vm6382, %v5918, 0.0
  %v6629 = vadd.f32 %v6627, %v6628
  %v6630 = vsel %vm6382, %v5919, 0.0
  %v6631 = vadd.f32 %v6629, %v6630
  %v6632 = vsel %vm6382, %v5920, 0.0
  %v6633 = vadd.f32 %v6631, %v6632
  %v6634 = vsel %vm6382, %v5921, 0.0
  %v6635 = vadd.f32 %v6633, %v6634
  %v6636 = vsel %vm6382, %v5922, 0.0
  %v6637 = vadd.f32 %v6635, %v6636
  %v6638 = vsel %vm6382, %v5923, 0.0
  %v6639 = vadd.f32 %v6637, %v6638
  %v6640 = vsel %vm6382, %v5924, 0.0
  %v6641 = vadd.f32 %v6639, %v6640
  %v6642 = vsel %vm6382, %v5925, 0.0
  %v6643 = vadd.f32 %v6641, %v6642
  %v6644 = vsel %vm6382, %v5926, 0.0
  %v6645 = vadd.f32 %v6643, %v6644
  %v6646 = vsel %vm6382, %v5927, 0.0
  %v6647 = vadd.f32 %v6645, %v6646
  %v6648 = vrot.slane %v6647, 4
  %v6649 = vadd.f32 %v6647, %v6648
  %v6650 = vrot.slane %v6649, 2
  %v6651 = vadd.f32 %v6649, %v6650
  %v6652 = vrot.slane %v6651, 1
  %v6653 = vadd.f32 %v6651, %v6652
  %6655 = vrot.lane.b32.xlu0 %v6653, 120
  %v6656 = vpop.permute.xlu0 %6655
  %6658 = vst.msk [vmem:[%s7] sm:$0x1] %vm5862, %v6656
  // Predicated region
  $region10: #{residual_block_pallas.3} parent=0 // pred_check
    _
  $region11: #{residual_block_pallas.3} parent=0 // pred_check_branch
    %6660 = sbr.rel (0) target = $region13
  $region12: #{residual_block_pallas.3} parent=0 // pred_region
    _
  $region13: #{residual_block_pallas.3} parent=0 // pred_fallthru
    _
  // Predicated region
  $region14: #{residual_block_pallas.3} parent=0 // pred_check
    _
  $region15: #{residual_block_pallas.3} parent=0 // pred_check_branch
    %6662 = sbr.rel (0) target = $region17
  $region16: #{residual_block_pallas.3} parent=0 // pred_region
    _
  $region17: #{residual_block_pallas.3} parent=0 // pred_fallthru
    _
  // Predicated region
  $region18: #{residual_block_pallas.3} parent=0 // pred_check
    _
  $region19: #{residual_block_pallas.3} parent=0 // pred_check_branch
    %6664 = sbr.rel (0) target = $region21
  $region20: #{residual_block_pallas.3} parent=0 // pred_region
    _
  $region21: #{residual_block_pallas.3} parent=0 // pred_fallthru
    _
  // Predicated region
  $region22: #{residual_block_pallas.3} parent=0 // pred_check
    _
  $region23: #{residual_block_pallas.3} parent=0 // pred_check_branch
    %6666 = sbr.rel (0) target = $region25
  $region24: #{residual_block_pallas.3} parent=0 // pred_region
    _
  $region25: #{residual_block_pallas.3} parent=0 // pred_fallthru
    _
  // Predicated region
  $region26: #{residual_block_pallas.3} parent=0 // pred_check
    _
  $region27: #{residual_block_pallas.3} parent=0 // pred_check_branch
    %6668 = sbr.rel (0) target = $region29
  $region28: #{residual_block_pallas.3} parent=0 // pred_region
    _
  $region29: #{residual_block_pallas.3} parent=0 // pred_fallthru
    _
  // Predicated region
  $region30: #{residual_block_pallas.3} parent=0 // pred_check
    _
  $region31: #{residual_block_pallas.3} parent=0 // pred_check_branch
    %6670 = sbr.rel (0) target = $region33
  $region32: #{residual_block_pallas.3} parent=0 // pred_region
    _
  $region33: #{residual_block_pallas.3} parent=0 // pred_fallthru
    _
  // Predicated region
  $region34: #{residual_block_pallas.3} parent=0 // pred_check
    _
  $region35: #{residual_block_pallas.3} parent=0 // pred_check_branch
    %6672 = sbr.rel (0) target = $region37
  $region36: #{residual_block_pallas.3} parent=0 // pred_region
    _
  $region37: #{residual_block_pallas.3} parent=0 // pred_fallthru
    _
  // Predicated region
  $region38: #{residual_block_pallas.3} parent=0 // pred_check
    _
  $region39: #{residual_block_pallas.3} parent=0 // pred_check_branch
    %6674 = sbr.rel (0) target = $region41
  $region40: #{residual_block_pallas.3} parent=0 // pred_region
    _
  $region41: #{residual_block_pallas.3} parent=0 // pred_fallthru
    _
  // Predicated region
  $region42: #{residual_block_pallas.3} parent=0 // pred_check
    _
  $region43: #{residual_block_pallas.3} parent=0 // pred_check_branch
    %6676 = sbr.rel (0) target = $region45
  $region44: #{residual_block_pallas.3} parent=0 // pred_region
    _
  $region45: #{residual_block_pallas.3} parent=0 // pred_fallthru
    _
  // Predicated region
  $region46: #{residual_block_pallas.3} parent=0 // pred_check
    _
  $region47: #{residual_block_pallas.3} parent=0 // pred_check_branch
    %6678 = sbr.rel (0) target = $region49
  $region48: #{residual_block_pallas.3} parent=0 // pred_region
    _
  $region49: #{residual_block_pallas.3} parent=0 // pred_fallthru
    _
  // Predicated region
  $region50: #{residual_block_pallas.3} parent=0 // pred_check
    _
  $region51: #{residual_block_pallas.3} parent=0 // pred_check_branch
    %6680 = sbr.rel (0) target = $region53
  $region52: #{residual_block_pallas.3} parent=0 // pred_region
    _
  $region53: #{residual_block_pallas.3} parent=0 // pred_fallthru
    _
  // Predicated region
  $region54: #{residual_block_pallas.3} parent=0 // pred_check
    _
  $region55: #{residual_block_pallas.3} parent=0 // pred_check_branch
    %6682 = sbr.rel (0) target = $region57
  $region56: #{residual_block_pallas.3} parent=0 // pred_region
    _
  $region57: #{residual_block_pallas.3} parent=0 // pred_fallthru
    _

// kernel: residual_block_pallas.4
$region0: #{residual_block_pallas.4}
  #allocation0 [shape = 'u32[]', space=smem, size = 0x4, offset = 0x4, fixed_abs, tag = 'smem constant byte address 0x4 - core index']
  #allocation1 [shape = 'u32[72,128]{1,0:T(1,128)}', space=vmem, size = 0x9000, scoped, tag = 'internal scratch']
  #allocation2 [shape = 'bf16[2,18,32,8]{3,2,1,0:T(8,128)(2,1)}', space=vmem, size = 0x48000, scoped, tag = 'scratch operand']
  %s0 = inlined_call_operand.vmem [shape: bf16[2,16,16,8], index: 0, kind: input, shape index: {}]
  %s1 = inlined_call_operand.vmem [shape: f32[1,8], index: 1, kind: input, shape index: {}]
  %s2 = inlined_call_operand.vmem [shape: f32[1,8], index: 2, kind: input, shape index: {}]
  %s3 = inlined_call_operand.vmem [shape: bf16[72,8], index: 3, kind: input, shape index: {}]
  %s4 = inlined_call_operand.vmem [shape: bf16[2,16,16,8], index: 4, kind: output, shape index: {0}]
  %s5 = inlined_call_operand.vmem [shape: f32[1,1,8], index: 5, kind: output, shape index: {1}]
  %s6 = inlined_call_operand.vmem [shape: f32[1,1,8], index: 6, kind: output, shape index: {2}]
  %7 = xla_tuple %s4, %s5, %s6
  %s8 = sld [smem:[#allocation0]]
  $region42: #{residual_block_pallas.4} parent=0
    _
  %s10 = ssub.s32 1, %s8
  %s11 = scalar_select 0, %s10, %s8
  // Predicated region
  $region2: #{residual_block_pallas.4} parent=0 // pred_check
    _
  $region3: #{residual_block_pallas.4} parent=0 // pred_check_branch
    %13 = sbr.rel (0) target = $region5
  $region4: #{residual_block_pallas.4} parent=0 // pred_region
    _
  $region5: #{residual_block_pallas.4} parent=0 // pred_fallthru
    _
  // Predicated region
  $region6: #{residual_block_pallas.4} parent=0 // pred_check
    _
  $region7: #{residual_block_pallas.4} parent=0 // pred_check_branch
    %15 = sbr.rel (0) target = $region9
  $region8: #{residual_block_pallas.4} parent=0 // pred_region
    _
  $region9: #{residual_block_pallas.4} parent=0 // pred_fallthru
    _
  // Predicated region
  $region10: #{residual_block_pallas.4} parent=0 // pred_check
    _
  $region11: #{residual_block_pallas.4} parent=0 // pred_check_branch
    %17 = sbr.rel (0) target = $region13
  $region12: #{residual_block_pallas.4} parent=0 // pred_region
    _
  $region13: #{residual_block_pallas.4} parent=0 // pred_fallthru
    _
  // Predicated region
  $region14: #{residual_block_pallas.4} parent=0 // pred_check
    _
  $region15: #{residual_block_pallas.4} parent=0 // pred_check_branch
    %19 = sbr.rel (0) target = $region17
  $region16: #{residual_block_pallas.4} parent=0 // pred_region
    _
  $region17: #{residual_block_pallas.4} parent=0 // pred_fallthru
    _
  %v21 = vld [vmem:[%s0] sm:$0xf]
  %v22 = vld [vmem:[%s0 + $0x4] sm:$0xf]
  %v23 = vld [vmem:[%s0 + $0x8] sm:$0xf]
  %v24 = vld [vmem:[%s0 + $0xc] sm:$0xf]
  %v25 = vld [vmem:[%s0 + $0x10] sm:$0xf]
  %v26 = vld [vmem:[%s0 + $0x14] sm:$0xf]
  %v27 = vld [vmem:[%s0 + $0x18] sm:$0xf]
  %v28 = vld [vmem:[%s0 + $0x1c] sm:$0xf]
  %v29 = vld [vmem:[%s0 + $0x20] sm:$0xf]
  %v30 = vld [vmem:[%s0 + $0x24] sm:$0xf]
  %v31 = vld [vmem:[%s0 + $0x28] sm:$0xf]
  %v32 = vld [vmem:[%s0 + $0x2c] sm:$0xf]
  %v33 = vld [vmem:[%s0 + $0x30] sm:$0xf]
  %v34 = vld [vmem:[%s0 + $0x34] sm:$0xf]
  %v35 = vld [vmem:[%s0 + $0x38] sm:$0xf]
  %v36 = vld [vmem:[%s0 + $0x3c] sm:$0xf]
  %v37 = vld [vmem:[%s0 + $0x40] sm:$0xf]
  %v38 = vld [vmem:[%s0 + $0x44] sm:$0xf]
  %v39 = vld [vmem:[%s0 + $0x48] sm:$0xf]
  %v40 = vld [vmem:[%s0 + $0x4c] sm:$0xf]
  %v41 = vld [vmem:[%s0 + $0x50] sm:$0xf]
  %v42 = vld [vmem:[%s0 + $0x54] sm:$0xf]
  %v43 = vld [vmem:[%s0 + $0x58] sm:$0xf]
  %v44 = vld [vmem:[%s0 + $0x5c] sm:$0xf]
  %v45 = vld [vmem:[%s0 + $0x60] sm:$0xf]
  %v46 = vld [vmem:[%s0 + $0x64] sm:$0xf]
  %v47 = vld [vmem:[%s0 + $0x68] sm:$0xf]
  %v48 = vld [vmem:[%s0 + $0x6c] sm:$0xf]
  %v49 = vld [vmem:[%s0 + $0x70] sm:$0xf]
  %v50 = vld [vmem:[%s0 + $0x74] sm:$0xf]
  %v51 = vld [vmem:[%s0 + $0x78] sm:$0xf]
  %v52 = vld [vmem:[%s0 + $0x7c] sm:$0xf]
  %v53 = vld [vmem:[%s0 + $0x80] sm:$0xf]
  %v54 = vld [vmem:[%s0 + $0x84] sm:$0xf]
  %v55 = vld [vmem:[%s0 + $0x88] sm:$0xf]
  %v56 = vld [vmem:[%s0 + $0x8c] sm:$0xf]
  %v57 = vld [vmem:[%s0 + $0x90] sm:$0xf]
  %v58 = vld [vmem:[%s0 + $0x94] sm:$0xf]
  %v59 = vld [vmem:[%s0 + $0x98] sm:$0xf]
  %v60 = vld [vmem:[%s0 + $0x9c] sm:$0xf]
  %v61 = vld [vmem:[%s0 + $0xa0] sm:$0xf]
  %v62 = vld [vmem:[%s0 + $0xa4] sm:$0xf]
  %v63 = vld [vmem:[%s0 + $0xa8] sm:$0xf]
  %v64 = vld [vmem:[%s0 + $0xac] sm:$0xf]
  %v65 = vld [vmem:[%s0 + $0xb0] sm:$0xf]
  %v66 = vld [vmem:[%s0 + $0xb4] sm:$0xf]
  %v67 = vld [vmem:[%s0 + $0xb8] sm:$0xf]
  %v68 = vld [vmem:[%s0 + $0xbc] sm:$0xf]
  %v69 = vld [vmem:[%s0 + $0xc0] sm:$0xf]
  %v70 = vld [vmem:[%s0 + $0xc4] sm:$0xf]
  %v71 = vld [vmem:[%s0 + $0xc8] sm:$0xf]
  %v72 = vld [vmem:[%s0 + $0xcc] sm:$0xf]
  %v73 = vld [vmem:[%s0 + $0xd0] sm:$0xf]
  %v74 = vld [vmem:[%s0 + $0xd4] sm:$0xf]
  %v75 = vld [vmem:[%s0 + $0xd8] sm:$0xf]
  %v76 = vld [vmem:[%s0 + $0xdc] sm:$0xf]
  %v77 = vld [vmem:[%s0 + $0xe0] sm:$0xf]
  %v78 = vld [vmem:[%s0 + $0xe4] sm:$0xf]
  %v79 = vld [vmem:[%s0 + $0xe8] sm:$0xf]
  %v80 = vld [vmem:[%s0 + $0xec] sm:$0xf]
  %v81 = vld [vmem:[%s0 + $0xf0] sm:$0xf]
  %v82 = vld [vmem:[%s0 + $0xf4] sm:$0xf]
  %v83 = vld [vmem:[%s0 + $0xf8] sm:$0xf]
  %v84 = vld [vmem:[%s0 + $0xfc] sm:$0xf]
  %v85 = vunpack.c.l.bf16 %v21
  %v86 = vunpack.c.l.bf16 %v22
  %v87 = vunpack.c.l.bf16 %v23
  %v88 = vunpack.c.l.bf16 %v24
  %v89 = vunpack.c.l.bf16 %v25
  %v90 = vunpack.c.l.bf16 %v26
  %v91 = vunpack.c.l.bf16 %v27
  %v92 = vunpack.c.l.bf16 %v28
  %v93 = vunpack.c.l.bf16 %v29
  %v94 = vunpack.c.l.bf16 %v30
  %v95 = vunpack.c.l.bf16 %v31
  %v96 = vunpack.c.l.bf16 %v32
  %v97 = vunpack.c.l.bf16 %v33
  %v98 = vunpack.c.l.bf16 %v34
  %v99 = vunpack.c.l.bf16 %v35
  %v100 = vunpack.c.l.bf16 %v36
  %v101 = vunpack.c.l.bf16 %v37
  %v102 = vunpack.c.l.bf16 %v38
  %v103 = vunpack.c.l.bf16 %v39
  %v104 = vunpack.c.l.bf16 %v40
  %v105 = vunpack.c.l.bf16 %v41
  %v106 = vunpack.c.l.bf16 %v42
  %v107 = vunpack.c.l.bf16 %v43
  %v108 = vunpack.c.l.bf16 %v44
  %v109 = vunpack.c.l.bf16 %v45
  %v110 = vunpack.c.l.bf16 %v46
  %v111 = vunpack.c.l.bf16 %v47
  %v112 = vunpack.c.l.bf16 %v48
  %v113 = vunpack.c.l.bf16 %v49
  %v114 = vunpack.c.l.bf16 %v50
  %v115 = vunpack.c.l.bf16 %v51
  %v116 = vunpack.c.l.bf16 %v52
  %v117 = vunpack.c.l.bf16 %v53
  %v118 = vunpack.c.l.bf16 %v54
  %v119 = vunpack.c.l.bf16 %v55
  %v120 = vunpack.c.l.bf16 %v56
  %v121 = vunpack.c.l.bf16 %v57
  %v122 = vunpack.c.l.bf16 %v58
  %v123 = vunpack.c.l.bf16 %v59
  %v124 = vunpack.c.l.bf16 %v60
  %v125 = vunpack.c.l.bf16 %v61
  %v126 = vunpack.c.l.bf16 %v62
  %v127 = vunpack.c.l.bf16 %v63
  %v128 = vunpack.c.l.bf16 %v64
  %v129 = vunpack.c.l.bf16 %v65
  %v130 = vunpack.c.l.bf16 %v66
  %v131 = vunpack.c.l.bf16 %v67
  %v132 = vunpack.c.l.bf16 %v68
  %v133 = vunpack.c.l.bf16 %v69
  %v134 = vunpack.c.l.bf16 %v70
  %v135 = vunpack.c.l.bf16 %v71
  %v136 = vunpack.c.l.bf16 %v72
  %v137 = vunpack.c.l.bf16 %v73
  %v138 = vunpack.c.l.bf16 %v74
  %v139 = vunpack.c.l.bf16 %v75
  %v140 = vunpack.c.l.bf16 %v76
  %v141 = vunpack.c.l.bf16 %v77
  %v142 = vunpack.c.l.bf16 %v78
  %v143 = vunpack.c.l.bf16 %v79
  %v144 = vunpack.c.l.bf16 %v80
  %v145 = vunpack.c.l.bf16 %v81
  %v146 = vunpack.c.l.bf16 %v82
  %v147 = vunpack.c.l.bf16 %v83
  %v148 = vunpack.c.l.bf16 %v84
  %v149 = vld [vmem:[%s1] sm:$0x1]
  %v151 = vperm.slane %v149, 0
  %v153 = vmul.f32 %v85, %v151
  %v154 = vmul.f32 %v86, %v151
  %v155 = vmul.f32 %v87, %v151
  %v156 = vmul.f32 %v88, %v151
  %v157 = vmul.f32 %v89, %v151
  %v158 = vmul.f32 %v90, %v151
  %v159 = vmul.f32 %v91, %v151
  %v160 = vmul.f32 %v92, %v151
  %v161 = vmul.f32 %v93, %v151
  %v162 = vmul.f32 %v94, %v151
  %v163 = vmul.f32 %v95, %v151
  %v164 = vmul.f32 %v96, %v151
  %v165 = vmul.f32 %v97, %v151
  %v166 = vmul.f32 %v98, %v151
  %v167 = vmul.f32 %v99, %v151
  %v168 = vmul.f32 %v100, %v151
  %v169 = vmul.f32 %v101, %v151
  %v170 = vmul.f32 %v102, %v151
  %v171 = vmul.f32 %v103, %v151
  %v172 = vmul.f32 %v104, %v151
  %v173 = vmul.f32 %v105, %v151
  %v174 = vmul.f32 %v106, %v151
  %v175 = vmul.f32 %v107, %v151
  %v176 = vmul.f32 %v108, %v151
  %v177 = vmul.f32 %v109, %v151
  %v178 = vmul.f32 %v110, %v151
  %v179 = vmul.f32 %v111, %v151
  %v180 = vmul.f32 %v112, %v151
  %v181 = vmul.f32 %v113, %v151
  %v182 = vmul.f32 %v114, %v151
  %v183 = vmul.f32 %v115, %v151
  %v184 = vmul.f32 %v116, %v151
  %v185 = vmul.f32 %v117, %v151
  %v186 = vmul.f32 %v118, %v151
  %v187 = vmul.f32 %v119, %v151
  %v188 = vmul.f32 %v120, %v151
  %v189 = vmul.f32 %v121, %v151
  %v190 = vmul.f32 %v122, %v151
  %v191 = vmul.f32 %v123, %v151
  %v192 = vmul.f32 %v124, %v151
  %v193 = vmul.f32 %v125, %v151
  %v194 = vmul.f32 %v126, %v151
  %v195 = vmul.f32 %v127, %v151
  %v196 = vmul.f32 %v128, %v151
  %v197 = vmul.f32 %v129, %v151
  %v198 = vmul.f32 %v130, %v151
  %v199 = vmul.f32 %v131, %v151
  %v200 = vmul.f32 %v132, %v151
  %v201 = vmul.f32 %v133, %v151
  %v202 = vmul.f32 %v134, %v151
  %v203 = vmul.f32 %v135, %v151
  %v204 = vmul.f32 %v136, %v151
  %v205 = vmul.f32 %v137, %v151
  %v206 = vmul.f32 %v138, %v151
  %v207 = vmul.f32 %v139, %v151
  %v208 = vmul.f32 %v140, %v151
  %v209 = vmul.f32 %v141, %v151
  %v210 = vmul.f32 %v142, %v151
  %v211 = vmul.f32 %v143, %v151
  %v212 = vmul.f32 %v144, %v151
  %v213 = vmul.f32 %v145, %v151
  %v214 = vmul.f32 %v146, %v151
  %v215 = vmul.f32 %v147, %v151
  %v216 = vmul.f32 %v148, %v151
  %v217 = vld [vmem:[%s2] sm:$0x1]
  %v219 = vperm.slane %v217, 0
  %v221 = vadd.f32 %v153, %v219
  %v222 = vadd.f32 %v154, %v219
  %v223 = vadd.f32 %v155, %v219
  %v224 = vadd.f32 %v156, %v219
  %v225 = vadd.f32 %v157, %v219
  %v226 = vadd.f32 %v158, %v219
  %v227 = vadd.f32 %v159, %v219
  %v228 = vadd.f32 %v160, %v219
  %v229 = vadd.f32 %v161, %v219
  %v230 = vadd.f32 %v162, %v219
  %v231 = vadd.f32 %v163, %v219
  %v232 = vadd.f32 %v164, %v219
  %v233 = vadd.f32 %v165, %v219
  %v234 = vadd.f32 %v166, %v219
  %v235 = vadd.f32 %v167, %v219
  %v236 = vadd.f32 %v168, %v219
  %v237 = vadd.f32 %v169, %v219
  %v238 = vadd.f32 %v170, %v219
  %v239 = vadd.f32 %v171, %v219
  %v240 = vadd.f32 %v172, %v219
  %v241 = vadd.f32 %v173, %v219
  %v242 = vadd.f32 %v174, %v219
  %v243 = vadd.f32 %v175, %v219
  %v244 = vadd.f32 %v176, %v219
  %v245 = vadd.f32 %v177, %v219
  %v246 = vadd.f32 %v178, %v219
  %v247 = vadd.f32 %v179, %v219
  %v248 = vadd.f32 %v180, %v219
  %v249 = vadd.f32 %v181, %v219
  %v250 = vadd.f32 %v182, %v219
  %v251 = vadd.f32 %v183, %v219
  %v252 = vadd.f32 %v184, %v219
  %v253 = vadd.f32 %v185, %v219
  %v254 = vadd.f32 %v186, %v219
  %v255 = vadd.f32 %v187, %v219
  %v256 = vadd.f32 %v188, %v219
  %v257 = vadd.f32 %v189, %v219
  %v258 = vadd.f32 %v190, %v219
  %v259 = vadd.f32 %v191, %v219
  %v260 = vadd.f32 %v192, %v219
  %v261 = vadd.f32 %v193, %v219
  %v262 = vadd.f32 %v194, %v219
  %v263 = vadd.f32 %v195, %v219
  %v264 = vadd.f32 %v196, %v219
  %v265 = vadd.f32 %v197, %v219
  %v266 = vadd.f32 %v198, %v219
  %v267 = vadd.f32 %v199, %v219
  %v268 = vadd.f32 %v200, %v219
  %v269 = vadd.f32 %v201, %v219
  %v270 = vadd.f32 %v202, %v219
  %v271 = vadd.f32 %v203, %v219
  %v272 = vadd.f32 %v204, %v219
  %v273 = vadd.f32 %v205, %v219
  %v274 = vadd.f32 %v206, %v219
  %v275 = vadd.f32 %v207, %v219
  %v276 = vadd.f32 %v208, %v219
  %v277 = vadd.f32 %v209, %v219
  %v278 = vadd.f32 %v210, %v219
  %v279 = vadd.f32 %v211, %v219
  %v280 = vadd.f32 %v212, %v219
  %v281 = vadd.f32 %v213, %v219
  %v282 = vadd.f32 %v214, %v219
  %v283 = vadd.f32 %v215, %v219
  %v284 = vadd.f32 %v216, %v219
  %v285 = vmax.f32 %v221, 0.0
  %v286 = vmax.f32 %v222, 0.0
  %v287 = vmax.f32 %v223, 0.0
  %v288 = vmax.f32 %v224, 0.0
  %v289 = vmax.f32 %v225, 0.0
  %v290 = vmax.f32 %v226, 0.0
  %v291 = vmax.f32 %v227, 0.0
  %v292 = vmax.f32 %v228, 0.0
  %v293 = vmax.f32 %v229, 0.0
  %v294 = vmax.f32 %v230, 0.0
  %v295 = vmax.f32 %v231, 0.0
  %v296 = vmax.f32 %v232, 0.0
  %v297 = vmax.f32 %v233, 0.0
  %v298 = vmax.f32 %v234, 0.0
  %v299 = vmax.f32 %v235, 0.0
  %v300 = vmax.f32 %v236, 0.0
  %v301 = vmax.f32 %v237, 0.0
  %v302 = vmax.f32 %v238, 0.0
  %v303 = vmax.f32 %v239, 0.0
  %v304 = vmax.f32 %v240, 0.0
  %v305 = vmax.f32 %v241, 0.0
  %v306 = vmax.f32 %v242, 0.0
  %v307 = vmax.f32 %v243, 0.0
  %v308 = vmax.f32 %v244, 0.0
  %v309 = vmax.f32 %v245, 0.0
  %v310 = vmax.f32 %v246, 0.0
  %v311 = vmax.f32 %v247, 0.0
  %v312 = vmax.f32 %v248, 0.0
  %v313 = vmax.f32 %v249, 0.0
  %v314 = vmax.f32 %v250, 0.0
  %v315 = vmax.f32 %v251, 0.0
  %v316 = vmax.f32 %v252, 0.0
  %v317 = vmax.f32 %v253, 0.0
  %v318 = vmax.f32 %v254, 0.0
  %v319 = vmax.f32 %v255, 0.0
  %v320 = vmax.f32 %v256, 0.0
  %v321 = vmax.f32 %v257, 0.0
  %v322 = vmax.f32 %v258, 0.0
  %v323 = vmax.f32 %v259, 0.0
  %v324 = vmax.f32 %v260, 0.0
  %v325 = vmax.f32 %v261, 0.0
  %v326 = vmax.f32 %v262, 0.0
  %v327 = vmax.f32 %v263, 0.0
  %v328 = vmax.f32 %v264, 0.0
  %v329 = vmax.f32 %v265, 0.0
  %v330 = vmax.f32 %v266, 0.0
  %v331 = vmax.f32 %v267, 0.0
  %v332 = vmax.f32 %v268, 0.0
  %v333 = vmax.f32 %v269, 0.0
  %v334 = vmax.f32 %v270, 0.0
  %v335 = vmax.f32 %v271, 0.0
  %v336 = vmax.f32 %v272, 0.0
  %v337 = vmax.f32 %v273, 0.0
  %v338 = vmax.f32 %v274, 0.0
  %v339 = vmax.f32 %v275, 0.0
  %v340 = vmax.f32 %v276, 0.0
  %v341 = vmax.f32 %v277, 0.0
  %v342 = vmax.f32 %v278, 0.0
  %v343 = vmax.f32 %v279, 0.0
  %v344 = vmax.f32 %v280, 0.0
  %v345 = vmax.f32 %v281, 0.0
  %v346 = vmax.f32 %v282, 0.0
  %v347 = vmax.f32 %v283, 0.0
  %v348 = vmax.f32 %v284, 0.0
  %v349 = vpack.c.bf16 %v285, %v285
  %v350 = vpack.c.bf16 %v286, %v286
  %v351 = vpack.c.bf16 %v287, %v287
  %v352 = vpack.c.bf16 %v288, %v288
  %v353 = vpack.c.bf16 %v289, %v289
  %v354 = vpack.c.bf16 %v290, %v290
  %v355 = vpack.c.bf16 %v291, %v291
  %v356 = vpack.c.bf16 %v292, %v292
  %v357 = vpack.c.bf16 %v293, %v293
  %v358 = vpack.c.bf16 %v294, %v294
  %v359 = vpack.c.bf16 %v295, %v295
  %v360 = vpack.c.bf16 %v296, %v296
  %v361 = vpack.c.bf16 %v297, %v297
  %v362 = vpack.c.bf16 %v298, %v298
  %v363 = vpack.c.bf16 %v299, %v299
  %v364 = vpack.c.bf16 %v300, %v300
  %v365 = vpack.c.bf16 %v301, %v301
  %v366 = vpack.c.bf16 %v302, %v302
  %v367 = vpack.c.bf16 %v303, %v303
  %v368 = vpack.c.bf16 %v304, %v304
  %v369 = vpack.c.bf16 %v305, %v305
  %v370 = vpack.c.bf16 %v306, %v306
  %v371 = vpack.c.bf16 %v307, %v307
  %v372 = vpack.c.bf16 %v308, %v308
  %v373 = vpack.c.bf16 %v309, %v309
  %v374 = vpack.c.bf16 %v310, %v310
  %v375 = vpack.c.bf16 %v311, %v311
  %v376 = vpack.c.bf16 %v312, %v312
  %v377 = vpack.c.bf16 %v313, %v313
  %v378 = vpack.c.bf16 %v314, %v314
  %v379 = vpack.c.bf16 %v315, %v315
  %v380 = vpack.c.bf16 %v316, %v316
  %v381 = vpack.c.bf16 %v317, %v317
  %v382 = vpack.c.bf16 %v318, %v318
  %v383 = vpack.c.bf16 %v319, %v319
  %v384 = vpack.c.bf16 %v320, %v320
  %v385 = vpack.c.bf16 %v321, %v321
  %v386 = vpack.c.bf16 %v322, %v322
  %v387 = vpack.c.bf16 %v323, %v323
  %v388 = vpack.c.bf16 %v324, %v324
  %v389 = vpack.c.bf16 %v325, %v325
  %v390 = vpack.c.bf16 %v326, %v326
  %v391 = vpack.c.bf16 %v327, %v327
  %v392 = vpack.c.bf16 %v328, %v328
  %v393 = vpack.c.bf16 %v329, %v329
  %v394 = vpack.c.bf16 %v330, %v330
  %v395 = vpack.c.bf16 %v331, %v331
  %v396 = vpack.c.bf16 %v332, %v332
  %v397 = vpack.c.bf16 %v333, %v333
  %v398 = vpack.c.bf16 %v334, %v334
  %v399 = vpack.c.bf16 %v335, %v335
  %v400 = vpack.c.bf16 %v336, %v336
  %v401 = vpack.c.bf16 %v337, %v337
  %v402 = vpack.c.bf16 %v338, %v338
  %v403 = vpack.c.bf16 %v339, %v339
  %v404 = vpack.c.bf16 %v340, %v340
  %v405 = vpack.c.bf16 %v341, %v341
  %v406 = vpack.c.bf16 %v342, %v342
  %v407 = vpack.c.bf16 %v343, %v343
  %v408 = vpack.c.bf16 %v344, %v344
  %v409 = vpack.c.bf16 %v345, %v345
  %v410 = vpack.c.bf16 %v346, %v346
  %v411 = vpack.c.bf16 %v347, %v347
  %v412 = vpack.c.bf16 %v348, %v348
  %vm413 = vcmask 60419
  %vm414 = vsmask.f32 7950
  %vm415 = vmand %vm413, %vm414
  %v416 = vld [vmem:[#allocation2] sm:$0x8]
  %v417 = vsel %vm415, 0, %v416
  %418 = vst [vmem:[#allocation2] sm:$0x8] %v417
  %vm419 = vcmask 60416
  %420 = vst.msk [vmem:[#allocation2 + $0x4] sm:$0xf] %vm419, 0
  %421 = vst.msk [vmem:[#allocation2 + $0x8] sm:$0xf] %vm419, 0
  %vm422 = vcmask 57344
  %vm423 = vsmask.f32 256
  %vm424 = vmand %vm422, %vm423
  %v425 = vld [vmem:[#allocation2 + $0xc] sm:$0x1]
  %v426 = vsel %vm424, 0, %v425
  %427 = vst [vmem:[#allocation2 + $0xc] sm:$0x1] %v426
  %v428 = vld [vmem:[#allocation2 + $0x120] sm:$0x8]
  %v429 = vsel %vm415, 0, %v428
  %430 = vst [vmem:[#allocation2 + $0x120] sm:$0x8] %v429
  %431 = vst.msk [vmem:[#allocation2 + $0x124] sm:$0xf] %vm419, 0
  %432 = vst.msk [vmem:[#allocation2 + $0x128] sm:$0xf] %vm419, 0
  %v433 = vld [vmem:[#allocation2 + $0x12c] sm:$0x1]
  %v434 = vsel %vm424, 0, %v433
  %435 = vst [vmem:[#allocation2 + $0x12c] sm:$0x1] %v434
  %s436 = scalar_lea.vmem [#allocation2], 272
  %v437 = vld [vmem:[%s436] sm:$0x8]
  %v438 = vsel %vm415, 0, %v437
  %439 = vst [vmem:[%s436] sm:$0x8] %v438
  %440 = vst.msk [vmem:[%s436 + $0x4] sm:$0xf] %vm419, 0
  %441 = vst.msk [vmem:[%s436 + $0x8] sm:$0xf] %vm419, 0
  %v442 = vld [vmem:[%s436 + $0xc] sm:$0x1]
  %v443 = vsel %vm424, 0, %v442
  %444 = vst [vmem:[%s436 + $0xc] sm:$0x1] %v443
  %v445 = vld [vmem:[%s436 + $0x120] sm:$0x8]
  %v446 = vsel %vm415, 0, %v445
  %447 = vst [vmem:[%s436 + $0x120] sm:$0x8] %v446
  %448 = vst.msk [vmem:[%s436 + $0x124] sm:$0xf] %vm419, 0
  %449 = vst.msk [vmem:[%s436 + $0x128] sm:$0xf] %vm419, 0
  %v450 = vld [vmem:[%s436 + $0x12c] sm:$0x1]
  %v451 = vsel %vm424, 0, %v450
  %452 = vst [vmem:[%s436 + $0x12c] sm:$0x1] %v451
  %v453 = vld [vmem:[#allocation2] sm:$0x8]
  %v454 = vsel %vm415, 0, %v453
  %455 = vst [vmem:[#allocation2] sm:$0x8] %v454
  %v456 = vld [vmem:[#allocation2 + $0x10] sm:$0x8]
  %v457 = vsel %vm415, 0, %v456
  %458 = vst [vmem:[#allocation2 + $0x10] sm:$0x8] %v457
  %v459 = vld [vmem:[#allocation2 + $0x20] sm:$0x8]
  %v460 = vsel %vm415, 0, %v459
  %461 = vst [vmem:[#allocation2 + $0x20] sm:$0x8] %v460
  %v462 = vld [vmem:[#allocation2 + $0x30] sm:$0x8]
  %v463 = vsel %vm415, 0, %v462
  %464 = vst [vmem:[#allocation2 + $0x30] sm:$0x8] %v463
  %v465 = vld [vmem:[#allocation2 + $0x40] sm:$0x8]
  %v466 = vsel %vm415, 0, %v465
  %467 = vst [vmem:[#allocation2 + $0x40] sm:$0x8] %v466
  %v468 = vld [vmem:[#allocation2 + $0x50] sm:$0x8]
  %v469 = vsel %vm415, 0, %v468
  %470 = vst [vmem:[#allocation2 + $0x50] sm:$0x8] %v469
  %v471 = vld [vmem:[#allocation2 + $0x60] sm:$0x8]
  %v472 = vsel %vm415, 0, %v471
  %473 = vst [vmem:[#allocation2 + $0x60] sm:$0x8] %v472
  %v474 = vld [vmem:[#allocation2 + $0x70] sm:$0x8]
  %v475 = vsel %vm415, 0, %v474
  %476 = vst [vmem:[#allocation2 + $0x70] sm:$0x8] %v475
  %v477 = vld [vmem:[#allocation2 + $0x80] sm:$0x8]
  %v478 = vsel %vm415, 0, %v477
  %479 = vst [vmem:[#allocation2 + $0x80] sm:$0x8] %v478
  %v480 = vld [vmem:[#allocation2 + $0x90] sm:$0x8]
  %v481 = vsel %vm415, 0, %v480
  %482 = vst [vmem:[#allocation2 + $0x90] sm:$0x8] %v481
  %v483 = vld [vmem:[#allocation2 + $0xa0] sm:$0x8]
  %v484 = vsel %vm415, 0, %v483
  %485 = vst [vmem:[#allocation2 + $0xa0] sm:$0x8] %v484
  %v486 = vld [vmem:[#allocation2 + $0xb0] sm:$0x8]
  %v487 = vsel %vm415, 0, %v486
  %488 = vst [vmem:[#allocation2 + $0xb0] sm:$0x8] %v487
  %v489 = vld [vmem:[#allocation2 + $0xc0] sm:$0x8]
  %v490 = vsel %vm415, 0, %v489
  %491 = vst [vmem:[#allocation2 + $0xc0] sm:$0x8] %v490
  %v492 = vld [vmem:[#allocation2 + $0xd0] sm:$0x8]
  %v493 = vsel %vm415, 0, %v492
  %494 = vst [vmem:[#allocation2 + $0xd0] sm:$0x8] %v493
  %v495 = vld [vmem:[#allocation2 + $0xe0] sm:$0x8]
  %v496 = vsel %vm415, 0, %v495
  %497 = vst [vmem:[#allocation2 + $0xe0] sm:$0x8] %v496
  %v498 = vld [vmem:[#allocation2 + $0xf0] sm:$0x8]
  %v499 = vsel %vm415, 0, %v498
  %500 = vst [vmem:[#allocation2 + $0xf0] sm:$0x8] %v499
  %v501 = vld [vmem:[#allocation2 + $0x100] sm:$0x8]
  %v502 = vsel %vm415, 0, %v501
  %503 = vst [vmem:[#allocation2 + $0x100] sm:$0x8] %v502
  %v504 = vld [vmem:[#allocation2 + $0x110] sm:$0x8]
  %v505 = vsel %vm415, 0, %v504
  %506 = vst [vmem:[#allocation2 + $0x110] sm:$0x8] %v505
  %v507 = vld [vmem:[#allocation2 + $0x120] sm:$0x8]
  %v508 = vsel %vm415, 0, %v507
  %509 = vst [vmem:[#allocation2 + $0x120] sm:$0x8] %v508
  %v510 = vld [vmem:[#allocation2 + $0x130] sm:$0x8]
  %v511 = vsel %vm415, 0, %v510
  %512 = vst [vmem:[#allocation2 + $0x130] sm:$0x8] %v511
  %v513 = vld [vmem:[#allocation2 + $0x140] sm:$0x8]
  %v514 = vsel %vm415, 0, %v513
  %515 = vst [vmem:[#allocation2 + $0x140] sm:$0x8] %v514
  %v516 = vld [vmem:[#allocation2 + $0x150] sm:$0x8]
  %v517 = vsel %vm415, 0, %v516
  %518 = vst [vmem:[#allocation2 + $0x150] sm:$0x8] %v517
  %v519 = vld [vmem:[#allocation2 + $0x160] sm:$0x8]
  %v520 = vsel %vm415, 0, %v519
  %521 = vst [vmem:[#allocation2 + $0x160] sm:$0x8] %v520
  %v522 = vld [vmem:[#allocation2 + $0x170] sm:$0x8]
  %v523 = vsel %vm415, 0, %v522
  %524 = vst [vmem:[#allocation2 + $0x170] sm:$0x8] %v523
  %v525 = vld [vmem:[#allocation2 + $0x180] sm:$0x8]
  %v526 = vsel %vm415, 0, %v525
  %527 = vst [vmem:[#allocation2 + $0x180] sm:$0x8] %v526
  %v528 = vld [vmem:[#allocation2 + $0x190] sm:$0x8]
  %v529 = vsel %vm415, 0, %v528
  %530 = vst [vmem:[#allocation2 + $0x190] sm:$0x8] %v529
  %v531 = vld [vmem:[#allocation2 + $0x1a0] sm:$0x8]
  %v532 = vsel %vm415, 0, %v531
  %533 = vst [vmem:[#allocation2 + $0x1a0] sm:$0x8] %v532
  %v534 = vld [vmem:[#allocation2 + $0x1b0] sm:$0x8]
  %v535 = vsel %vm415, 0, %v534
  %536 = vst [vmem:[#allocation2 + $0x1b0] sm:$0x8] %v535
  %v537 = vld [vmem:[#allocation2 + $0x1c0] sm:$0x8]
  %v538 = vsel %vm415, 0, %v537
  %539 = vst [vmem:[#allocation2 + $0x1c0] sm:$0x8] %v538
  %v540 = vld [vmem:[#allocation2 + $0x1d0] sm:$0x8]
  %v541 = vsel %vm415, 0, %v540
  %542 = vst [vmem:[#allocation2 + $0x1d0] sm:$0x8] %v541
  %v543 = vld [vmem:[#allocation2 + $0x1e0] sm:$0x8]
  %v544 = vsel %vm415, 0, %v543
  %545 = vst [vmem:[#allocation2 + $0x1e0] sm:$0x8] %v544
  %v546 = vld [vmem:[#allocation2 + $0x1f0] sm:$0x8]
  %v547 = vsel %vm415, 0, %v546
  %548 = vst [vmem:[#allocation2 + $0x1f0] sm:$0x8] %v547
  %v549 = vld [vmem:[#allocation2 + $0x200] sm:$0x8]
  %v550 = vsel %vm415, 0, %v549
  %551 = vst [vmem:[#allocation2 + $0x200] sm:$0x8] %v550
  %v552 = vld [vmem:[#allocation2 + $0x210] sm:$0x8]
  %v553 = vsel %vm415, 0, %v552
  %554 = vst [vmem:[#allocation2 + $0x210] sm:$0x8] %v553
  %v555 = vld [vmem:[#allocation2 + $0x220] sm:$0x8]
  %v556 = vsel %vm415, 0, %v555
  %557 = vst [vmem:[#allocation2 + $0x220] sm:$0x8] %v556
  %v558 = vld [vmem:[#allocation2 + $0x230] sm:$0x8]
  %v559 = vsel %vm415, 0, %v558
  %560 = vst [vmem:[#allocation2 + $0x230] sm:$0x8] %v559
  %v561 = vld [vmem:[#allocation2 + $0xc] sm:$0x1]
  %v562 = vsel %vm424, 0, %v561
  %563 = vst [vmem:[#allocation2 + $0xc] sm:$0x1] %v562
  %v564 = vld [vmem:[#allocation2 + $0x1c] sm:$0x1]
  %v565 = vsel %vm424, 0, %v564
  %566 = vst [vmem:[#allocation2 + $0x1c] sm:$0x1] %v565
  %v567 = vld [vmem:[#allocation2 + $0x2c] sm:$0x1]
  %v568 = vsel %vm424, 0, %v567
  %569 = vst [vmem:[#allocation2 + $0x2c] sm:$0x1] %v568
  %v570 = vld [vmem:[#allocation2 + $0x3c] sm:$0x1]
  %v571 = vsel %vm424, 0, %v570
  %572 = vst [vmem:[#allocation2 + $0x3c] sm:$0x1] %v571
  %v573 = vld [vmem:[#allocation2 + $0x4c] sm:$0x1]
  %v574 = vsel %vm424, 0, %v573
  %575 = vst [vmem:[#allocation2 + $0x4c] sm:$0x1] %v574
  %v576 = vld [vmem:[#allocation2 + $0x5c] sm:$0x1]
  %v577 = vsel %vm424, 0, %v576
  %578 = vst [vmem:[#allocation2 + $0x5c] sm:$0x1] %v577
  %v579 = vld [vmem:[#allocation2 + $0x6c] sm:$0x1]
  %v580 = vsel %vm424, 0, %v579
  %581 = vst [vmem:[#allocation2 + $0x6c] sm:$0x1] %v580
  %v582 = vld [vmem:[#allocation2 + $0x7c] sm:$0x1]
  %v583 = vsel %vm424, 0, %v582
  %584 = vst [vmem:[#allocation2 + $0x7c] sm:$0x1] %v583
  %v585 = vld [vmem:[#allocation2 + $0x8c] sm:$0x1]
  %v586 = vsel %vm424, 0, %v585
  %587 = vst [vmem:[#allocation2 + $0x8c] sm:$0x1] %v586
  %v588 = vld [vmem:[#allocation2 + $0x9c] sm:$0x1]
  %v589 = vsel %vm424, 0, %v588
  %590 = vst [vmem:[#allocation2 + $0x9c] sm:$0x1] %v589
  %v591 = vld [vmem:[#allocation2 + $0xac] sm:$0x1]
  %v592 = vsel %vm424, 0, %v591
  %593 = vst [vmem:[#allocation2 + $0xac] sm:$0x1] %v592
  %v594 = vld [vmem:[#allocation2 + $0xbc] sm:$0x1]
  %v595 = vsel %vm424, 0, %v594
  %596 = vst [vmem:[#allocation2 + $0xbc] sm:$0x1] %v595
  %v597 = vld [vmem:[#allocation2 + $0xcc] sm:$0x1]
  %v598 = vsel %vm424, 0, %v597
  %599 = vst [vmem:[#allocation2 + $0xcc] sm:$0x1] %v598
  %v600 = vld [vmem:[#allocation2 + $0xdc] sm:$0x1]
  %v601 = vsel %vm424, 0, %v600
  %602 = vst [vmem:[#allocation2 + $0xdc] sm:$0x1] %v601
  %v603 = vld [vmem:[#allocation2 + $0xec] sm:$0x1]
  %v604 = vsel %vm424, 0, %v603
  %605 = vst [vmem:[#allocation2 + $0xec] sm:$0x1] %v604
  %v606 = vld [vmem:[#allocation2 + $0xfc] sm:$0x1]
  %v607 = vsel %vm424, 0, %v606
  %608 = vst [vmem:[#allocation2 + $0xfc] sm:$0x1] %v607
  %v609 = vld [vmem:[#allocation2 + $0x10c] sm:$0x1]
  %v610 = vsel %vm424, 0, %v609
  %611 = vst [vmem:[#allocation2 + $0x10c] sm:$0x1] %v610
  %v612 = vld [vmem:[#allocation2 + $0x11c] sm:$0x1]
  %v613 = vsel %vm424, 0, %v612
  %614 = vst [vmem:[#allocation2 + $0x11c] sm:$0x1] %v613
  %v615 = vld [vmem:[#allocation2 + $0x12c] sm:$0x1]
  %v616 = vsel %vm424, 0, %v615
  %617 = vst [vmem:[#allocation2 + $0x12c] sm:$0x1] %v616
  %v618 = vld [vmem:[#allocation2 + $0x13c] sm:$0x1]
  %v619 = vsel %vm424, 0, %v618
  %620 = vst [vmem:[#allocation2 + $0x13c] sm:$0x1] %v619
  %v621 = vld [vmem:[#allocation2 + $0x14c] sm:$0x1]
  %v622 = vsel %vm424, 0, %v621
  %623 = vst [vmem:[#allocation2 + $0x14c] sm:$0x1] %v622
  %v624 = vld [vmem:[#allocation2 + $0x15c] sm:$0x1]
  %v625 = vsel %vm424, 0, %v624
  %626 = vst [vmem:[#allocation2 + $0x15c] sm:$0x1] %v625
  %v627 = vld [vmem:[#allocation2 + $0x16c] sm:$0x1]
  %v628 = vsel %vm424, 0, %v627
  %629 = vst [vmem:[#allocation2 + $0x16c] sm:$0x1] %v628
  %v630 = vld [vmem:[#allocation2 + $0x17c] sm:$0x1]
  %v631 = vsel %vm424, 0, %v630
  %632 = vst [vmem:[#allocation2 + $0x17c] sm:$0x1] %v631
  %v633 = vld [vmem:[#allocation2 + $0x18c] sm:$0x1]
  %v634 = vsel %vm424, 0, %v633
  %635 = vst [vmem:[#allocation2 + $0x18c] sm:$0x1] %v634
  %v636 = vld [vmem:[#allocation2 + $0x19c] sm:$0x1]
  %v637 = vsel %vm424, 0, %v636
  %638 = vst [vmem:[#allocation2 + $0x19c] sm:$0x1] %v637
  %v639 = vld [vmem:[#allocation2 + $0x1ac] sm:$0x1]
  %v640 = vsel %vm424, 0, %v639
  %641 = vst [vmem:[#allocation2 + $0x1ac] sm:$0x1] %v640
  %v642 = vld [vmem:[#allocation2 + $0x1bc] sm:$0x1]
  %v643 = vsel %vm424, 0, %v642
  %644 = vst [vmem:[#allocation2 + $0x1bc] sm:$0x1] %v643
  %v645 = vld [vmem:[#allocation2 + $0x1cc] sm:$0x1]
  %v646 = vsel %vm424, 0, %v645
  %647 = vst [vmem:[#allocation2 + $0x1cc] sm:$0x1] %v646
  %v648 = vld [vmem:[#allocation2 + $0x1dc] sm:$0x1]
  %v649 = vsel %vm424, 0, %v648
  %650 = vst [vmem:[#allocation2 + $0x1dc] sm:$0x1] %v649
  %v651 = vld [vmem:[#allocation2 + $0x1ec] sm:$0x1]
  %v652 = vsel %vm424, 0, %v651
  %653 = vst [vmem:[#allocation2 + $0x1ec] sm:$0x1] %v652
  %v654 = vld [vmem:[#allocation2 + $0x1fc] sm:$0x1]
  %v655 = vsel %vm424, 0, %v654
  %656 = vst [vmem:[#allocation2 + $0x1fc] sm:$0x1] %v655
  %v657 = vld [vmem:[#allocation2 + $0x20c] sm:$0x1]
  %v658 = vsel %vm424, 0, %v657
  %659 = vst [vmem:[#allocation2 + $0x20c] sm:$0x1] %v658
  %v660 = vld [vmem:[#allocation2 + $0x21c] sm:$0x1]
  %v661 = vsel %vm424, 0, %v660
  %662 = vst [vmem:[#allocation2 + $0x21c] sm:$0x1] %v661
  %v663 = vld [vmem:[#allocation2 + $0x22c] sm:$0x1]
  %v664 = vsel %vm424, 0, %v663
  %665 = vst [vmem:[#allocation2 + $0x22c] sm:$0x1] %v664
  %v666 = vld [vmem:[#allocation2 + $0x23c] sm:$0x1]
  %v667 = vsel %vm424, 0, %v666
  %668 = vst [vmem:[#allocation2 + $0x23c] sm:$0x1] %v667
  %s669 = scalar_lea.vmem [#allocation2], 16
  %670 = vst.msk [vmem:[%s669 + $0x4] sm:$0xf] %vm419, %v349
  %671 = vst.msk [vmem:[%s669 + $0x8] sm:$0xf] %vm419, %v350
  %672 = vst.msk [vmem:[%s669 + $0x14] sm:$0xf] %vm419, %v351
  %673 = vst.msk [vmem:[%s669 + $0x18] sm:$0xf] %vm419, %v352
  %674 = vst.msk [vmem:[%s669 + $0x24] sm:$0xf] %vm419, %v353
  %675 = vst.msk [vmem:[%s669 + $0x28] sm:$0xf] %vm419, %v354
  %676 = vst.msk [vmem:[%s669 + $0x34] sm:$0xf] %vm419, %v355
  %677 = vst.msk [vmem:[%s669 + $0x38] sm:$0xf] %vm419, %v356
  %678 = vst.msk [vmem:[%s669 + $0x44] sm:$0xf] %vm419, %v357
  %679 = vst.msk [vmem:[%s669 + $0x48] sm:$0xf] %vm419, %v358
  %680 = vst.msk [vmem:[%s669 + $0x54] sm:$0xf] %vm419, %v359
  %681 = vst.msk [vmem:[%s669 + $0x58] sm:$0xf] %vm419, %v360
  %682 = vst.msk [vmem:[%s669 + $0x64] sm:$0xf] %vm419, %v361
  %683 = vst.msk [vmem:[%s669 + $0x68] sm:$0xf] %vm419, %v362
  %684 = vst.msk [vmem:[%s669 + $0x74] sm:$0xf] %vm419, %v363
  %685 = vst.msk [vmem:[%s669 + $0x78] sm:$0xf] %vm419, %v364
  %686 = vst.msk [vmem:[%s669 + $0x84] sm:$0xf] %vm419, %v365
  %687 = vst.msk [vmem:[%s669 + $0x88] sm:$0xf] %vm419, %v366
  %688 = vst.msk [vmem:[%s669 + $0x94] sm:$0xf] %vm419, %v367
  %689 = vst.msk [vmem:[%s669 + $0x98] sm:$0xf] %vm419, %v368
  %690 = vst.msk [vmem:[%s669 + $0xa4] sm:$0xf] %vm419, %v369
  %691 = vst.msk [vmem:[%s669 + $0xa8] sm:$0xf] %vm419, %v370
  %692 = vst.msk [vmem:[%s669 + $0xb4] sm:$0xf] %vm419, %v371
  %693 = vst.msk [vmem:[%s669 + $0xb8] sm:$0xf] %vm419, %v372
  %694 = vst.msk [vmem:[%s669 + $0xc4] sm:$0xf] %vm419, %v373
  %695 = vst.msk [vmem:[%s669 + $0xc8] sm:$0xf] %vm419, %v374
  %696 = vst.msk [vmem:[%s669 + $0xd4] sm:$0xf] %vm419, %v375
  %697 = vst.msk [vmem:[%s669 + $0xd8] sm:$0xf] %vm419, %v376
  %698 = vst.msk [vmem:[%s669 + $0xe4] sm:$0xf] %vm419, %v377
  %699 = vst.msk [vmem:[%s669 + $0xe8] sm:$0xf] %vm419, %v378
  %700 = vst.msk [vmem:[%s669 + $0xf4] sm:$0xf] %vm419, %v379
  %701 = vst.msk [vmem:[%s669 + $0xf8] sm:$0xf] %vm419, %v380
  %702 = vst.msk [vmem:[%s669 + $0x124] sm:$0xf] %vm419, %v381
  %703 = vst.msk [vmem:[%s669 + $0x128] sm:$0xf] %vm419, %v382
  %704 = vst.msk [vmem:[%s669 + $0x134] sm:$0xf] %vm419, %v383
  %705 = vst.msk [vmem:[%s669 + $0x138] sm:$0xf] %vm419, %v384
  %706 = vst.msk [vmem:[%s669 + $0x144] sm:$0xf] %vm419, %v385
  %707 = vst.msk [vmem:[%s669 + $0x148] sm:$0xf] %vm419, %v386
  %708 = vst.msk [vmem:[%s669 + $0x154] sm:$0xf] %vm419, %v387
  %709 = vst.msk [vmem:[%s669 + $0x158] sm:$0xf] %vm419, %v388
  %710 = vst.msk [vmem:[%s669 + $0x164] sm:$0xf] %vm419, %v389
  %711 = vst.msk [vmem:[%s669 + $0x168] sm:$0xf] %vm419, %v390
  %712 = vst.msk [vmem:[%s669 + $0x174] sm:$0xf] %vm419, %v391
  %713 = vst.msk [vmem:[%s669 + $0x178] sm:$0xf] %vm419, %v392
  %714 = vst.msk [vmem:[%s669 + $0x184] sm:$0xf] %vm419, %v393
  %715 = vst.msk [vmem:[%s669 + $0x188] sm:$0xf] %vm419, %v394
  %716 = vst.msk [vmem:[%s669 + $0x194] sm:$0xf] %vm419, %v395
  %717 = vst.msk [vmem:[%s669 + $0x198] sm:$0xf] %vm419, %v396
  %718 = vst.msk [vmem:[%s669 + $0x1a4] sm:$0xf] %vm419, %v397
  %719 = vst.msk [vmem:[%s669 + $0x1a8] sm:$0xf] %vm419, %v398
  %720 = vst.msk [vmem:[%s669 + $0x1b4] sm:$0xf] %vm419, %v399
  %721 = vst.msk [vmem:[%s669 + $0x1b8] sm:$0xf] %vm419, %v400
  %722 = vst.msk [vmem:[%s669 + $0x1c4] sm:$0xf] %vm419, %v401
  %723 = vst.msk [vmem:[%s669 + $0x1c8] sm:$0xf] %vm419, %v402
  %724 = vst.msk [vmem:[%s669 + $0x1d4] sm:$0xf] %vm419, %v403
  %725 = vst.msk [vmem:[%s669 + $0x1d8] sm:$0xf] %vm419, %v404
  %726 = vst.msk [vmem:[%s669 + $0x1e4] sm:$0xf] %vm419, %v405
  %727 = vst.msk [vmem:[%s669 + $0x1e8] sm:$0xf] %vm419, %v406
  %728 = vst.msk [vmem:[%s669 + $0x1f4] sm:$0xf] %vm419, %v407
  %729 = vst.msk [vmem:[%s669 + $0x1f8] sm:$0xf] %vm419, %v408
  %730 = vst.msk [vmem:[%s669 + $0x204] sm:$0xf] %vm419, %v409
  %731 = vst.msk [vmem:[%s669 + $0x208] sm:$0xf] %vm419, %v410
  %732 = vst.msk [vmem:[%s669 + $0x214] sm:$0xf] %vm419, %v411
  %733 = vst.msk [vmem:[%s669 + $0x218] sm:$0xf] %vm419, %v412
  %v734 = vld [vmem:[#allocation2] sm:$0x8]
  %v735 = vld [vmem:[#allocation2 + $0x4] sm:$0xf]
  %v736 = vld [vmem:[#allocation2 + $0x8] sm:$0xf]
  %v737 = vld [vmem:[#allocation2 + $0x10] sm:$0x8]
  %v738 = vld [vmem:[#allocation2 + $0x14] sm:$0xf]
  %v739 = vld [vmem:[#allocation2 + $0x18] sm:$0xf]
  %v740 = vld [vmem:[#allocation2 + $0x20] sm:$0x8]
  %v741 = vld [vmem:[#allocation2 + $0x24] sm:$0xf]
  %v742 = vld [vmem:[#allocation2 + $0x28] sm:$0xf]
  %v743 = vld [vmem:[#allocation2 + $0x30] sm:$0x8]
  %v744 = vld [vmem:[#allocation2 + $0x34] sm:$0xf]
  %v745 = vld [vmem:[#allocation2 + $0x38] sm:$0xf]
  %v746 = vld [vmem:[#allocation2 + $0x40] sm:$0x8]
  %v747 = vld [vmem:[#allocation2 + $0x44] sm:$0xf]
  %v748 = vld [vmem:[#allocation2 + $0x48] sm:$0xf]
  %v749 = vld [vmem:[#allocation2 + $0x50] sm:$0x8]
  %v750 = vld [vmem:[#allocation2 + $0x54] sm:$0xf]
  %v751 = vld [vmem:[#allocation2 + $0x58] sm:$0xf]
  %v752 = vld [vmem:[#allocation2 + $0x60] sm:$0x8]
  %v753 = vld [vmem:[#allocation2 + $0x64] sm:$0xf]
  %v754 = vld [vmem:[#allocation2 + $0x68] sm:$0xf]
  %v755 = vld [vmem:[#allocation2 + $0x70] sm:$0x8]
  %v756 = vld [vmem:[#allocation2 + $0x74] sm:$0xf]
  %v757 = vld [vmem:[#allocation2 + $0x78] sm:$0xf]
  %v758 = vld [vmem:[#allocation2 + $0x80] sm:$0x8]
  %v759 = vld [vmem:[#allocation2 + $0x84] sm:$0xf]
  %v760 = vld [vmem:[#allocation2 + $0x88] sm:$0xf]
  %v761 = vld [vmem:[#allocation2 + $0x90] sm:$0x8]
  %v762 = vld [vmem:[#allocation2 + $0x94] sm:$0xf]
  %v763 = vld [vmem:[#allocation2 + $0x98] sm:$0xf]
  %v764 = vld [vmem:[#allocation2 + $0xa0] sm:$0x8]
  %v765 = vld [vmem:[#allocation2 + $0xa4] sm:$0xf]
  %v766 = vld [vmem:[#allocation2 + $0xa8] sm:$0xf]
  %v767 = vld [vmem:[#allocation2 + $0xb0] sm:$0x8]
  %v768 = vld [vmem:[#allocation2 + $0xb4] sm:$0xf]
  %v769 = vld [vmem:[#allocation2 + $0xb8] sm:$0xf]
  %v770 = vld [vmem:[#allocation2 + $0xc0] sm:$0x8]
  %v771 = vld [vmem:[#allocation2 + $0xc4] sm:$0xf]
  %v772 = vld [vmem:[#allocation2 + $0xc8] sm:$0xf]
  %v773 = vld [vmem:[#allocation2 + $0xd0] sm:$0x8]
  %v774 = vld [vmem:[#allocation2 + $0xd4] sm:$0xf]
  %v775 = vld [vmem:[#allocation2 + $0xd8] sm:$0xf]
  %v776 = vld [vmem:[#allocation2 + $0xe0] sm:$0x8]
  %v777 = vld [vmem:[#allocation2 + $0xe4] sm:$0xf]
  %v778 = vld [vmem:[#allocation2 + $0xe8] sm:$0xf]
  %v779 = vld [vmem:[#allocation2 + $0xf0] sm:$0x8]
  %v780 = vld [vmem:[#allocation2 + $0xf4] sm:$0xf]
  %v781 = vld [vmem:[#allocation2 + $0xf8] sm:$0xf]
  %v782 = vld [vmem:[#allocation2 + $0x120] sm:$0x8]
  %v783 = vld [vmem:[#allocation2 + $0x124] sm:$0xf]
  %v784 = vld [vmem:[#allocation2 + $0x128] sm:$0xf]
  %v785 = vld [vmem:[#allocation2 + $0x130] sm:$0x8]
  %v786 = vld [vmem:[#allocation2 + $0x134] sm:$0xf]
  %v787 = vld [vmem:[#allocation2 + $0x138] sm:$0xf]
  %v788 = vld [vmem:[#allocation2 + $0x140] sm:$0x8]
  %v789 = vld [vmem:[#allocation2 + $0x144] sm:$0xf]
  %v790 = vld [vmem:[#allocation2 + $0x148] sm:$0xf]
  %v791 = vld [vmem:[#allocation2 + $0x150] sm:$0x8]
  %v792 = vld [vmem:[#allocation2 + $0x154] sm:$0xf]
  %v793 = vld [vmem:[#allocation2 + $0x158] sm:$0xf]
  %v794 = vld [vmem:[#allocation2 + $0x160] sm:$0x8]
  %v795 = vld [vmem:[#allocation2 + $0x164] sm:$0xf]
  %v796 = vld [vmem:[#allocation2 + $0x168] sm:$0xf]
  %v797 = vld [vmem:[#allocation2 + $0x170] sm:$0x8]
  %v798 = vld [vmem:[#allocation2 + $0x174] sm:$0xf]
  %v799 = vld [vmem:[#allocation2 + $0x178] sm:$0xf]
  %v800 = vld [vmem:[#allocation2 + $0x180] sm:$0x8]
  %v801 = vld [vmem:[#allocation2 + $0x184] sm:$0xf]
  %v802 = vld [vmem:[#allocation2 + $0x188] sm:$0xf]
  %v803 = vld [vmem:[#allocation2 + $0x190] sm:$0x8]
  %v804 = vld [vmem:[#allocation2 + $0x194] sm:$0xf]
  %v805 = vld [vmem:[#allocation2 + $0x198] sm:$0xf]
  %v806 = vld [vmem:[#allocation2 + $0x1a0] sm:$0x8]
  %v807 = vld [vmem:[#allocation2 + $0x1a4] sm:$0xf]
  %v808 = vld [vmem:[#allocation2 + $0x1a8] sm:$0xf]
  %v809 = vld [vmem:[#allocation2 + $0x1b0] sm:$0x8]
  %v810 = vld [vmem:[#allocation2 + $0x1b4] sm:$0xf]
  %v811 = vld [vmem:[#allocation2 + $0x1b8] sm:$0xf]
  %v812 = vld [vmem:[#allocation2 + $0x1c0] sm:$0x8]
  %v813 = vld [vmem:[#allocation2 + $0x1c4] sm:$0xf]
  %v814 = vld [vmem:[#allocation2 + $0x1c8] sm:$0xf]
  %v815 = vld [vmem:[#allocation2 + $0x1d0] sm:$0x8]
  %v816 = vld [vmem:[#allocation2 + $0x1d4] sm:$0xf]
  %v817 = vld [vmem:[#allocation2 + $0x1d8] sm:$0xf]
  %v818 = vld [vmem:[#allocation2 + $0x1e0] sm:$0x8]
  %v819 = vld [vmem:[#allocation2 + $0x1e4] sm:$0xf]
  %v820 = vld [vmem:[#allocation2 + $0x1e8] sm:$0xf]
  %v821 = vld [vmem:[#allocation2 + $0x1f0] sm:$0x8]
  %v822 = vld [vmem:[#allocation2 + $0x1f4] sm:$0xf]
  %v823 = vld [vmem:[#allocation2 + $0x1f8] sm:$0xf]
  %v824 = vld [vmem:[#allocation2 + $0x200] sm:$0x8]
  %v825 = vld [vmem:[#allocation2 + $0x204] sm:$0xf]
  %v826 = vld [vmem:[#allocation2 + $0x208] sm:$0xf]
  %v827 = vld [vmem:[#allocation2 + $0x210] sm:$0x8]
  %v828 = vld [vmem:[#allocation2 + $0x214] sm:$0xf]
  %v829 = vld [vmem:[#allocation2 + $0x218] sm:$0xf]
  %v830 = vld [vmem:[#allocation2 + $0xc] sm:$0x1]
  %v831 = vld [vmem:[#allocation2 + $0x1c] sm:$0x1]
  %v832 = vld [vmem:[#allocation2 + $0x2c] sm:$0x1]
  %v833 = vld [vmem:[#allocation2 + $0x3c] sm:$0x1]
  %v834 = vld [vmem:[#allocation2 + $0x4c] sm:$0x1]
  %v835 = vld [vmem:[#allocation2 + $0x5c] sm:$0x1]
  %v836 = vld [vmem:[#allocation2 + $0x6c] sm:$0x1]
  %v837 = vld [vmem:[#allocation2 + $0x7c] sm:$0x1]
  %v838 = vld [vmem:[#allocation2 + $0x8c] sm:$0x1]
  %v839 = vld [vmem:[#allocation2 + $0x9c] sm:$0x1]
  %v840 = vld [vmem:[#allocation2 + $0xac] sm:$0x1]
  %v841 = vld [vmem:[#allocation2 + $0xbc] sm:$0x1]
  %v842 = vld [vmem:[#allocation2 + $0xcc] sm:$0x1]
  %v843 = vld [vmem:[#allocation2 + $0xdc] sm:$0x1]
  %v844 = vld [vmem:[#allocation2 + $0xec] sm:$0x1]
  %v845 = vld [vmem:[#allocation2 + $0xfc] sm:$0x1]
  %v846 = vld [vmem:[#allocation2 + $0x12c] sm:$0x1]
  %v847 = vld [vmem:[#allocation2 + $0x13c] sm:$0x1]
  %v848 = vld [vmem:[#allocation2 + $0x14c] sm:$0x1]
  %v849 = vld [vmem:[#allocation2 + $0x15c] sm:$0x1]
  %v850 = vld [vmem:[#allocation2 + $0x16c] sm:$0x1]
  %v851 = vld [vmem:[#allocation2 + $0x17c] sm:$0x1]
  %v852 = vld [vmem:[#allocation2 + $0x18c] sm:$0x1]
  %v853 = vld [vmem:[#allocation2 + $0x19c] sm:$0x1]
  %v854 = vld [vmem:[#allocation2 + $0x1ac] sm:$0x1]
  %v855 = vld [vmem:[#allocation2 + $0x1bc] sm:$0x1]
  %v856 = vld [vmem:[#allocation2 + $0x1cc] sm:$0x1]
  %v857 = vld [vmem:[#allocation2 + $0x1dc] sm:$0x1]
  %v858 = vld [vmem:[#allocation2 + $0x1ec] sm:$0x1]
  %v859 = vld [vmem:[#allocation2 + $0x1fc] sm:$0x1]
  %v860 = vld [vmem:[#allocation2 + $0x20c] sm:$0x1]
  %v861 = vld [vmem:[#allocation2 + $0x21c] sm:$0x1]
  %v862 = vld [vmem:[%s669] sm:$0x8]
  %v863 = vld [vmem:[%s669 + $0x4] sm:$0xf]
  %v864 = vld [vmem:[%s669 + $0x8] sm:$0xf]
  %v865 = vld [vmem:[%s669 + $0x10] sm:$0x8]
  %v866 = vld [vmem:[%s669 + $0x14] sm:$0xf]
  %v867 = vld [vmem:[%s669 + $0x18] sm:$0xf]
  %v868 = vld [vmem:[%s669 + $0x20] sm:$0x8]
  %v869 = vld [vmem:[%s669 + $0x24] sm:$0xf]
  %v870 = vld [vmem:[%s669 + $0x28] sm:$0xf]
  %v871 = vld [vmem:[%s669 + $0x30] sm:$0x8]
  %v872 = vld [vmem:[%s669 + $0x34] sm:$0xf]
  %v873 = vld [vmem:[%s669 + $0x38] sm:$0xf]
  %v874 = vld [vmem:[%s669 + $0x40] sm:$0x8]
  %v875 = vld [vmem:[%s669 + $0x44] sm:$0xf]
  %v876 = vld [vmem:[%s669 + $0x48] sm:$0xf]
  %v877 = vld [vmem:[%s669 + $0x50] sm:$0x8]
  %v878 = vld [vmem:[%s669 + $0x54] sm:$0xf]
  %v879 = vld [vmem:[%s669 + $0x58] sm:$0xf]
  %v880 = vld [vmem:[%s669 + $0x60] sm:$0x8]
  %v881 = vld [vmem:[%s669 + $0x64] sm:$0xf]
  %v882 = vld [vmem:[%s669 + $0x68] sm:$0xf]
  %v883 = vld [vmem:[%s669 + $0x70] sm:$0x8]
  %v884 = vld [vmem:[%s669 + $0x74] sm:$0xf]
  %v885 = vld [vmem:[%s669 + $0x78] sm:$0xf]
  %v886 = vld [vmem:[%s669 + $0x80] sm:$0x8]
  %v887 = vld [vmem:[%s669 + $0x84] sm:$0xf]
  %v888 = vld [vmem:[%s669 + $0x88] sm:$0xf]
  %v889 = vld [vmem:[%s669 + $0x90] sm:$0x8]
  %v890 = vld [vmem:[%s669 + $0x94] sm:$0xf]
  %v891 = vld [vmem:[%s669 + $0x98] sm:$0xf]
  %v892 = vld [vmem:[%s669 + $0xa0] sm:$0x8]
  %v893 = vld [vmem:[%s669 + $0xa4] sm:$0xf]
  %v894 = vld [vmem:[%s669 + $0xa8] sm:$0xf]
  %v895 = vld [vmem:[%s669 + $0xb0] sm:$0x8]
  %v896 = vld [vmem:[%s669 + $0xb4] sm:$0xf]
  %v897 = vld [vmem:[%s669 + $0xb8] sm:$0xf]
  %v898 = vld [vmem:[%s669 + $0xc0] sm:$0x8]
  %v899 = vld [vmem:[%s669 + $0xc4] sm:$0xf]
  %v900 = vld [vmem:[%s669 + $0xc8] sm:$0xf]
  %v901 = vld [vmem:[%s669 + $0xd0] sm:$0x8]
  %v902 = vld [vmem:[%s669 + $0xd4] sm:$0xf]
  %v903 = vld [vmem:[%s669 + $0xd8] sm:$0xf]
  %v904 = vld [vmem:[%s669 + $0xe0] sm:$0x8]
  %v905 = vld [vmem:[%s669 + $0xe4] sm:$0xf]
  %v906 = vld [vmem:[%s669 + $0xe8] sm:$0xf]
  %v907 = vld [vmem:[%s669 + $0xf0] sm:$0x8]
  %v908 = vld [vmem:[%s669 + $0xf4] sm:$0xf]
  %v909 = vld [vmem:[%s669 + $0xf8] sm:$0xf]
  %v910 = vld [vmem:[%s669 + $0x120] sm:$0x8]
  %v911 = vld [vmem:[%s669 + $0x124] sm:$0xf]
  %v912 = vld [vmem:[%s669 + $0x128] sm:$0xf]
  %v913 = vld [vmem:[%s669 + $0x130] sm:$0x8]
  %v914 = vld [vmem:[%s669 + $0x134] sm:$0xf]
  %v915 = vld [vmem:[%s669 + $0x138] sm:$0xf]
  %v916 = vld [vmem:[%s669 + $0x140] sm:$0x8]
  %v917 = vld [vmem:[%s669 + $0x144] sm:$0xf]
  %v918 = vld [vmem:[%s669 + $0x148] sm:$0xf]
  %v919 = vld [vmem:[%s669 + $0x150] sm:$0x8]
  %v920 = vld [vmem:[%s669 + $0x154] sm:$0xf]
  %v921 = vld [vmem:[%s669 + $0x158] sm:$0xf]
  %v922 = vld [vmem:[%s669 + $0x160] sm:$0x8]
  %v923 = vld [vmem:[%s669 + $0x164] sm:$0xf]
  %v924 = vld [vmem:[%s669 + $0x168] sm:$0xf]
  %v925 = vld [vmem:[%s669 + $0x170] sm:$0x8]
  %v926 = vld [vmem:[%s669 + $0x174] sm:$0xf]
  %v927 = vld [vmem:[%s669 + $0x178] sm:$0xf]
  %v928 = vld [vmem:[%s669 + $0x180] sm:$0x8]
  %v929 = vld [vmem:[%s669 + $0x184] sm:$0xf]
  %v930 = vld [vmem:[%s669 + $0x188] sm:$0xf]
  %v931 = vld [vmem:[%s669 + $0x190] sm:$0x8]
  %v932 = vld [vmem:[%s669 + $0x194] sm:$0xf]
  %v933 = vld [vmem:[%s669 + $0x198] sm:$0xf]
  %v934 = vld [vmem:[%s669 + $0x1a0] sm:$0x8]
  %v935 = vld [vmem:[%s669 + $0x1a4] sm:$0xf]
  %v936 = vld [vmem:[%s669 + $0x1a8] sm:$0xf]
  %v937 = vld [vmem:[%s669 + $0x1b0] sm:$0x8]
  %v938 = vld [vmem:[%s669 + $0x1b4] sm:$0xf]
  %v939 = vld [vmem:[%s669 + $0x1b8] sm:$0xf]
  %v940 = vld [vmem:[%s669 + $0x1c0] sm:$0x8]
  %v941 = vld [vmem:[%s669 + $0x1c4] sm:$0xf]
  %v942 = vld [vmem:[%s669 + $0x1c8] sm:$0xf]
  %v943 = vld [vmem:[%s669 + $0x1d0] sm:$0x8]
  %v944 = vld [vmem:[%s669 + $0x1d4] sm:$0xf]
  %v945 = vld [vmem:[%s669 + $0x1d8] sm:$0xf]
  %v946 = vld [vmem:[%s669 + $0x1e0] sm:$0x8]
  %v947 = vld [vmem:[%s669 + $0x1e4] sm:$0xf]
  %v948 = vld [vmem:[%s669 + $0x1e8] sm:$0xf]
  %v949 = vld [vmem:[%s669 + $0x1f0] sm:$0x8]
  %v950 = vld [vmem:[%s669 + $0x1f4] sm:$0xf]
  %v951 = vld [vmem:[%s669 + $0x1f8] sm:$0xf]
  %v952 = vld [vmem:[%s669 + $0x200] sm:$0x8]
  %v953 = vld [vmem:[%s669 + $0x204] sm:$0xf]
  %v954 = vld [vmem:[%s669 + $0x208] sm:$0xf]
  %v955 = vld [vmem:[%s669 + $0x210] sm:$0x8]
  %v956 = vld [vmem:[%s669 + $0x214] sm:$0xf]
  %v957 = vld [vmem:[%s669 + $0x218] sm:$0xf]
  %v958 = vld [vmem:[%s669 + $0xc] sm:$0x1]
  %v959 = vld [vmem:[%s669 + $0x1c] sm:$0x1]
  %v960 = vld [vmem:[%s669 + $0x2c] sm:$0x1]
  %v961 = vld [vmem:[%s669 + $0x3c] sm:$0x1]
  %v962 = vld [vmem:[%s669 + $0x4c] sm:$0x1]
  %v963 = vld [vmem:[%s669 + $0x5c] sm:$0x1]
  %v964 = vld [vmem:[%s669 + $0x6c] sm:$0x1]
  %v965 = vld [vmem:[%s669 + $0x7c] sm:$0x1]
  %v966 = vld [vmem:[%s669 + $0x8c] sm:$0x1]
  %v967 = vld [vmem:[%s669 + $0x9c] sm:$0x1]
  %v968 = vld [vmem:[%s669 + $0xac] sm:$0x1]
  %v969 = vld [vmem:[%s669 + $0xbc] sm:$0x1]
  %v970 = vld [vmem:[%s669 + $0xcc] sm:$0x1]
  %v971 = vld [vmem:[%s669 + $0xdc] sm:$0x1]
  %v972 = vld [vmem:[%s669 + $0xec] sm:$0x1]
  %v973 = vld [vmem:[%s669 + $0xfc] sm:$0x1]
  %v974 = vld [vmem:[%s669 + $0x12c] sm:$0x1]
  %v975 = vld [vmem:[%s669 + $0x13c] sm:$0x1]
  %v976 = vld [vmem:[%s669 + $0x14c] sm:$0x1]
  %v977 = vld [vmem:[%s669 + $0x15c] sm:$0x1]
  %v978 = vld [vmem:[%s669 + $0x16c] sm:$0x1]
  %v979 = vld [vmem:[%s669 + $0x17c] sm:$0x1]
  %v980 = vld [vmem:[%s669 + $0x18c] sm:$0x1]
  %v981 = vld [vmem:[%s669 + $0x19c] sm:$0x1]
  %v982 = vld [vmem:[%s669 + $0x1ac] sm:$0x1]
  %v983 = vld [vmem:[%s669 + $0x1bc] sm:$0x1]
  %v984 = vld [vmem:[%s669 + $0x1cc] sm:$0x1]
  %v985 = vld [vmem:[%s669 + $0x1dc] sm:$0x1]
  %v986 = vld [vmem:[%s669 + $0x1ec] sm:$0x1]
  %v987 = vld [vmem:[%s669 + $0x1fc] sm:$0x1]
  %v988 = vld [vmem:[%s669 + $0x20c] sm:$0x1]
  %v989 = vld [vmem:[%s669 + $0x21c] sm:$0x1]
  %s990 = scalar_lea.vmem [#allocation2], 32
  %v991 = vld [vmem:[%s990] sm:$0x8]
  %v992 = vld [vmem:[%s990 + $0x4] sm:$0xf]
  %v993 = vld [vmem:[%s990 + $0x8] sm:$0xf]
  %v994 = vld [vmem:[%s990 + $0x10] sm:$0x8]
  %v995 = vld [vmem:[%s990 + $0x14] sm:$0xf]
  %v996 = vld [vmem:[%s990 + $0x18] sm:$0xf]
  %v997 = vld [vmem:[%s990 + $0x20] sm:$0x8]
  %v998 = vld [vmem:[%s990 + $0x24] sm:$0xf]
  %v999 = vld [vmem:[%s990 + $0x28] sm:$0xf]
  %v1000 = vld [vmem:[%s990 + $0x30] sm:$0x8]
  %v1001 = vld [vmem:[%s990 + $0x34] sm:$0xf]
  %v1002 = vld [vmem:[%s990 + $0x38] sm:$0xf]
  %v1003 = vld [vmem:[%s990 + $0x40] sm:$0x8]
  %v1004 = vld [vmem:[%s990 + $0x44] sm:$0xf]
  %v1005 = vld [vmem:[%s990 + $0x48] sm:$0xf]
  %v1006 = vld [vmem:[%s990 + $0x50] sm:$0x8]
  %v1007 = vld [vmem:[%s990 + $0x54] sm:$0xf]
  %v1008 = vld [vmem:[%s990 + $0x58] sm:$0xf]
  %v1009 = vld [vmem:[%s990 + $0x60] sm:$0x8]
  %v1010 = vld [vmem:[%s990 + $0x64] sm:$0xf]
  %v1011 = vld [vmem:[%s990 + $0x68] sm:$0xf]
  %v1012 = vld [vmem:[%s990 + $0x70] sm:$0x8]
  %v1013 = vld [vmem:[%s990 + $0x74] sm:$0xf]
  %v1014 = vld [vmem:[%s990 + $0x78] sm:$0xf]
  %v1015 = vld [vmem:[%s990 + $0x80] sm:$0x8]
  %v1016 = vld [vmem:[%s990 + $0x84] sm:$0xf]
  %v1017 = vld [vmem:[%s990 + $0x88] sm:$0xf]
  %v1018 = vld [vmem:[%s990 + $0x90] sm:$0x8]
  %v1019 = vld [vmem:[%s990 + $0x94] sm:$0xf]
  %v1020 = vld [vmem:[%s990 + $0x98] sm:$0xf]
  %v1021 = vld [vmem:[%s990 + $0xa0] sm:$0x8]
  %v1022 = vld [vmem:[%s990 + $0xa4] sm:$0xf]
  %v1023 = vld [vmem:[%s990 + $0xa8] sm:$0xf]
  %v1024 = vld [vmem:[%s990 + $0xb0] sm:$0x8]
  %v1025 = vld [vmem:[%s990 + $0xb4] sm:$0xf]
  %v1026 = vld [vmem:[%s990 + $0xb8] sm:$0xf]
  %v1027 = vld [vmem:[%s990 + $0xc0] sm:$0x8]
  %v1028 = vld [vmem:[%s990 + $0xc4] sm:$0xf]
  %v1029 = vld [vmem:[%s990 + $0xc8] sm:$0xf]
  %v1030 = vld [vmem:[%s990 + $0xd0] sm:$0x8]
  %v1031 = vld [vmem:[%s990 + $0xd4] sm:$0xf]
  %v1032 = vld [vmem:[%s990 + $0xd8] sm:$0xf]
  %v1033 = vld [vmem:[%s990 + $0xe0] sm:$0x8]
  %v1034 = vld [vmem:[%s990 + $0xe4] sm:$0xf]
  %v1035 = vld [vmem:[%s990 + $0xe8] sm:$0xf]
  %v1036 = vld [vmem:[%s990 + $0xf0] sm:$0x8]
  %v1037 = vld [vmem:[%s990 + $0xf4] sm:$0xf]
  %v1038 = vld [vmem:[%s990 + $0xf8] sm:$0xf]
  %v1039 = vld [vmem:[%s990 + $0x120] sm:$0x8]
  %v1040 = vld [vmem:[%s990 + $0x124] sm:$0xf]
  %v1041 = vld [vmem:[%s990 + $0x128] sm:$0xf]
  %v1042 = vld [vmem:[%s990 + $0x130] sm:$0x8]
  %v1043 = vld [vmem:[%s990 + $0x134] sm:$0xf]
  %v1044 = vld [vmem:[%s990 + $0x138] sm:$0xf]
  %v1045 = vld [vmem:[%s990 + $0x140] sm:$0x8]
  %v1046 = vld [vmem:[%s990 + $0x144] sm:$0xf]
  %v1047 = vld [vmem:[%s990 + $0x148] sm:$0xf]
  %v1048 = vld [vmem:[%s990 + $0x150] sm:$0x8]
  %v1049 = vld [vmem:[%s990 + $0x154] sm:$0xf]
  %v1050 = vld [vmem:[%s990 + $0x158] sm:$0xf]
  %v1051 = vld [vmem:[%s990 + $0x160] sm:$0x8]
  %v1052 = vld [vmem:[%s990 + $0x164] sm:$0xf]
  %v1053 = vld [vmem:[%s990 + $0x168] sm:$0xf]
  %v1054 = vld [vmem:[%s990 + $0x170] sm:$0x8]
  %v1055 = vld [vmem:[%s990 + $0x174] sm:$0xf]
  %v1056 = vld [vmem:[%s990 + $0x178] sm:$0xf]
  %v1057 = vld [vmem:[%s990 + $0x180] sm:$0x8]
  %v1058 = vld [vmem:[%s990 + $0x184] sm:$0xf]
  %v1059 = vld [vmem:[%s990 + $0x188] sm:$0xf]
  %v1060 = vld [vmem:[%s990 + $0x190] sm:$0x8]
  %v1061 = vld [vmem:[%s990 + $0x194] sm:$0xf]
  %v1062 = vld [vmem:[%s990 + $0x198] sm:$0xf]
  %v1063 = vld [vmem:[%s990 + $0x1a0] sm:$0x8]
  %v1064 = vld [vmem:[%s990 + $0x1a4] sm:$0xf]
  %v1065 = vld [vmem:[%s990 + $0x1a8] sm:$0xf]
  %v1066 = vld [vmem:[%s990 + $0x1b0] sm:$0x8]
  %v1067 = vld [vmem:[%s990 + $0x1b4] sm:$0xf]
  %v1068 = vld [vmem:[%s990 + $0x1b8] sm:$0xf]
  %v1069 = vld [vmem:[%s990 + $0x1c0] sm:$0x8]
  %v1070 = vld [vmem:[%s990 + $0x1c4] sm:$0xf]
  %v1071 = vld [vmem:[%s990 + $0x1c8] sm:$0xf]
  %v1072 = vld [vmem:[%s990 + $0x1d0] sm:$0x8]
  %v1073 = vld [vmem:[%s990 + $0x1d4] sm:$0xf]
  %v1074 = vld [vmem:[%s990 + $0x1d8] sm:$0xf]
  %v1075 = vld [vmem:[%s990 + $0x1e0] sm:$0x8]
  %v1076 = vld [vmem:[%s990 + $0x1e4] sm:$0xf]
  %v1077 = vld [vmem:[%s990 + $0x1e8] sm:$0xf]
  %v1078 = vld [vmem:[%s990 + $0x1f0] sm:$0x8]
  %v1079 = vld [vmem:[%s990 + $0x1f4] sm:$0xf]
  %v1080 = vld [vmem:[%s990 + $0x1f8] sm:$0xf]
  %v1081 = vld [vmem:[%s990 + $0x200] sm:$0x8]
  %v1082 = vld [vmem:[%s990 + $0x204] sm:$0xf]
  %v1083 = vld [vmem:[%s990 + $0x208] sm:$0xf]
  %v1084 = vld [vmem:[%s990 + $0x210] sm:$0x8]
  %v1085 = vld [vmem:[%s990 + $0x214] sm:$0xf]
  %v1086 = vld [vmem:[%s990 + $0x218] sm:$0xf]
  %v1087 = vld [vmem:[%s990 + $0xc] sm:$0x1]
  %v1088 = vld [vmem:[%s990 + $0x1c] sm:$0x1]
  %v1089 = vld [vmem:[%s990 + $0x2c] sm:$0x1]
  %v1090 = vld [vmem:[%s990 + $0x3c] sm:$0x1]
  %v1091 = vld [vmem:[%s990 + $0x4c] sm:$0x1]
  %v1092 = vld [vmem:[%s990 + $0x5c] sm:$0x1]
  %v1093 = vld [vmem:[%s990 + $0x6c] sm:$0x1]
  %v1094 = vld [vmem:[%s990 + $0x7c] sm:$0x1]
  %v1095 = vld [vmem:[%s990 + $0x8c] sm:$0x1]
  %v1096 = vld [vmem:[%s990 + $0x9c] sm:$0x1]
  %v1097 = vld [vmem:[%s990 + $0xac] sm:$0x1]
  %v1098 = vld [vmem:[%s990 + $0xbc] sm:$0x1]
  %v1099 = vld [vmem:[%s990 + $0xcc] sm:$0x1]
  %v1100 = vld [vmem:[%s990 + $0xdc] sm:$0x1]
  %v1101 = vld [vmem:[%s990 + $0xec] sm:$0x1]
  %v1102 = vld [vmem:[%s990 + $0xfc] sm:$0x1]
  %v1103 = vld [vmem:[%s990 + $0x12c] sm:$0x1]
  %v1104 = vld [vmem:[%s990 + $0x13c] sm:$0x1]
  %v1105 = vld [vmem:[%s990 + $0x14c] sm:$0x1]
  %v1106 = vld [vmem:[%s990 + $0x15c] sm:$0x1]
  %v1107 = vld [vmem:[%s990 + $0x16c] sm:$0x1]
  %v1108 = vld [vmem:[%s990 + $0x17c] sm:$0x1]
  %v1109 = vld [vmem:[%s990 + $0x18c] sm:$0x1]
  %v1110 = vld [vmem:[%s990 + $0x19c] sm:$0x1]
  %v1111 = vld [vmem:[%s990 + $0x1ac] sm:$0x1]
  %v1112 = vld [vmem:[%s990 + $0x1bc] sm:$0x1]
  %v1113 = vld [vmem:[%s990 + $0x1cc] sm:$0x1]
  %v1114 = vld [vmem:[%s990 + $0x1dc] sm:$0x1]
  %v1115 = vld [vmem:[%s990 + $0x1ec] sm:$0x1]
  %v1116 = vld [vmem:[%s990 + $0x1fc] sm:$0x1]
  %v1117 = vld [vmem:[%s990 + $0x20c] sm:$0x1]
  %v1118 = vld [vmem:[%s990 + $0x21c] sm:$0x1]
  %v1215 = vunpack.c.l.b16 %v734
  %v1216 = vunpack.c.l.b16 %v735
  %v1217 = vunpack.c.l.b16 %v736
  %v1218 = vunpack.c.l.b16 %v737
  %v1219 = vunpack.c.l.b16 %v738
  %v1220 = vunpack.c.l.b16 %v739
  %v1221 = vunpack.c.l.b16 %v740
  %v1222 = vunpack.c.l.b16 %v741
  %v1223 = vunpack.c.l.b16 %v742
  %v1224 = vunpack.c.l.b16 %v743
  %v1225 = vunpack.c.l.b16 %v744
  %v1226 = vunpack.c.l.b16 %v745
  %v1227 = vunpack.c.l.b16 %v746
  %v1228 = vunpack.c.l.b16 %v747
  %v1229 = vunpack.c.l.b16 %v748
  %v1230 = vunpack.c.l.b16 %v749
  %v1231 = vunpack.c.l.b16 %v750
  %v1232 = vunpack.c.l.b16 %v751
  %v1233 = vunpack.c.l.b16 %v752
  %v1234 = vunpack.c.l.b16 %v753
  %v1235 = vunpack.c.l.b16 %v754
  %v1236 = vunpack.c.l.b16 %v755
  %v1237 = vunpack.c.l.b16 %v756
  %v1238 = vunpack.c.l.b16 %v757
  %v1239 = vunpack.c.l.b16 %v758
  %v1240 = vunpack.c.l.b16 %v759
  %v1241 = vunpack.c.l.b16 %v760
  %v1242 = vunpack.c.l.b16 %v761
  %v1243 = vunpack.c.l.b16 %v762
  %v1244 = vunpack.c.l.b16 %v763
  %v1245 = vunpack.c.l.b16 %v764
  %v1246 = vunpack.c.l.b16 %v765
  %v1247 = vunpack.c.l.b16 %v766
  %v1248 = vunpack.c.l.b16 %v767
  %v1249 = vunpack.c.l.b16 %v768
  %v1250 = vunpack.c.l.b16 %v769
  %v1251 = vunpack.c.l.b16 %v770
  %v1252 = vunpack.c.l.b16 %v771
  %v1253 = vunpack.c.l.b16 %v772
  %v1254 = vunpack.c.l.b16 %v773
  %v1255 = vunpack.c.l.b16 %v774
  %v1256 = vunpack.c.l.b16 %v775
  %v1257 = vunpack.c.l.b16 %v776
  %v1258 = vunpack.c.l.b16 %v777
  %v1259 = vunpack.c.l.b16 %v778
  %v1260 = vunpack.c.l.b16 %v779
  %v1261 = vunpack.c.l.b16 %v780
  %v1262 = vunpack.c.l.b16 %v781
  %v1263 = vunpack.c.l.b16 %v782
  %v1264 = vunpack.c.l.b16 %v783
  %v1265 = vunpack.c.l.b16 %v784
  %v1266 = vunpack.c.l.b16 %v785
  %v1267 = vunpack.c.l.b16 %v786
  %v1268 = vunpack.c.l.b16 %v787
  %v1269 = vunpack.c.l.b16 %v788
  %v1270 = vunpack.c.l.b16 %v789
  %v1271 = vunpack.c.l.b16 %v790
  %v1272 = vunpack.c.l.b16 %v791
  %v1273 = vunpack.c.l.b16 %v792
  %v1274 = vunpack.c.l.b16 %v793
  %v1275 = vunpack.c.l.b16 %v794
  %v1276 = vunpack.c.l.b16 %v795
  %v1277 = vunpack.c.l.b16 %v796
  %v1278 = vunpack.c.l.b16 %v797
  %v1279 = vunpack.c.l.b16 %v798
  %v1280 = vunpack.c.l.b16 %v799
  %v1281 = vunpack.c.l.b16 %v800
  %v1282 = vunpack.c.l.b16 %v801
  %v1283 = vunpack.c.l.b16 %v802
  %v1284 = vunpack.c.l.b16 %v803
  %v1285 = vunpack.c.l.b16 %v804
  %v1286 = vunpack.c.l.b16 %v805
  %v1287 = vunpack.c.l.b16 %v806
  %v1288 = vunpack.c.l.b16 %v807
  %v1289 = vunpack.c.l.b16 %v808
  %v1290 = vunpack.c.l.b16 %v809
  %v1291 = vunpack.c.l.b16 %v810
  %v1292 = vunpack.c.l.b16 %v811
  %v1293 = vunpack.c.l.b16 %v812
  %v1294 = vunpack.c.l.b16 %v813
  %v1295 = vunpack.c.l.b16 %v814
  %v1296 = vunpack.c.l.b16 %v815
  %v1297 = vunpack.c.l.b16 %v816
  %v1298 = vunpack.c.l.b16 %v817
  %v1299 = vunpack.c.l.b16 %v818
  %v1300 = vunpack.c.l.b16 %v819
  %v1301 = vunpack.c.l.b16 %v820
  %v1302 = vunpack.c.l.b16 %v821
  %v1303 = vunpack.c.l.b16 %v822
  %v1304 = vunpack.c.l.b16 %v823
  %v1305 = vunpack.c.l.b16 %v824
  %v1306 = vunpack.c.l.b16 %v825
  %v1307 = vunpack.c.l.b16 %v826
  %v1308 = vunpack.c.l.b16 %v827
  %v1309 = vunpack.c.l.b16 %v828
  %v1310 = vunpack.c.l.b16 %v829
  %v1311 = vpack.c.b16 %v1216, %v1215
  %v1312 = vpack.c.b16 %v1217, %v1217
  %v1313 = vpack.c.b16 %v1219, %v1218
  %v1314 = vpack.c.b16 %v1220, %v1220
  %v1315 = vpack.c.b16 %v1222, %v1221
  %v1316 = vpack.c.b16 %v1223, %v1223
  %v1317 = vpack.c.b16 %v1225, %v1224
  %v1318 = vpack.c.b16 %v1226, %v1226
  %v1319 = vpack.c.b16 %v1228, %v1227
  %v1320 = vpack.c.b16 %v1229, %v1229
  %v1321 = vpack.c.b16 %v1231, %v1230
  %v1322 = vpack.c.b16 %v1232, %v1232
  %v1323 = vpack.c.b16 %v1234, %v1233
  %v1324 = vpack.c.b16 %v1235, %v1235
  %v1325 = vpack.c.b16 %v1237, %v1236
  %v1326 = vpack.c.b16 %v1238, %v1238
  %v1327 = vpack.c.b16 %v1240, %v1239
  %v1328 = vpack.c.b16 %v1241, %v1241
  %v1329 = vpack.c.b16 %v1243, %v1242
  %v1330 = vpack.c.b16 %v1244, %v1244
  %v1331 = vpack.c.b16 %v1246, %v1245
  %v1332 = vpack.c.b16 %v1247, %v1247
  %v1333 = vpack.c.b16 %v1249, %v1248
  %v1334 = vpack.c.b16 %v1250, %v1250
  %v1335 = vpack.c.b16 %v1252, %v1251
  %v1336 = vpack.c.b16 %v1253, %v1253
  %v1337 = vpack.c.b16 %v1255, %v1254
  %v1338 = vpack.c.b16 %v1256, %v1256
  %v1339 = vpack.c.b16 %v1258, %v1257
  %v1340 = vpack.c.b16 %v1259, %v1259
  %v1341 = vpack.c.b16 %v1261, %v1260
  %v1342 = vpack.c.b16 %v1262, %v1262
  %v1343 = vpack.c.b16 %v1264, %v1263
  %v1344 = vpack.c.b16 %v1265, %v1265
  %v1345 = vpack.c.b16 %v1267, %v1266
  %v1346 = vpack.c.b16 %v1268, %v1268
  %v1347 = vpack.c.b16 %v1270, %v1269
  %v1348 = vpack.c.b16 %v1271, %v1271
  %v1349 = vpack.c.b16 %v1273, %v1272
  %v1350 = vpack.c.b16 %v1274, %v1274
  %v1351 = vpack.c.b16 %v1276, %v1275
  %v1352 = vpack.c.b16 %v1277, %v1277
  %v1353 = vpack.c.b16 %v1279, %v1278
  %v1354 = vpack.c.b16 %v1280, %v1280
  %v1355 = vpack.c.b16 %v1282, %v1281
  %v1356 = vpack.c.b16 %v1283, %v1283
  %v1357 = vpack.c.b16 %v1285, %v1284
  %v1358 = vpack.c.b16 %v1286, %v1286
  %v1359 = vpack.c.b16 %v1288, %v1287
  %v1360 = vpack.c.b16 %v1289, %v1289
  %v1361 = vpack.c.b16 %v1291, %v1290
  %v1362 = vpack.c.b16 %v1292, %v1292
  %v1363 = vpack.c.b16 %v1294, %v1293
  %v1364 = vpack.c.b16 %v1295, %v1295
  %v1365 = vpack.c.b16 %v1297, %v1296
  %v1366 = vpack.c.b16 %v1298, %v1298
  %v1367 = vpack.c.b16 %v1300, %v1299
  %v1368 = vpack.c.b16 %v1301, %v1301
  %v1369 = vpack.c.b16 %v1303, %v1302
  %v1370 = vpack.c.b16 %v1304, %v1304
  %v1371 = vpack.c.b16 %v1306, %v1305
  %v1372 = vpack.c.b16 %v1307, %v1307
  %v1373 = vpack.c.b16 %v1309, %v1308
  %v1374 = vpack.c.b16 %v1310, %v1310
  %v1375 = vpack.c.b16 %v1217, %v1216
  %v1376 = vpack.c.b16 %v1220, %v1219
  %v1377 = vpack.c.b16 %v1223, %v1222
  %v1378 = vpack.c.b16 %v1226, %v1225
  %v1379 = vpack.c.b16 %v1229, %v1228
  %v1380 = vpack.c.b16 %v1232, %v1231
  %v1381 = vpack.c.b16 %v1235, %v1234
  %v1382 = vpack.c.b16 %v1238, %v1237
  %v1383 = vpack.c.b16 %v1241, %v1240
  %v1384 = vpack.c.b16 %v1244, %v1243
  %v1385 = vpack.c.b16 %v1247, %v1246
  %v1386 = vpack.c.b16 %v1250, %v1249
  %v1387 = vpack.c.b16 %v1253, %v1252
  %v1388 = vpack.c.b16 %v1256, %v1255
  %v1389 = vpack.c.b16 %v1259, %v1258
  %v1390 = vpack.c.b16 %v1262, %v1261
  %v1391 = vpack.c.b16 %v1265, %v1264
  %v1392 = vpack.c.b16 %v1268, %v1267
  %v1393 = vpack.c.b16 %v1271, %v1270
  %v1394 = vpack.c.b16 %v1274, %v1273
  %v1395 = vpack.c.b16 %v1277, %v1276
  %v1396 = vpack.c.b16 %v1280, %v1279
  %v1397 = vpack.c.b16 %v1283, %v1282
  %v1398 = vpack.c.b16 %v1286, %v1285
  %v1399 = vpack.c.b16 %v1289, %v1288
  %v1400 = vpack.c.b16 %v1292, %v1291
  %v1401 = vpack.c.b16 %v1295, %v1294
  %v1402 = vpack.c.b16 %v1298, %v1297
  %v1403 = vpack.c.b16 %v1301, %v1300
  %v1404 = vpack.c.b16 %v1304, %v1303
  %v1405 = vpack.c.b16 %v1307, %v1306
  %v1406 = vpack.c.b16 %v1310, %v1309
  %v1408 = vshrl.u32 %v1375, 16
  %v1410 = vrot.slane %v1408, 4
  %v1411 = vshll.u32 %v1375, 16
  %v1413 = vrot.slane %v1411, 5
  %v1414 = vor.u32 %v1410, %v1413
  %v1416 = vshrl.u32 %v1376, 16
  %v1418 = vrot.slane %v1416, 4
  %v1419 = vshll.u32 %v1376, 16
  %v1421 = vrot.slane %v1419, 5
  %v1422 = vor.u32 %v1418, %v1421
  %v1424 = vshrl.u32 %v1377, 16
  %v1426 = vrot.slane %v1424, 4
  %v1427 = vshll.u32 %v1377, 16
  %v1429 = vrot.slane %v1427, 5
  %v1430 = vor.u32 %v1426, %v1429
  %v1432 = vshrl.u32 %v1378, 16
  %v1434 = vrot.slane %v1432, 4
  %v1435 = vshll.u32 %v1378, 16
  %v1437 = vrot.slane %v1435, 5
  %v1438 = vor.u32 %v1434, %v1437
  %v1440 = vshrl.u32 %v1379, 16
  %v1442 = vrot.slane %v1440, 4
  %v1443 = vshll.u32 %v1379, 16
  %v1445 = vrot.slane %v1443, 5
  %v1446 = vor.u32 %v1442, %v1445
  %v1448 = vshrl.u32 %v1380, 16
  %v1450 = vrot.slane %v1448, 4
  %v1451 = vshll.u32 %v1380, 16
  %v1453 = vrot.slane %v1451, 5
  %v1454 = vor.u32 %v1450, %v1453
  %v1456 = vshrl.u32 %v1381, 16
  %v1458 = vrot.slane %v1456, 4
  %v1459 = vshll.u32 %v1381, 16
  %v1461 = vrot.slane %v1459, 5
  %v1462 = vor.u32 %v1458, %v1461
  %v1464 = vshrl.u32 %v1382, 16
  %v1466 = vrot.slane %v1464, 4
  %v1467 = vshll.u32 %v1382, 16
  %v1469 = vrot.slane %v1467, 5
  %v1470 = vor.u32 %v1466, %v1469
  %v1472 = vshrl.u32 %v1383, 16
  %v1474 = vrot.slane %v1472, 4
  %v1475 = vshll.u32 %v1383, 16
  %v1477 = vrot.slane %v1475, 5
  %v1478 = vor.u32 %v1474, %v1477
  %v1480 = vshrl.u32 %v1384, 16
  %v1482 = vrot.slane %v1480, 4
  %v1483 = vshll.u32 %v1384, 16
  %v1485 = vrot.slane %v1483, 5
  %v1486 = vor.u32 %v1482, %v1485
  %v1488 = vshrl.u32 %v1385, 16
  %v1490 = vrot.slane %v1488, 4
  %v1491 = vshll.u32 %v1385, 16
  %v1493 = vrot.slane %v1491, 5
  %v1494 = vor.u32 %v1490, %v1493
  %v1496 = vshrl.u32 %v1386, 16
  %v1498 = vrot.slane %v1496, 4
  %v1499 = vshll.u32 %v1386, 16
  %v1501 = vrot.slane %v1499, 5
  %v1502 = vor.u32 %v1498, %v1501
  %v1504 = vshrl.u32 %v1387, 16
  %v1506 = vrot.slane %v1504, 4
  %v1507 = vshll.u32 %v1387, 16
  %v1509 = vrot.slane %v1507, 5
  %v1510 = vor.u32 %v1506, %v1509
  %v1512 = vshrl.u32 %v1388, 16
  %v1514 = vrot.slane %v1512, 4
  %v1515 = vshll.u32 %v1388, 16
  %v1517 = vrot.slane %v1515, 5
  %v1518 = vor.u32 %v1514, %v1517
  %v1520 = vshrl.u32 %v1389, 16
  %v1522 = vrot.slane %v1520, 4
  %v1523 = vshll.u32 %v1389, 16
  %v1525 = vrot.slane %v1523, 5
  %v1526 = vor.u32 %v1522, %v1525
  %v1528 = vshrl.u32 %v1390, 16
  %v1530 = vrot.slane %v1528, 4
  %v1531 = vshll.u32 %v1390, 16
  %v1533 = vrot.slane %v1531, 5
  %v1534 = vor.u32 %v1530, %v1533
  %v1536 = vshrl.u32 %v1391, 16
  %v1538 = vrot.slane %v1536, 4
  %v1539 = vshll.u32 %v1391, 16
  %v1541 = vrot.slane %v1539, 5
  %v1542 = vor.u32 %v1538, %v1541
  %v1544 = vshrl.u32 %v1392, 16
  %v1546 = vrot.slane %v1544, 4
  %v1547 = vshll.u32 %v1392, 16
  %v1549 = vrot.slane %v1547, 5
  %v1550 = vor.u32 %v1546, %v1549
  %v1552 = vshrl.u32 %v1393, 16
  %v1554 = vrot.slane %v1552, 4
  %v1555 = vshll.u32 %v1393, 16
  %v1557 = vrot.slane %v1555, 5
  %v1558 = vor.u32 %v1554, %v1557
  %v1560 = vshrl.u32 %v1394, 16
  %v1562 = vrot.slane %v1560, 4
  %v1563 = vshll.u32 %v1394, 16
  %v1565 = vrot.slane %v1563, 5
  %v1566 = vor.u32 %v1562, %v1565
  %v1568 = vshrl.u32 %v1395, 16
  %v1570 = vrot.slane %v1568, 4
  %v1571 = vshll.u32 %v1395, 16
  %v1573 = vrot.slane %v1571, 5
  %v1574 = vor.u32 %v1570, %v1573
  %v1576 = vshrl.u32 %v1396, 16
  %v1578 = vrot.slane %v1576, 4
  %v1579 = vshll.u32 %v1396, 16
  %v1581 = vrot.slane %v1579, 5
  %v1582 = vor.u32 %v1578, %v1581
  %v1584 = vshrl.u32 %v1397, 16
  %v1586 = vrot.slane %v1584, 4
  %v1587 = vshll.u32 %v1397, 16
  %v1589 = vrot.slane %v1587, 5
  %v1590 = vor.u32 %v1586, %v1589
  %v1592 = vshrl.u32 %v1398, 16
  %v1594 = vrot.slane %v1592, 4
  %v1595 = vshll.u32 %v1398, 16
  %v1597 = vrot.slane %v1595, 5
  %v1598 = vor.u32 %v1594, %v1597
  %v1600 = vshrl.u32 %v1399, 16
  %v1602 = vrot.slane %v1600, 4
  %v1603 = vshll.u32 %v1399, 16
  %v1605 = vrot.slane %v1603, 5
  %v1606 = vor.u32 %v1602, %v1605
  %v1608 = vshrl.u32 %v1400, 16
  %v1610 = vrot.slane %v1608, 4
  %v1611 = vshll.u32 %v1400, 16
  %v1613 = vrot.slane %v1611, 5
  %v1614 = vor.u32 %v1610, %v1613
  %v1616 = vshrl.u32 %v1401, 16
  %v1618 = vrot.slane %v1616, 4
  %v1619 = vshll.u32 %v1401, 16
  %v1621 = vrot.slane %v1619, 5
  %v1622 = vor.u32 %v1618, %v1621
  %v1624 = vshrl.u32 %v1402, 16
  %v1626 = vrot.slane %v1624, 4
  %v1627 = vshll.u32 %v1402, 16
  %v1629 = vrot.slane %v1627, 5
  %v1630 = vor.u32 %v1626, %v1629
  %v1632 = vshrl.u32 %v1403, 16
  %v1634 = vrot.slane %v1632, 4
  %v1635 = vshll.u32 %v1403, 16
  %v1637 = vrot.slane %v1635, 5
  %v1638 = vor.u32 %v1634, %v1637
  %v1640 = vshrl.u32 %v1404, 16
  %v1642 = vrot.slane %v1640, 4
  %v1643 = vshll.u32 %v1404, 16
  %v1645 = vrot.slane %v1643, 5
  %v1646 = vor.u32 %v1642, %v1645
  %v1648 = vshrl.u32 %v1405, 16
  %v1650 = vrot.slane %v1648, 4
  %v1651 = vshll.u32 %v1405, 16
  %v1653 = vrot.slane %v1651, 5
  %v1654 = vor.u32 %v1650, %v1653
  %v1656 = vshrl.u32 %v1406, 16
  %v1658 = vrot.slane %v1656, 4
  %v1659 = vshll.u32 %v1406, 16
  %v1661 = vrot.slane %v1659, 5
  %v1662 = vor.u32 %v1658, %v1661
  %1663 = vrot.lane.b32.xlu0 %v1414, 8
  %v1664 = vpop.permute.xlu0 %1663
  %1665 = vrot.lane.b32.xlu0 %v1422, 8
  %v1666 = vpop.permute.xlu0 %1665
  %1667 = vrot.lane.b32.xlu0 %v1430, 8
  %v1668 = vpop.permute.xlu0 %1667
  %1669 = vrot.lane.b32.xlu0 %v1438, 8
  %v1670 = vpop.permute.xlu0 %1669
  %1671 = vrot.lane.b32.xlu0 %v1446, 8
  %v1672 = vpop.permute.xlu0 %1671
  %1673 = vrot.lane.b32.xlu0 %v1454, 8
  %v1674 = vpop.permute.xlu0 %1673
  %1675 = vrot.lane.b32.xlu0 %v1462, 8
  %v1676 = vpop.permute.xlu0 %1675
  %1677 = vrot.lane.b32.xlu0 %v1470, 8
  %v1678 = vpop.permute.xlu0 %1677
  %1679 = vrot.lane.b32.xlu0 %v1478, 8
  %v1680 = vpop.permute.xlu0 %1679
  %1681 = vrot.lane.b32.xlu0 %v1486, 8
  %v1682 = vpop.permute.xlu0 %1681
  %1683 = vrot.lane.b32.xlu0 %v1494, 8
  %v1684 = vpop.permute.xlu0 %1683
  %1685 = vrot.lane.b32.xlu0 %v1502, 8
  %v1686 = vpop.permute.xlu0 %1685
  %1687 = vrot.lane.b32.xlu0 %v1510, 8
  %v1688 = vpop.permute.xlu0 %1687
  %1689 = vrot.lane.b32.xlu0 %v1518, 8
  %v1690 = vpop.permute.xlu0 %1689
  %1691 = vrot.lane.b32.xlu0 %v1526, 8
  %v1692 = vpop.permute.xlu0 %1691
  %1693 = vrot.lane.b32.xlu0 %v1534, 8
  %v1694 = vpop.permute.xlu0 %1693
  %1695 = vrot.lane.b32.xlu0 %v1542, 8
  %v1696 = vpop.permute.xlu0 %1695
  %1697 = vrot.lane.b32.xlu0 %v1550, 8
  %v1698 = vpop.permute.xlu0 %1697
  %1699 = vrot.lane.b32.xlu0 %v1558, 8
  %v1700 = vpop.permute.xlu0 %1699
  %1701 = vrot.lane.b32.xlu0 %v1566, 8
  %v1702 = vpop.permute.xlu0 %1701
  %1703 = vrot.lane.b32.xlu0 %v1574, 8
  %v1704 = vpop.permute.xlu0 %1703
  %1705 = vrot.lane.b32.xlu0 %v1582, 8
  %v1706 = vpop.permute.xlu0 %1705
  %1707 = vrot.lane.b32.xlu0 %v1590, 8
  %v1708 = vpop.permute.xlu0 %1707
  %1709 = vrot.lane.b32.xlu0 %v1598, 8
  %v1710 = vpop.permute.xlu0 %1709
  %1711 = vrot.lane.b32.xlu0 %v1606, 8
  %v1712 = vpop.permute.xlu0 %1711
  %1713 = vrot.lane.b32.xlu0 %v1614, 8
  %v1714 = vpop.permute.xlu0 %1713
  %1715 = vrot.lane.b32.xlu0 %v1622, 8
  %v1716 = vpop.permute.xlu0 %1715
  %1717 = vrot.lane.b32.xlu0 %v1630, 8
  %v1718 = vpop.permute.xlu0 %1717
  %1719 = vrot.lane.b32.xlu0 %v1638, 8
  %v1720 = vpop.permute.xlu0 %1719
  %1721 = vrot.lane.b32.xlu0 %v1646, 8
  %v1722 = vpop.permute.xlu0 %1721
  %1723 = vrot.lane.b32.xlu0 %v1654, 8
  %v1724 = vpop.permute.xlu0 %1723
  %1725 = vrot.lane.b32.xlu0 %v1662, 8
  %v1726 = vpop.permute.xlu0 %1725
  %v1759 = vunpack.c.l.b16 %v830
  %v1760 = vunpack.c.l.b16 %v831
  %v1761 = vunpack.c.l.b16 %v832
  %v1762 = vunpack.c.l.b16 %v833
  %v1763 = vunpack.c.l.b16 %v834
  %v1764 = vunpack.c.l.b16 %v835
  %v1765 = vunpack.c.l.b16 %v836
  %v1766 = vunpack.c.l.b16 %v837
  %v1767 = vunpack.c.l.b16 %v838
  %v1768 = vunpack.c.l.b16 %v839
  %v1769 = vunpack.c.l.b16 %v840
  %v1770 = vunpack.c.l.b16 %v841
  %v1771 = vunpack.c.l.b16 %v842
  %v1772 = vunpack.c.l.b16 %v843
  %v1773 = vunpack.c.l.b16 %v844
  %v1774 = vunpack.c.l.b16 %v845
  %v1775 = vunpack.c.l.b16 %v846
  %v1776 = vunpack.c.l.b16 %v847
  %v1777 = vunpack.c.l.b16 %v848
  %v1778 = vunpack.c.l.b16 %v849
  %v1779 = vunpack.c.l.b16 %v850
  %v1780 = vunpack.c.l.b16 %v851
  %v1781 = vunpack.c.l.b16 %v852
  %v1782 = vunpack.c.l.b16 %v853
  %v1783 = vunpack.c.l.b16 %v854
  %v1784 = vunpack.c.l.b16 %v855
  %v1785 = vunpack.c.l.b16 %v856
  %v1786 = vunpack.c.l.b16 %v857
  %v1787 = vunpack.c.l.b16 %v858
  %v1788 = vunpack.c.l.b16 %v859
  %v1789 = vunpack.c.l.b16 %v860
  %v1790 = vunpack.c.l.b16 %v861
  %v1791 = vpack.c.b16 %v1759, %v1759
  %v1792 = vpack.c.b16 %v1760, %v1760
  %v1793 = vpack.c.b16 %v1761, %v1761
  %v1794 = vpack.c.b16 %v1762, %v1762
  %v1795 = vpack.c.b16 %v1763, %v1763
  %v1796 = vpack.c.b16 %v1764, %v1764
  %v1797 = vpack.c.b16 %v1765, %v1765
  %v1798 = vpack.c.b16 %v1766, %v1766
  %v1799 = vpack.c.b16 %v1767, %v1767
  %v1800 = vpack.c.b16 %v1768, %v1768
  %v1801 = vpack.c.b16 %v1769, %v1769
  %v1802 = vpack.c.b16 %v1770, %v1770
  %v1803 = vpack.c.b16 %v1771, %v1771
  %v1804 = vpack.c.b16 %v1772, %v1772
  %v1805 = vpack.c.b16 %v1773, %v1773
  %v1806 = vpack.c.b16 %v1774, %v1774
  %v1807 = vpack.c.b16 %v1775, %v1775
  %v1808 = vpack.c.b16 %v1776, %v1776
  %v1809 = vpack.c.b16 %v1777, %v1777
  %v1810 = vpack.c.b16 %v1778, %v1778
  %v1811 = vpack.c.b16 %v1779, %v1779
  %v1812 = vpack.c.b16 %v1780, %v1780
  %v1813 = vpack.c.b16 %v1781, %v1781
  %v1814 = vpack.c.b16 %v1782, %v1782
  %v1815 = vpack.c.b16 %v1783, %v1783
  %v1816 = vpack.c.b16 %v1784, %v1784
  %v1817 = vpack.c.b16 %v1785, %v1785
  %v1818 = vpack.c.b16 %v1786, %v1786
  %v1819 = vpack.c.b16 %v1787, %v1787
  %v1820 = vpack.c.b16 %v1788, %v1788
  %v1821 = vpack.c.b16 %v1789, %v1789
  %v1822 = vpack.c.b16 %v1790, %v1790
  %vm1823 = vcmask 1042432
  %v1824 = vrot.slane %v1375, 5
  %v1825 = vrot.slane %v1791, 5
  %v1826 = vsel %vm1823, %v1824, %v1825
  %v1827 = vrot.slane %v1376, 5
  %v1828 = vrot.slane %v1792, 5
  %v1829 = vsel %vm1823, %v1827, %v1828
  %v1830 = vrot.slane %v1377, 5
  %v1831 = vrot.slane %v1793, 5
  %v1832 = vsel %vm1823, %v1830, %v1831
  %v1833 = vrot.slane %v1378, 5
  %v1834 = vrot.slane %v1794, 5
  %v1835 = vsel %vm1823, %v1833, %v1834
  %v1836 = vrot.slane %v1379, 5
  %v1837 = vrot.slane %v1795, 5
  %v1838 = vsel %vm1823, %v1836, %v1837
  %v1839 = vrot.slane %v1380, 5
  %v1840 = vrot.slane %v1796, 5
  %v1841 = vsel %vm1823, %v1839, %v1840
  %v1842 = vrot.slane %v1381, 5
  %v1843 = vrot.slane %v1797, 5
  %v1844 = vsel %vm1823, %v1842, %v1843
  %v1845 = vrot.slane %v1382, 5
  %v1846 = vrot.slane %v1798, 5
  %v1847 = vsel %vm1823, %v1845, %v1846
  %v1848 = vrot.slane %v1383, 5
  %v1849 = vrot.slane %v1799, 5
  %v1850 = vsel %vm1823, %v1848, %v1849
  %v1851 = vrot.slane %v1384, 5
  %v1852 = vrot.slane %v1800, 5
  %v1853 = vsel %vm1823, %v1851, %v1852
  %v1854 = vrot.slane %v1385, 5
  %v1855 = vrot.slane %v1801, 5
  %v1856 = vsel %vm1823, %v1854, %v1855
  %v1857 = vrot.slane %v1386, 5
  %v1858 = vrot.slane %v1802, 5
  %v1859 = vsel %vm1823, %v1857, %v1858
  %v1860 = vrot.slane %v1387, 5
  %v1861 = vrot.slane %v1803, 5
  %v1862 = vsel %vm1823, %v1860, %v1861
  %v1863 = vrot.slane %v1388, 5
  %v1864 = vrot.slane %v1804, 5
  %v1865 = vsel %vm1823, %v1863, %v1864
  %v1866 = vrot.slane %v1389, 5
  %v1867 = vrot.slane %v1805, 5
  %v1868 = vsel %vm1823, %v1866, %v1867
  %v1869 = vrot.slane %v1390, 5
  %v1870 = vrot.slane %v1806, 5
  %v1871 = vsel %vm1823, %v1869, %v1870
  %v1872 = vrot.slane %v1391, 5
  %v1873 = vrot.slane %v1807, 5
  %v1874 = vsel %vm1823, %v1872, %v1873
  %v1875 = vrot.slane %v1392, 5
  %v1876 = vrot.slane %v1808, 5
  %v1877 = vsel %vm1823, %v1875, %v1876
  %v1878 = vrot.slane %v1393, 5
  %v1879 = vrot.slane %v1809, 5
  %v1880 = vsel %vm1823, %v1878, %v1879
  %v1881 = vrot.slane %v1394, 5
  %v1882 = vrot.slane %v1810, 5
  %v1883 = vsel %vm1823, %v1881, %v1882
  %v1884 = vrot.slane %v1395, 5
  %v1885 = vrot.slane %v1811, 5
  %v1886 = vsel %vm1823, %v1884, %v1885
  %v1887 = vrot.slane %v1396, 5
  %v1888 = vrot.slane %v1812, 5
  %v1889 = vsel %vm1823, %v1887, %v1888
  %v1890 = vrot.slane %v1397, 5
  %v1891 = vrot.slane %v1813, 5
  %v1892 = vsel %vm1823, %v1890, %v1891
  %v1893 = vrot.slane %v1398, 5
  %v1894 = vrot.slane %v1814, 5
  %v1895 = vsel %vm1823, %v1893, %v1894
  %v1896 = vrot.slane %v1399, 5
  %v1897 = vrot.slane %v1815, 5
  %v1898 = vsel %vm1823, %v1896, %v1897
  %v1899 = vrot.slane %v1400, 5
  %v1900 = vrot.slane %v1816, 5
  %v1901 = vsel %vm1823, %v1899, %v1900
  %v1902 = vrot.slane %v1401, 5
  %v1903 = vrot.slane %v1817, 5
  %v1904 = vsel %vm1823, %v1902, %v1903
  %v1905 = vrot.slane %v1402, 5
  %v1906 = vrot.slane %v1818, 5
  %v1907 = vsel %vm1823, %v1905, %v1906
  %v1908 = vrot.slane %v1403, 5
  %v1909 = vrot.slane %v1819, 5
  %v1910 = vsel %vm1823, %v1908, %v1909
  %v1911 = vrot.slane %v1404, 5
  %v1912 = vrot.slane %v1820, 5
  %v1913 = vsel %vm1823, %v1911, %v1912
  %v1914 = vrot.slane %v1405, 5
  %v1915 = vrot.slane %v1821, 5
  %v1916 = vsel %vm1823, %v1914, %v1915
  %v1917 = vrot.slane %v1406, 5
  %v1918 = vrot.slane %v1822, 5
  %v1919 = vsel %vm1823, %v1917, %v1918
  %1920 = vrot.lane.b32.xlu0 %v1824, 16
  %v1921 = vpop.permute.xlu0 %1920
  %1922 = vrot.lane.b32.xlu0 %v1826, 16
  %v1923 = vpop.permute.xlu0 %1922
  %1924 = vrot.lane.b32.xlu0 %v1827, 16
  %v1925 = vpop.permute.xlu0 %1924
  %1926 = vrot.lane.b32.xlu0 %v1829, 16
  %v1927 = vpop.permute.xlu0 %1926
  %1928 = vrot.lane.b32.xlu0 %v1830, 16
  %v1929 = vpop.permute.xlu0 %1928
  %1930 = vrot.lane.b32.xlu0 %v1832, 16
  %v1931 = vpop.permute.xlu0 %1930
  %1932 = vrot.lane.b32.xlu0 %v1833, 16
  %v1933 = vpop.permute.xlu0 %1932
  %1934 = vrot.lane.b32.xlu0 %v1835, 16
  %v1935 = vpop.permute.xlu0 %1934
  %1936 = vrot.lane.b32.xlu0 %v1836, 16
  %v1937 = vpop.permute.xlu0 %1936
  %1938 = vrot.lane.b32.xlu0 %v1838, 16
  %v1939 = vpop.permute.xlu0 %1938
  %1940 = vrot.lane.b32.xlu0 %v1839, 16
  %v1941 = vpop.permute.xlu0 %1940
  %1942 = vrot.lane.b32.xlu0 %v1841, 16
  %v1943 = vpop.permute.xlu0 %1942
  %1944 = vrot.lane.b32.xlu0 %v1842, 16
  %v1945 = vpop.permute.xlu0 %1944
  %1946 = vrot.lane.b32.xlu0 %v1844, 16
  %v1947 = vpop.permute.xlu0 %1946
  %1948 = vrot.lane.b32.xlu0 %v1845, 16
  %v1949 = vpop.permute.xlu0 %1948
  %1950 = vrot.lane.b32.xlu0 %v1847, 16
  %v1951 = vpop.permute.xlu0 %1950
  %1952 = vrot.lane.b32.xlu0 %v1848, 16
  %v1953 = vpop.permute.xlu0 %1952
  %1954 = vrot.lane.b32.xlu0 %v1850, 16
  %v1955 = vpop.permute.xlu0 %1954
  %1956 = vrot.lane.b32.xlu0 %v1851, 16
  %v1957 = vpop.permute.xlu0 %1956
  %1958 = vrot.lane.b32.xlu0 %v1853, 16
  %v1959 = vpop.permute.xlu0 %1958
  %1960 = vrot.lane.b32.xlu0 %v1854, 16
  %v1961 = vpop.permute.xlu0 %1960
  %1962 = vrot.lane.b32.xlu0 %v1856, 16
  %v1963 = vpop.permute.xlu0 %1962
  %1964 = vrot.lane.b32.xlu0 %v1857, 16
  %v1965 = vpop.permute.xlu0 %1964
  %1966 = vrot.lane.b32.xlu0 %v1859, 16
  %v1967 = vpop.permute.xlu0 %1966
  %1968 = vrot.lane.b32.xlu0 %v1860, 16
  %v1969 = vpop.permute.xlu0 %1968
  %1970 = vrot.lane.b32.xlu0 %v1862, 16
  %v1971 = vpop.permute.xlu0 %1970
  %1972 = vrot.lane.b32.xlu0 %v1863, 16
  %v1973 = vpop.permute.xlu0 %1972
  %1974 = vrot.lane.b32.xlu0 %v1865, 16
  %v1975 = vpop.permute.xlu0 %1974
  %1976 = vrot.lane.b32.xlu0 %v1866, 16
  %v1977 = vpop.permute.xlu0 %1976
  %1978 = vrot.lane.b32.xlu0 %v1868, 16
  %v1979 = vpop.permute.xlu0 %1978
  %1980 = vrot.lane.b32.xlu0 %v1869, 16
  %v1981 = vpop.permute.xlu0 %1980
  %1982 = vrot.lane.b32.xlu0 %v1871, 16
  %v1983 = vpop.permute.xlu0 %1982
  %1984 = vrot.lane.b32.xlu0 %v1872, 16
  %v1985 = vpop.permute.xlu0 %1984
  %1986 = vrot.lane.b32.xlu0 %v1874, 16
  %v1987 = vpop.permute.xlu0 %1986
  %1988 = vrot.lane.b32.xlu0 %v1875, 16
  %v1989 = vpop.permute.xlu0 %1988
  %1990 = vrot.lane.b32.xlu0 %v1877, 16
  %v1991 = vpop.permute.xlu0 %1990
  %1992 = vrot.lane.b32.xlu0 %v1878, 16
  %v1993 = vpop.permute.xlu0 %1992
  %1994 = vrot.lane.b32.xlu0 %v1880, 16
  %v1995 = vpop.permute.xlu0 %1994
  %1996 = vrot.lane.b32.xlu0 %v1881, 16
  %v1997 = vpop.permute.xlu0 %1996
  %1998 = vrot.lane.b32.xlu0 %v1883, 16
  %v1999 = vpop.permute.xlu0 %1998
  %2000 = vrot.lane.b32.xlu0 %v1884, 16
  %v2001 = vpop.permute.xlu0 %2000
  %2002 = vrot.lane.b32.xlu0 %v1886, 16
  %v2003 = vpop.permute.xlu0 %2002
  %2004 = vrot.lane.b32.xlu0 %v1887, 16
  %v2005 = vpop.permute.xlu0 %2004
  %2006 = vrot.lane.b32.xlu0 %v1889, 16
  %v2007 = vpop.permute.xlu0 %2006
  %2008 = vrot.lane.b32.xlu0 %v1890, 16
  %v2009 = vpop.permute.xlu0 %2008
  %2010 = vrot.lane.b32.xlu0 %v1892, 16
  %v2011 = vpop.permute.xlu0 %2010
  %2012 = vrot.lane.b32.xlu0 %v1893, 16
  %v2013 = vpop.permute.xlu0 %2012
  %2014 = vrot.lane.b32.xlu0 %v1895, 16
  %v2015 = vpop.permute.xlu0 %2014
  %2016 = vrot.lane.b32.xlu0 %v1896, 16
  %v2017 = vpop.permute.xlu0 %2016
  %2018 = vrot.lane.b32.xlu0 %v1898, 16
  %v2019 = vpop.permute.xlu0 %2018
  %2020 = vrot.lane.b32.xlu0 %v1899, 16
  %v2021 = vpop.permute.xlu0 %2020
  %2022 = vrot.lane.b32.xlu0 %v1901, 16
  %v2023 = vpop.permute.xlu0 %2022
  %2024 = vrot.lane.b32.xlu0 %v1902, 16
  %v2025 = vpop.permute.xlu0 %2024
  %2026 = vrot.lane.b32.xlu0 %v1904, 16
  %v2027 = vpop.permute.xlu0 %2026
  %2028 = vrot.lane.b32.xlu0 %v1905, 16
  %v2029 = vpop.permute.xlu0 %2028
  %2030 = vrot.lane.b32.xlu0 %v1907, 16
  %v2031 = vpop.permute.xlu0 %2030
  %2032 = vrot.lane.b32.xlu0 %v1908, 16
  %v2033 = vpop.permute.xlu0 %2032
  %2034 = vrot.lane.b32.xlu0 %v1910, 16
  %v2035 = vpop.permute.xlu0 %2034
  %2036 = vrot.lane.b32.xlu0 %v1911, 16
  %v2037 = vpop.permute.xlu0 %2036
  %2038 = vrot.lane.b32.xlu0 %v1913, 16
  %v2039 = vpop.permute.xlu0 %2038
  %2040 = vrot.lane.b32.xlu0 %v1914, 16
  %v2041 = vpop.permute.xlu0 %2040
  %2042 = vrot.lane.b32.xlu0 %v1916, 16
  %v2043 = vpop.permute.xlu0 %2042
  %2044 = vrot.lane.b32.xlu0 %v1917, 16
  %v2045 = vpop.permute.xlu0 %2044
  %2046 = vrot.lane.b32.xlu0 %v1919, 16
  %v2047 = vpop.permute.xlu0 %2046
  %v2144 = vunpack.c.l.b16 %v862
  %v2145 = vunpack.c.l.b16 %v863
  %v2146 = vunpack.c.l.b16 %v864
  %v2147 = vunpack.c.l.b16 %v865
  %v2148 = vunpack.c.l.b16 %v866
  %v2149 = vunpack.c.l.b16 %v867
  %v2150 = vunpack.c.l.b16 %v868
  %v2151 = vunpack.c.l.b16 %v869
  %v2152 = vunpack.c.l.b16 %v870
  %v2153 = vunpack.c.l.b16 %v871
  %v2154 = vunpack.c.l.b16 %v872
  %v2155 = vunpack.c.l.b16 %v873
  %v2156 = vunpack.c.l.b16 %v874
  %v2157 = vunpack.c.l.b16 %v875
  %v2158 = vunpack.c.l.b16 %v876
  %v2159 = vunpack.c.l.b16 %v877
  %v2160 = vunpack.c.l.b16 %v878
  %v2161 = vunpack.c.l.b16 %v879
  %v2162 = vunpack.c.l.b16 %v880
  %v2163 = vunpack.c.l.b16 %v881
  %v2164 = vunpack.c.l.b16 %v882
  %v2165 = vunpack.c.l.b16 %v883
  %v2166 = vunpack.c.l.b16 %v884
  %v2167 = vunpack.c.l.b16 %v885
  %v2168 = vunpack.c.l.b16 %v886
  %v2169 = vunpack.c.l.b16 %v887
  %v2170 = vunpack.c.l.b16 %v888
  %v2171 = vunpack.c.l.b16 %v889
  %v2172 = vunpack.c.l.b16 %v890
  %v2173 = vunpack.c.l.b16 %v891
  %v2174 = vunpack.c.l.b16 %v892
  %v2175 = vunpack.c.l.b16 %v893
  %v2176 = vunpack.c.l.b16 %v894
  %v2177 = vunpack.c.l.b16 %v895
  %v2178 = vunpack.c.l.b16 %v896
  %v2179 = vunpack.c.l.b16 %v897
  %v2180 = vunpack.c.l.b16 %v898
  %v2181 = vunpack.c.l.b16 %v899
  %v2182 = vunpack.c.l.b16 %v900
  %v2183 = vunpack.c.l.b16 %v901
  %v2184 = vunpack.c.l.b16 %v902
  %v2185 = vunpack.c.l.b16 %v903
  %v2186 = vunpack.c.l.b16 %v904
  %v2187 = vunpack.c.l.b16 %v905
  %v2188 = vunpack.c.l.b16 %v906
  %v2189 = vunpack.c.l.b16 %v907
  %v2190 = vunpack.c.l.b16 %v908
  %v2191 = vunpack.c.l.b16 %v909
  %v2192 = vunpack.c.l.b16 %v910
  %v2193 = vunpack.c.l.b16 %v911
  %v2194 = vunpack.c.l.b16 %v912
  %v2195 = vunpack.c.l.b16 %v913
  %v2196 = vunpack.c.l.b16 %v914
  %v2197 = vunpack.c.l.b16 %v915
  %v2198 = vunpack.c.l.b16 %v916
  %v2199 = vunpack.c.l.b16 %v917
  %v2200 = vunpack.c.l.b16 %v918
  %v2201 = vunpack.c.l.b16 %v919
  %v2202 = vunpack.c.l.b16 %v920
  %v2203 = vunpack.c.l.b16 %v921
  %v2204 = vunpack.c.l.b16 %v922
  %v2205 = vunpack.c.l.b16 %v923
  %v2206 = vunpack.c.l.b16 %v924
  %v2207 = vunpack.c.l.b16 %v925
  %v2208 = vunpack.c.l.b16 %v926
  %v2209 = vunpack.c.l.b16 %v927
  %v2210 = vunpack.c.l.b16 %v928
  %v2211 = vunpack.c.l.b16 %v929
  %v2212 = vunpack.c.l.b16 %v930
  %v2213 = vunpack.c.l.b16 %v931
  %v2214 = vunpack.c.l.b16 %v932
  %v2215 = vunpack.c.l.b16 %v933
  %v2216 = vunpack.c.l.b16 %v934
  %v2217 = vunpack.c.l.b16 %v935
  %v2218 = vunpack.c.l.b16 %v936
  %v2219 = vunpack.c.l.b16 %v937
  %v2220 = vunpack.c.l.b16 %v938
  %v2221 = vunpack.c.l.b16 %v939
  %v2222 = vunpack.c.l.b16 %v940
  %v2223 = vunpack.c.l.b16 %v941
  %v2224 = vunpack.c.l.b16 %v942
  %v2225 = vunpack.c.l.b16 %v943
  %v2226 = vunpack.c.l.b16 %v944
  %v2227 = vunpack.c.l.b16 %v945
  %v2228 = vunpack.c.l.b16 %v946
  %v2229 = vunpack.c.l.b16 %v947
  %v2230 = vunpack.c.l.b16 %v948
  %v2231 = vunpack.c.l.b16 %v949
  %v2232 = vunpack.c.l.b16 %v950
  %v2233 = vunpack.c.l.b16 %v951
  %v2234 = vunpack.c.l.b16 %v952
  %v2235 = vunpack.c.l.b16 %v953
  %v2236 = vunpack.c.l.b16 %v954
  %v2237 = vunpack.c.l.b16 %v955
  %v2238 = vunpack.c.l.b16 %v956
  %v2239 = vunpack.c.l.b16 %v957
  %v2240 = vpack.c.b16 %v2145, %v2144
  %v2241 = vpack.c.b16 %v2146, %v2146
  %v2242 = vpack.c.b16 %v2148, %v2147
  %v2243 = vpack.c.b16 %v2149, %v2149
  %v2244 = vpack.c.b16 %v2151, %v2150
  %v2245 = vpack.c.b16 %v2152, %v2152
  %v2246 = vpack.c.b16 %v2154, %v2153
  %v2247 = vpack.c.b16 %v2155, %v2155
  %v2248 = vpack.c.b16 %v2157, %v2156
  %v2249 = vpack.c.b16 %v2158, %v2158
  %v2250 = vpack.c.b16 %v2160, %v2159
  %v2251 = vpack.c.b16 %v2161, %v2161
  %v2252 = vpack.c.b16 %v2163, %v2162
  %v2253 = vpack.c.b16 %v2164, %v2164
  %v2254 = vpack.c.b16 %v2166, %v2165
  %v2255 = vpack.c.b16 %v2167, %v2167
  %v2256 = vpack.c.b16 %v2169, %v2168
  %v2257 = vpack.c.b16 %v2170, %v2170
  %v2258 = vpack.c.b16 %v2172, %v2171
  %v2259 = vpack.c.b16 %v2173, %v2173
  %v2260 = vpack.c.b16 %v2175, %v2174
  %v2261 = vpack.c.b16 %v2176, %v2176
  %v2262 = vpack.c.b16 %v2178, %v2177
  %v2263 = vpack.c.b16 %v2179, %v2179
  %v2264 = vpack.c.b16 %v2181, %v2180
  %v2265 = vpack.c.b16 %v2182, %v2182
  %v2266 = vpack.c.b16 %v2184, %v2183
  %v2267 = vpack.c.b16 %v2185, %v2185
  %v2268 = vpack.c.b16 %v2187, %v2186
  %v2269 = vpack.c.b16 %v2188, %v2188
  %v2270 = vpack.c.b16 %v2190, %v2189
  %v2271 = vpack.c.b16 %v2191, %v2191
  %v2272 = vpack.c.b16 %v2193, %v2192
  %v2273 = vpack.c.b16 %v2194, %v2194
  %v2274 = vpack.c.b16 %v2196, %v2195
  %v2275 = vpack.c.b16 %v2197, %v2197
  %v2276 = vpack.c.b16 %v2199, %v2198
  %v2277 = vpack.c.b16 %v2200, %v2200
  %v2278 = vpack.c.b16 %v2202, %v2201
  %v2279 = vpack.c.b16 %v2203, %v2203
  %v2280 = vpack.c.b16 %v2205, %v2204
  %v2281 = vpack.c.b16 %v2206, %v2206
  %v2282 = vpack.c.b16 %v2208, %v2207
  %v2283 = vpack.c.b16 %v2209, %v2209
  %v2284 = vpack.c.b16 %v2211, %v2210
  %v2285 = vpack.c.b16 %v2212, %v2212
  %v2286 = vpack.c.b16 %v2214, %v2213
  %v2287 = vpack.c.b16 %v2215, %v2215
  %v2288 = vpack.c.b16 %v2217, %v2216
  %v2289 = vpack.c.b16 %v2218, %v2218
  %v2290 = vpack.c.b16 %v2220, %v2219
  %v2291 = vpack.c.b16 %v2221, %v2221
  %v2292 = vpack.c.b16 %v2223, %v2222
  %v2293 = vpack.c.b16 %v2224, %v2224
  %v2294 = vpack.c.b16 %v2226, %v2225
  %v2295 = vpack.c.b16 %v2227, %v2227
  %v2296 = vpack.c.b16 %v2229, %v2228
  %v2297 = vpack.c.b16 %v2230, %v2230
  %v2298 = vpack.c.b16 %v2232, %v2231
  %v2299 = vpack.c.b16 %v2233, %v2233
  %v2300 = vpack.c.b16 %v2235, %v2234
  %v2301 = vpack.c.b16 %v2236, %v2236
  %v2302 = vpack.c.b16 %v2238, %v2237
  %v2303 = vpack.c.b16 %v2239, %v2239
  %2304 = vrot.lane.b32.xlu0 %v2240, 24
  %v2305 = vpop.permute.xlu0 %2304
  %2306 = vrot.lane.b32.xlu0 %v2241, 24
  %v2307 = vpop.permute.xlu0 %2306
  %2308 = vrot.lane.b32.xlu0 %v2242, 24
  %v2309 = vpop.permute.xlu0 %2308
  %2310 = vrot.lane.b32.xlu0 %v2243, 24
  %v2311 = vpop.permute.xlu0 %2310
  %2312 = vrot.lane.b32.xlu0 %v2244, 24
  %v2313 = vpop.permute.xlu0 %2312
  %2314 = vrot.lane.b32.xlu0 %v2245, 24
  %v2315 = vpop.permute.xlu0 %2314
  %2316 = vrot.lane.b32.xlu0 %v2246, 24
  %v2317 = vpop.permute.xlu0 %2316
  %2318 = vrot.lane.b32.xlu0 %v2247, 24
  %v2319 = vpop.permute.xlu0 %2318
  %2320 = vrot.lane.b32.xlu0 %v2248, 24
  %v2321 = vpop.permute.xlu0 %2320
  %2322 = vrot.lane.b32.xlu0 %v2249, 24
  %v2323 = vpop.permute.xlu0 %2322
  %2324 = vrot.lane.b32.xlu0 %v2250, 24
  %v2325 = vpop.permute.xlu0 %2324
  %2326 = vrot.lane.b32.xlu0 %v2251, 24
  %v2327 = vpop.permute.xlu0 %2326
  %2328 = vrot.lane.b32.xlu0 %v2252, 24
  %v2329 = vpop.permute.xlu0 %2328
  %2330 = vrot.lane.b32.xlu0 %v2253, 24
  %v2331 = vpop.permute.xlu0 %2330
  %2332 = vrot.lane.b32.xlu0 %v2254, 24
  %v2333 = vpop.permute.xlu0 %2332
  %2334 = vrot.lane.b32.xlu0 %v2255, 24
  %v2335 = vpop.permute.xlu0 %2334
  %2336 = vrot.lane.b32.xlu0 %v2256, 24
  %v2337 = vpop.permute.xlu0 %2336
  %2338 = vrot.lane.b32.xlu0 %v2257, 24
  %v2339 = vpop.permute.xlu0 %2338
  %2340 = vrot.lane.b32.xlu0 %v2258, 24
  %v2341 = vpop.permute.xlu0 %2340
  %2342 = vrot.lane.b32.xlu0 %v2259, 24
  %v2343 = vpop.permute.xlu0 %2342
  %2344 = vrot.lane.b32.xlu0 %v2260, 24
  %v2345 = vpop.permute.xlu0 %2344
  %2346 = vrot.lane.b32.xlu0 %v2261, 24
  %v2347 = vpop.permute.xlu0 %2346
  %2348 = vrot.lane.b32.xlu0 %v2262, 24
  %v2349 = vpop.permute.xlu0 %2348
  %2350 = vrot.lane.b32.xlu0 %v2263, 24
  %v2351 = vpop.permute.xlu0 %2350
  %2352 = vrot.lane.b32.xlu0 %v2264, 24
  %v2353 = vpop.permute.xlu0 %2352
  %2354 = vrot.lane.b32.xlu0 %v2265, 24
  %v2355 = vpop.permute.xlu0 %2354
  %2356 = vrot.lane.b32.xlu0 %v2266, 24
  %v2357 = vpop.permute.xlu0 %2356
  %2358 = vrot.lane.b32.xlu0 %v2267, 24
  %v2359 = vpop.permute.xlu0 %2358
  %2360 = vrot.lane.b32.xlu0 %v2268, 24
  %v2361 = vpop.permute.xlu0 %2360
  %2362 = vrot.lane.b32.xlu0 %v2269, 24
  %v2363 = vpop.permute.xlu0 %2362
  %2364 = vrot.lane.b32.xlu0 %v2270, 24
  %v2365 = vpop.permute.xlu0 %2364
  %2366 = vrot.lane.b32.xlu0 %v2271, 24
  %v2367 = vpop.permute.xlu0 %2366
  %2368 = vrot.lane.b32.xlu0 %v2272, 24
  %v2369 = vpop.permute.xlu0 %2368
  %2370 = vrot.lane.b32.xlu0 %v2273, 24
  %v2371 = vpop.permute.xlu0 %2370
  %2372 = vrot.lane.b32.xlu0 %v2274, 24
  %v2373 = vpop.permute.xlu0 %2372
  %2374 = vrot.lane.b32.xlu0 %v2275, 24
  %v2375 = vpop.permute.xlu0 %2374
  %2376 = vrot.lane.b32.xlu0 %v2276, 24
  %v2377 = vpop.permute.xlu0 %2376
  %2378 = vrot.lane.b32.xlu0 %v2277, 24
  %v2379 = vpop.permute.xlu0 %2378
  %2380 = vrot.lane.b32.xlu0 %v2278, 24
  %v2381 = vpop.permute.xlu0 %2380
  %2382 = vrot.lane.b32.xlu0 %v2279, 24
  %v2383 = vpop.permute.xlu0 %2382
  %2384 = vrot.lane.b32.xlu0 %v2280, 24
  %v2385 = vpop.permute.xlu0 %2384
  %2386 = vrot.lane.b32.xlu0 %v2281, 24
  %v2387 = vpop.permute.xlu0 %2386
  %2388 = vrot.lane.b32.xlu0 %v2282, 24
  %v2389 = vpop.permute.xlu0 %2388
  %2390 = vrot.lane.b32.xlu0 %v2283, 24
  %v2391 = vpop.permute.xlu0 %2390
  %2392 = vrot.lane.b32.xlu0 %v2284, 24
  %v2393 = vpop.permute.xlu0 %2392
  %2394 = vrot.lane.b32.xlu0 %v2285, 24
  %v2395 = vpop.permute.xlu0 %2394
  %2396 = vrot.lane.b32.xlu0 %v2286, 24
  %v2397 = vpop.permute.xlu0 %2396
  %2398 = vrot.lane.b32.xlu0 %v2287, 24
  %v2399 = vpop.permute.xlu0 %2398
  %2400 = vrot.lane.b32.xlu0 %v2288, 24
  %v2401 = vpop.permute.xlu0 %2400
  %2402 = vrot.lane.b32.xlu0 %v2289, 24
  %v2403 = vpop.permute.xlu0 %2402
  %2404 = vrot.lane.b32.xlu0 %v2290, 24
  %v2405 = vpop.permute.xlu0 %2404
  %2406 = vrot.lane.b32.xlu0 %v2291, 24
  %v2407 = vpop.permute.xlu0 %2406
  %2408 = vrot.lane.b32.xlu0 %v2292, 24
  %v2409 = vpop.permute.xlu0 %2408
  %2410 = vrot.lane.b32.xlu0 %v2293, 24
  %v2411 = vpop.permute.xlu0 %2410
  %2412 = vrot.lane.b32.xlu0 %v2294, 24
  %v2413 = vpop.permute.xlu0 %2412
  %2414 = vrot.lane.b32.xlu0 %v2295, 24
  %v2415 = vpop.permute.xlu0 %2414
  %2416 = vrot.lane.b32.xlu0 %v2296, 24
  %v2417 = vpop.permute.xlu0 %2416
  %2418 = vrot.lane.b32.xlu0 %v2297, 24
  %v2419 = vpop.permute.xlu0 %2418
  %2420 = vrot.lane.b32.xlu0 %v2298, 24
  %v2421 = vpop.permute.xlu0 %2420
  %2422 = vrot.lane.b32.xlu0 %v2299, 24
  %v2423 = vpop.permute.xlu0 %2422
  %2424 = vrot.lane.b32.xlu0 %v2300, 24
  %v2425 = vpop.permute.xlu0 %2424
  %2426 = vrot.lane.b32.xlu0 %v2301, 24
  %v2427 = vpop.permute.xlu0 %2426
  %2428 = vrot.lane.b32.xlu0 %v2302, 24
  %v2429 = vpop.permute.xlu0 %2428
  %2430 = vrot.lane.b32.xlu0 %v2303, 24
  %v2431 = vpop.permute.xlu0 %2430
  %v2432 = vpack.c.b16 %v2146, %v2145
  %v2433 = vpack.c.b16 %v2149, %v2148
  %v2434 = vpack.c.b16 %v2152, %v2151
  %v2435 = vpack.c.b16 %v2155, %v2154
  %v2436 = vpack.c.b16 %v2158, %v2157
  %v2437 = vpack.c.b16 %v2161, %v2160
  %v2438 = vpack.c.b16 %v2164, %v2163
  %v2439 = vpack.c.b16 %v2167, %v2166
  %v2440 = vpack.c.b16 %v2170, %v2169
  %v2441 = vpack.c.b16 %v2173, %v2172
  %v2442 = vpack.c.b16 %v2176, %v2175
  %v2443 = vpack.c.b16 %v2179, %v2178
  %v2444 = vpack.c.b16 %v2182, %v2181
  %v2445 = vpack.c.b16 %v2185, %v2184
  %v2446 = vpack.c.b16 %v2188, %v2187
  %v2447 = vpack.c.b16 %v2191, %v2190
  %v2448 = vpack.c.b16 %v2194, %v2193
  %v2449 = vpack.c.b16 %v2197, %v2196
  %v2450 = vpack.c.b16 %v2200, %v2199
  %v2451 = vpack.c.b16 %v2203, %v2202
  %v2452 = vpack.c.b16 %v2206, %v2205
  %v2453 = vpack.c.b16 %v2209, %v2208
  %v2454 = vpack.c.b16 %v2212, %v2211
  %v2455 = vpack.c.b16 %v2215, %v2214
  %v2456 = vpack.c.b16 %v2218, %v2217
  %v2457 = vpack.c.b16 %v2221, %v2220
  %v2458 = vpack.c.b16 %v2224, %v2223
  %v2459 = vpack.c.b16 %v2227, %v2226
  %v2460 = vpack.c.b16 %v2230, %v2229
  %v2461 = vpack.c.b16 %v2233, %v2232
  %v2462 = vpack.c.b16 %v2236, %v2235
  %v2463 = vpack.c.b16 %v2239, %v2238
  %v2465 = vshrl.u32 %v2432, 16
  %v2467 = vrot.slane %v2465, 4
  %v2468 = vshll.u32 %v2432, 16
  %v2470 = vrot.slane %v2468, 5
  %v2471 = vor.u32 %v2467, %v2470
  %v2473 = vshrl.u32 %v2433, 16
  %v2475 = vrot.slane %v2473, 4
  %v2476 = vshll.u32 %v2433, 16
  %v2478 = vrot.slane %v2476, 5
  %v2479 = vor.u32 %v2475, %v2478
  %v2481 = vshrl.u32 %v2434, 16
  %v2483 = vrot.slane %v2481, 4
  %v2484 = vshll.u32 %v2434, 16
  %v2486 = vrot.slane %v2484, 5
  %v2487 = vor.u32 %v2483, %v2486
  %v2489 = vshrl.u32 %v2435, 16
  %v2491 = vrot.slane %v2489, 4
  %v2492 = vshll.u32 %v2435, 16
  %v2494 = vrot.slane %v2492, 5
  %v2495 = vor.u32 %v2491, %v2494
  %v2497 = vshrl.u32 %v2436, 16
  %v2499 = vrot.slane %v2497, 4
  %v2500 = vshll.u32 %v2436, 16
  %v2502 = vrot.slane %v2500, 5
  %v2503 = vor.u32 %v2499, %v2502
  %v2505 = vshrl.u32 %v2437, 16
  %v2507 = vrot.slane %v2505, 4
  %v2508 = vshll.u32 %v2437, 16
  %v2510 = vrot.slane %v2508, 5
  %v2511 = vor.u32 %v2507, %v2510
  %v2513 = vshrl.u32 %v2438, 16
  %v2515 = vrot.slane %v2513, 4
  %v2516 = vshll.u32 %v2438, 16
  %v2518 = vrot.slane %v2516, 5
  %v2519 = vor.u32 %v2515, %v2518
  %v2521 = vshrl.u32 %v2439, 16
  %v2523 = vrot.slane %v2521, 4
  %v2524 = vshll.u32 %v2439, 16
  %v2526 = vrot.slane %v2524, 5
  %v2527 = vor.u32 %v2523, %v2526
  %v2529 = vshrl.u32 %v2440, 16
  %v2531 = vrot.slane %v2529, 4
  %v2532 = vshll.u32 %v2440, 16
  %v2534 = vrot.slane %v2532, 5
  %v2535 = vor.u32 %v2531, %v2534
  %v2537 = vshrl.u32 %v2441, 16
  %v2539 = vrot.slane %v2537, 4
  %v2540 = vshll.u32 %v2441, 16
  %v2542 = vrot.slane %v2540, 5
  %v2543 = vor.u32 %v2539, %v2542
  %v2545 = vshrl.u32 %v2442, 16
  %v2547 = vrot.slane %v2545, 4
  %v2548 = vshll.u32 %v2442, 16
  %v2550 = vrot.slane %v2548, 5
  %v2551 = vor.u32 %v2547, %v2550
  %v2553 = vshrl.u32 %v2443, 16
  %v2555 = vrot.slane %v2553, 4
  %v2556 = vshll.u32 %v2443, 16
  %v2558 = vrot.slane %v2556, 5
  %v2559 = vor.u32 %v2555, %v2558
  %v2561 = vshrl.u32 %v2444, 16
  %v2563 = vrot.slane %v2561, 4
  %v2564 = vshll.u32 %v2444, 16
  %v2566 = vrot.slane %v2564, 5
  %v2567 = vor.u32 %v2563, %v2566
  %v2569 = vshrl.u32 %v2445, 16
  %v2571 = vrot.slane %v2569, 4
  %v2572 = vshll.u32 %v2445, 16
  %v2574 = vrot.slane %v2572, 5
  %v2575 = vor.u32 %v2571, %v2574
  %v2577 = vshrl.u32 %v2446, 16
  %v2579 = vrot.slane %v2577, 4
  %v2580 = vshll.u32 %v2446, 16
  %v2582 = vrot.slane %v2580, 5
  %v2583 = vor.u32 %v2579, %v2582
  %v2585 = vshrl.u32 %v2447, 16
  %v2587 = vrot.slane %v2585, 4
  %v2588 = vshll.u32 %v2447, 16
  %v2590 = vrot.slane %v2588, 5
  %v2591 = vor.u32 %v2587, %v2590
  %v2593 = vshrl.u32 %v2448, 16
  %v2595 = vrot.slane %v2593, 4
  %v2596 = vshll.u32 %v2448, 16
  %v2598 = vrot.slane %v2596, 5
  %v2599 = vor.u32 %v2595, %v2598
  %v2601 = vshrl.u32 %v2449, 16
  %v2603 = vrot.slane %v2601, 4
  %v2604 = vshll.u32 %v2449, 16
  %v2606 = vrot.slane %v2604, 5
  %v2607 = vor.u32 %v2603, %v2606
  %v2609 = vshrl.u32 %v2450, 16
  %v2611 = vrot.slane %v2609, 4
  %v2612 = vshll.u32 %v2450, 16
  %v2614 = vrot.slane %v2612, 5
  %v2615 = vor.u32 %v2611, %v2614
  %v2617 = vshrl.u32 %v2451, 16
  %v2619 = vrot.slane %v2617, 4
  %v2620 = vshll.u32 %v2451, 16
  %v2622 = vrot.slane %v2620, 5
  %v2623 = vor.u32 %v2619, %v2622
  %v2625 = vshrl.u32 %v2452, 16
  %v2627 = vrot.slane %v2625, 4
  %v2628 = vshll.u32 %v2452, 16
  %v2630 = vrot.slane %v2628, 5
  %v2631 = vor.u32 %v2627, %v2630
  %v2633 = vshrl.u32 %v2453, 16
  %v2635 = vrot.slane %v2633, 4
  %v2636 = vshll.u32 %v2453, 16
  %v2638 = vrot.slane %v2636, 5
  %v2639 = vor.u32 %v2635, %v2638
  %v2641 = vshrl.u32 %v2454, 16
  %v2643 = vrot.slane %v2641, 4
  %v2644 = vshll.u32 %v2454, 16
  %v2646 = vrot.slane %v2644, 5
  %v2647 = vor.u32 %v2643, %v2646
  %v2649 = vshrl.u32 %v2455, 16
  %v2651 = vrot.slane %v2649, 4
  %v2652 = vshll.u32 %v2455, 16
  %v2654 = vrot.slane %v2652, 5
  %v2655 = vor.u32 %v2651, %v2654
  %v2657 = vshrl.u32 %v2456, 16
  %v2659 = vrot.slane %v2657, 4
  %v2660 = vshll.u32 %v2456, 16
  %v2662 = vrot.slane %v2660, 5
  %v2663 = vor.u32 %v2659, %v2662
  %v2665 = vshrl.u32 %v2457, 16
  %v2667 = vrot.slane %v2665, 4
  %v2668 = vshll.u32 %v2457, 16
  %v2670 = vrot.slane %v2668, 5
  %v2671 = vor.u32 %v2667, %v2670
  %v2673 = vshrl.u32 %v2458, 16
  %v2675 = vrot.slane %v2673, 4
  %v2676 = vshll.u32 %v2458, 16
  %v2678 = vrot.slane %v2676, 5
  %v2679 = vor.u32 %v2675, %v2678
  %v2681 = vshrl.u32 %v2459, 16
  %v2683 = vrot.slane %v2681, 4
  %v2684 = vshll.u32 %v2459, 16
  %v2686 = vrot.slane %v2684, 5
  %v2687 = vor.u32 %v2683, %v2686
  %v2689 = vshrl.u32 %v2460, 16
  %v2691 = vrot.slane %v2689, 4
  %v2692 = vshll.u32 %v2460, 16
  %v2694 = vrot.slane %v2692, 5
  %v2695 = vor.u32 %v2691, %v2694
  %v2697 = vshrl.u32 %v2461, 16
  %v2699 = vrot.slane %v2697, 4
  %v2700 = vshll.u32 %v2461, 16
  %v2702 = vrot.slane %v2700, 5
  %v2703 = vor.u32 %v2699, %v2702
  %v2705 = vshrl.u32 %v2462, 16
  %v2707 = vrot.slane %v2705, 4
  %v2708 = vshll.u32 %v2462, 16
  %v2710 = vrot.slane %v2708, 5
  %v2711 = vor.u32 %v2707, %v2710
  %v2713 = vshrl.u32 %v2463, 16
  %v2715 = vrot.slane %v2713, 4
  %v2716 = vshll.u32 %v2463, 16
  %v2718 = vrot.slane %v2716, 5
  %v2719 = vor.u32 %v2715, %v2718
  %2720 = vrot.lane.b32.xlu0 %v2471, 32
  %v2721 = vpop.permute.xlu0 %2720
  %2722 = vrot.lane.b32.xlu0 %v2479, 32
  %v2723 = vpop.permute.xlu0 %2722
  %2724 = vrot.lane.b32.xlu0 %v2487, 32
  %v2725 = vpop.permute.xlu0 %2724
  %2726 = vrot.lane.b32.xlu0 %v2495, 32
  %v2727 = vpop.permute.xlu0 %2726
  %2728 = vrot.lane.b32.xlu0 %v2503, 32
  %v2729 = vpop.permute.xlu0 %2728
  %2730 = vrot.lane.b32.xlu0 %v2511, 32
  %v2731 = vpop.permute.xlu0 %2730
  %2732 = vrot.lane.b32.xlu0 %v2519, 32
  %v2733 = vpop.permute.xlu0 %2732
  %2734 = vrot.lane.b32.xlu0 %v2527, 32
  %v2735 = vpop.permute.xlu0 %2734
  %2736 = vrot.lane.b32.xlu0 %v2535, 32
  %v2737 = vpop.permute.xlu0 %2736
  %2738 = vrot.lane.b32.xlu0 %v2543, 32
  %v2739 = vpop.permute.xlu0 %2738
  %2740 = vrot.lane.b32.xlu0 %v2551, 32
  %v2741 = vpop.permute.xlu0 %2740
  %2742 = vrot.lane.b32.xlu0 %v2559, 32
  %v2743 = vpop.permute.xlu0 %2742
  %2744 = vrot.lane.b32.xlu0 %v2567, 32
  %v2745 = vpop.permute.xlu0 %2744
  %2746 = vrot.lane.b32.xlu0 %v2575, 32
  %v2747 = vpop.permute.xlu0 %2746
  %2748 = vrot.lane.b32.xlu0 %v2583, 32
  %v2749 = vpop.permute.xlu0 %2748
  %2750 = vrot.lane.b32.xlu0 %v2591, 32
  %v2751 = vpop.permute.xlu0 %2750
  %2752 = vrot.lane.b32.xlu0 %v2599, 32
  %v2753 = vpop.permute.xlu0 %2752
  %2754 = vrot.lane.b32.xlu0 %v2607, 32
  %v2755 = vpop.permute.xlu0 %2754
  %2756 = vrot.lane.b32.xlu0 %v2615, 32
  %v2757 = vpop.permute.xlu0 %2756
  %2758 = vrot.lane.b32.xlu0 %v2623, 32
  %v2759 = vpop.permute.xlu0 %2758
  %2760 = vrot.lane.b32.xlu0 %v2631, 32
  %v2761 = vpop.permute.xlu0 %2760
  %2762 = vrot.lane.b32.xlu0 %v2639, 32
  %v2763 = vpop.permute.xlu0 %2762
  %2764 = vrot.lane.b32.xlu0 %v2647, 32
  %v2765 = vpop.permute.xlu0 %2764
  %2766 = vrot.lane.b32.xlu0 %v2655, 32
  %v2767 = vpop.permute.xlu0 %2766
  %2768 = vrot.lane.b32.xlu0 %v2663, 32
  %v2769 = vpop.permute.xlu0 %2768
  %2770 = vrot.lane.b32.xlu0 %v2671, 32
  %v2771 = vpop.permute.xlu0 %2770
  %2772 = vrot.lane.b32.xlu0 %v2679, 32
  %v2773 = vpop.permute.xlu0 %2772
  %2774 = vrot.lane.b32.xlu0 %v2687, 32
  %v2775 = vpop.permute.xlu0 %2774
  %2776 = vrot.lane.b32.xlu0 %v2695, 32
  %v2777 = vpop.permute.xlu0 %2776
  %2778 = vrot.lane.b32.xlu0 %v2703, 32
  %v2779 = vpop.permute.xlu0 %2778
  %2780 = vrot.lane.b32.xlu0 %v2711, 32
  %v2781 = vpop.permute.xlu0 %2780
  %2782 = vrot.lane.b32.xlu0 %v2719, 32
  %v2783 = vpop.permute.xlu0 %2782
  %v2816 = vunpack.c.l.b16 %v958
  %v2817 = vunpack.c.l.b16 %v959
  %v2818 = vunpack.c.l.b16 %v960
  %v2819 = vunpack.c.l.b16 %v961
  %v2820 = vunpack.c.l.b16 %v962
  %v2821 = vunpack.c.l.b16 %v963
  %v2822 = vunpack.c.l.b16 %v964
  %v2823 = vunpack.c.l.b16 %v965
  %v2824 = vunpack.c.l.b16 %v966
  %v2825 = vunpack.c.l.b16 %v967
  %v2826 = vunpack.c.l.b16 %v968
  %v2827 = vunpack.c.l.b16 %v969
  %v2828 = vunpack.c.l.b16 %v970
  %v2829 = vunpack.c.l.b16 %v971
  %v2830 = vunpack.c.l.b16 %v972
  %v2831 = vunpack.c.l.b16 %v973
  %v2832 = vunpack.c.l.b16 %v974
  %v2833 = vunpack.c.l.b16 %v975
  %v2834 = vunpack.c.l.b16 %v976
  %v2835 = vunpack.c.l.b16 %v977
  %v2836 = vunpack.c.l.b16 %v978
  %v2837 = vunpack.c.l.b16 %v979
  %v2838 = vunpack.c.l.b16 %v980
  %v2839 = vunpack.c.l.b16 %v981
  %v2840 = vunpack.c.l.b16 %v982
  %v2841 = vunpack.c.l.b16 %v983
  %v2842 = vunpack.c.l.b16 %v984
  %v2843 = vunpack.c.l.b16 %v985
  %v2844 = vunpack.c.l.b16 %v986
  %v2845 = vunpack.c.l.b16 %v987
  %v2846 = vunpack.c.l.b16 %v988
  %v2847 = vunpack.c.l.b16 %v989
  %v2848 = vpack.c.b16 %v2816, %v2816
  %v2849 = vpack.c.b16 %v2817, %v2817
  %v2850 = vpack.c.b16 %v2818, %v2818
  %v2851 = vpack.c.b16 %v2819, %v2819
  %v2852 = vpack.c.b16 %v2820, %v2820
  %v2853 = vpack.c.b16 %v2821, %v2821
  %v2854 = vpack.c.b16 %v2822, %v2822
  %v2855 = vpack.c.b16 %v2823, %v2823
  %v2856 = vpack.c.b16 %v2824, %v2824
  %v2857 = vpack.c.b16 %v2825, %v2825
  %v2858 = vpack.c.b16 %v2826, %v2826
  %v2859 = vpack.c.b16 %v2827, %v2827
  %v2860 = vpack.c.b16 %v2828, %v2828
  %v2861 = vpack.c.b16 %v2829, %v2829
  %v2862 = vpack.c.b16 %v2830, %v2830
  %v2863 = vpack.c.b16 %v2831, %v2831
  %v2864 = vpack.c.b16 %v2832, %v2832
  %v2865 = vpack.c.b16 %v2833, %v2833
  %v2866 = vpack.c.b16 %v2834, %v2834
  %v2867 = vpack.c.b16 %v2835, %v2835
  %v2868 = vpack.c.b16 %v2836, %v2836
  %v2869 = vpack.c.b16 %v2837, %v2837
  %v2870 = vpack.c.b16 %v2838, %v2838
  %v2871 = vpack.c.b16 %v2839, %v2839
  %v2872 = vpack.c.b16 %v2840, %v2840
  %v2873 = vpack.c.b16 %v2841, %v2841
  %v2874 = vpack.c.b16 %v2842, %v2842
  %v2875 = vpack.c.b16 %v2843, %v2843
  %v2876 = vpack.c.b16 %v2844, %v2844
  %v2877 = vpack.c.b16 %v2845, %v2845
  %v2878 = vpack.c.b16 %v2846, %v2846
  %v2879 = vpack.c.b16 %v2847, %v2847
  %v2880 = vrot.slane %v2432, 5
  %v2881 = vrot.slane %v2848, 5
  %v2882 = vsel %vm1823, %v2880, %v2881
  %v2883 = vrot.slane %v2433, 5
  %v2884 = vrot.slane %v2849, 5
  %v2885 = vsel %vm1823, %v2883, %v2884
  %v2886 = vrot.slane %v2434, 5
  %v2887 = vrot.slane %v2850, 5
  %v2888 = vsel %vm1823, %v2886, %v2887
  %v2889 = vrot.slane %v2435, 5
  %v2890 = vrot.slane %v2851, 5
  %v2891 = vsel %vm1823, %v2889, %v2890
  %v2892 = vrot.slane %v2436, 5
  %v2893 = vrot.slane %v2852, 5
  %v2894 = vsel %vm1823, %v2892, %v2893
  %v2895 = vrot.slane %v2437, 5
  %v2896 = vrot.slane %v2853, 5
  %v2897 = vsel %vm1823, %v2895, %v2896
  %v2898 = vrot.slane %v2438, 5
  %v2899 = vrot.slane %v2854, 5
  %v2900 = vsel %vm1823, %v2898, %v2899
  %v2901 = vrot.slane %v2439, 5
  %v2902 = vrot.slane %v2855, 5
  %v2903 = vsel %vm1823, %v2901, %v2902
  %v2904 = vrot.slane %v2440, 5
  %v2905 = vrot.slane %v2856, 5
  %v2906 = vsel %vm1823, %v2904, %v2905
  %v2907 = vrot.slane %v2441, 5
  %v2908 = vrot.slane %v2857, 5
  %v2909 = vsel %vm1823, %v2907, %v2908
  %v2910 = vrot.slane %v2442, 5
  %v2911 = vrot.slane %v2858, 5
  %v2912 = vsel %vm1823, %v2910, %v2911
  %v2913 = vrot.slane %v2443, 5
  %v2914 = vrot.slane %v2859, 5
  %v2915 = vsel %vm1823, %v2913, %v2914
  %v2916 = vrot.slane %v2444, 5
  %v2917 = vrot.slane %v2860, 5
  %v2918 = vsel %vm1823, %v2916, %v2917
  %v2919 = vrot.slane %v2445, 5
  %v2920 = vrot.slane %v2861, 5
  %v2921 = vsel %vm1823, %v2919, %v2920
  %v2922 = vrot.slane %v2446, 5
  %v2923 = vrot.slane %v2862, 5
  %v2924 = vsel %vm1823, %v2922, %v2923
  %v2925 = vrot.slane %v2447, 5
  %v2926 = vrot.slane %v2863, 5
  %v2927 = vsel %vm1823, %v2925, %v2926
  %v2928 = vrot.slane %v2448, 5
  %v2929 = vrot.slane %v2864, 5
  %v2930 = vsel %vm1823, %v2928, %v2929
  %v2931 = vrot.slane %v2449, 5
  %v2932 = vrot.slane %v2865, 5
  %v2933 = vsel %vm1823, %v2931, %v2932
  %v2934 = vrot.slane %v2450, 5
  %v2935 = vrot.slane %v2866, 5
  %v2936 = vsel %vm1823, %v2934, %v2935
  %v2937 = vrot.slane %v2451, 5
  %v2938 = vrot.slane %v2867, 5
  %v2939 = vsel %vm1823, %v2937, %v2938
  %v2940 = vrot.slane %v2452, 5
  %v2941 = vrot.slane %v2868, 5
  %v2942 = vsel %vm1823, %v2940, %v2941
  %v2943 = vrot.slane %v2453, 5
  %v2944 = vrot.slane %v2869, 5
  %v2945 = vsel %vm1823, %v2943, %v2944
  %v2946 = vrot.slane %v2454, 5
  %v2947 = vrot.slane %v2870, 5
  %v2948 = vsel %vm1823, %v2946, %v2947
  %v2949 = vrot.slane %v2455, 5
  %v2950 = vrot.slane %v2871, 5
  %v2951 = vsel %vm1823, %v2949, %v2950
  %v2952 = vrot.slane %v2456, 5
  %v2953 = vrot.slane %v2872, 5
  %v2954 = vsel %vm1823, %v2952, %v2953
  %v2955 = vrot.slane %v2457, 5
  %v2956 = vrot.slane %v2873, 5
  %v2957 = vsel %vm1823, %v2955, %v2956
  %v2958 = vrot.slane %v2458, 5
  %v2959 = vrot.slane %v2874, 5
  %v2960 = vsel %vm1823, %v2958, %v2959
  %v2961 = vrot.slane %v2459, 5
  %v2962 = vrot.slane %v2875, 5
  %v2963 = vsel %vm1823, %v2961, %v2962
  %v2964 = vrot.slane %v2460, 5
  %v2965 = vrot.slane %v2876, 5
  %v2966 = vsel %vm1823, %v2964, %v2965
  %v2967 = vrot.slane %v2461, 5
  %v2968 = vrot.slane %v2877, 5
  %v2969 = vsel %vm1823, %v2967, %v2968
  %v2970 = vrot.slane %v2462, 5
  %v2971 = vrot.slane %v2878, 5
  %v2972 = vsel %vm1823, %v2970, %v2971
  %v2973 = vrot.slane %v2463, 5
  %v2974 = vrot.slane %v2879, 5
  %v2975 = vsel %vm1823, %v2973, %v2974
  %2976 = vrot.lane.b32.xlu0 %v2880, 40
  %v2977 = vpop.permute.xlu0 %2976
  %2978 = vrot.lane.b32.xlu0 %v2882, 40
  %v2979 = vpop.permute.xlu0 %2978
  %2980 = vrot.lane.b32.xlu0 %v2883, 40
  %v2981 = vpop.permute.xlu0 %2980
  %2982 = vrot.lane.b32.xlu0 %v2885, 40
  %v2983 = vpop.permute.xlu0 %2982
  %2984 = vrot.lane.b32.xlu0 %v2886, 40
  %v2985 = vpop.permute.xlu0 %2984
  %2986 = vrot.lane.b32.xlu0 %v2888, 40
  %v2987 = vpop.permute.xlu0 %2986
  %2988 = vrot.lane.b32.xlu0 %v2889, 40
  %v2989 = vpop.permute.xlu0 %2988
  %2990 = vrot.lane.b32.xlu0 %v2891, 40
  %v2991 = vpop.permute.xlu0 %2990
  %2992 = vrot.lane.b32.xlu0 %v2892, 40
  %v2993 = vpop.permute.xlu0 %2992
  %2994 = vrot.lane.b32.xlu0 %v2894, 40
  %v2995 = vpop.permute.xlu0 %2994
  %2996 = vrot.lane.b32.xlu0 %v2895, 40
  %v2997 = vpop.permute.xlu0 %2996
  %2998 = vrot.lane.b32.xlu0 %v2897, 40
  %v2999 = vpop.permute.xlu0 %2998
  %3000 = vrot.lane.b32.xlu0 %v2898, 40
  %v3001 = vpop.permute.xlu0 %3000
  %3002 = vrot.lane.b32.xlu0 %v2900, 40
  %v3003 = vpop.permute.xlu0 %3002
  %3004 = vrot.lane.b32.xlu0 %v2901, 40
  %v3005 = vpop.permute.xlu0 %3004
  %3006 = vrot.lane.b32.xlu0 %v2903, 40
  %v3007 = vpop.permute.xlu0 %3006
  %3008 = vrot.lane.b32.xlu0 %v2904, 40
  %v3009 = vpop.permute.xlu0 %3008
  %3010 = vrot.lane.b32.xlu0 %v2906, 40
  %v3011 = vpop.permute.xlu0 %3010
  %3012 = vrot.lane.b32.xlu0 %v2907, 40
  %v3013 = vpop.permute.xlu0 %3012
  %3014 = vrot.lane.b32.xlu0 %v2909, 40
  %v3015 = vpop.permute.xlu0 %3014
  %3016 = vrot.lane.b32.xlu0 %v2910, 40
  %v3017 = vpop.permute.xlu0 %3016
  %3018 = vrot.lane.b32.xlu0 %v2912, 40
  %v3019 = vpop.permute.xlu0 %3018
  %3020 = vrot.lane.b32.xlu0 %v2913, 40
  %v3021 = vpop.permute.xlu0 %3020
  %3022 = vrot.lane.b32.xlu0 %v2915, 40
  %v3023 = vpop.permute.xlu0 %3022
  %3024 = vrot.lane.b32.xlu0 %v2916, 40
  %v3025 = vpop.permute.xlu0 %3024
  %3026 = vrot.lane.b32.xlu0 %v2918, 40
  %v3027 = vpop.permute.xlu0 %3026
  %3028 = vrot.lane.b32.xlu0 %v2919, 40
  %v3029 = vpop.permute.xlu0 %3028
  %3030 = vrot.lane.b32.xlu0 %v2921, 40
  %v3031 = vpop.permute.xlu0 %3030
  %3032 = vrot.lane.b32.xlu0 %v2922, 40
  %v3033 = vpop.permute.xlu0 %3032
  %3034 = vrot.lane.b32.xlu0 %v2924, 40
  %v3035 = vpop.permute.xlu0 %3034
  %3036 = vrot.lane.b32.xlu0 %v2925, 40
  %v3037 = vpop.permute.xlu0 %3036
  %3038 = vrot.lane.b32.xlu0 %v2927, 40
  %v3039 = vpop.permute.xlu0 %3038
  %3040 = vrot.lane.b32.xlu0 %v2928, 40
  %v3041 = vpop.permute.xlu0 %3040
  %3042 = vrot.lane.b32.xlu0 %v2930, 40
  %v3043 = vpop.permute.xlu0 %3042
  %3044 = vrot.lane.b32.xlu0 %v2931, 40
  %v3045 = vpop.permute.xlu0 %3044
  %3046 = vrot.lane.b32.xlu0 %v2933, 40
  %v3047 = vpop.permute.xlu0 %3046
  %3048 = vrot.lane.b32.xlu0 %v2934, 40
  %v3049 = vpop.permute.xlu0 %3048
  %3050 = vrot.lane.b32.xlu0 %v2936, 40
  %v3051 = vpop.permute.xlu0 %3050
  %3052 = vrot.lane.b32.xlu0 %v2937, 40
  %v3053 = vpop.permute.xlu0 %3052
  %3054 = vrot.lane.b32.xlu0 %v2939, 40
  %v3055 = vpop.permute.xlu0 %3054
  %3056 = vrot.lane.b32.xlu0 %v2940, 40
  %v3057 = vpop.permute.xlu0 %3056
  %3058 = vrot.lane.b32.xlu0 %v2942, 40
  %v3059 = vpop.permute.xlu0 %3058
  %3060 = vrot.lane.b32.xlu0 %v2943, 40
  %v3061 = vpop.permute.xlu0 %3060
  %3062 = vrot.lane.b32.xlu0 %v2945, 40
  %v3063 = vpop.permute.xlu0 %3062
  %3064 = vrot.lane.b32.xlu0 %v2946, 40
  %v3065 = vpop.permute.xlu0 %3064
  %3066 = vrot.lane.b32.xlu0 %v2948, 40
  %v3067 = vpop.permute.xlu0 %3066
  %3068 = vrot.lane.b32.xlu0 %v2949, 40
  %v3069 = vpop.permute.xlu0 %3068
  %3070 = vrot.lane.b32.xlu0 %v2951, 40
  %v3071 = vpop.permute.xlu0 %3070
  %3072 = vrot.lane.b32.xlu0 %v2952, 40
  %v3073 = vpop.permute.xlu0 %3072
  %3074 = vrot.lane.b32.xlu0 %v2954, 40
  %v3075 = vpop.permute.xlu0 %3074
  %3076 = vrot.lane.b32.xlu0 %v2955, 40
  %v3077 = vpop.permute.xlu0 %3076
  %3078 = vrot.lane.b32.xlu0 %v2957, 40
  %v3079 = vpop.permute.xlu0 %3078
  %3080 = vrot.lane.b32.xlu0 %v2958, 40
  %v3081 = vpop.permute.xlu0 %3080
  %3082 = vrot.lane.b32.xlu0 %v2960, 40
  %v3083 = vpop.permute.xlu0 %3082
  %3084 = vrot.lane.b32.xlu0 %v2961, 40
  %v3085 = vpop.permute.xlu0 %3084
  %3086 = vrot.lane.b32.xlu0 %v2963, 40
  %v3087 = vpop.permute.xlu0 %3086
  %3088 = vrot.lane.b32.xlu0 %v2964, 40
  %v3089 = vpop.permute.xlu0 %3088
  %3090 = vrot.lane.b32.xlu0 %v2966, 40
  %v3091 = vpop.permute.xlu0 %3090
  %3092 = vrot.lane.b32.xlu0 %v2967, 40
  %v3093 = vpop.permute.xlu0 %3092
  %3094 = vrot.lane.b32.xlu0 %v2969, 40
  %v3095 = vpop.permute.xlu0 %3094
  %3096 = vrot.lane.b32.xlu0 %v2970, 40
  %v3097 = vpop.permute.xlu0 %3096
  %3098 = vrot.lane.b32.xlu0 %v2972, 40
  %v3099 = vpop.permute.xlu0 %3098
  %3100 = vrot.lane.b32.xlu0 %v2973, 40
  %v3101 = vpop.permute.xlu0 %3100
  %3102 = vrot.lane.b32.xlu0 %v2975, 40
  %v3103 = vpop.permute.xlu0 %3102
  %v3200 = vunpack.c.l.b16 %v991
  %v3201 = vunpack.c.l.b16 %v992
  %v3202 = vunpack.c.l.b16 %v993
  %v3203 = vunpack.c.l.b16 %v994
  %v3204 = vunpack.c.l.b16 %v995
  %v3205 = vunpack.c.l.b16 %v996
  %v3206 = vunpack.c.l.b16 %v997
  %v3207 = vunpack.c.l.b16 %v998
  %v3208 = vunpack.c.l.b16 %v999
  %v3209 = vunpack.c.l.b16 %v1000
  %v3210 = vunpack.c.l.b16 %v1001
  %v3211 = vunpack.c.l.b16 %v1002
  %v3212 = vunpack.c.l.b16 %v1003
  %v3213 = vunpack.c.l.b16 %v1004
  %v3214 = vunpack.c.l.b16 %v1005
  %v3215 = vunpack.c.l.b16 %v1006
  %v3216 = vunpack.c.l.b16 %v1007
  %v3217 = vunpack.c.l.b16 %v1008
  %v3218 = vunpack.c.l.b16 %v1009
  %v3219 = vunpack.c.l.b16 %v1010
  %v3220 = vunpack.c.l.b16 %v1011
  %v3221 = vunpack.c.l.b16 %v1012
  %v3222 = vunpack.c.l.b16 %v1013
  %v3223 = vunpack.c.l.b16 %v1014
  %v3224 = vunpack.c.l.b16 %v1015
  %v3225 = vunpack.c.l.b16 %v1016
  %v3226 = vunpack.c.l.b16 %v1017
  %v3227 = vunpack.c.l.b16 %v1018
  %v3228 = vunpack.c.l.b16 %v1019
  %v3229 = vunpack.c.l.b16 %v1020
  %v3230 = vunpack.c.l.b16 %v1021
  %v3231 = vunpack.c.l.b16 %v1022
  %v3232 = vunpack.c.l.b16 %v1023
  %v3233 = vunpack.c.l.b16 %v1024
  %v3234 = vunpack.c.l.b16 %v1025
  %v3235 = vunpack.c.l.b16 %v1026
  %v3236 = vunpack.c.l.b16 %v1027
  %v3237 = vunpack.c.l.b16 %v1028
  %v3238 = vunpack.c.l.b16 %v1029
  %v3239 = vunpack.c.l.b16 %v1030
  %v3240 = vunpack.c.l.b16 %v1031
  %v3241 = vunpack.c.l.b16 %v1032
  %v3242 = vunpack.c.l.b16 %v1033
  %v3243 = vunpack.c.l.b16 %v1034
  %v3244 = vunpack.c.l.b16 %v1035
  %v3245 = vunpack.c.l.b16 %v1036
  %v3246 = vunpack.c.l.b16 %v1037
  %v3247 = vunpack.c.l.b16 %v1038
  %v3248 = vunpack.c.l.b16 %v1039
  %v3249 = vunpack.c.l.b16 %v1040
  %v3250 = vunpack.c.l.b16 %v1041
  %v3251 = vunpack.c.l.b16 %v1042
  %v3252 = vunpack.c.l.b16 %v1043
  %v3253 = vunpack.c.l.b16 %v1044
  %v3254 = vunpack.c.l.b16 %v1045
  %v3255 = vunpack.c.l.b16 %v1046
  %v3256 = vunpack.c.l.b16 %v1047
  %v3257 = vunpack.c.l.b16 %v1048
  %v3258 = vunpack.c.l.b16 %v1049
  %v3259 = vunpack.c.l.b16 %v1050
  %v3260 = vunpack.c.l.b16 %v1051
  %v3261 = vunpack.c.l.b16 %v1052
  %v3262 = vunpack.c.l.b16 %v1053
  %v3263 = vunpack.c.l.b16 %v1054
  %v3264 = vunpack.c.l.b16 %v1055
  %v3265 = vunpack.c.l.b16 %v1056
  %v3266 = vunpack.c.l.b16 %v1057
  %v3267 = vunpack.c.l.b16 %v1058
  %v3268 = vunpack.c.l.b16 %v1059
  %v3269 = vunpack.c.l.b16 %v1060
  %v3270 = vunpack.c.l.b16 %v1061
  %v3271 = vunpack.c.l.b16 %v1062
  %v3272 = vunpack.c.l.b16 %v1063
  %v3273 = vunpack.c.l.b16 %v1064
  %v3274 = vunpack.c.l.b16 %v1065
  %v3275 = vunpack.c.l.b16 %v1066
  %v3276 = vunpack.c.l.b16 %v1067
  %v3277 = vunpack.c.l.b16 %v1068
  %v3278 = vunpack.c.l.b16 %v1069
  %v3279 = vunpack.c.l.b16 %v1070
  %v3280 = vunpack.c.l.b16 %v1071
  %v3281 = vunpack.c.l.b16 %v1072
  %v3282 = vunpack.c.l.b16 %v1073
  %v3283 = vunpack.c.l.b16 %v1074
  %v3284 = vunpack.c.l.b16 %v1075
  %v3285 = vunpack.c.l.b16 %v1076
  %v3286 = vunpack.c.l.b16 %v1077
  %v3287 = vunpack.c.l.b16 %v1078
  %v3288 = vunpack.c.l.b16 %v1079
  %v3289 = vunpack.c.l.b16 %v1080
  %v3290 = vunpack.c.l.b16 %v1081
  %v3291 = vunpack.c.l.b16 %v1082
  %v3292 = vunpack.c.l.b16 %v1083
  %v3293 = vunpack.c.l.b16 %v1084
  %v3294 = vunpack.c.l.b16 %v1085
  %v3295 = vunpack.c.l.b16 %v1086
  %v3296 = vpack.c.b16 %v3201, %v3200
  %v3297 = vpack.c.b16 %v3202, %v3202
  %v3298 = vpack.c.b16 %v3204, %v3203
  %v3299 = vpack.c.b16 %v3205, %v3205
  %v3300 = vpack.c.b16 %v3207, %v3206
  %v3301 = vpack.c.b16 %v3208, %v3208
  %v3302 = vpack.c.b16 %v3210, %v3209
  %v3303 = vpack.c.b16 %v3211, %v3211
  %v3304 = vpack.c.b16 %v3213, %v3212
  %v3305 = vpack.c.b16 %v3214, %v3214
  %v3306 = vpack.c.b16 %v3216, %v3215
  %v3307 = vpack.c.b16 %v3217, %v3217
  %v3308 = vpack.c.b16 %v3219, %v3218
  %v3309 = vpack.c.b16 %v3220, %v3220
  %v3310 = vpack.c.b16 %v3222, %v3221
  %v3311 = vpack.c.b16 %v3223, %v3223
  %v3312 = vpack.c.b16 %v3225, %v3224
  %v3313 = vpack.c.b16 %v3226, %v3226
  %v3314 = vpack.c.b16 %v3228, %v3227
  %v3315 = vpack.c.b16 %v3229, %v3229
  %v3316 = vpack.c.b16 %v3231, %v3230
  %v3317 = vpack.c.b16 %v3232, %v3232
  %v3318 = vpack.c.b16 %v3234, %v3233
  %v3319 = vpack.c.b16 %v3235, %v3235
  %v3320 = vpack.c.b16 %v3237, %v3236
  %v3321 = vpack.c.b16 %v3238, %v3238
  %v3322 = vpack.c.b16 %v3240, %v3239
  %v3323 = vpack.c.b16 %v3241, %v3241
  %v3324 = vpack.c.b16 %v3243, %v3242
  %v3325 = vpack.c.b16 %v3244, %v3244
  %v3326 = vpack.c.b16 %v3246, %v3245
  %v3327 = vpack.c.b16 %v3247, %v3247
  %v3328 = vpack.c.b16 %v3249, %v3248
  %v3329 = vpack.c.b16 %v3250, %v3250
  %v3330 = vpack.c.b16 %v3252, %v3251
  %v3331 = vpack.c.b16 %v3253, %v3253
  %v3332 = vpack.c.b16 %v3255, %v3254
  %v3333 = vpack.c.b16 %v3256, %v3256
  %v3334 = vpack.c.b16 %v3258, %v3257
  %v3335 = vpack.c.b16 %v3259, %v3259
  %v3336 = vpack.c.b16 %v3261, %v3260
  %v3337 = vpack.c.b16 %v3262, %v3262
  %v3338 = vpack.c.b16 %v3264, %v3263
  %v3339 = vpack.c.b16 %v3265, %v3265
  %v3340 = vpack.c.b16 %v3267, %v3266
  %v3341 = vpack.c.b16 %v3268, %v3268
  %v3342 = vpack.c.b16 %v3270, %v3269
  %v3343 = vpack.c.b16 %v3271, %v3271
  %v3344 = vpack.c.b16 %v3273, %v3272
  %v3345 = vpack.c.b16 %v3274, %v3274
  %v3346 = vpack.c.b16 %v3276, %v3275
  %v3347 = vpack.c.b16 %v3277, %v3277
  %v3348 = vpack.c.b16 %v3279, %v3278
  %v3349 = vpack.c.b16 %v3280, %v3280
  %v3350 = vpack.c.b16 %v3282, %v3281
  %v3351 = vpack.c.b16 %v3283, %v3283
  %v3352 = vpack.c.b16 %v3285, %v3284
  %v3353 = vpack.c.b16 %v3286, %v3286
  %v3354 = vpack.c.b16 %v3288, %v3287
  %v3355 = vpack.c.b16 %v3289, %v3289
  %v3356 = vpack.c.b16 %v3291, %v3290
  %v3357 = vpack.c.b16 %v3292, %v3292
  %v3358 = vpack.c.b16 %v3294, %v3293
  %v3359 = vpack.c.b16 %v3295, %v3295
  %3360 = vrot.lane.b32.xlu0 %v3296, 48
  %v3361 = vpop.permute.xlu0 %3360
  %3362 = vrot.lane.b32.xlu0 %v3297, 48
  %v3363 = vpop.permute.xlu0 %3362
  %3364 = vrot.lane.b32.xlu0 %v3298, 48
  %v3365 = vpop.permute.xlu0 %3364
  %3366 = vrot.lane.b32.xlu0 %v3299, 48
  %v3367 = vpop.permute.xlu0 %3366
  %3368 = vrot.lane.b32.xlu0 %v3300, 48
  %v3369 = vpop.permute.xlu0 %3368
  %3370 = vrot.lane.b32.xlu0 %v3301, 48
  %v3371 = vpop.permute.xlu0 %3370
  %3372 = vrot.lane.b32.xlu0 %v3302, 48
  %v3373 = vpop.permute.xlu0 %3372
  %3374 = vrot.lane.b32.xlu0 %v3303, 48
  %v3375 = vpop.permute.xlu0 %3374
  %3376 = vrot.lane.b32.xlu0 %v3304, 48
  %v3377 = vpop.permute.xlu0 %3376
  %3378 = vrot.lane.b32.xlu0 %v3305, 48
  %v3379 = vpop.permute.xlu0 %3378
  %3380 = vrot.lane.b32.xlu0 %v3306, 48
  %v3381 = vpop.permute.xlu0 %3380
  %3382 = vrot.lane.b32.xlu0 %v3307, 48
  %v3383 = vpop.permute.xlu0 %3382
  %3384 = vrot.lane.b32.xlu0 %v3308, 48
  %v3385 = vpop.permute.xlu0 %3384
  %3386 = vrot.lane.b32.xlu0 %v3309, 48
  %v3387 = vpop.permute.xlu0 %3386
  %3388 = vrot.lane.b32.xlu0 %v3310, 48
  %v3389 = vpop.permute.xlu0 %3388
  %3390 = vrot.lane.b32.xlu0 %v3311, 48
  %v3391 = vpop.permute.xlu0 %3390
  %3392 = vrot.lane.b32.xlu0 %v3312, 48
  %v3393 = vpop.permute.xlu0 %3392
  %3394 = vrot.lane.b32.xlu0 %v3313, 48
  %v3395 = vpop.permute.xlu0 %3394
  %3396 = vrot.lane.b32.xlu0 %v3314, 48
  %v3397 = vpop.permute.xlu0 %3396
  %3398 = vrot.lane.b32.xlu0 %v3315, 48
  %v3399 = vpop.permute.xlu0 %3398
  %3400 = vrot.lane.b32.xlu0 %v3316, 48
  %v3401 = vpop.permute.xlu0 %3400
  %3402 = vrot.lane.b32.xlu0 %v3317, 48
  %v3403 = vpop.permute.xlu0 %3402
  %3404 = vrot.lane.b32.xlu0 %v3318, 48
  %v3405 = vpop.permute.xlu0 %3404
  %3406 = vrot.lane.b32.xlu0 %v3319, 48
  %v3407 = vpop.permute.xlu0 %3406
  %3408 = vrot.lane.b32.xlu0 %v3320, 48
  %v3409 = vpop.permute.xlu0 %3408
  %3410 = vrot.lane.b32.xlu0 %v3321, 48
  %v3411 = vpop.permute.xlu0 %3410
  %3412 = vrot.lane.b32.xlu0 %v3322, 48
  %v3413 = vpop.permute.xlu0 %3412
  %3414 = vrot.lane.b32.xlu0 %v3323, 48
  %v3415 = vpop.permute.xlu0 %3414
  %3416 = vrot.lane.b32.xlu0 %v3324, 48
  %v3417 = vpop.permute.xlu0 %3416
  %3418 = vrot.lane.b32.xlu0 %v3325, 48
  %v3419 = vpop.permute.xlu0 %3418
  %3420 = vrot.lane.b32.xlu0 %v3326, 48
  %v3421 = vpop.permute.xlu0 %3420
  %3422 = vrot.lane.b32.xlu0 %v3327, 48
  %v3423 = vpop.permute.xlu0 %3422
  %3424 = vrot.lane.b32.xlu0 %v3328, 48
  %v3425 = vpop.permute.xlu0 %3424
  %3426 = vrot.lane.b32.xlu0 %v3329, 48
  %v3427 = vpop.permute.xlu0 %3426
  %3428 = vrot.lane.b32.xlu0 %v3330, 48
  %v3429 = vpop.permute.xlu0 %3428
  %3430 = vrot.lane.b32.xlu0 %v3331, 48
  %v3431 = vpop.permute.xlu0 %3430
  %3432 = vrot.lane.b32.xlu0 %v3332, 48
  %v3433 = vpop.permute.xlu0 %3432
  %3434 = vrot.lane.b32.xlu0 %v3333, 48
  %v3435 = vpop.permute.xlu0 %3434
  %3436 = vrot.lane.b32.xlu0 %v3334, 48
  %v3437 = vpop.permute.xlu0 %3436
  %3438 = vrot.lane.b32.xlu0 %v3335, 48
  %v3439 = vpop.permute.xlu0 %3438
  %3440 = vrot.lane.b32.xlu0 %v3336, 48
  %v3441 = vpop.permute.xlu0 %3440
  %3442 = vrot.lane.b32.xlu0 %v3337, 48
  %v3443 = vpop.permute.xlu0 %3442
  %3444 = vrot.lane.b32.xlu0 %v3338, 48
  %v3445 = vpop.permute.xlu0 %3444
  %3446 = vrot.lane.b32.xlu0 %v3339, 48
  %v3447 = vpop.permute.xlu0 %3446
  %3448 = vrot.lane.b32.xlu0 %v3340, 48
  %v3449 = vpop.permute.xlu0 %3448
  %3450 = vrot.lane.b32.xlu0 %v3341, 48
  %v3451 = vpop.permute.xlu0 %3450
  %3452 = vrot.lane.b32.xlu0 %v3342, 48
  %v3453 = vpop.permute.xlu0 %3452
  %3454 = vrot.lane.b32.xlu0 %v3343, 48
  %v3455 = vpop.permute.xlu0 %3454
  %3456 = vrot.lane.b32.xlu0 %v3344, 48
  %v3457 = vpop.permute.xlu0 %3456
  %3458 = vrot.lane.b32.xlu0 %v3345, 48
  %v3459 = vpop.permute.xlu0 %3458
  %3460 = vrot.lane.b32.xlu0 %v3346, 48
  %v3461 = vpop.permute.xlu0 %3460
  %3462 = vrot.lane.b32.xlu0 %v3347, 48
  %v3463 = vpop.permute.xlu0 %3462
  %3464 = vrot.lane.b32.xlu0 %v3348, 48
  %v3465 = vpop.permute.xlu0 %3464
  %3466 = vrot.lane.b32.xlu0 %v3349, 48
  %v3467 = vpop.permute.xlu0 %3466
  %3468 = vrot.lane.b32.xlu0 %v3350, 48
  %v3469 = vpop.permute.xlu0 %3468
  %3470 = vrot.lane.b32.xlu0 %v3351, 48
  %v3471 = vpop.permute.xlu0 %3470
  %3472 = vrot.lane.b32.xlu0 %v3352, 48
  %v3473 = vpop.permute.xlu0 %3472
  %3474 = vrot.lane.b32.xlu0 %v3353, 48
  %v3475 = vpop.permute.xlu0 %3474
  %3476 = vrot.lane.b32.xlu0 %v3354, 48
  %v3477 = vpop.permute.xlu0 %3476
  %3478 = vrot.lane.b32.xlu0 %v3355, 48
  %v3479 = vpop.permute.xlu0 %3478
  %3480 = vrot.lane.b32.xlu0 %v3356, 48
  %v3481 = vpop.permute.xlu0 %3480
  %3482 = vrot.lane.b32.xlu0 %v3357, 48
  %v3483 = vpop.permute.xlu0 %3482
  %3484 = vrot.lane.b32.xlu0 %v3358, 48
  %v3485 = vpop.permute.xlu0 %3484
  %3486 = vrot.lane.b32.xlu0 %v3359, 48
  %v3487 = vpop.permute.xlu0 %3486
  %v3488 = vpack.c.b16 %v3202, %v3201
  %v3489 = vpack.c.b16 %v3205, %v3204
  %v3490 = vpack.c.b16 %v3208, %v3207
  %v3491 = vpack.c.b16 %v3211, %v3210
  %v3492 = vpack.c.b16 %v3214, %v3213
  %v3493 = vpack.c.b16 %v3217, %v3216
  %v3494 = vpack.c.b16 %v3220, %v3219
  %v3495 = vpack.c.b16 %v3223, %v3222
  %v3496 = vpack.c.b16 %v3226, %v3225
  %v3497 = vpack.c.b16 %v3229, %v3228
  %v3498 = vpack.c.b16 %v3232, %v3231
  %v3499 = vpack.c.b16 %v3235, %v3234
  %v3500 = vpack.c.b16 %v3238, %v3237
  %v3501 = vpack.c.b16 %v3241, %v3240
  %v3502 = vpack.c.b16 %v3244, %v3243
  %v3503 = vpack.c.b16 %v3247, %v3246
  %v3504 = vpack.c.b16 %v3250, %v3249
  %v3505 = vpack.c.b16 %v3253, %v3252
  %v3506 = vpack.c.b16 %v3256, %v3255
  %v3507 = vpack.c.b16 %v3259, %v3258
  %v3508 = vpack.c.b16 %v3262, %v3261
  %v3509 = vpack.c.b16 %v3265, %v3264
  %v3510 = vpack.c.b16 %v3268, %v3267
  %v3511 = vpack.c.b16 %v3271, %v3270
  %v3512 = vpack.c.b16 %v3274, %v3273
  %v3513 = vpack.c.b16 %v3277, %v3276
  %v3514 = vpack.c.b16 %v3280, %v3279
  %v3515 = vpack.c.b16 %v3283, %v3282
  %v3516 = vpack.c.b16 %v3286, %v3285
  %v3517 = vpack.c.b16 %v3289, %v3288
  %v3518 = vpack.c.b16 %v3292, %v3291
  %v3519 = vpack.c.b16 %v3295, %v3294
  %v3521 = vshrl.u32 %v3488, 16
  %v3523 = vrot.slane %v3521, 4
  %v3524 = vshll.u32 %v3488, 16
  %v3526 = vrot.slane %v3524, 5
  %v3527 = vor.u32 %v3523, %v3526
  %v3529 = vshrl.u32 %v3489, 16
  %v3531 = vrot.slane %v3529, 4
  %v3532 = vshll.u32 %v3489, 16
  %v3534 = vrot.slane %v3532, 5
  %v3535 = vor.u32 %v3531, %v3534
  %v3537 = vshrl.u32 %v3490, 16
  %v3539 = vrot.slane %v3537, 4
  %v3540 = vshll.u32 %v3490, 16
  %v3542 = vrot.slane %v3540, 5
  %v3543 = vor.u32 %v3539, %v3542
  %v3545 = vshrl.u32 %v3491, 16
  %v3547 = vrot.slane %v3545, 4
  %v3548 = vshll.u32 %v3491, 16
  %v3550 = vrot.slane %v3548, 5
  %v3551 = vor.u32 %v3547, %v3550
  %v3553 = vshrl.u32 %v3492, 16
  %v3555 = vrot.slane %v3553, 4
  %v3556 = vshll.u32 %v3492, 16
  %v3558 = vrot.slane %v3556, 5
  %v3559 = vor.u32 %v3555, %v3558
  %v3561 = vshrl.u32 %v3493, 16
  %v3563 = vrot.slane %v3561, 4
  %v3564 = vshll.u32 %v3493, 16
  %v3566 = vrot.slane %v3564, 5
  %v3567 = vor.u32 %v3563, %v3566
  %v3569 = vshrl.u32 %v3494, 16
  %v3571 = vrot.slane %v3569, 4
  %v3572 = vshll.u32 %v3494, 16
  %v3574 = vrot.slane %v3572, 5
  %v3575 = vor.u32 %v3571, %v3574
  %v3577 = vshrl.u32 %v3495, 16
  %v3579 = vrot.slane %v3577, 4
  %v3580 = vshll.u32 %v3495, 16
  %v3582 = vrot.slane %v3580, 5
  %v3583 = vor.u32 %v3579, %v3582
  %v3585 = vshrl.u32 %v3496, 16
  %v3587 = vrot.slane %v3585, 4
  %v3588 = vshll.u32 %v3496, 16
  %v3590 = vrot.slane %v3588, 5
  %v3591 = vor.u32 %v3587, %v3590
  %v3593 = vshrl.u32 %v3497, 16
  %v3595 = vrot.slane %v3593, 4
  %v3596 = vshll.u32 %v3497, 16
  %v3598 = vrot.slane %v3596, 5
  %v3599 = vor.u32 %v3595, %v3598
  %v3601 = vshrl.u32 %v3498, 16
  %v3603 = vrot.slane %v3601, 4
  %v3604 = vshll.u32 %v3498, 16
  %v3606 = vrot.slane %v3604, 5
  %v3607 = vor.u32 %v3603, %v3606
  %v3609 = vshrl.u32 %v3499, 16
  %v3611 = vrot.slane %v3609, 4
  %v3612 = vshll.u32 %v3499, 16
  %v3614 = vrot.slane %v3612, 5
  %v3615 = vor.u32 %v3611, %v3614
  %v3617 = vshrl.u32 %v3500, 16
  %v3619 = vrot.slane %v3617, 4
  %v3620 = vshll.u32 %v3500, 16
  %v3622 = vrot.slane %v3620, 5
  %v3623 = vor.u32 %v3619, %v3622
  %v3625 = vshrl.u32 %v3501, 16
  %v3627 = vrot.slane %v3625, 4
  %v3628 = vshll.u32 %v3501, 16
  %v3630 = vrot.slane %v3628, 5
  %v3631 = vor.u32 %v3627, %v3630
  %v3633 = vshrl.u32 %v3502, 16
  %v3635 = vrot.slane %v3633, 4
  %v3636 = vshll.u32 %v3502, 16
  %v3638 = vrot.slane %v3636, 5
  %v3639 = vor.u32 %v3635, %v3638
  %v3641 = vshrl.u32 %v3503, 16
  %v3643 = vrot.slane %v3641, 4
  %v3644 = vshll.u32 %v3503, 16
  %v3646 = vrot.slane %v3644, 5
  %v3647 = vor.u32 %v3643, %v3646
  %v3649 = vshrl.u32 %v3504, 16
  %v3651 = vrot.slane %v3649, 4
  %v3652 = vshll.u32 %v3504, 16
  %v3654 = vrot.slane %v3652, 5
  %v3655 = vor.u32 %v3651, %v3654
  %v3657 = vshrl.u32 %v3505, 16
  %v3659 = vrot.slane %v3657, 4
  %v3660 = vshll.u32 %v3505, 16
  %v3662 = vrot.slane %v3660, 5
  %v3663 = vor.u32 %v3659, %v3662
  %v3665 = vshrl.u32 %v3506, 16
  %v3667 = vrot.slane %v3665, 4
  %v3668 = vshll.u32 %v3506, 16
  %v3670 = vrot.slane %v3668, 5
  %v3671 = vor.u32 %v3667, %v3670
  %v3673 = vshrl.u32 %v3507, 16
  %v3675 = vrot.slane %v3673, 4
  %v3676 = vshll.u32 %v3507, 16
  %v3678 = vrot.slane %v3676, 5
  %v3679 = vor.u32 %v3675, %v3678
  %v3681 = vshrl.u32 %v3508, 16
  %v3683 = vrot.slane %v3681, 4
  %v3684 = vshll.u32 %v3508, 16
  %v3686 = vrot.slane %v3684, 5
  %v3687 = vor.u32 %v3683, %v3686
  %v3689 = vshrl.u32 %v3509, 16
  %v3691 = vrot.slane %v3689, 4
  %v3692 = vshll.u32 %v3509, 16
  %v3694 = vrot.slane %v3692, 5
  %v3695 = vor.u32 %v3691, %v3694
  %v3697 = vshrl.u32 %v3510, 16
  %v3699 = vrot.slane %v3697, 4
  %v3700 = vshll.u32 %v3510, 16
  %v3702 = vrot.slane %v3700, 5
  %v3703 = vor.u32 %v3699, %v3702
  %v3705 = vshrl.u32 %v3511, 16
  %v3707 = vrot.slane %v3705, 4
  %v3708 = vshll.u32 %v3511, 16
  %v3710 = vrot.slane %v3708, 5
  %v3711 = vor.u32 %v3707, %v3710
  %v3713 = vshrl.u32 %v3512, 16
  %v3715 = vrot.slane %v3713, 4
  %v3716 = vshll.u32 %v3512, 16
  %v3718 = vrot.slane %v3716, 5
  %v3719 = vor.u32 %v3715, %v3718
  %v3721 = vshrl.u32 %v3513, 16
  %v3723 = vrot.slane %v3721, 4
  %v3724 = vshll.u32 %v3513, 16
  %v3726 = vrot.slane %v3724, 5
  %v3727 = vor.u32 %v3723, %v3726
  %v3729 = vshrl.u32 %v3514, 16
  %v3731 = vrot.slane %v3729, 4
  %v3732 = vshll.u32 %v3514, 16
  %v3734 = vrot.slane %v3732, 5
  %v3735 = vor.u32 %v3731, %v3734
  %v3737 = vshrl.u32 %v3515, 16
  %v3739 = vrot.slane %v3737, 4
  %v3740 = vshll.u32 %v3515, 16
  %v3742 = vrot.slane %v3740, 5
  %v3743 = vor.u32 %v3739, %v3742
  %v3745 = vshrl.u32 %v3516, 16
  %v3747 = vrot.slane %v3745, 4
  %v3748 = vshll.u32 %v3516, 16
  %v3750 = vrot.slane %v3748, 5
  %v3751 = vor.u32 %v3747, %v3750
  %v3753 = vshrl.u32 %v3517, 16
  %v3755 = vrot.slane %v3753, 4
  %v3756 = vshll.u32 %v3517, 16
  %v3758 = vrot.slane %v3756, 5
  %v3759 = vor.u32 %v3755, %v3758
  %v3761 = vshrl.u32 %v3518, 16
  %v3763 = vrot.slane %v3761, 4
  %v3764 = vshll.u32 %v3518, 16
  %v3766 = vrot.slane %v3764, 5
  %v3767 = vor.u32 %v3763, %v3766
  %v3769 = vshrl.u32 %v3519, 16
  %v3771 = vrot.slane %v3769, 4
  %v3772 = vshll.u32 %v3519, 16
  %v3774 = vrot.slane %v3772, 5
  %v3775 = vor.u32 %v3771, %v3774
  %3776 = vrot.lane.b32.xlu0 %v3527, 56
  %v3777 = vpop.permute.xlu0 %3776
  %3778 = vrot.lane.b32.xlu0 %v3535, 56
  %v3779 = vpop.permute.xlu0 %3778
  %3780 = vrot.lane.b32.xlu0 %v3543, 56
  %v3781 = vpop.permute.xlu0 %3780
  %3782 = vrot.lane.b32.xlu0 %v3551, 56
  %v3783 = vpop.permute.xlu0 %3782
  %3784 = vrot.lane.b32.xlu0 %v3559, 56
  %v3785 = vpop.permute.xlu0 %3784
  %3786 = vrot.lane.b32.xlu0 %v3567, 56
  %v3787 = vpop.permute.xlu0 %3786
  %3788 = vrot.lane.b32.xlu0 %v3575, 56
  %v3789 = vpop.permute.xlu0 %3788
  %3790 = vrot.lane.b32.xlu0 %v3583, 56
  %v3791 = vpop.permute.xlu0 %3790
  %3792 = vrot.lane.b32.xlu0 %v3591, 56
  %v3793 = vpop.permute.xlu0 %3792
  %3794 = vrot.lane.b32.xlu0 %v3599, 56
  %v3795 = vpop.permute.xlu0 %3794
  %3796 = vrot.lane.b32.xlu0 %v3607, 56
  %v3797 = vpop.permute.xlu0 %3796
  %3798 = vrot.lane.b32.xlu0 %v3615, 56
  %v3799 = vpop.permute.xlu0 %3798
  %3800 = vrot.lane.b32.xlu0 %v3623, 56
  %v3801 = vpop.permute.xlu0 %3800
  %3802 = vrot.lane.b32.xlu0 %v3631, 56
  %v3803 = vpop.permute.xlu0 %3802
  %3804 = vrot.lane.b32.xlu0 %v3639, 56
  %v3805 = vpop.permute.xlu0 %3804
  %3806 = vrot.lane.b32.xlu0 %v3647, 56
  %v3807 = vpop.permute.xlu0 %3806
  %3808 = vrot.lane.b32.xlu0 %v3655, 56
  %v3809 = vpop.permute.xlu0 %3808
  %3810 = vrot.lane.b32.xlu0 %v3663, 56
  %v3811 = vpop.permute.xlu0 %3810
  %3812 = vrot.lane.b32.xlu0 %v3671, 56
  %v3813 = vpop.permute.xlu0 %3812
  %3814 = vrot.lane.b32.xlu0 %v3679, 56
  %v3815 = vpop.permute.xlu0 %3814
  %3816 = vrot.lane.b32.xlu0 %v3687, 56
  %v3817 = vpop.permute.xlu0 %3816
  %3818 = vrot.lane.b32.xlu0 %v3695, 56
  %v3819 = vpop.permute.xlu0 %3818
  %3820 = vrot.lane.b32.xlu0 %v3703, 56
  %v3821 = vpop.permute.xlu0 %3820
  %3822 = vrot.lane.b32.xlu0 %v3711, 56
  %v3823 = vpop.permute.xlu0 %3822
  %3824 = vrot.lane.b32.xlu0 %v3719, 56
  %v3825 = vpop.permute.xlu0 %3824
  %3826 = vrot.lane.b32.xlu0 %v3727, 56
  %v3827 = vpop.permute.xlu0 %3826
  %3828 = vrot.lane.b32.xlu0 %v3735, 56
  %v3829 = vpop.permute.xlu0 %3828
  %3830 = vrot.lane.b32.xlu0 %v3743, 56
  %v3831 = vpop.permute.xlu0 %3830
  %3832 = vrot.lane.b32.xlu0 %v3751, 56
  %v3833 = vpop.permute.xlu0 %3832
  %3834 = vrot.lane.b32.xlu0 %v3759, 56
  %v3835 = vpop.permute.xlu0 %3834
  %3836 = vrot.lane.b32.xlu0 %v3767, 56
  %v3837 = vpop.permute.xlu0 %3836
  %3838 = vrot.lane.b32.xlu0 %v3775, 56
  %v3839 = vpop.permute.xlu0 %3838
  %v3872 = vunpack.c.l.b16 %v1087
  %v3873 = vunpack.c.l.b16 %v1088
  %v3874 = vunpack.c.l.b16 %v1089
  %v3875 = vunpack.c.l.b16 %v1090
  %v3876 = vunpack.c.l.b16 %v1091
  %v3877 = vunpack.c.l.b16 %v1092
  %v3878 = vunpack.c.l.b16 %v1093
  %v3879 = vunpack.c.l.b16 %v1094
  %v3880 = vunpack.c.l.b16 %v1095
  %v3881 = vunpack.c.l.b16 %v1096
  %v3882 = vunpack.c.l.b16 %v1097
  %v3883 = vunpack.c.l.b16 %v1098
  %v3884 = vunpack.c.l.b16 %v1099
  %v3885 = vunpack.c.l.b16 %v1100
  %v3886 = vunpack.c.l.b16 %v1101
  %v3887 = vunpack.c.l.b16 %v1102
  %v3888 = vunpack.c.l.b16 %v1103
  %v3889 = vunpack.c.l.b16 %v1104
  %v3890 = vunpack.c.l.b16 %v1105
  %v3891 = vunpack.c.l.b16 %v1106
  %v3892 = vunpack.c.l.b16 %v1107
  %v3893 = vunpack.c.l.b16 %v1108
  %v3894 = vunpack.c.l.b16 %v1109
  %v3895 = vunpack.c.l.b16 %v1110
  %v3896 = vunpack.c.l.b16 %v1111
  %v3897 = vunpack.c.l.b16 %v1112
  %v3898 = vunpack.c.l.b16 %v1113
  %v3899 = vunpack.c.l.b16 %v1114
  %v3900 = vunpack.c.l.b16 %v1115
  %v3901 = vunpack.c.l.b16 %v1116
  %v3902 = vunpack.c.l.b16 %v1117
  %v3903 = vunpack.c.l.b16 %v1118
  %v3904 = vpack.c.b16 %v3872, %v3872
  %v3905 = vpack.c.b16 %v3873, %v3873
  %v3906 = vpack.c.b16 %v3874, %v3874
  %v3907 = vpack.c.b16 %v3875, %v3875
  %v3908 = vpack.c.b16 %v3876, %v3876
  %v3909 = vpack.c.b16 %v3877, %v3877
  %v3910 = vpack.c.b16 %v3878, %v3878
  %v3911 = vpack.c.b16 %v3879, %v3879
  %v3912 = vpack.c.b16 %v3880, %v3880
  %v3913 = vpack.c.b16 %v3881, %v3881
  %v3914 = vpack.c.b16 %v3882, %v3882
  %v3915 = vpack.c.b16 %v3883, %v3883
  %v3916 = vpack.c.b16 %v3884, %v3884
  %v3917 = vpack.c.b16 %v3885, %v3885
  %v3918 = vpack.c.b16 %v3886, %v3886
  %v3919 = vpack.c.b16 %v3887, %v3887
  %v3920 = vpack.c.b16 %v3888, %v3888
  %v3921 = vpack.c.b16 %v3889, %v3889
  %v3922 = vpack.c.b16 %v3890, %v3890
  %v3923 = vpack.c.b16 %v3891, %v3891
  %v3924 = vpack.c.b16 %v3892, %v3892
  %v3925 = vpack.c.b16 %v3893, %v3893
  %v3926 = vpack.c.b16 %v3894, %v3894
  %v3927 = vpack.c.b16 %v3895, %v3895
  %v3928 = vpack.c.b16 %v3896, %v3896
  %v3929 = vpack.c.b16 %v3897, %v3897
  %v3930 = vpack.c.b16 %v3898, %v3898
  %v3931 = vpack.c.b16 %v3899, %v3899
  %v3932 = vpack.c.b16 %v3900, %v3900
  %v3933 = vpack.c.b16 %v3901, %v3901
  %v3934 = vpack.c.b16 %v3902, %v3902
  %v3935 = vpack.c.b16 %v3903, %v3903
  %v3936 = vrot.slane %v3488, 5
  %v3937 = vrot.slane %v3904, 5
  %v3938 = vsel %vm1823, %v3936, %v3937
  %v3939 = vrot.slane %v3489, 5
  %v3940 = vrot.slane %v3905, 5
  %v3941 = vsel %vm1823, %v3939, %v3940
  %v3942 = vrot.slane %v3490, 5
  %v3943 = vrot.slane %v3906, 5
  %v3944 = vsel %vm1823, %v3942, %v3943
  %v3945 = vrot.slane %v3491, 5
  %v3946 = vrot.slane %v3907, 5
  %v3947 = vsel %vm1823, %v3945, %v3946
  %v3948 = vrot.slane %v3492, 5
  %v3949 = vrot.slane %v3908, 5
  %v3950 = vsel %vm1823, %v3948, %v3949
  %v3951 = vrot.slane %v3493, 5
  %v3952 = vrot.slane %v3909, 5
  %v3953 = vsel %vm1823, %v3951, %v3952
  %v3954 = vrot.slane %v3494, 5
  %v3955 = vrot.slane %v3910, 5
  %v3956 = vsel %vm1823, %v3954, %v3955
  %v3957 = vrot.slane %v3495, 5
  %v3958 = vrot.slane %v3911, 5
  %v3959 = vsel %vm1823, %v3957, %v3958
  %v3960 = vrot.slane %v3496, 5
  %v3961 = vrot.slane %v3912, 5
  %v3962 = vsel %vm1823, %v3960, %v3961
  %v3963 = vrot.slane %v3497, 5
  %v3964 = vrot.slane %v3913, 5
  %v3965 = vsel %vm1823, %v3963, %v3964
  %v3966 = vrot.slane %v3498, 5
  %v3967 = vrot.slane %v3914, 5
  %v3968 = vsel %vm1823, %v3966, %v3967
  %v3969 = vrot.slane %v3499, 5
  %v3970 = vrot.slane %v3915, 5
  %v3971 = vsel %vm1823, %v3969, %v3970
  %v3972 = vrot.slane %v3500, 5
  %v3973 = vrot.slane %v3916, 5
  %v3974 = vsel %vm1823, %v3972, %v3973
  %v3975 = vrot.slane %v3501, 5
  %v3976 = vrot.slane %v3917, 5
  %v3977 = vsel %vm1823, %v3975, %v3976
  %v3978 = vrot.slane %v3502, 5
  %v3979 = vrot.slane %v3918, 5
  %v3980 = vsel %vm1823, %v3978, %v3979
  %v3981 = vrot.slane %v3503, 5
  %v3982 = vrot.slane %v3919, 5
  %v3983 = vsel %vm1823, %v3981, %v3982
  %v3984 = vrot.slane %v3504, 5
  %v3985 = vrot.slane %v3920, 5
  %v3986 = vsel %vm1823, %v3984, %v3985
  %v3987 = vrot.slane %v3505, 5
  %v3988 = vrot.slane %v3921, 5
  %v3989 = vsel %vm1823, %v3987, %v3988
  %v3990 = vrot.slane %v3506, 5
  %v3991 = vrot.slane %v3922, 5
  %v3992 = vsel %vm1823, %v3990, %v3991
  %v3993 = vrot.slane %v3507, 5
  %v3994 = vrot.slane %v3923, 5
  %v3995 = vsel %vm1823, %v3993, %v3994
  %v3996 = vrot.slane %v3508, 5
  %v3997 = vrot.slane %v3924, 5
  %v3998 = vsel %vm1823, %v3996, %v3997
  %v3999 = vrot.slane %v3509, 5
  %v4000 = vrot.slane %v3925, 5
  %v4001 = vsel %vm1823, %v3999, %v4000
  %v4002 = vrot.slane %v3510, 5
  %v4003 = vrot.slane %v3926, 5
  %v4004 = vsel %vm1823, %v4002, %v4003
  %v4005 = vrot.slane %v3511, 5
  %v4006 = vrot.slane %v3927, 5
  %v4007 = vsel %vm1823, %v4005, %v4006
  %v4008 = vrot.slane %v3512, 5
  %v4009 = vrot.slane %v3928, 5
  %v4010 = vsel %vm1823, %v4008, %v4009
  %v4011 = vrot.slane %v3513, 5
  %v4012 = vrot.slane %v3929, 5
  %v4013 = vsel %vm1823, %v4011, %v4012
  %v4014 = vrot.slane %v3514, 5
  %v4015 = vrot.slane %v3930, 5
  %v4016 = vsel %vm1823, %v4014, %v4015
  %v4017 = vrot.slane %v3515, 5
  %v4018 = vrot.slane %v3931, 5
  %v4019 = vsel %vm1823, %v4017, %v4018
  %v4020 = vrot.slane %v3516, 5
  %v4021 = vrot.slane %v3932, 5
  %v4022 = vsel %vm1823, %v4020, %v4021
  %v4023 = vrot.slane %v3517, 5
  %v4024 = vrot.slane %v3933, 5
  %v4025 = vsel %vm1823, %v4023, %v4024
  %v4026 = vrot.slane %v3518, 5
  %v4027 = vrot.slane %v3934, 5
  %v4028 = vsel %vm1823, %v4026, %v4027
  %v4029 = vrot.slane %v3519, 5
  %v4030 = vrot.slane %v3935, 5
  %v4031 = vsel %vm1823, %v4029, %v4030
  %4032 = vrot.lane.b32.xlu0 %v3936, 64
  %v4033 = vpop.permute.xlu0 %4032
  %4034 = vrot.lane.b32.xlu0 %v3938, 64
  %v4035 = vpop.permute.xlu0 %4034
  %4036 = vrot.lane.b32.xlu0 %v3939, 64
  %v4037 = vpop.permute.xlu0 %4036
  %4038 = vrot.lane.b32.xlu0 %v3941, 64
  %v4039 = vpop.permute.xlu0 %4038
  %4040 = vrot.lane.b32.xlu0 %v3942, 64
  %v4041 = vpop.permute.xlu0 %4040
  %4042 = vrot.lane.b32.xlu0 %v3944, 64
  %v4043 = vpop.permute.xlu0 %4042
  %4044 = vrot.lane.b32.xlu0 %v3945, 64
  %v4045 = vpop.permute.xlu0 %4044
  %4046 = vrot.lane.b32.xlu0 %v3947, 64
  %v4047 = vpop.permute.xlu0 %4046
  %4048 = vrot.lane.b32.xlu0 %v3948, 64
  %v4049 = vpop.permute.xlu0 %4048
  %4050 = vrot.lane.b32.xlu0 %v3950, 64
  %v4051 = vpop.permute.xlu0 %4050
  %4052 = vrot.lane.b32.xlu0 %v3951, 64
  %v4053 = vpop.permute.xlu0 %4052
  %4054 = vrot.lane.b32.xlu0 %v3953, 64
  %v4055 = vpop.permute.xlu0 %4054
  %4056 = vrot.lane.b32.xlu0 %v3954, 64
  %v4057 = vpop.permute.xlu0 %4056
  %4058 = vrot.lane.b32.xlu0 %v3956, 64
  %v4059 = vpop.permute.xlu0 %4058
  %4060 = vrot.lane.b32.xlu0 %v3957, 64
  %v4061 = vpop.permute.xlu0 %4060
  %4062 = vrot.lane.b32.xlu0 %v3959, 64
  %v4063 = vpop.permute.xlu0 %4062
  %4064 = vrot.lane.b32.xlu0 %v3960, 64
  %v4065 = vpop.permute.xlu0 %4064
  %4066 = vrot.lane.b32.xlu0 %v3962, 64
  %v4067 = vpop.permute.xlu0 %4066
  %4068 = vrot.lane.b32.xlu0 %v3963, 64
  %v4069 = vpop.permute.xlu0 %4068
  %4070 = vrot.lane.b32.xlu0 %v3965, 64
  %v4071 = vpop.permute.xlu0 %4070
  %4072 = vrot.lane.b32.xlu0 %v3966, 64
  %v4073 = vpop.permute.xlu0 %4072
  %4074 = vrot.lane.b32.xlu0 %v3968, 64
  %v4075 = vpop.permute.xlu0 %4074
  %4076 = vrot.lane.b32.xlu0 %v3969, 64
  %v4077 = vpop.permute.xlu0 %4076
  %4078 = vrot.lane.b32.xlu0 %v3971, 64
  %v4079 = vpop.permute.xlu0 %4078
  %4080 = vrot.lane.b32.xlu0 %v3972, 64
  %v4081 = vpop.permute.xlu0 %4080
  %4082 = vrot.lane.b32.xlu0 %v3974, 64
  %v4083 = vpop.permute.xlu0 %4082
  %4084 = vrot.lane.b32.xlu0 %v3975, 64
  %v4085 = vpop.permute.xlu0 %4084
  %4086 = vrot.lane.b32.xlu0 %v3977, 64
  %v4087 = vpop.permute.xlu0 %4086
  %4088 = vrot.lane.b32.xlu0 %v3978, 64
  %v4089 = vpop.permute.xlu0 %4088
  %4090 = vrot.lane.b32.xlu0 %v3980, 64
  %v4091 = vpop.permute.xlu0 %4090
  %4092 = vrot.lane.b32.xlu0 %v3981, 64
  %v4093 = vpop.permute.xlu0 %4092
  %4094 = vrot.lane.b32.xlu0 %v3983, 64
  %v4095 = vpop.permute.xlu0 %4094
  %4096 = vrot.lane.b32.xlu0 %v3984, 64
  %v4097 = vpop.permute.xlu0 %4096
  %4098 = vrot.lane.b32.xlu0 %v3986, 64
  %v4099 = vpop.permute.xlu0 %4098
  %4100 = vrot.lane.b32.xlu0 %v3987, 64
  %v4101 = vpop.permute.xlu0 %4100
  %4102 = vrot.lane.b32.xlu0 %v3989, 64
  %v4103 = vpop.permute.xlu0 %4102
  %4104 = vrot.lane.b32.xlu0 %v3990, 64
  %v4105 = vpop.permute.xlu0 %4104
  %4106 = vrot.lane.b32.xlu0 %v3992, 64
  %v4107 = vpop.permute.xlu0 %4106
  %4108 = vrot.lane.b32.xlu0 %v3993, 64
  %v4109 = vpop.permute.xlu0 %4108
  %4110 = vrot.lane.b32.xlu0 %v3995, 64
  %v4111 = vpop.permute.xlu0 %4110
  %4112 = vrot.lane.b32.xlu0 %v3996, 64
  %v4113 = vpop.permute.xlu0 %4112
  %4114 = vrot.lane.b32.xlu0 %v3998, 64
  %v4115 = vpop.permute.xlu0 %4114
  %4116 = vrot.lane.b32.xlu0 %v3999, 64
  %v4117 = vpop.permute.xlu0 %4116
  %4118 = vrot.lane.b32.xlu0 %v4001, 64
  %v4119 = vpop.permute.xlu0 %4118
  %4120 = vrot.lane.b32.xlu0 %v4002, 64
  %v4121 = vpop.permute.xlu0 %4120
  %4122 = vrot.lane.b32.xlu0 %v4004, 64
  %v4123 = vpop.permute.xlu0 %4122
  %4124 = vrot.lane.b32.xlu0 %v4005, 64
  %v4125 = vpop.permute.xlu0 %4124
  %4126 = vrot.lane.b32.xlu0 %v4007, 64
  %v4127 = vpop.permute.xlu0 %4126
  %4128 = vrot.lane.b32.xlu0 %v4008, 64
  %v4129 = vpop.permute.xlu0 %4128
  %4130 = vrot.lane.b32.xlu0 %v4010, 64
  %v4131 = vpop.permute.xlu0 %4130
  %4132 = vrot.lane.b32.xlu0 %v4011, 64
  %v4133 = vpop.permute.xlu0 %4132
  %4134 = vrot.lane.b32.xlu0 %v4013, 64
  %v4135 = vpop.permute.xlu0 %4134
  %4136 = vrot.lane.b32.xlu0 %v4014, 64
  %v4137 = vpop.permute.xlu0 %4136
  %4138 = vrot.lane.b32.xlu0 %v4016, 64
  %v4139 = vpop.permute.xlu0 %4138
  %4140 = vrot.lane.b32.xlu0 %v4017, 64
  %v4141 = vpop.permute.xlu0 %4140
  %4142 = vrot.lane.b32.xlu0 %v4019, 64
  %v4143 = vpop.permute.xlu0 %4142
  %4144 = vrot.lane.b32.xlu0 %v4020, 64
  %v4145 = vpop.permute.xlu0 %4144
  %4146 = vrot.lane.b32.xlu0 %v4022, 64
  %v4147 = vpop.permute.xlu0 %4146
  %4148 = vrot.lane.b32.xlu0 %v4023, 64
  %v4149 = vpop.permute.xlu0 %4148
  %4150 = vrot.lane.b32.xlu0 %v4025, 64
  %v4151 = vpop.permute.xlu0 %4150
  %4152 = vrot.lane.b32.xlu0 %v4026, 64
  %v4153 = vpop.permute.xlu0 %4152
  %4154 = vrot.lane.b32.xlu0 %v4028, 64
  %v4155 = vpop.permute.xlu0 %4154
  %4156 = vrot.lane.b32.xlu0 %v4029, 64
  %v4157 = vpop.permute.xlu0 %4156
  %4158 = vrot.lane.b32.xlu0 %v4031, 64
  %v4159 = vpop.permute.xlu0 %4158
  %vm4160 = vcmask 64512
  %v4163 = vsel %vm4160, %v1311, %v1664
  %v4165 = vsel %vm4160, %v1312, %v1664
  %v4168 = vsel %vm4160, %v1313, %v1666
  %v4170 = vsel %vm4160, %v1314, %v1666
  %v4173 = vsel %vm4160, %v1315, %v1668
  %v4175 = vsel %vm4160, %v1316, %v1668
  %v4178 = vsel %vm4160, %v1317, %v1670
  %v4180 = vsel %vm4160, %v1318, %v1670
  %v4183 = vsel %vm4160, %v1319, %v1672
  %v4185 = vsel %vm4160, %v1320, %v1672
  %v4188 = vsel %vm4160, %v1321, %v1674
  %v4190 = vsel %vm4160, %v1322, %v1674
  %v4193 = vsel %vm4160, %v1323, %v1676
  %v4195 = vsel %vm4160, %v1324, %v1676
  %v4198 = vsel %vm4160, %v1325, %v1678
  %v4200 = vsel %vm4160, %v1326, %v1678
  %v4203 = vsel %vm4160, %v1327, %v1680
  %v4205 = vsel %vm4160, %v1328, %v1680
  %v4208 = vsel %vm4160, %v1329, %v1682
  %v4210 = vsel %vm4160, %v1330, %v1682
  %v4213 = vsel %vm4160, %v1331, %v1684
  %v4215 = vsel %vm4160, %v1332, %v1684
  %v4218 = vsel %vm4160, %v1333, %v1686
  %v4220 = vsel %vm4160, %v1334, %v1686
  %v4223 = vsel %vm4160, %v1335, %v1688
  %v4225 = vsel %vm4160, %v1336, %v1688
  %v4228 = vsel %vm4160, %v1337, %v1690
  %v4230 = vsel %vm4160, %v1338, %v1690
  %v4233 = vsel %vm4160, %v1339, %v1692
  %v4235 = vsel %vm4160, %v1340, %v1692
  %v4238 = vsel %vm4160, %v1341, %v1694
  %v4240 = vsel %vm4160, %v1342, %v1694
  %v4243 = vsel %vm4160, %v1343, %v1696
  %v4245 = vsel %vm4160, %v1344, %v1696
  %v4248 = vsel %vm4160, %v1345, %v1698
  %v4250 = vsel %vm4160, %v1346, %v1698
  %v4253 = vsel %vm4160, %v1347, %v1700
  %v4255 = vsel %vm4160, %v1348, %v1700
  %v4258 = vsel %vm4160, %v1349, %v1702
  %v4260 = vsel %vm4160, %v1350, %v1702
  %v4263 = vsel %vm4160, %v1351, %v1704
  %v4265 = vsel %vm4160, %v1352, %v1704
  %v4268 = vsel %vm4160, %v1353, %v1706
  %v4270 = vsel %vm4160, %v1354, %v1706
  %v4273 = vsel %vm4160, %v1355, %v1708
  %v4275 = vsel %vm4160, %v1356, %v1708
  %v4278 = vsel %vm4160, %v1357, %v1710
  %v4280 = vsel %vm4160, %v1358, %v1710
  %v4283 = vsel %vm4160, %v1359, %v1712
  %v4285 = vsel %vm4160, %v1360, %v1712
  %v4288 = vsel %vm4160, %v1361, %v1714
  %v4290 = vsel %vm4160, %v1362, %v1714
  %v4293 = vsel %vm4160, %v1363, %v1716
  %v4295 = vsel %vm4160, %v1364, %v1716
  %v4298 = vsel %vm4160, %v1365, %v1718
  %v4300 = vsel %vm4160, %v1366, %v1718
  %v4303 = vsel %vm4160, %v1367, %v1720
  %v4305 = vsel %vm4160, %v1368, %v1720
  %v4308 = vsel %vm4160, %v1369, %v1722
  %v4310 = vsel %vm4160, %v1370, %v1722
  %v4313 = vsel %vm4160, %v1371, %v1724
  %v4315 = vsel %vm4160, %v1372, %v1724
  %v4318 = vsel %vm4160, %v1373, %v1726
  %v4320 = vsel %vm4160, %v1374, %v1726
  %vm4321 = vcmask 130048
  %v4323 = vsel %vm4321, %v4163, %v1921
  %v4325 = vsel %vm4321, %v4165, %v1923
  %v4327 = vsel %vm4321, %v4168, %v1925
  %v4329 = vsel %vm4321, %v4170, %v1927
  %v4331 = vsel %vm4321, %v4173, %v1929
  %v4333 = vsel %vm4321, %v4175, %v1931
  %v4335 = vsel %vm4321, %v4178, %v1933
  %v4337 = vsel %vm4321, %v4180, %v1935
  %v4339 = vsel %vm4321, %v4183, %v1937
  %v4341 = vsel %vm4321, %v4185, %v1939
  %v4343 = vsel %vm4321, %v4188, %v1941
  %v4345 = vsel %vm4321, %v4190, %v1943
  %v4347 = vsel %vm4321, %v4193, %v1945
  %v4349 = vsel %vm4321, %v4195, %v1947
  %v4351 = vsel %vm4321, %v4198, %v1949
  %v4353 = vsel %vm4321, %v4200, %v1951
  %v4355 = vsel %vm4321, %v4203, %v1953
  %v4357 = vsel %vm4321, %v4205, %v1955
  %v4359 = vsel %vm4321, %v4208, %v1957
  %v4361 = vsel %vm4321, %v4210, %v1959
  %v4363 = vsel %vm4321, %v4213, %v1961
  %v4365 = vsel %vm4321, %v4215, %v1963
  %v4367 = vsel %vm4321, %v4218, %v1965
  %v4369 = vsel %vm4321, %v4220, %v1967
  %v4371 = vsel %vm4321, %v4223, %v1969
  %v4373 = vsel %vm4321, %v4225, %v1971
  %v4375 = vsel %vm4321, %v4228, %v1973
  %v4377 = vsel %vm4321, %v4230, %v1975
  %v4379 = vsel %vm4321, %v4233, %v1977
  %v4381 = vsel %vm4321, %v4235, %v1979
  %v4383 = vsel %vm4321, %v4238, %v1981
  %v4385 = vsel %vm4321, %v4240, %v1983
  %v4387 = vsel %vm4321, %v4243, %v1985
  %v4389 = vsel %vm4321, %v4245, %v1987
  %v4391 = vsel %vm4321, %v4248, %v1989
  %v4393 = vsel %vm4321, %v4250, %v1991
  %v4395 = vsel %vm4321, %v4253, %v1993
  %v4397 = vsel %vm4321, %v4255, %v1995
  %v4399 = vsel %vm4321, %v4258, %v1997
  %v4401 = vsel %vm4321, %v4260, %v1999
  %v4403 = vsel %vm4321, %v4263, %v2001
  %v4405 = vsel %vm4321, %v4265, %v2003
  %v4407 = vsel %vm4321, %v4268, %v2005
  %v4409 = vsel %vm4321, %v4270, %v2007
  %v4411 = vsel %vm4321, %v4273, %v2009
  %v4413 = vsel %vm4321, %v4275, %v2011
  %v4415 = vsel %vm4321, %v4278, %v2013
  %v4417 = vsel %vm4321, %v4280, %v2015
  %v4419 = vsel %vm4321, %v4283, %v2017
  %v4421 = vsel %vm4321, %v4285, %v2019
  %v4423 = vsel %vm4321, %v4288, %v2021
  %v4425 = vsel %vm4321, %v4290, %v2023
  %v4427 = vsel %vm4321, %v4293, %v2025
  %v4429 = vsel %vm4321, %v4295, %v2027
  %v4431 = vsel %vm4321, %v4298, %v2029
  %v4433 = vsel %vm4321, %v4300, %v2031
  %v4435 = vsel %vm4321, %v4303, %v2033
  %v4437 = vsel %vm4321, %v4305, %v2035
  %v4439 = vsel %vm4321, %v4308, %v2037
  %v4441 = vsel %vm4321, %v4310, %v2039
  %v4443 = vsel %vm4321, %v4313, %v2041
  %v4445 = vsel %vm4321, %v4315, %v2043
  %v4447 = vsel %vm4321, %v4318, %v2045
  %v4449 = vsel %vm4321, %v4320, %v2047
  %vm4450 = vcmask 195584
  %v4452 = vsel %vm4450, %v4323, %v2305
  %v4454 = vsel %vm4450, %v4325, %v2307
  %v4456 = vsel %vm4450, %v4327, %v2309
  %v4458 = vsel %vm4450, %v4329, %v2311
  %v4460 = vsel %vm4450, %v4331, %v2313
  %v4462 = vsel %vm4450, %v4333, %v2315
  %v4464 = vsel %vm4450, %v4335, %v2317
  %v4466 = vsel %vm4450, %v4337, %v2319
  %v4468 = vsel %vm4450, %v4339, %v2321
  %v4470 = vsel %vm4450, %v4341, %v2323
  %v4472 = vsel %vm4450, %v4343, %v2325
  %v4474 = vsel %vm4450, %v4345, %v2327
  %v4476 = vsel %vm4450, %v4347, %v2329
  %v4478 = vsel %vm4450, %v4349, %v2331
  %v4480 = vsel %vm4450, %v4351, %v2333
  %v4482 = vsel %vm4450, %v4353, %v2335
  %v4484 = vsel %vm4450, %v4355, %v2337
  %v4486 = vsel %vm4450, %v4357, %v2339
  %v4488 = vsel %vm4450, %v4359, %v2341
  %v4490 = vsel %vm4450, %v4361, %v2343
  %v4492 = vsel %vm4450, %v4363, %v2345
  %v4494 = vsel %vm4450, %v4365, %v2347
  %v4496 = vsel %vm4450, %v4367, %v2349
  %v4498 = vsel %vm4450, %v4369, %v2351
  %v4500 = vsel %vm4450, %v4371, %v2353
  %v4502 = vsel %vm4450, %v4373, %v2355
  %v4504 = vsel %vm4450, %v4375, %v2357
  %v4506 = vsel %vm4450, %v4377, %v2359
  %v4508 = vsel %vm4450, %v4379, %v2361
  %v4510 = vsel %vm4450, %v4381, %v2363
  %v4512 = vsel %vm4450, %v4383, %v2365
  %v4514 = vsel %vm4450, %v4385, %v2367
  %v4516 = vsel %vm4450, %v4387, %v2369
  %v4518 = vsel %vm4450, %v4389, %v2371
  %v4520 = vsel %vm4450, %v4391, %v2373
  %v4522 = vsel %vm4450, %v4393, %v2375
  %v4524 = vsel %vm4450, %v4395, %v2377
  %v4526 = vsel %vm4450, %v4397, %v2379
  %v4528 = vsel %vm4450, %v4399, %v2381
  %v4530 = vsel %vm4450, %v4401, %v2383
  %v4532 = vsel %vm4450, %v4403, %v2385
  %v4534 = vsel %vm4450, %v4405, %v2387
  %v4536 = vsel %vm4450, %v4407, %v2389
  %v4538 = vsel %vm4450, %v4409, %v2391
  %v4540 = vsel %vm4450, %v4411, %v2393
  %v4542 = vsel %vm4450, %v4413, %v2395
  %v4544 = vsel %vm4450, %v4415, %v2397
  %v4546 = vsel %vm4450, %v4417, %v2399
  %v4548 = vsel %vm4450, %v4419, %v2401
  %v4550 = vsel %vm4450, %v4421, %v2403
  %v4552 = vsel %vm4450, %v4423, %v2405
  %v4554 = vsel %vm4450, %v4425, %v2407
  %v4556 = vsel %vm4450, %v4427, %v2409
  %v4558 = vsel %vm4450, %v4429, %v2411
  %v4560 = vsel %vm4450, %v4431, %v2413
  %v4562 = vsel %vm4450, %v4433, %v2415
  %v4564 = vsel %vm4450, %v4435, %v2417
  %v4566 = vsel %vm4450, %v4437, %v2419
  %v4568 = vsel %vm4450, %v4439, %v2421
  %v4570 = vsel %vm4450, %v4441, %v2423
  %v4572 = vsel %vm4450, %v4443, %v2425
  %v4574 = vsel %vm4450, %v4445, %v2427
  %v4576 = vsel %vm4450, %v4447, %v2429
  %v4578 = vsel %vm4450, %v4449, %v2431
  %vm4579 = vcmask 261120
  %v4581 = vsel %vm4579, %v4452, %v2721
  %v4582 = vsel %vm4579, %v4454, %v2721
  %v4584 = vsel %vm4579, %v4456, %v2723
  %v4585 = vsel %vm4579, %v4458, %v2723
  %v4587 = vsel %vm4579, %v4460, %v2725
  %v4588 = vsel %vm4579, %v4462, %v2725
  %v4590 = vsel %vm4579, %v4464, %v2727
  %v4591 = vsel %vm4579, %v4466, %v2727
  %v4593 = vsel %vm4579, %v4468, %v2729
  %v4594 = vsel %vm4579, %v4470, %v2729
  %v4596 = vsel %vm4579, %v4472, %v2731
  %v4597 = vsel %vm4579, %v4474, %v2731
  %v4599 = vsel %vm4579, %v4476, %v2733
  %v4600 = vsel %vm4579, %v4478, %v2733
  %v4602 = vsel %vm4579, %v4480, %v2735
  %v4603 = vsel %vm4579, %v4482, %v2735
  %v4605 = vsel %vm4579, %v4484, %v2737
  %v4606 = vsel %vm4579, %v4486, %v2737
  %v4608 = vsel %vm4579, %v4488, %v2739
  %v4609 = vsel %vm4579, %v4490, %v2739
  %v4611 = vsel %vm4579, %v4492, %v2741
  %v4612 = vsel %vm4579, %v4494, %v2741
  %v4614 = vsel %vm4579, %v4496, %v2743
  %v4615 = vsel %vm4579, %v4498, %v2743
  %v4617 = vsel %vm4579, %v4500, %v2745
  %v4618 = vsel %vm4579, %v4502, %v2745
  %v4620 = vsel %vm4579, %v4504, %v2747
  %v4621 = vsel %vm4579, %v4506, %v2747
  %v4623 = vsel %vm4579, %v4508, %v2749
  %v4624 = vsel %vm4579, %v4510, %v2749
  %v4626 = vsel %vm4579, %v4512, %v2751
  %v4627 = vsel %vm4579, %v4514, %v2751
  %v4629 = vsel %vm4579, %v4516, %v2753
  %v4630 = vsel %vm4579, %v4518, %v2753
  %v4632 = vsel %vm4579, %v4520, %v2755
  %v4633 = vsel %vm4579, %v4522, %v2755
  %v4635 = vsel %vm4579, %v4524, %v2757
  %v4636 = vsel %vm4579, %v4526, %v2757
  %v4638 = vsel %vm4579, %v4528, %v2759
  %v4639 = vsel %vm4579, %v4530, %v2759
  %v4641 = vsel %vm4579, %v4532, %v2761
  %v4642 = vsel %vm4579, %v4534, %v2761
  %v4644 = vsel %vm4579, %v4536, %v2763
  %v4645 = vsel %vm4579, %v4538, %v2763
  %v4647 = vsel %vm4579, %v4540, %v2765
  %v4648 = vsel %vm4579, %v4542, %v2765
  %v4650 = vsel %vm4579, %v4544, %v2767
  %v4651 = vsel %vm4579, %v4546, %v2767
  %v4653 = vsel %vm4579, %v4548, %v2769
  %v4654 = vsel %vm4579, %v4550, %v2769
  %v4656 = vsel %vm4579, %v4552, %v2771
  %v4657 = vsel %vm4579, %v4554, %v2771
  %v4659 = vsel %vm4579, %v4556, %v2773
  %v4660 = vsel %vm4579, %v4558, %v2773
  %v4662 = vsel %vm4579, %v4560, %v2775
  %v4663 = vsel %vm4579, %v4562, %v2775
  %v4665 = vsel %vm4579, %v4564, %v2777
  %v4666 = vsel %vm4579, %v4566, %v2777
  %v4668 = vsel %vm4579, %v4568, %v2779
  %v4669 = vsel %vm4579, %v4570, %v2779
  %v4671 = vsel %vm4579, %v4572, %v2781
  %v4672 = vsel %vm4579, %v4574, %v2781
  %v4674 = vsel %vm4579, %v4576, %v2783
  %v4675 = vsel %vm4579, %v4578, %v2783
  %vm4676 = vcmask 326656
  %v4678 = vsel %vm4676, %v4581, %v2977
  %v4680 = vsel %vm4676, %v4582, %v2979
  %v4682 = vsel %vm4676, %v4584, %v2981
  %v4684 = vsel %vm4676, %v4585, %v2983
  %v4686 = vsel %vm4676, %v4587, %v2985
  %v4688 = vsel %vm4676, %v4588, %v2987
  %v4690 = vsel %vm4676, %v4590, %v2989
  %v4692 = vsel %vm4676, %v4591, %v2991
  %v4694 = vsel %vm4676, %v4593, %v2993
  %v4696 = vsel %vm4676, %v4594, %v2995
  %v4698 = vsel %vm4676, %v4596, %v2997
  %v4700 = vsel %vm4676, %v4597, %v2999
  %v4702 = vsel %vm4676, %v4599, %v3001
  %v4704 = vsel %vm4676, %v4600, %v3003
  %v4706 = vsel %vm4676, %v4602, %v3005
  %v4708 = vsel %vm4676, %v4603, %v3007
  %v4710 = vsel %vm4676, %v4605, %v3009
  %v4712 = vsel %vm4676, %v4606, %v3011
  %v4714 = vsel %vm4676, %v4608, %v3013
  %v4716 = vsel %vm4676, %v4609, %v3015
  %v4718 = vsel %vm4676, %v4611, %v3017
  %v4720 = vsel %vm4676, %v4612, %v3019
  %v4722 = vsel %vm4676, %v4614, %v3021
  %v4724 = vsel %vm4676, %v4615, %v3023
  %v4726 = vsel %vm4676, %v4617, %v3025
  %v4728 = vsel %vm4676, %v4618, %v3027
  %v4730 = vsel %vm4676, %v4620, %v3029
  %v4732 = vsel %vm4676, %v4621, %v3031
  %v4734 = vsel %vm4676, %v4623, %v3033
  %v4736 = vsel %vm4676, %v4624, %v3035
  %v4738 = vsel %vm4676, %v4626, %v3037
  %v4740 = vsel %vm4676, %v4627, %v3039
  %v4742 = vsel %vm4676, %v4629, %v3041
  %v4744 = vsel %vm4676, %v4630, %v3043
  %v4746 = vsel %vm4676, %v4632, %v3045
  %v4748 = vsel %vm4676, %v4633, %v3047
  %v4750 = vsel %vm4676, %v4635, %v3049
  %v4752 = vsel %vm4676, %v4636, %v3051
  %v4754 = vsel %vm4676, %v4638, %v3053
  %v4756 = vsel %vm4676, %v4639, %v3055
  %v4758 = vsel %vm4676, %v4641, %v3057
  %v4760 = vsel %vm4676, %v4642, %v3059
  %v4762 = vsel %vm4676, %v4644, %v3061
  %v4764 = vsel %vm4676, %v4645, %v3063
  %v4766 = vsel %vm4676, %v4647, %v3065
  %v4768 = vsel %vm4676, %v4648, %v3067
  %v4770 = vsel %vm4676, %v4650, %v3069
  %v4772 = vsel %vm4676, %v4651, %v3071
  %v4774 = vsel %vm4676, %v4653, %v3073
  %v4776 = vsel %vm4676, %v4654, %v3075
  %v4778 = vsel %vm4676, %v4656, %v3077
  %v4780 = vsel %vm4676, %v4657, %v3079
  %v4782 = vsel %vm4676, %v4659, %v3081
  %v4784 = vsel %vm4676, %v4660, %v3083
  %v4786 = vsel %vm4676, %v4662, %v3085
  %v4788 = vsel %vm4676, %v4663, %v3087
  %v4790 = vsel %vm4676, %v4665, %v3089
  %v4792 = vsel %vm4676, %v4666, %v3091
  %v4794 = vsel %vm4676, %v4668, %v3093
  %v4796 = vsel %vm4676, %v4669, %v3095
  %v4798 = vsel %vm4676, %v4671, %v3097
  %v4800 = vsel %vm4676, %v4672, %v3099
  %v4802 = vsel %vm4676, %v4674, %v3101
  %v4804 = vsel %vm4676, %v4675, %v3103
  %vm4805 = vcmask 392192
  %v4807 = vsel %vm4805, %v4678, %v3361
  %v4809 = vsel %vm4805, %v4680, %v3363
  %v4811 = vsel %vm4805, %v4682, %v3365
  %v4813 = vsel %vm4805, %v4684, %v3367
  %v4815 = vsel %vm4805, %v4686, %v3369
  %v4817 = vsel %vm4805, %v4688, %v3371
  %v4819 = vsel %vm4805, %v4690, %v3373
  %v4821 = vsel %vm4805, %v4692, %v3375
  %v4823 = vsel %vm4805, %v4694, %v3377
  %v4825 = vsel %vm4805, %v4696, %v3379
  %v4827 = vsel %vm4805, %v4698, %v3381
  %v4829 = vsel %vm4805, %v4700, %v3383
  %v4831 = vsel %vm4805, %v4702, %v3385
  %v4833 = vsel %vm4805, %v4704, %v3387
  %v4835 = vsel %vm4805, %v4706, %v3389
  %v4837 = vsel %vm4805, %v4708, %v3391
  %v4839 = vsel %vm4805, %v4710, %v3393
  %v4841 = vsel %vm4805, %v4712, %v3395
  %v4843 = vsel %vm4805, %v4714, %v3397
  %v4845 = vsel %vm4805, %v4716, %v3399
  %v4847 = vsel %vm4805, %v4718, %v3401
  %v4849 = vsel %vm4805, %v4720, %v3403
  %v4851 = vsel %vm4805, %v4722, %v3405
  %v4853 = vsel %vm4805, %v4724, %v3407
  %v4855 = vsel %vm4805, %v4726, %v3409
  %v4857 = vsel %vm4805, %v4728, %v3411
  %v4859 = vsel %vm4805, %v4730, %v3413
  %v4861 = vsel %vm4805, %v4732, %v3415
  %v4863 = vsel %vm4805, %v4734, %v3417
  %v4865 = vsel %vm4805, %v4736, %v3419
  %v4867 = vsel %vm4805, %v4738, %v3421
  %v4869 = vsel %vm4805, %v4740, %v3423
  %v4871 = vsel %vm4805, %v4742, %v3425
  %v4873 = vsel %vm4805, %v4744, %v3427
  %v4875 = vsel %vm4805, %v4746, %v3429
  %v4877 = vsel %vm4805, %v4748, %v3431
  %v4879 = vsel %vm4805, %v4750, %v3433
  %v4881 = vsel %vm4805, %v4752, %v3435
  %v4883 = vsel %vm4805, %v4754, %v3437
  %v4885 = vsel %vm4805, %v4756, %v3439
  %v4887 = vsel %vm4805, %v4758, %v3441
  %v4889 = vsel %vm4805, %v4760, %v3443
  %v4891 = vsel %vm4805, %v4762, %v3445
  %v4893 = vsel %vm4805, %v4764, %v3447
  %v4895 = vsel %vm4805, %v4766, %v3449
  %v4897 = vsel %vm4805, %v4768, %v3451
  %v4899 = vsel %vm4805, %v4770, %v3453
  %v4901 = vsel %vm4805, %v4772, %v3455
  %v4903 = vsel %vm4805, %v4774, %v3457
  %v4905 = vsel %vm4805, %v4776, %v3459
  %v4907 = vsel %vm4805, %v4778, %v3461
  %v4909 = vsel %vm4805, %v4780, %v3463
  %v4911 = vsel %vm4805, %v4782, %v3465
  %v4913 = vsel %vm4805, %v4784, %v3467
  %v4915 = vsel %vm4805, %v4786, %v3469
  %v4917 = vsel %vm4805, %v4788, %v3471
  %v4919 = vsel %vm4805, %v4790, %v3473
  %v4921 = vsel %vm4805, %v4792, %v3475
  %v4923 = vsel %vm4805, %v4794, %v3477
  %v4925 = vsel %vm4805, %v4796, %v3479
  %v4927 = vsel %vm4805, %v4798, %v3481
  %v4929 = vsel %vm4805, %v4800, %v3483
  %v4931 = vsel %vm4805, %v4802, %v3485
  %v4933 = vsel %vm4805, %v4804, %v3487
  %vm4934 = vcmask 457728
  %v4936 = vsel %vm4934, %v4807, %v3777
  %v4937 = vsel %vm4934, %v4809, %v3777
  %v4939 = vsel %vm4934, %v4811, %v3779
  %v4940 = vsel %vm4934, %v4813, %v3779
  %v4942 = vsel %vm4934, %v4815, %v3781
  %v4943 = vsel %vm4934, %v4817, %v3781
  %v4945 = vsel %vm4934, %v4819, %v3783
  %v4946 = vsel %vm4934, %v4821, %v3783
  %v4948 = vsel %vm4934, %v4823, %v3785
  %v4949 = vsel %vm4934, %v4825, %v3785
  %v4951 = vsel %vm4934, %v4827, %v3787
  %v4952 = vsel %vm4934, %v4829, %v3787
  %v4954 = vsel %vm4934, %v4831, %v3789
  %v4955 = vsel %vm4934, %v4833, %v3789
  %v4957 = vsel %vm4934, %v4835, %v3791
  %v4958 = vsel %vm4934, %v4837, %v3791
  %v4960 = vsel %vm4934, %v4839, %v3793
  %v4961 = vsel %vm4934, %v4841, %v3793
  %v4963 = vsel %vm4934, %v4843, %v3795
  %v4964 = vsel %vm4934, %v4845, %v3795
  %v4966 = vsel %vm4934, %v4847, %v3797
  %v4967 = vsel %vm4934, %v4849, %v3797
  %v4969 = vsel %vm4934, %v4851, %v3799
  %v4970 = vsel %vm4934, %v4853, %v3799
  %v4972 = vsel %vm4934, %v4855, %v3801
  %v4973 = vsel %vm4934, %v4857, %v3801
  %v4975 = vsel %vm4934, %v4859, %v3803
  %v4976 = vsel %vm4934, %v4861, %v3803
  %v4978 = vsel %vm4934, %v4863, %v3805
  %v4979 = vsel %vm4934, %v4865, %v3805
  %v4981 = vsel %vm4934, %v4867, %v3807
  %v4982 = vsel %vm4934, %v4869, %v3807
  %v4984 = vsel %vm4934, %v4871, %v3809
  %v4985 = vsel %vm4934, %v4873, %v3809
  %v4987 = vsel %vm4934, %v4875, %v3811
  %v4988 = vsel %vm4934, %v4877, %v3811
  %v4990 = vsel %vm4934, %v4879, %v3813
  %v4991 = vsel %vm4934, %v4881, %v3813
  %v4993 = vsel %vm4934, %v4883, %v3815
  %v4994 = vsel %vm4934, %v4885, %v3815
  %v4996 = vsel %vm4934, %v4887, %v3817
  %v4997 = vsel %vm4934, %v4889, %v3817
  %v4999 = vsel %vm4934, %v4891, %v3819
  %v5000 = vsel %vm4934, %v4893, %v3819
  %v5002 = vsel %vm4934, %v4895, %v3821
  %v5003 = vsel %vm4934, %v4897, %v3821
  %v5005 = vsel %vm4934, %v4899, %v3823
  %v5006 = vsel %vm4934, %v4901, %v3823
  %v5008 = vsel %vm4934, %v4903, %v3825
  %v5009 = vsel %vm4934, %v4905, %v3825
  %v5011 = vsel %vm4934, %v4907, %v3827
  %v5012 = vsel %vm4934, %v4909, %v3827
  %v5014 = vsel %vm4934, %v4911, %v3829
  %v5015 = vsel %vm4934, %v4913, %v3829
  %v5017 = vsel %vm4934, %v4915, %v3831
  %v5018 = vsel %vm4934, %v4917, %v3831
  %v5020 = vsel %vm4934, %v4919, %v3833
  %v5021 = vsel %vm4934, %v4921, %v3833
  %v5023 = vsel %vm4934, %v4923, %v3835
  %v5024 = vsel %vm4934, %v4925, %v3835
  %v5026 = vsel %vm4934, %v4927, %v3837
  %v5027 = vsel %vm4934, %v4929, %v3837
  %v5029 = vsel %vm4934, %v4931, %v3839
  %v5030 = vsel %vm4934, %v4933, %v3839
  %vm5031 = vcmask 523264
  %v5033 = vsel %vm5031, %v4936, %v4033
  %v5035 = vsel %vm5031, %v4937, %v4035
  %v5037 = vsel %vm5031, %v4939, %v4037
  %v5039 = vsel %vm5031, %v4940, %v4039
  %v5041 = vsel %vm5031, %v4942, %v4041
  %v5043 = vsel %vm5031, %v4943, %v4043
  %v5045 = vsel %vm5031, %v4945, %v4045
  %v5047 = vsel %vm5031, %v4946, %v4047
  %v5049 = vsel %vm5031, %v4948, %v4049
  %v5051 = vsel %vm5031, %v4949, %v4051
  %v5053 = vsel %vm5031, %v4951, %v4053
  %v5055 = vsel %vm5031, %v4952, %v4055
  %v5057 = vsel %vm5031, %v4954, %v4057
  %v5059 = vsel %vm5031, %v4955, %v4059
  %v5061 = vsel %vm5031, %v4957, %v4061
  %v5063 = vsel %vm5031, %v4958, %v4063
  %v5065 = vsel %vm5031, %v4960, %v4065
  %v5067 = vsel %vm5031, %v4961, %v4067
  %v5069 = vsel %vm5031, %v4963, %v4069
  %v5071 = vsel %vm5031, %v4964, %v4071
  %v5073 = vsel %vm5031, %v4966, %v4073
  %v5075 = vsel %vm5031, %v4967, %v4075
  %v5077 = vsel %vm5031, %v4969, %v4077
  %v5079 = vsel %vm5031, %v4970, %v4079
  %v5081 = vsel %vm5031, %v4972, %v4081
  %v5083 = vsel %vm5031, %v4973, %v4083
  %v5085 = vsel %vm5031, %v4975, %v4085
  %v5087 = vsel %vm5031, %v4976, %v4087
  %v5089 = vsel %vm5031, %v4978, %v4089
  %v5091 = vsel %vm5031, %v4979, %v4091
  %v5093 = vsel %vm5031, %v4981, %v4093
  %v5095 = vsel %vm5031, %v4982, %v4095
  %v5097 = vsel %vm5031, %v4984, %v4097
  %v5099 = vsel %vm5031, %v4985, %v4099
  %v5101 = vsel %vm5031, %v4987, %v4101
  %v5103 = vsel %vm5031, %v4988, %v4103
  %v5105 = vsel %vm5031, %v4990, %v4105
  %v5107 = vsel %vm5031, %v4991, %v4107
  %v5109 = vsel %vm5031, %v4993, %v4109
  %v5111 = vsel %vm5031, %v4994, %v4111
  %v5113 = vsel %vm5031, %v4996, %v4113
  %v5115 = vsel %vm5031, %v4997, %v4115
  %v5117 = vsel %vm5031, %v4999, %v4117
  %v5119 = vsel %vm5031, %v5000, %v4119
  %v5121 = vsel %vm5031, %v5002, %v4121
  %v5123 = vsel %vm5031, %v5003, %v4123
  %v5125 = vsel %vm5031, %v5005, %v4125
  %v5127 = vsel %vm5031, %v5006, %v4127
  %v5129 = vsel %vm5031, %v5008, %v4129
  %v5131 = vsel %vm5031, %v5009, %v4131
  %v5133 = vsel %vm5031, %v5011, %v4133
  %v5135 = vsel %vm5031, %v5012, %v4135
  %v5137 = vsel %vm5031, %v5014, %v4137
  %v5139 = vsel %vm5031, %v5015, %v4139
  %v5141 = vsel %vm5031, %v5017, %v4141
  %v5143 = vsel %vm5031, %v5018, %v4143
  %v5145 = vsel %vm5031, %v5020, %v4145
  %v5147 = vsel %vm5031, %v5021, %v4147
  %v5149 = vsel %vm5031, %v5023, %v4149
  %v5151 = vsel %vm5031, %v5024, %v4151
  %v5153 = vsel %vm5031, %v5026, %v4153
  %v5155 = vsel %vm5031, %v5027, %v4155
  %v5157 = vsel %vm5031, %v5029, %v4157
  %v5159 = vsel %vm5031, %v5030, %v4159
  %vm5160 = vsmask.f32 4352
  %v5161 = vshrl.u32 %v5033, 16
  %v5163 = vrot.slane %v5161, 3
  %v5164 = vshll.u32 %v5033, 16
  %v5166 = vrot.slane %v5164, 4
  %v5167 = vor.u32 %v5163, %v5166
  %v5168 = vshrl.u32 %v5035, 16
  %v5170 = vrot.slane %v5168, 3
  %v5171 = vshll.u32 %v5035, 16
  %v5173 = vrot.slane %v5171, 4
  %v5174 = vor.u32 %v5170, %v5173
  %v5175 = vsel %vm5160, %v5167, %v5174
  %v5176 = vshrl.u32 %v5037, 16
  %v5178 = vrot.slane %v5176, 3
  %v5179 = vshll.u32 %v5037, 16
  %v5181 = vrot.slane %v5179, 4
  %v5182 = vor.u32 %v5178, %v5181
  %v5183 = vshrl.u32 %v5039, 16
  %v5185 = vrot.slane %v5183, 3
  %v5186 = vshll.u32 %v5039, 16
  %v5188 = vrot.slane %v5186, 4
  %v5189 = vor.u32 %v5185, %v5188
  %v5190 = vsel %vm5160, %v5182, %v5189
  %v5191 = vshrl.u32 %v5041, 16
  %v5193 = vrot.slane %v5191, 3
  %v5194 = vshll.u32 %v5041, 16
  %v5196 = vrot.slane %v5194, 4
  %v5197 = vor.u32 %v5193, %v5196
  %v5198 = vshrl.u32 %v5043, 16
  %v5200 = vrot.slane %v5198, 3
  %v5201 = vshll.u32 %v5043, 16
  %v5203 = vrot.slane %v5201, 4
  %v5204 = vor.u32 %v5200, %v5203
  %v5205 = vsel %vm5160, %v5197, %v5204
  %v5206 = vshrl.u32 %v5045, 16
  %v5208 = vrot.slane %v5206, 3
  %v5209 = vshll.u32 %v5045, 16
  %v5211 = vrot.slane %v5209, 4
  %v5212 = vor.u32 %v5208, %v5211
  %v5213 = vshrl.u32 %v5047, 16
  %v5215 = vrot.slane %v5213, 3
  %v5216 = vshll.u32 %v5047, 16
  %v5218 = vrot.slane %v5216, 4
  %v5219 = vor.u32 %v5215, %v5218
  %v5220 = vsel %vm5160, %v5212, %v5219
  %v5221 = vshrl.u32 %v5049, 16
  %v5223 = vrot.slane %v5221, 3
  %v5224 = vshll.u32 %v5049, 16
  %v5226 = vrot.slane %v5224, 4
  %v5227 = vor.u32 %v5223, %v5226
  %v5228 = vshrl.u32 %v5051, 16
  %v5230 = vrot.slane %v5228, 3
  %v5231 = vshll.u32 %v5051, 16
  %v5233 = vrot.slane %v5231, 4
  %v5234 = vor.u32 %v5230, %v5233
  %v5235 = vsel %vm5160, %v5227, %v5234
  %v5236 = vshrl.u32 %v5053, 16
  %v5238 = vrot.slane %v5236, 3
  %v5239 = vshll.u32 %v5053, 16
  %v5241 = vrot.slane %v5239, 4
  %v5242 = vor.u32 %v5238, %v5241
  %v5243 = vshrl.u32 %v5055, 16
  %v5245 = vrot.slane %v5243, 3
  %v5246 = vshll.u32 %v5055, 16
  %v5248 = vrot.slane %v5246, 4
  %v5249 = vor.u32 %v5245, %v5248
  %v5250 = vsel %vm5160, %v5242, %v5249
  %v5251 = vshrl.u32 %v5057, 16
  %v5253 = vrot.slane %v5251, 3
  %v5254 = vshll.u32 %v5057, 16
  %v5256 = vrot.slane %v5254, 4
  %v5257 = vor.u32 %v5253, %v5256
  %v5258 = vshrl.u32 %v5059, 16
  %v5260 = vrot.slane %v5258, 3
  %v5261 = vshll.u32 %v5059, 16
  %v5263 = vrot.slane %v5261, 4
  %v5264 = vor.u32 %v5260, %v5263
  %v5265 = vsel %vm5160, %v5257, %v5264
  %v5266 = vshrl.u32 %v5061, 16
  %v5268 = vrot.slane %v5266, 3
  %v5269 = vshll.u32 %v5061, 16
  %v5271 = vrot.slane %v5269, 4
  %v5272 = vor.u32 %v5268, %v5271
  %v5273 = vshrl.u32 %v5063, 16
  %v5275 = vrot.slane %v5273, 3
  %v5276 = vshll.u32 %v5063, 16
  %v5278 = vrot.slane %v5276, 4
  %v5279 = vor.u32 %v5275, %v5278
  %v5280 = vsel %vm5160, %v5272, %v5279
  %v5281 = vshrl.u32 %v5065, 16
  %v5283 = vrot.slane %v5281, 3
  %v5284 = vshll.u32 %v5065, 16
  %v5286 = vrot.slane %v5284, 4
  %v5287 = vor.u32 %v5283, %v5286
  %v5288 = vshrl.u32 %v5067, 16
  %v5290 = vrot.slane %v5288, 3
  %v5291 = vshll.u32 %v5067, 16
  %v5293 = vrot.slane %v5291, 4
  %v5294 = vor.u32 %v5290, %v5293
  %v5295 = vsel %vm5160, %v5287, %v5294
  %v5296 = vshrl.u32 %v5069, 16
  %v5298 = vrot.slane %v5296, 3
  %v5299 = vshll.u32 %v5069, 16
  %v5301 = vrot.slane %v5299, 4
  %v5302 = vor.u32 %v5298, %v5301
  %v5303 = vshrl.u32 %v5071, 16
  %v5305 = vrot.slane %v5303, 3
  %v5306 = vshll.u32 %v5071, 16
  %v5308 = vrot.slane %v5306, 4
  %v5309 = vor.u32 %v5305, %v5308
  %v5310 = vsel %vm5160, %v5302, %v5309
  %v5311 = vshrl.u32 %v5073, 16
  %v5313 = vrot.slane %v5311, 3
  %v5314 = vshll.u32 %v5073, 16
  %v5316 = vrot.slane %v5314, 4
  %v5317 = vor.u32 %v5313, %v5316
  %v5318 = vshrl.u32 %v5075, 16
  %v5320 = vrot.slane %v5318, 3
  %v5321 = vshll.u32 %v5075, 16
  %v5323 = vrot.slane %v5321, 4
  %v5324 = vor.u32 %v5320, %v5323
  %v5325 = vsel %vm5160, %v5317, %v5324
  %v5326 = vshrl.u32 %v5077, 16
  %v5328 = vrot.slane %v5326, 3
  %v5329 = vshll.u32 %v5077, 16
  %v5331 = vrot.slane %v5329, 4
  %v5332 = vor.u32 %v5328, %v5331
  %v5333 = vshrl.u32 %v5079, 16
  %v5335 = vrot.slane %v5333, 3
  %v5336 = vshll.u32 %v5079, 16
  %v5338 = vrot.slane %v5336, 4
  %v5339 = vor.u32 %v5335, %v5338
  %v5340 = vsel %vm5160, %v5332, %v5339
  %v5341 = vshrl.u32 %v5081, 16
  %v5343 = vrot.slane %v5341, 3
  %v5344 = vshll.u32 %v5081, 16
  %v5346 = vrot.slane %v5344, 4
  %v5347 = vor.u32 %v5343, %v5346
  %v5348 = vshrl.u32 %v5083, 16
  %v5350 = vrot.slane %v5348, 3
  %v5351 = vshll.u32 %v5083, 16
  %v5353 = vrot.slane %v5351, 4
  %v5354 = vor.u32 %v5350, %v5353
  %v5355 = vsel %vm5160, %v5347, %v5354
  %v5356 = vshrl.u32 %v5085, 16
  %v5358 = vrot.slane %v5356, 3
  %v5359 = vshll.u32 %v5085, 16
  %v5361 = vrot.slane %v5359, 4
  %v5362 = vor.u32 %v5358, %v5361
  %v5363 = vshrl.u32 %v5087, 16
  %v5365 = vrot.slane %v5363, 3
  %v5366 = vshll.u32 %v5087, 16
  %v5368 = vrot.slane %v5366, 4
  %v5369 = vor.u32 %v5365, %v5368
  %v5370 = vsel %vm5160, %v5362, %v5369
  %v5371 = vshrl.u32 %v5089, 16
  %v5373 = vrot.slane %v5371, 3
  %v5374 = vshll.u32 %v5089, 16
  %v5376 = vrot.slane %v5374, 4
  %v5377 = vor.u32 %v5373, %v5376
  %v5378 = vshrl.u32 %v5091, 16
  %v5380 = vrot.slane %v5378, 3
  %v5381 = vshll.u32 %v5091, 16
  %v5383 = vrot.slane %v5381, 4
  %v5384 = vor.u32 %v5380, %v5383
  %v5385 = vsel %vm5160, %v5377, %v5384
  %v5386 = vshrl.u32 %v5093, 16
  %v5388 = vrot.slane %v5386, 3
  %v5389 = vshll.u32 %v5093, 16
  %v5391 = vrot.slane %v5389, 4
  %v5392 = vor.u32 %v5388, %v5391
  %v5393 = vshrl.u32 %v5095, 16
  %v5395 = vrot.slane %v5393, 3
  %v5396 = vshll.u32 %v5095, 16
  %v5398 = vrot.slane %v5396, 4
  %v5399 = vor.u32 %v5395, %v5398
  %v5400 = vsel %vm5160, %v5392, %v5399
  %v5401 = vshrl.u32 %v5097, 16
  %v5403 = vrot.slane %v5401, 3
  %v5404 = vshll.u32 %v5097, 16
  %v5406 = vrot.slane %v5404, 4
  %v5407 = vor.u32 %v5403, %v5406
  %v5408 = vshrl.u32 %v5099, 16
  %v5410 = vrot.slane %v5408, 3
  %v5411 = vshll.u32 %v5099, 16
  %v5413 = vrot.slane %v5411, 4
  %v5414 = vor.u32 %v5410, %v5413
  %v5415 = vsel %vm5160, %v5407, %v5414
  %v5416 = vshrl.u32 %v5101, 16
  %v5418 = vrot.slane %v5416, 3
  %v5419 = vshll.u32 %v5101, 16
  %v5421 = vrot.slane %v5419, 4
  %v5422 = vor.u32 %v5418, %v5421
  %v5423 = vshrl.u32 %v5103, 16
  %v5425 = vrot.slane %v5423, 3
  %v5426 = vshll.u32 %v5103, 16
  %v5428 = vrot.slane %v5426, 4
  %v5429 = vor.u32 %v5425, %v5428
  %v5430 = vsel %vm5160, %v5422, %v5429
  %v5431 = vshrl.u32 %v5105, 16
  %v5433 = vrot.slane %v5431, 3
  %v5434 = vshll.u32 %v5105, 16
  %v5436 = vrot.slane %v5434, 4
  %v5437 = vor.u32 %v5433, %v5436
  %v5438 = vshrl.u32 %v5107, 16
  %v5440 = vrot.slane %v5438, 3
  %v5441 = vshll.u32 %v5107, 16
  %v5443 = vrot.slane %v5441, 4
  %v5444 = vor.u32 %v5440, %v5443
  %v5445 = vsel %vm5160, %v5437, %v5444
  %v5446 = vshrl.u32 %v5109, 16
  %v5448 = vrot.slane %v5446, 3
  %v5449 = vshll.u32 %v5109, 16
  %v5451 = vrot.slane %v5449, 4
  %v5452 = vor.u32 %v5448, %v5451
  %v5453 = vshrl.u32 %v5111, 16
  %v5455 = vrot.slane %v5453, 3
  %v5456 = vshll.u32 %v5111, 16
  %v5458 = vrot.slane %v5456, 4
  %v5459 = vor.u32 %v5455, %v5458
  %v5460 = vsel %vm5160, %v5452, %v5459
  %v5461 = vshrl.u32 %v5113, 16
  %v5463 = vrot.slane %v5461, 3
  %v5464 = vshll.u32 %v5113, 16
  %v5466 = vrot.slane %v5464, 4
  %v5467 = vor.u32 %v5463, %v5466
  %v5468 = vshrl.u32 %v5115, 16
  %v5470 = vrot.slane %v5468, 3
  %v5471 = vshll.u32 %v5115, 16
  %v5473 = vrot.slane %v5471, 4
  %v5474 = vor.u32 %v5470, %v5473
  %v5475 = vsel %vm5160, %v5467, %v5474
  %v5476 = vshrl.u32 %v5117, 16
  %v5478 = vrot.slane %v5476, 3
  %v5479 = vshll.u32 %v5117, 16
  %v5481 = vrot.slane %v5479, 4
  %v5482 = vor.u32 %v5478, %v5481
  %v5483 = vshrl.u32 %v5119, 16
  %v5485 = vrot.slane %v5483, 3
  %v5486 = vshll.u32 %v5119, 16
  %v5488 = vrot.slane %v5486, 4
  %v5489 = vor.u32 %v5485, %v5488
  %v5490 = vsel %vm5160, %v5482, %v5489
  %v5491 = vshrl.u32 %v5121, 16
  %v5493 = vrot.slane %v5491, 3
  %v5494 = vshll.u32 %v5121, 16
  %v5496 = vrot.slane %v5494, 4
  %v5497 = vor.u32 %v5493, %v5496
  %v5498 = vshrl.u32 %v5123, 16
  %v5500 = vrot.slane %v5498, 3
  %v5501 = vshll.u32 %v5123, 16
  %v5503 = vrot.slane %v5501, 4
  %v5504 = vor.u32 %v5500, %v5503
  %v5505 = vsel %vm5160, %v5497, %v5504
  %v5506 = vshrl.u32 %v5125, 16
  %v5508 = vrot.slane %v5506, 3
  %v5509 = vshll.u32 %v5125, 16
  %v5511 = vrot.slane %v5509, 4
  %v5512 = vor.u32 %v5508, %v5511
  %v5513 = vshrl.u32 %v5127, 16
  %v5515 = vrot.slane %v5513, 3
  %v5516 = vshll.u32 %v5127, 16
  %v5518 = vrot.slane %v5516, 4
  %v5519 = vor.u32 %v5515, %v5518
  %v5520 = vsel %vm5160, %v5512, %v5519
  %v5521 = vshrl.u32 %v5129, 16
  %v5523 = vrot.slane %v5521, 3
  %v5524 = vshll.u32 %v5129, 16
  %v5526 = vrot.slane %v5524, 4
  %v5527 = vor.u32 %v5523, %v5526
  %v5528 = vshrl.u32 %v5131, 16
  %v5530 = vrot.slane %v5528, 3
  %v5531 = vshll.u32 %v5131, 16
  %v5533 = vrot.slane %v5531, 4
  %v5534 = vor.u32 %v5530, %v5533
  %v5535 = vsel %vm5160, %v5527, %v5534
  %v5536 = vshrl.u32 %v5133, 16
  %v5538 = vrot.slane %v5536, 3
  %v5539 = vshll.u32 %v5133, 16
  %v5541 = vrot.slane %v5539, 4
  %v5542 = vor.u32 %v5538, %v5541
  %v5543 = vshrl.u32 %v5135, 16
  %v5545 = vrot.slane %v5543, 3
  %v5546 = vshll.u32 %v5135, 16
  %v5548 = vrot.slane %v5546, 4
  %v5549 = vor.u32 %v5545, %v5548
  %v5550 = vsel %vm5160, %v5542, %v5549
  %v5551 = vshrl.u32 %v5137, 16
  %v5553 = vrot.slane %v5551, 3
  %v5554 = vshll.u32 %v5137, 16
  %v5556 = vrot.slane %v5554, 4
  %v5557 = vor.u32 %v5553, %v5556
  %v5558 = vshrl.u32 %v5139, 16
  %v5560 = vrot.slane %v5558, 3
  %v5561 = vshll.u32 %v5139, 16
  %v5563 = vrot.slane %v5561, 4
  %v5564 = vor.u32 %v5560, %v5563
  %v5565 = vsel %vm5160, %v5557, %v5564
  %v5566 = vshrl.u32 %v5141, 16
  %v5568 = vrot.slane %v5566, 3
  %v5569 = vshll.u32 %v5141, 16
  %v5571 = vrot.slane %v5569, 4
  %v5572 = vor.u32 %v5568, %v5571
  %v5573 = vshrl.u32 %v5143, 16
  %v5575 = vrot.slane %v5573, 3
  %v5576 = vshll.u32 %v5143, 16
  %v5578 = vrot.slane %v5576, 4
  %v5579 = vor.u32 %v5575, %v5578
  %v5580 = vsel %vm5160, %v5572, %v5579
  %v5581 = vshrl.u32 %v5145, 16
  %v5583 = vrot.slane %v5581, 3
  %v5584 = vshll.u32 %v5145, 16
  %v5586 = vrot.slane %v5584, 4
  %v5587 = vor.u32 %v5583, %v5586
  %v5588 = vshrl.u32 %v5147, 16
  %v5590 = vrot.slane %v5588, 3
  %v5591 = vshll.u32 %v5147, 16
  %v5593 = vrot.slane %v5591, 4
  %v5594 = vor.u32 %v5590, %v5593
  %v5595 = vsel %vm5160, %v5587, %v5594
  %v5596 = vshrl.u32 %v5149, 16
  %v5598 = vrot.slane %v5596, 3
  %v5599 = vshll.u32 %v5149, 16
  %v5601 = vrot.slane %v5599, 4
  %v5602 = vor.u32 %v5598, %v5601
  %v5603 = vshrl.u32 %v5151, 16
  %v5605 = vrot.slane %v5603, 3
  %v5606 = vshll.u32 %v5151, 16
  %v5608 = vrot.slane %v5606, 4
  %v5609 = vor.u32 %v5605, %v5608
  %v5610 = vsel %vm5160, %v5602, %v5609
  %v5611 = vshrl.u32 %v5153, 16
  %v5613 = vrot.slane %v5611, 3
  %v5614 = vshll.u32 %v5153, 16
  %v5616 = vrot.slane %v5614, 4
  %v5617 = vor.u32 %v5613, %v5616
  %v5618 = vshrl.u32 %v5155, 16
  %v5620 = vrot.slane %v5618, 3
  %v5621 = vshll.u32 %v5155, 16
  %v5623 = vrot.slane %v5621, 4
  %v5624 = vor.u32 %v5620, %v5623
  %v5625 = vsel %vm5160, %v5617, %v5624
  %v5626 = vshrl.u32 %v5157, 16
  %v5628 = vrot.slane %v5626, 3
  %v5629 = vshll.u32 %v5157, 16
  %v5631 = vrot.slane %v5629, 4
  %v5632 = vor.u32 %v5628, %v5631
  %v5633 = vshrl.u32 %v5159, 16
  %v5635 = vrot.slane %v5633, 3
  %v5636 = vshll.u32 %v5159, 16
  %v5638 = vrot.slane %v5636, 4
  %v5639 = vor.u32 %v5635, %v5638
  %v5640 = vsel %vm5160, %v5632, %v5639
  %v5641 = vld [vmem:[%s3] sm:$0xf]
  %v5642 = vld [vmem:[%s3 + $0x4] sm:$0xf]
  %v5643 = vld [vmem:[%s3 + $0x8] sm:$0xf]
  %v5644 = vld [vmem:[%s3 + $0xc] sm:$0xf]
  %v5645 = vld [vmem:[%s3 + $0x10] sm:$0xf]
  %v5646 = vld [vmem:[%s3 + $0x14] sm:$0xf]
  %v5647 = vld [vmem:[%s3 + $0x18] sm:$0xf]
  %v5648 = vld [vmem:[%s3 + $0x1c] sm:$0xf]
  %v5649 = vld [vmem:[%s3 + $0x20] sm:$0xf]
  %v5659 = vunpack.c.l.b16 %v5641
  %v5660 = vunpack.c.l.b16 %v5642
  %v5661 = vunpack.c.l.b16 %v5643
  %v5662 = vunpack.c.l.b16 %v5644
  %v5663 = vunpack.c.l.b16 %v5645
  %v5664 = vunpack.c.l.b16 %v5646
  %v5665 = vunpack.c.l.b16 %v5647
  %v5666 = vunpack.c.l.b16 %v5648
  %v5667 = vunpack.c.l.b16 %v5649
  %v5668 = vpack.c.b16 %v5660, %v5659
  %v5669 = vpack.c.b16 %v5662, %v5661
  %v5670 = vpack.c.b16 %v5664, %v5663
  %v5671 = vpack.c.b16 %v5666, %v5665
  %v5672 = vpack.c.b16 %v5667, %v5667
  %vm5677 = vcmask 588800
  %v5679 = vsel %vm5677, %v5175, 0
  %v5682 = vsel %vm5677, %v5190, 0
  %v5685 = vsel %vm5677, %v5205, 0
  %v5688 = vsel %vm5677, %v5220, 0
  %v5691 = vsel %vm5677, %v5235, 0
  %v5694 = vsel %vm5677, %v5250, 0
  %v5697 = vsel %vm5677, %v5265, 0
  %v5700 = vsel %vm5677, %v5280, 0
  %v5703 = vsel %vm5677, %v5295, 0
  %v5706 = vsel %vm5677, %v5310, 0
  %v5709 = vsel %vm5677, %v5325, 0
  %v5712 = vsel %vm5677, %v5340, 0
  %v5715 = vsel %vm5677, %v5355, 0
  %v5718 = vsel %vm5677, %v5370, 0
  %v5721 = vsel %vm5677, %v5385, 0
  %v5724 = vsel %vm5677, %v5400, 0
  %v5727 = vsel %vm5677, %v5415, 0
  %v5730 = vsel %vm5677, %v5430, 0
  %v5733 = vsel %vm5677, %v5445, 0
  %v5736 = vsel %vm5677, %v5460, 0
  %v5739 = vsel %vm5677, %v5475, 0
  %v5742 = vsel %vm5677, %v5490, 0
  %v5745 = vsel %vm5677, %v5505, 0
  %v5748 = vsel %vm5677, %v5520, 0
  %v5751 = vsel %vm5677, %v5535, 0
  %v5754 = vsel %vm5677, %v5550, 0
  %v5757 = vsel %vm5677, %v5565, 0
  %v5760 = vsel %vm5677, %v5580, 0
  %v5763 = vsel %vm5677, %v5595, 0
  %v5766 = vsel %vm5677, %v5610, 0
  %v5769 = vsel %vm5677, %v5625, 0
  %v5772 = vsel %vm5677, %v5640, 0
  %vm5774 = vcmask 1043456
  %v5776 = vsel %vm5774, %v5672, 0
  %5778 = vmatpush.bf16.msra.mxu0 0
  %5779 = vmatpush.bf16.msra.mxu0 0
  %5780 = vmatpush.bf16.msra.mxu0 0
  %5781 = vmatpush.bf16.msra.mxu0 %v5776
  %5782 = vmatpush.bf16.msra.mxu0 %v5671
  %5783 = vmatpush.bf16.msra.mxu0 %v5670
  %5784 = vmatpush.bf16.msra.mxu0 %v5669
  %5785 = vmatpush.bf16.msra.mxu0 %v5668
  %5786 = vmatmul.bf16.gmra.mxu0 %v5679
  %v5787 = vpop.f32.mrf.mxu0
  %v5788 = vadd.f32 0.0, %v5787
  %v5789 = vpop.f32.mrf.mxu0
  %v5790 = vadd.f32 0.0, %v5789
  %5791 = vmatmul.bf16.gmra.mxu0 %v5682
  %v5792 = vpop.f32.mrf.mxu0
  %v5793 = vadd.f32 0.0, %v5792
  %v5794 = vpop.f32.mrf.mxu0
  %v5795 = vadd.f32 0.0, %v5794
  %5796 = vmatmul.bf16.gmra.mxu0 %v5685
  %v5797 = vpop.f32.mrf.mxu0
  %v5798 = vadd.f32 0.0, %v5797
  %v5799 = vpop.f32.mrf.mxu0
  %v5800 = vadd.f32 0.0, %v5799
  %5801 = vmatmul.bf16.gmra.mxu0 %v5688
  %v5802 = vpop.f32.mrf.mxu0
  %v5803 = vadd.f32 0.0, %v5802
  %v5804 = vpop.f32.mrf.mxu0
  %v5805 = vadd.f32 0.0, %v5804
  %5806 = vmatmul.bf16.gmra.mxu0 %v5691
  %v5807 = vpop.f32.mrf.mxu0
  %v5808 = vadd.f32 0.0, %v5807
  %v5809 = vpop.f32.mrf.mxu0
  %v5810 = vadd.f32 0.0, %v5809
  %5811 = vmatmul.bf16.gmra.mxu0 %v5694
  %v5812 = vpop.f32.mrf.mxu0
  %v5813 = vadd.f32 0.0, %v5812
  %v5814 = vpop.f32.mrf.mxu0
  %v5815 = vadd.f32 0.0, %v5814
  %5816 = vmatmul.bf16.gmra.mxu0 %v5697
  %v5817 = vpop.f32.mrf.mxu0
  %v5818 = vadd.f32 0.0, %v5817
  %v5819 = vpop.f32.mrf.mxu0
  %v5820 = vadd.f32 0.0, %v5819
  %5821 = vmatmul.bf16.gmra.mxu0 %v5700
  %v5822 = vpop.f32.mrf.mxu0
  %v5823 = vadd.f32 0.0, %v5822
  %v5824 = vpop.f32.mrf.mxu0
  %v5825 = vadd.f32 0.0, %v5824
  %5826 = vmatmul.bf16.gmra.mxu0 %v5703
  %v5827 = vpop.f32.mrf.mxu0
  %v5828 = vadd.f32 0.0, %v5827
  %v5829 = vpop.f32.mrf.mxu0
  %v5830 = vadd.f32 0.0, %v5829
  %5831 = vmatmul.bf16.gmra.mxu0 %v5706
  %v5832 = vpop.f32.mrf.mxu0
  %v5833 = vadd.f32 0.0, %v5832
  %v5834 = vpop.f32.mrf.mxu0
  %v5835 = vadd.f32 0.0, %v5834
  %5836 = vmatmul.bf16.gmra.mxu0 %v5709
  %v5837 = vpop.f32.mrf.mxu0
  %v5838 = vadd.f32 0.0, %v5837
  %v5839 = vpop.f32.mrf.mxu0
  %v5840 = vadd.f32 0.0, %v5839
  %5841 = vmatmul.bf16.gmra.mxu0 %v5712
  %v5842 = vpop.f32.mrf.mxu0
  %v5843 = vadd.f32 0.0, %v5842
  %v5844 = vpop.f32.mrf.mxu0
  %v5845 = vadd.f32 0.0, %v5844
  %5846 = vmatmul.bf16.gmra.mxu0 %v5715
  %v5847 = vpop.f32.mrf.mxu0
  %v5848 = vadd.f32 0.0, %v5847
  %v5849 = vpop.f32.mrf.mxu0
  %v5850 = vadd.f32 0.0, %v5849
  %5851 = vmatmul.bf16.gmra.mxu0 %v5718
  %v5852 = vpop.f32.mrf.mxu0
  %v5853 = vadd.f32 0.0, %v5852
  %v5854 = vpop.f32.mrf.mxu0
  %v5855 = vadd.f32 0.0, %v5854
  %5856 = vmatmul.bf16.gmra.mxu0 %v5721
  %v5857 = vpop.f32.mrf.mxu0
  %v5858 = vadd.f32 0.0, %v5857
  %v5859 = vpop.f32.mrf.mxu0
  %v5860 = vadd.f32 0.0, %v5859
  %5861 = vmatmul.bf16.gmra.mxu0 %v5724
  %v5862 = vpop.f32.mrf.mxu0
  %v5863 = vadd.f32 0.0, %v5862
  %v5864 = vpop.f32.mrf.mxu0
  %v5865 = vadd.f32 0.0, %v5864
  %5866 = vmatmul.bf16.gmra.mxu0 %v5727
  %v5867 = vpop.f32.mrf.mxu0
  %v5868 = vadd.f32 0.0, %v5867
  %v5869 = vpop.f32.mrf.mxu0
  %v5870 = vadd.f32 0.0, %v5869
  %5871 = vmatmul.bf16.gmra.mxu0 %v5730
  %v5872 = vpop.f32.mrf.mxu0
  %v5873 = vadd.f32 0.0, %v5872
  %v5874 = vpop.f32.mrf.mxu0
  %v5875 = vadd.f32 0.0, %v5874
  %5876 = vmatmul.bf16.gmra.mxu0 %v5733
  %v5877 = vpop.f32.mrf.mxu0
  %v5878 = vadd.f32 0.0, %v5877
  %v5879 = vpop.f32.mrf.mxu0
  %v5880 = vadd.f32 0.0, %v5879
  %5881 = vmatmul.bf16.gmra.mxu0 %v5736
  %v5882 = vpop.f32.mrf.mxu0
  %v5883 = vadd.f32 0.0, %v5882
  %v5884 = vpop.f32.mrf.mxu0
  %v5885 = vadd.f32 0.0, %v5884
  %5886 = vmatmul.bf16.gmra.mxu0 %v5739
  %v5887 = vpop.f32.mrf.mxu0
  %v5888 = vadd.f32 0.0, %v5887
  %v5889 = vpop.f32.mrf.mxu0
  %v5890 = vadd.f32 0.0, %v5889
  %5891 = vmatmul.bf16.gmra.mxu0 %v5742
  %v5892 = vpop.f32.mrf.mxu0
  %v5893 = vadd.f32 0.0, %v5892
  %v5894 = vpop.f32.mrf.mxu0
  %v5895 = vadd.f32 0.0, %v5894
  %5896 = vmatmul.bf16.gmra.mxu0 %v5745
  %v5897 = vpop.f32.mrf.mxu0
  %v5898 = vadd.f32 0.0, %v5897
  %v5899 = vpop.f32.mrf.mxu0
  %v5900 = vadd.f32 0.0, %v5899
  %5901 = vmatmul.bf16.gmra.mxu0 %v5748
  %v5902 = vpop.f32.mrf.mxu0
  %v5903 = vadd.f32 0.0, %v5902
  %v5904 = vpop.f32.mrf.mxu0
  %v5905 = vadd.f32 0.0, %v5904
  %5906 = vmatmul.bf16.gmra.mxu0 %v5751
  %v5907 = vpop.f32.mrf.mxu0
  %v5908 = vadd.f32 0.0, %v5907
  %v5909 = vpop.f32.mrf.mxu0
  %v5910 = vadd.f32 0.0, %v5909
  %5911 = vmatmul.bf16.gmra.mxu0 %v5754
  %v5912 = vpop.f32.mrf.mxu0
  %v5913 = vadd.f32 0.0, %v5912
  %v5914 = vpop.f32.mrf.mxu0
  %v5915 = vadd.f32 0.0, %v5914
  %5916 = vmatmul.bf16.gmra.mxu0 %v5757
  %v5917 = vpop.f32.mrf.mxu0
  %v5918 = vadd.f32 0.0, %v5917
  %v5919 = vpop.f32.mrf.mxu0
  %v5920 = vadd.f32 0.0, %v5919
  %5921 = vmatmul.bf16.gmra.mxu0 %v5760
  %v5922 = vpop.f32.mrf.mxu0
  %v5923 = vadd.f32 0.0, %v5922
  %v5924 = vpop.f32.mrf.mxu0
  %v5925 = vadd.f32 0.0, %v5924
  %5926 = vmatmul.bf16.gmra.mxu0 %v5763
  %v5927 = vpop.f32.mrf.mxu0
  %v5928 = vadd.f32 0.0, %v5927
  %v5929 = vpop.f32.mrf.mxu0
  %v5930 = vadd.f32 0.0, %v5929
  %5931 = vmatmul.bf16.gmra.mxu0 %v5766
  %v5932 = vpop.f32.mrf.mxu0
  %v5933 = vadd.f32 0.0, %v5932
  %v5934 = vpop.f32.mrf.mxu0
  %v5935 = vadd.f32 0.0, %v5934
  %5936 = vmatmul.bf16.gmra.mxu0 %v5769
  %v5937 = vpop.f32.mrf.mxu0
  %v5938 = vadd.f32 0.0, %v5937
  %v5939 = vpop.f32.mrf.mxu0
  %v5940 = vadd.f32 0.0, %v5939
  %5941 = vmatmul.bf16.gmra.mxu0 %v5772
  %v5942 = vpop.f32.mrf.mxu0
  %v5943 = vadd.f32 0.0, %v5942
  %v5944 = vpop.f32.mrf.mxu0
  %v5945 = vadd.f32 0.0, %v5944
  %5946 = vdwg.mxu0
  %v5947 = vpack.c.bf16 %v5788, %v5788
  %v5948 = vpack.c.bf16 %v5790, %v5790
  %v5949 = vpack.c.bf16 %v5793, %v5793
  %v5950 = vpack.c.bf16 %v5795, %v5795
  %v5951 = vpack.c.bf16 %v5798, %v5798
  %v5952 = vpack.c.bf16 %v5800, %v5800
  %v5953 = vpack.c.bf16 %v5803, %v5803
  %v5954 = vpack.c.bf16 %v5805, %v5805
  %v5955 = vpack.c.bf16 %v5808, %v5808
  %v5956 = vpack.c.bf16 %v5810, %v5810
  %v5957 = vpack.c.bf16 %v5813, %v5813
  %v5958 = vpack.c.bf16 %v5815, %v5815
  %v5959 = vpack.c.bf16 %v5818, %v5818
  %v5960 = vpack.c.bf16 %v5820, %v5820
  %v5961 = vpack.c.bf16 %v5823, %v5823
  %v5962 = vpack.c.bf16 %v5825, %v5825
  %v5963 = vpack.c.bf16 %v5828, %v5828
  %v5964 = vpack.c.bf16 %v5830, %v5830
  %v5965 = vpack.c.bf16 %v5833, %v5833
  %v5966 = vpack.c.bf16 %v5835, %v5835
  %v5967 = vpack.c.bf16 %v5838, %v5838
  %v5968 = vpack.c.bf16 %v5840, %v5840
  %v5969 = vpack.c.bf16 %v5843, %v5843
  %v5970 = vpack.c.bf16 %v5845, %v5845
  %v5971 = vpack.c.bf16 %v5848, %v5848
  %v5972 = vpack.c.bf16 %v5850, %v5850
  %v5973 = vpack.c.bf16 %v5853, %v5853
  %v5974 = vpack.c.bf16 %v5855, %v5855
  %v5975 = vpack.c.bf16 %v5858, %v5858
  %v5976 = vpack.c.bf16 %v5860, %v5860
  %v5977 = vpack.c.bf16 %v5863, %v5863
  %v5978 = vpack.c.bf16 %v5865, %v5865
  %v5979 = vpack.c.bf16 %v5868, %v5868
  %v5980 = vpack.c.bf16 %v5870, %v5870
  %v5981 = vpack.c.bf16 %v5873, %v5873
  %v5982 = vpack.c.bf16 %v5875, %v5875
  %v5983 = vpack.c.bf16 %v5878, %v5878
  %v5984 = vpack.c.bf16 %v5880, %v5880
  %v5985 = vpack.c.bf16 %v5883, %v5883
  %v5986 = vpack.c.bf16 %v5885, %v5885
  %v5987 = vpack.c.bf16 %v5888, %v5888
  %v5988 = vpack.c.bf16 %v5890, %v5890
  %v5989 = vpack.c.bf16 %v5893, %v5893
  %v5990 = vpack.c.bf16 %v5895, %v5895
  %v5991 = vpack.c.bf16 %v5898, %v5898
  %v5992 = vpack.c.bf16 %v5900, %v5900
  %v5993 = vpack.c.bf16 %v5903, %v5903
  %v5994 = vpack.c.bf16 %v5905, %v5905
  %v5995 = vpack.c.bf16 %v5908, %v5908
  %v5996 = vpack.c.bf16 %v5910, %v5910
  %v5997 = vpack.c.bf16 %v5913, %v5913
  %v5998 = vpack.c.bf16 %v5915, %v5915
  %v5999 = vpack.c.bf16 %v5918, %v5918
  %v6000 = vpack.c.bf16 %v5920, %v5920
  %v6001 = vpack.c.bf16 %v5923, %v5923
  %v6002 = vpack.c.bf16 %v5925, %v5925
  %v6003 = vpack.c.bf16 %v5928, %v5928
  %v6004 = vpack.c.bf16 %v5930, %v5930
  %v6005 = vpack.c.bf16 %v5933, %v5933
  %v6006 = vpack.c.bf16 %v5935, %v5935
  %v6007 = vpack.c.bf16 %v5938, %v5938
  %v6008 = vpack.c.bf16 %v5940, %v5940
  %v6009 = vpack.c.bf16 %v5943, %v5943
  %v6010 = vpack.c.bf16 %v5945, %v5945
  %6011 = vst.msk [vmem:[%s4] sm:$0xf] %vm419, %v5947
  %6012 = vst.msk [vmem:[%s4 + $0x4] sm:$0xf] %vm419, %v5948
  %6013 = vst.msk [vmem:[%s4 + $0x8] sm:$0xf] %vm419, %v5949
  %6014 = vst.msk [vmem:[%s4 + $0xc] sm:$0xf] %vm419, %v5950
  %6015 = vst.msk [vmem:[%s4 + $0x10] sm:$0xf] %vm419, %v5951
  %6016 = vst.msk [vmem:[%s4 + $0x14] sm:$0xf] %vm419, %v5952
  %6017 = vst.msk [vmem:[%s4 + $0x18] sm:$0xf] %vm419, %v5953
  %6018 = vst.msk [vmem:[%s4 + $0x1c] sm:$0xf] %vm419, %v5954
  %6019 = vst.msk [vmem:[%s4 + $0x20] sm:$0xf] %vm419, %v5955
  %6020 = vst.msk [vmem:[%s4 + $0x24] sm:$0xf] %vm419, %v5956
  %6021 = vst.msk [vmem:[%s4 + $0x28] sm:$0xf] %vm419, %v5957
  %6022 = vst.msk [vmem:[%s4 + $0x2c] sm:$0xf] %vm419, %v5958
  %6023 = vst.msk [vmem:[%s4 + $0x30] sm:$0xf] %vm419, %v5959
  %6024 = vst.msk [vmem:[%s4 + $0x34] sm:$0xf] %vm419, %v5960
  %6025 = vst.msk [vmem:[%s4 + $0x38] sm:$0xf] %vm419, %v5961
  %6026 = vst.msk [vmem:[%s4 + $0x3c] sm:$0xf] %vm419, %v5962
  %6027 = vst.msk [vmem:[%s4 + $0x40] sm:$0xf] %vm419, %v5963
  %6028 = vst.msk [vmem:[%s4 + $0x44] sm:$0xf] %vm419, %v5964
  %6029 = vst.msk [vmem:[%s4 + $0x48] sm:$0xf] %vm419, %v5965
  %6030 = vst.msk [vmem:[%s4 + $0x4c] sm:$0xf] %vm419, %v5966
  %6031 = vst.msk [vmem:[%s4 + $0x50] sm:$0xf] %vm419, %v5967
  %6032 = vst.msk [vmem:[%s4 + $0x54] sm:$0xf] %vm419, %v5968
  %6033 = vst.msk [vmem:[%s4 + $0x58] sm:$0xf] %vm419, %v5969
  %6034 = vst.msk [vmem:[%s4 + $0x5c] sm:$0xf] %vm419, %v5970
  %6035 = vst.msk [vmem:[%s4 + $0x60] sm:$0xf] %vm419, %v5971
  %6036 = vst.msk [vmem:[%s4 + $0x64] sm:$0xf] %vm419, %v5972
  %6037 = vst.msk [vmem:[%s4 + $0x68] sm:$0xf] %vm419, %v5973
  %6038 = vst.msk [vmem:[%s4 + $0x6c] sm:$0xf] %vm419, %v5974
  %6039 = vst.msk [vmem:[%s4 + $0x70] sm:$0xf] %vm419, %v5975
  %6040 = vst.msk [vmem:[%s4 + $0x74] sm:$0xf] %vm419, %v5976
  %6041 = vst.msk [vmem:[%s4 + $0x78] sm:$0xf] %vm419, %v5977
  %6042 = vst.msk [vmem:[%s4 + $0x7c] sm:$0xf] %vm419, %v5978
  %6043 = vst.msk [vmem:[%s4 + $0x80] sm:$0xf] %vm419, %v5979
  %6044 = vst.msk [vmem:[%s4 + $0x84] sm:$0xf] %vm419, %v5980
  %6045 = vst.msk [vmem:[%s4 + $0x88] sm:$0xf] %vm419, %v5981
  %6046 = vst.msk [vmem:[%s4 + $0x8c] sm:$0xf] %vm419, %v5982
  %6047 = vst.msk [vmem:[%s4 + $0x90] sm:$0xf] %vm419, %v5983
  %6048 = vst.msk [vmem:[%s4 + $0x94] sm:$0xf] %vm419, %v5984
  %6049 = vst.msk [vmem:[%s4 + $0x98] sm:$0xf] %vm419, %v5985
  %6050 = vst.msk [vmem:[%s4 + $0x9c] sm:$0xf] %vm419, %v5986
  %6051 = vst.msk [vmem:[%s4 + $0xa0] sm:$0xf] %vm419, %v5987
  %6052 = vst.msk [vmem:[%s4 + $0xa4] sm:$0xf] %vm419, %v5988
  %6053 = vst.msk [vmem:[%s4 + $0xa8] sm:$0xf] %vm419, %v5989
  %6054 = vst.msk [vmem:[%s4 + $0xac] sm:$0xf] %vm419, %v5990
  %6055 = vst.msk [vmem:[%s4 + $0xb0] sm:$0xf] %vm419, %v5991
  %6056 = vst.msk [vmem:[%s4 + $0xb4] sm:$0xf] %vm419, %v5992
  %6057 = vst.msk [vmem:[%s4 + $0xb8] sm:$0xf] %vm419, %v5993
  %6058 = vst.msk [vmem:[%s4 + $0xbc] sm:$0xf] %vm419, %v5994
  %6059 = vst.msk [vmem:[%s4 + $0xc0] sm:$0xf] %vm419, %v5995
  %6060 = vst.msk [vmem:[%s4 + $0xc4] sm:$0xf] %vm419, %v5996
  %6061 = vst.msk [vmem:[%s4 + $0xc8] sm:$0xf] %vm419, %v5997
  %6062 = vst.msk [vmem:[%s4 + $0xcc] sm:$0xf] %vm419, %v5998
  %6063 = vst.msk [vmem:[%s4 + $0xd0] sm:$0xf] %vm419, %v5999
  %6064 = vst.msk [vmem:[%s4 + $0xd4] sm:$0xf] %vm419, %v6000
  %6065 = vst.msk [vmem:[%s4 + $0xd8] sm:$0xf] %vm419, %v6001
  %6066 = vst.msk [vmem:[%s4 + $0xdc] sm:$0xf] %vm419, %v6002
  %6067 = vst.msk [vmem:[%s4 + $0xe0] sm:$0xf] %vm419, %v6003
  %6068 = vst.msk [vmem:[%s4 + $0xe4] sm:$0xf] %vm419, %v6004
  %6069 = vst.msk [vmem:[%s4 + $0xe8] sm:$0xf] %vm419, %v6005
  %6070 = vst.msk [vmem:[%s4 + $0xec] sm:$0xf] %vm419, %v6006
  %6071 = vst.msk [vmem:[%s4 + $0xf0] sm:$0xf] %vm419, %v6007
  %6072 = vst.msk [vmem:[%s4 + $0xf4] sm:$0xf] %vm419, %v6008
  %6073 = vst.msk [vmem:[%s4 + $0xf8] sm:$0xf] %vm419, %v6009
  %6074 = vst.msk [vmem:[%s4 + $0xfc] sm:$0xf] %vm419, %v6010
  %v6075 = vsel %vm4160, %v5788, 0.0
  %v6076 = vsel %vm4160, %v5790, 0.0
  %v6077 = vadd.f32 %v6075, %v6076
  %v6078 = vsel %vm4160, %v5793, 0.0
  %v6079 = vadd.f32 %v6077, %v6078
  %v6080 = vsel %vm4160, %v5795, 0.0
  %v6081 = vadd.f32 %v6079, %v6080
  %v6082 = vsel %vm4160, %v5798, 0.0
  %v6083 = vadd.f32 %v6081, %v6082
  %v6084 = vsel %vm4160, %v5800, 0.0
  %v6085 = vadd.f32 %v6083, %v6084
  %v6086 = vsel %vm4160, %v5803, 0.0
  %v6087 = vadd.f32 %v6085, %v6086
  %v6088 = vsel %vm4160, %v5805, 0.0
  %v6089 = vadd.f32 %v6087, %v6088
  %v6090 = vsel %vm4160, %v5808, 0.0
  %v6091 = vadd.f32 %v6089, %v6090
  %v6092 = vsel %vm4160, %v5810, 0.0
  %v6093 = vadd.f32 %v6091, %v6092
  %v6094 = vsel %vm4160, %v5813, 0.0
  %v6095 = vadd.f32 %v6093, %v6094
  %v6096 = vsel %vm4160, %v5815, 0.0
  %v6097 = vadd.f32 %v6095, %v6096
  %v6098 = vsel %vm4160, %v5818, 0.0
  %v6099 = vadd.f32 %v6097, %v6098
  %v6100 = vsel %vm4160, %v5820, 0.0
  %v6101 = vadd.f32 %v6099, %v6100
  %v6102 = vsel %vm4160, %v5823, 0.0
  %v6103 = vadd.f32 %v6101, %v6102
  %v6104 = vsel %vm4160, %v5825, 0.0
  %v6105 = vadd.f32 %v6103, %v6104
  %v6106 = vsel %vm4160, %v5828, 0.0
  %v6107 = vadd.f32 %v6105, %v6106
  %v6108 = vsel %vm4160, %v5830, 0.0
  %v6109 = vadd.f32 %v6107, %v6108
  %v6110 = vsel %vm4160, %v5833, 0.0
  %v6111 = vadd.f32 %v6109, %v6110
  %v6112 = vsel %vm4160, %v5835, 0.0
  %v6113 = vadd.f32 %v6111, %v6112
  %v6114 = vsel %vm4160, %v5838, 0.0
  %v6115 = vadd.f32 %v6113, %v6114
  %v6116 = vsel %vm4160, %v5840, 0.0
  %v6117 = vadd.f32 %v6115, %v6116
  %v6118 = vsel %vm4160, %v5843, 0.0
  %v6119 = vadd.f32 %v6117, %v6118
  %v6120 = vsel %vm4160, %v5845, 0.0
  %v6121 = vadd.f32 %v6119, %v6120
  %v6122 = vsel %vm4160, %v5848, 0.0
  %v6123 = vadd.f32 %v6121, %v6122
  %v6124 = vsel %vm4160, %v5850, 0.0
  %v6125 = vadd.f32 %v6123, %v6124
  %v6126 = vsel %vm4160, %v5853, 0.0
  %v6127 = vadd.f32 %v6125, %v6126
  %v6128 = vsel %vm4160, %v5855, 0.0
  %v6129 = vadd.f32 %v6127, %v6128
  %v6130 = vsel %vm4160, %v5858, 0.0
  %v6131 = vadd.f32 %v6129, %v6130
  %v6132 = vsel %vm4160, %v5860, 0.0
  %v6133 = vadd.f32 %v6131, %v6132
  %v6134 = vsel %vm4160, %v5863, 0.0
  %v6135 = vadd.f32 %v6133, %v6134
  %v6136 = vsel %vm4160, %v5865, 0.0
  %v6137 = vadd.f32 %v6135, %v6136
  %v6138 = vsel %vm4160, %v5868, 0.0
  %v6139 = vadd.f32 %v6137, %v6138
  %v6140 = vsel %vm4160, %v5870, 0.0
  %v6141 = vadd.f32 %v6139, %v6140
  %v6142 = vsel %vm4160, %v5873, 0.0
  %v6143 = vadd.f32 %v6141, %v6142
  %v6144 = vsel %vm4160, %v5875, 0.0
  %v6145 = vadd.f32 %v6143, %v6144
  %v6146 = vsel %vm4160, %v5878, 0.0
  %v6147 = vadd.f32 %v6145, %v6146
  %v6148 = vsel %vm4160, %v5880, 0.0
  %v6149 = vadd.f32 %v6147, %v6148
  %v6150 = vsel %vm4160, %v5883, 0.0
  %v6151 = vadd.f32 %v6149, %v6150
  %v6152 = vsel %vm4160, %v5885, 0.0
  %v6153 = vadd.f32 %v6151, %v6152
  %v6154 = vsel %vm4160, %v5888, 0.0
  %v6155 = vadd.f32 %v6153, %v6154
  %v6156 = vsel %vm4160, %v5890, 0.0
  %v6157 = vadd.f32 %v6155, %v6156
  %v6158 = vsel %vm4160, %v5893, 0.0
  %v6159 = vadd.f32 %v6157, %v6158
  %v6160 = vsel %vm4160, %v5895, 0.0
  %v6161 = vadd.f32 %v6159, %v6160
  %v6162 = vsel %vm4160, %v5898, 0.0
  %v6163 = vadd.f32 %v6161, %v6162
  %v6164 = vsel %vm4160, %v5900, 0.0
  %v6165 = vadd.f32 %v6163, %v6164
  %v6166 = vsel %vm4160, %v5903, 0.0
  %v6167 = vadd.f32 %v6165, %v6166
  %v6168 = vsel %vm4160, %v5905, 0.0
  %v6169 = vadd.f32 %v6167, %v6168
  %v6170 = vsel %vm4160, %v5908, 0.0
  %v6171 = vadd.f32 %v6169, %v6170
  %v6172 = vsel %vm4160, %v5910, 0.0
  %v6173 = vadd.f32 %v6171, %v6172
  %v6174 = vsel %vm4160, %v5913, 0.0
  %v6175 = vadd.f32 %v6173, %v6174
  %v6176 = vsel %vm4160, %v5915, 0.0
  %v6177 = vadd.f32 %v6175, %v6176
  %v6178 = vsel %vm4160, %v5918, 0.0
  %v6179 = vadd.f32 %v6177, %v6178
  %v6180 = vsel %vm4160, %v5920, 0.0
  %v6181 = vadd.f32 %v6179, %v6180
  %v6182 = vsel %vm4160, %v5923, 0.0
  %v6183 = vadd.f32 %v6181, %v6182
  %v6184 = vsel %vm4160, %v5925, 0.0
  %v6185 = vadd.f32 %v6183, %v6184
  %v6186 = vsel %vm4160, %v5928, 0.0
  %v6187 = vadd.f32 %v6185, %v6186
  %v6188 = vsel %vm4160, %v5930, 0.0
  %v6189 = vadd.f32 %v6187, %v6188
  %v6190 = vsel %vm4160, %v5933, 0.0
  %v6191 = vadd.f32 %v6189, %v6190
  %v6192 = vsel %vm4160, %v5935, 0.0
  %v6193 = vadd.f32 %v6191, %v6192
  %v6194 = vsel %vm4160, %v5938, 0.0
  %v6195 = vadd.f32 %v6193, %v6194
  %v6196 = vsel %vm4160, %v5940, 0.0
  %v6197 = vadd.f32 %v6195, %v6196
  %v6198 = vsel %vm4160, %v5943, 0.0
  %v6199 = vadd.f32 %v6197, %v6198
  %v6200 = vsel %vm4160, %v5945, 0.0
  %v6201 = vadd.f32 %v6199, %v6200
  %v6202 = vrot.slane %v6201, 4
  %v6203 = vadd.f32 %v6201, %v6202
  %v6204 = vrot.slane %v6203, 2
  %v6205 = vadd.f32 %v6203, %v6204
  %v6206 = vrot.slane %v6205, 1
  %v6207 = vadd.f32 %v6205, %v6206
  %vm6208 = vcmask 57344
  %6209 = vst.msk [vmem:[%s5] sm:$0x1] %vm6208, %v6207
  %v6210 = vmul.f32 %v5788, %v5788
  %v6211 = vmul.f32 %v5790, %v5790
  %v6212 = vmul.f32 %v5793, %v5793
  %v6213 = vmul.f32 %v5795, %v5795
  %v6214 = vmul.f32 %v5798, %v5798
  %v6215 = vmul.f32 %v5800, %v5800
  %v6216 = vmul.f32 %v5803, %v5803
  %v6217 = vmul.f32 %v5805, %v5805
  %v6218 = vmul.f32 %v5808, %v5808
  %v6219 = vmul.f32 %v5810, %v5810
  %v6220 = vmul.f32 %v5813, %v5813
  %v6221 = vmul.f32 %v5815, %v5815
  %v6222 = vmul.f32 %v5818, %v5818
  %v6223 = vmul.f32 %v5820, %v5820
  %v6224 = vmul.f32 %v5823, %v5823
  %v6225 = vmul.f32 %v5825, %v5825
  %v6226 = vmul.f32 %v5828, %v5828
  %v6227 = vmul.f32 %v5830, %v5830
  %v6228 = vmul.f32 %v5833, %v5833
  %v6229 = vmul.f32 %v5835, %v5835
  %v6230 = vmul.f32 %v5838, %v5838
  %v6231 = vmul.f32 %v5840, %v5840
  %v6232 = vmul.f32 %v5843, %v5843
  %v6233 = vmul.f32 %v5845, %v5845
  %v6234 = vmul.f32 %v5848, %v5848
  %v6235 = vmul.f32 %v5850, %v5850
  %v6236 = vmul.f32 %v5853, %v5853
  %v6237 = vmul.f32 %v5855, %v5855
  %v6238 = vmul.f32 %v5858, %v5858
  %v6239 = vmul.f32 %v5860, %v5860
  %v6240 = vmul.f32 %v5863, %v5863
  %v6241 = vmul.f32 %v5865, %v5865
  %v6242 = vmul.f32 %v5868, %v5868
  %v6243 = vmul.f32 %v5870, %v5870
  %v6244 = vmul.f32 %v5873, %v5873
  %v6245 = vmul.f32 %v5875, %v5875
  %v6246 = vmul.f32 %v5878, %v5878
  %v6247 = vmul.f32 %v5880, %v5880
  %v6248 = vmul.f32 %v5883, %v5883
  %v6249 = vmul.f32 %v5885, %v5885
  %v6250 = vmul.f32 %v5888, %v5888
  %v6251 = vmul.f32 %v5890, %v5890
  %v6252 = vmul.f32 %v5893, %v5893
  %v6253 = vmul.f32 %v5895, %v5895
  %v6254 = vmul.f32 %v5898, %v5898
  %v6255 = vmul.f32 %v5900, %v5900
  %v6256 = vmul.f32 %v5903, %v5903
  %v6257 = vmul.f32 %v5905, %v5905
  %v6258 = vmul.f32 %v5908, %v5908
  %v6259 = vmul.f32 %v5910, %v5910
  %v6260 = vmul.f32 %v5913, %v5913
  %v6261 = vmul.f32 %v5915, %v5915
  %v6262 = vmul.f32 %v5918, %v5918
  %v6263 = vmul.f32 %v5920, %v5920
  %v6264 = vmul.f32 %v5923, %v5923
  %v6265 = vmul.f32 %v5925, %v5925
  %v6266 = vmul.f32 %v5928, %v5928
  %v6267 = vmul.f32 %v5930, %v5930
  %v6268 = vmul.f32 %v5933, %v5933
  %v6269 = vmul.f32 %v5935, %v5935
  %v6270 = vmul.f32 %v5938, %v5938
  %v6271 = vmul.f32 %v5940, %v5940
  %v6272 = vmul.f32 %v5943, %v5943
  %v6273 = vmul.f32 %v5945, %v5945
  %v6274 = vsel %vm4160, %v6210, 0.0
  %v6275 = vsel %vm4160, %v6211, 0.0
  %v6276 = vadd.f32 %v6274, %v6275
  %v6277 = vsel %vm4160, %v6212, 0.0
  %v6278 = vadd.f32 %v6276, %v6277
  %v6279 = vsel %vm4160, %v6213, 0.0
  %v6280 = vadd.f32 %v6278, %v6279
  %v6281 = vsel %vm4160, %v6214, 0.0
  %v6282 = vadd.f32 %v6280, %v6281
  %v6283 = vsel %vm4160, %v6215, 0.0
  %v6284 = vadd.f32 %v6282, %v6283
  %v6285 = vsel %vm4160, %v6216, 0.0
  %v6286 = vadd.f32 %v6284, %v6285
  %v6287 = vsel %vm4160, %v6217, 0.0
  %v6288 = vadd.f32 %v6286, %v6287
  %v6289 = vsel %vm4160, %v6218, 0.0
  %v6290 = vadd.f32 %v6288, %v6289
  %v6291 = vsel %vm4160, %v6219, 0.0
  %v6292 = vadd.f32 %v6290, %v6291
  %v6293 = vsel %vm4160, %v6220, 0.0
  %v6294 = vadd.f32 %v6292, %v6293
  %v6295 = vsel %vm4160, %v6221, 0.0
  %v6296 = vadd.f32 %v6294, %v6295
  %v6297 = vsel %vm4160, %v6222, 0.0
  %v6298 = vadd.f32 %v6296, %v6297
  %v6299 = vsel %vm4160, %v6223, 0.0
  %v6300 = vadd.f32 %v6298, %v6299
  %v6301 = vsel %vm4160, %v6224, 0.0
  %v6302 = vadd.f32 %v6300, %v6301
  %v6303 = vsel %vm4160, %v6225, 0.0
  %v6304 = vadd.f32 %v6302, %v6303
  %v6305 = vsel %vm4160, %v6226, 0.0
  %v6306 = vadd.f32 %v6304, %v6305
  %v6307 = vsel %vm4160, %v6227, 0.0
  %v6308 = vadd.f32 %v6306, %v6307
  %v6309 = vsel %vm4160, %v6228, 0.0
  %v6310 = vadd.f32 %v6308, %v6309
  %v6311 = vsel %vm4160, %v6229, 0.0
  %v6312 = vadd.f32 %v6310, %v6311
  %v6313 = vsel %vm4160, %v6230, 0.0
  %v6314 = vadd.f32 %v6312, %v6313
  %v6315 = vsel %vm4160, %v6231, 0.0
  %v6316 = vadd.f32 %v6314, %v6315
  %v6317 = vsel %vm4160, %v6232, 0.0
  %v6318 = vadd.f32 %v6316, %v6317
  %v6319 = vsel %vm4160, %v6233, 0.0
  %v6320 = vadd.f32 %v6318, %v6319
  %v6321 = vsel %vm4160, %v6234, 0.0
  %v6322 = vadd.f32 %v6320, %v6321
  %v6323 = vsel %vm4160, %v6235, 0.0
  %v6324 = vadd.f32 %v6322, %v6323
  %v6325 = vsel %vm4160, %v6236, 0.0
  %v6326 = vadd.f32 %v6324, %v6325
  %v6327 = vsel %vm4160, %v6237, 0.0
  %v6328 = vadd.f32 %v6326, %v6327
  %v6329 = vsel %vm4160, %v6238, 0.0
  %v6330 = vadd.f32 %v6328, %v6329
  %v6331 = vsel %vm4160, %v6239, 0.0
  %v6332 = vadd.f32 %v6330, %v6331
  %v6333 = vsel %vm4160, %v6240, 0.0
  %v6334 = vadd.f32 %v6332, %v6333
  %v6335 = vsel %vm4160, %v6241, 0.0
  %v6336 = vadd.f32 %v6334, %v6335
  %v6337 = vsel %vm4160, %v6242, 0.0
  %v6338 = vadd.f32 %v6336, %v6337
  %v6339 = vsel %vm4160, %v6243, 0.0
  %v6340 = vadd.f32 %v6338, %v6339
  %v6341 = vsel %vm4160, %v6244, 0.0
  %v6342 = vadd.f32 %v6340, %v6341
  %v6343 = vsel %vm4160, %v6245, 0.0
  %v6344 = vadd.f32 %v6342, %v6343
  %v6345 = vsel %vm4160, %v6246, 0.0
  %v6346 = vadd.f32 %v6344, %v6345
  %v6347 = vsel %vm4160, %v6247, 0.0
  %v6348 = vadd.f32 %v6346, %v6347
  %v6349 = vsel %vm4160, %v6248, 0.0
  %v6350 = vadd.f32 %v6348, %v6349
  %v6351 = vsel %vm4160, %v6249, 0.0
  %v6352 = vadd.f32 %v6350, %v6351
  %v6353 = vsel %vm4160, %v6250, 0.0
  %v6354 = vadd.f32 %v6352, %v6353
  %v6355 = vsel %vm4160, %v6251, 0.0
  %v6356 = vadd.f32 %v6354, %v6355
  %v6357 = vsel %vm4160, %v6252, 0.0
  %v6358 = vadd.f32 %v6356, %v6357
  %v6359 = vsel %vm4160, %v6253, 0.0
  %v6360 = vadd.f32 %v6358, %v6359
  %v6361 = vsel %vm4160, %v6254, 0.0
  %v6362 = vadd.f32 %v6360, %v6361
  %v6363 = vsel %vm4160, %v6255, 0.0
  %v6364 = vadd.f32 %v6362, %v6363
  %v6365 = vsel %vm4160, %v6256, 0.0
  %v6366 = vadd.f32 %v6364, %v6365
  %v6367 = vsel %vm4160, %v6257, 0.0
  %v6368 = vadd.f32 %v6366, %v6367
  %v6369 = vsel %vm4160, %v6258, 0.0
  %v6370 = vadd.f32 %v6368, %v6369
  %v6371 = vsel %vm4160, %v6259, 0.0
  %v6372 = vadd.f32 %v6370, %v6371
  %v6373 = vsel %vm4160, %v6260, 0.0
  %v6374 = vadd.f32 %v6372, %v6373
  %v6375 = vsel %vm4160, %v6261, 0.0
  %v6376 = vadd.f32 %v6374, %v6375
  %v6377 = vsel %vm4160, %v6262, 0.0
  %v6378 = vadd.f32 %v6376, %v6377
  %v6379 = vsel %vm4160, %v6263, 0.0
  %v6380 = vadd.f32 %v6378, %v6379
  %v6381 = vsel %vm4160, %v6264, 0.0
  %v6382 = vadd.f32 %v6380, %v6381
  %v6383 = vsel %vm4160, %v6265, 0.0
  %v6384 = vadd.f32 %v6382, %v6383
  %v6385 = vsel %vm4160, %v6266, 0.0
  %v6386 = vadd.f32 %v6384, %v6385
  %v6387 = vsel %vm4160, %v6267, 0.0
  %v6388 = vadd.f32 %v6386, %v6387
  %v6389 = vsel %vm4160, %v6268, 0.0
  %v6390 = vadd.f32 %v6388, %v6389
  %v6391 = vsel %vm4160, %v6269, 0.0
  %v6392 = vadd.f32 %v6390, %v6391
  %v6393 = vsel %vm4160, %v6270, 0.0
  %v6394 = vadd.f32 %v6392, %v6393
  %v6395 = vsel %vm4160, %v6271, 0.0
  %v6396 = vadd.f32 %v6394, %v6395
  %v6397 = vsel %vm4160, %v6272, 0.0
  %v6398 = vadd.f32 %v6396, %v6397
  %v6399 = vsel %vm4160, %v6273, 0.0
  %v6400 = vadd.f32 %v6398, %v6399
  %v6401 = vrot.slane %v6400, 4
  %v6402 = vadd.f32 %v6400, %v6401
  %v6403 = vrot.slane %v6402, 2
  %v6404 = vadd.f32 %v6402, %v6403
  %v6405 = vrot.slane %v6404, 1
  %v6406 = vadd.f32 %v6404, %v6405
  %6407 = vst.msk [vmem:[%s6] sm:$0x1] %vm6208, %v6406
  // Predicated region
  $region18: #{residual_block_pallas.4} parent=0 // pred_check
    _
  $region19: #{residual_block_pallas.4} parent=0 // pred_check_branch
    %6409 = sbr.rel (0) target = $region21
  $region20: #{residual_block_pallas.4} parent=0 // pred_region
    _
  $region21: #{residual_block_pallas.4} parent=0 // pred_fallthru
    _
  // Predicated region
  $region22: #{residual_block_pallas.4} parent=0 // pred_check
    _
  $region23: #{residual_block_pallas.4} parent=0 // pred_check_branch
    %6411 = sbr.rel (0) target = $region25
  $region24: #{residual_block_pallas.4} parent=0 // pred_region
    _
  $region25: #{residual_block_pallas.4} parent=0 // pred_fallthru
    _
  // Predicated region
  $region26: #{residual_block_pallas.4} parent=0 // pred_check
    _
  $region27: #{residual_block_pallas.4} parent=0 // pred_check_branch
    %6413 = sbr.rel (0) target = $region29
  $region28: #{residual_block_pallas.4} parent=0 // pred_region
    _
  $region29: #{residual_block_pallas.4} parent=0 // pred_fallthru
    _
  // Predicated region
  $region30: #{residual_block_pallas.4} parent=0 // pred_check
    _
  $region31: #{residual_block_pallas.4} parent=0 // pred_check_branch
    %6415 = sbr.rel (0) target = $region33
  $region32: #{residual_block_pallas.4} parent=0 // pred_region
    _
  $region33: #{residual_block_pallas.4} parent=0 // pred_fallthru
    _
  // Predicated region
  $region34: #{residual_block_pallas.4} parent=0 // pred_check
    _
  $region35: #{residual_block_pallas.4} parent=0 // pred_check_branch
    %6417 = sbr.rel (0) target = $region37
  $region36: #{residual_block_pallas.4} parent=0 // pred_region
    _
  $region37: #{residual_block_pallas.4} parent=0 // pred_fallthru
    _
  // Predicated region
  $region38: #{residual_block_pallas.4} parent=0 // pred_check
    _
  $region39: #{residual_block_pallas.4} parent=0 // pred_check_branch
    %6419 = sbr.rel (0) target = $region41
  $region40: #{residual_block_pallas.4} parent=0 // pred_region
    _
  $region41: #{residual_block_pallas.4} parent=0 // pred_fallthru
    _

</llo_original>
